<compile_context>
chip_gen: v5e
topology: v5e:2x2
jax: 0.10.0
libtpu: 0.0.40
codegen_flags: <defaults>
</compile_context>

<pallas_src>
import jax
import jax.numpy as jnp
from jax.experimental import pallas as pl
from jax.experimental.pallas import tpu as pltpu

IN_DIM = 32 * 32 * 3   # 3072
HID = 512
OUT_PAD = 128          # lane-dense padded width of the final (., 1) output
EPS = 1e-5
SLOPE = 0.2            # LeakyReLU negative slope in the WGAN block
TM_MAX = 512           # max batch-tile rows per grid step
SPLIT_MIN_B = 128      # force >= 2 grid steps once the batch has this many rows
VMEM_LIMIT = 40 * 1024 * 1024


def _round_up(x, m):
    return (x + m - 1) // m * m


def _cdiv(a, b):
    return -(-a // b)


def _choose_tiling(batch):
    """Balanced batch tiles: tm multiple of 16, <= TM_MAX, >= 2 tiles for moderate B."""
    n_tiles = _cdiv(batch, TM_MAX)
    if batch >= SPLIT_MIN_B:
        n_tiles = max(n_tiles, 2)          # >= 1 tile per TensorCore on v7x / megacore
    tm = _round_up(_cdiv(batch, n_tiles), 16)
    return n_tiles, tm


def discriminator_kernel(x_ref,
                         w1_ref, b1_ref,
                         w2_ref, b2_ref,
                         w3_ref, b3_ref,
                         w4_ref, b4_ref,
                         out_ref):
    """One batch tile of the fused 4-layer MLP critic (eval-mode BN folded into the linears)."""

    def block(h, w_ref, b_ref):
        # bf16 x bf16 MXU matmul, f32 accumulate; BN already folded into w/b.
        z = jnp.dot(h, w_ref[...], preferred_element_type=jnp.float32) + b_ref[...]
        # LeakyReLU(0.2); Dropout is identity in eval mode.
        a = jnp.where(z >= 0, z, SLOPE * z)
        # Keep inter-layer activations in bf16 (halves vreg pressure, feeds MXU at bf16 rate).
        return a.astype(jnp.bfloat16)

    # f32 -> bf16 cast fused here: avoids a separate XLA convert/pad pass over the
    # activations in HBM before the kernel re-reads them.
    h = x_ref[...].astype(jnp.bfloat16)
    h = block(h, w1_ref, b1_ref)
    h = block(h, w2_ref, b2_ref)
    h = block(h, w3_ref, b3_ref)
    # Final Linear(512, 1), padded to 128 output lanes -> unmasked lane-dense stores.
    z = jnp.dot(h, w4_ref[...], preferred_element_type=jnp.float32) + b4_ref[...]
    out_ref[...] = z.astype(out_ref.dtype)


def init_params(key):
    """Deterministic synthetic parameters in the raw PyTorch-module layout (f32)."""
    ks = jax.random.split(key, 20)

    def lin(kw, kb, fan_in, fan_out):
        w = jax.random.normal(kw, (fan_in, fan_out), jnp.float32) * 0.02
        b = jax.random.normal(kb, (1, fan_out), jnp.float32) * 0.02
        return w, b

    def bn(kg, kb, km, kv, n):
        g = 1.0 + jax.random.normal(kg, (1, n), jnp.float32) * 0.02
        be = jax.random.normal(kb, (1, n), jnp.float32) * 0.02
        rm = jax.random.normal(km, (1, n), jnp.float32) * 0.1          # running_mean
        rv = 1.0 + jnp.abs(jax.random.normal(kv, (1, n), jnp.float32)) * 0.1  # running_var
        return g, be, rm, rv

    w1, b1 = lin(ks[0], ks[1], IN_DIM, HID)
    g1, be1, rm1, rv1 = bn(ks[2], ks[3], ks[4], ks[5], HID)
    w2, b2 = lin(ks[6], ks[7], HID, HID)
    g2, be2, rm2, rv2 = bn(ks[8], ks[9], ks[10], ks[11], HID)
    w3, b3 = lin(ks[12], ks[13], HID, HID)
    g3, be3, rm3, rv3 = bn(ks[14], ks[15], ks[16], ks[17], HID)
    w4, b4 = lin(ks[18], ks[19], HID, 1)
    return (w1, b1, g1, be1, rm1, rv1,
            w2, b2, g2, be2, rm2, rv2,
            w3, b3, g3, be3, rm3, rv3,
            w4, b4)


def prepare_params(raw):
    """One-time prep: fold eval-mode BN (full running stats) into the linears, cast
    weights to bf16, pad the final 1-wide layer to 128 lanes. Call once, outside the
    forward path."""
    (w1, b1, g1, be1, rm1, rv1,
     w2, b2, g2, be2, rm2, rv2,
     w3, b3, g3, be3, rm3, rv3,
     w4, b4) = raw

    def fold(w, b, g, be, rm, rv):
        s = g / jnp.sqrt(rv + EPS)                                     # (1, out)
        return (w * s).astype(jnp.bfloat16), ((b - rm) * s + be).astype(jnp.float32)

    w1f, b1f = fold(w1, b1, g1, be1, rm1, rv1)
    w2f, b2f = fold(w2, b2, g2, be2, rm2, rv2)
    w3f, b3f = fold(w3, b3, g3, be3, rm3, rv3)
    w4p = jnp.zeros((HID, OUT_PAD), jnp.bfloat16).at[:, :1].set(w4.astype(jnp.bfloat16))
    b4p = jnp.zeros((1, OUT_PAD), jnp.float32).at[:, :1].set(b4)
    return (w1f, b1f, w2f, b2f, w3f, b3f, w4p, b4p)


@jax.jit
def discriminator_forward(img, kparams):
    """Glue: flatten NCHW -> (B, 3072) like torch's .view; balanced batch tiles over a 1-D grid."""
    B = img.shape[0]
    x = img.reshape(B, -1)                         # stays f32; cast happens inside the kernel

    n_tiles, tm = _choose_tiling(B)
    b_pad = n_tiles * tm
    if b_pad != B:
        x = jnp.pad(x, ((0, b_pad - B), (0, 0)))   # only for ragged batches; < 16 rows/tile waste

    (w1, b1, w2, b2, w3, b3, w4, b4) = kparams

    def const_spec(arr):
        # Whole array, same block every grid step -> fetched once and kept resident;
        # single buffer so no second pipeline buffer is wasted on a block that never changes.
        return pl.BlockSpec(arr.shape, lambda i: (0, 0),
                            pipeline_mode=pl.Buffered(buffer_count=1))

    weight_bytes = sum(int(a.size) * a.dtype.itemsize for a in kparams)
    cost = pl.CostEstimate(
        flops=2 * b_pad * (IN_DIM * HID + HID * HID + HID * HID + HID * OUT_PAD),
        transcendentals=0,
        bytes_accessed=b_pad * IN_DIM * 4 + b_pad * OUT_PAD * 2 + weight_bytes,
    )

    out = pl.pallas_call(
        discriminator_kernel,
        out_shape=jax.ShapeDtypeStruct((b_pad, OUT_PAD), jnp.bfloat16),
        grid=(n_tiles,),
        in_specs=[
            pl.BlockSpec((tm, IN_DIM), lambda i: (i, 0)),   # streamed f32 activation tile
            const_spec(w1), const_spec(b1),
            const_spec(w2), const_spec(b2),
            const_spec(w3), const_spec(b3),
            const_spec(w4), const_spec(b4),
        ],
        out_specs=pl.BlockSpec((tm, OUT_PAD), lambda i: (i, 0)),
        compiler_params=pltpu.CompilerParams(
            dimension_semantics=("parallel",),   # batch tiles shard across TensorCores
            vmem_limit_bytes=VMEM_LIMIT,         # defaults (16/32 MiB) are too tight for tm=512
        ),
        cost_estimate=cost,
    )(x, w1, b1, w2, b2, w3, b3, w4, b4)

    return out[:B, :1].astype(jnp.float32)


def reference_forward(img, raw):
    """Pure-JAX f32 reference with un-folded parameters (eval-mode BN, identity dropout)."""
    (w1, b1, g1, be1, rm1, rv1,
     w2, b2, g2, be2, rm2, rv2,
     w3, b3, g3, be3, rm3, rv3,
     w4, b4) = raw
    x = img.reshape(img.shape[0], -1).astype(jnp.float32)

    def block(h, w, b, g, be, rm, rv):
        z = h @ w + b
        zn = (z - rm) / jnp.sqrt(rv + EPS) * g + be
        return jnp.where(zn >= 0, zn, SLOPE * zn)

    h = block(x, w1, b1, g1, be1, rm1, rv1)
    h = block(h, w2, b2, g2, be2, rm2, rv2)
    h = block(h, w3, b3, g3, be3, rm3, rv3)
    return h @ w4 + b4


if __name__ == "__main__":
    key = jax.random.PRNGKey(0)
    k_img, k_par, k_big = jax.random.split(key, 3)

    raw = init_params(k_par)
    kparams = prepare_params(raw)

    # Small CIFAR-10-shaped batch (first Linear requires 3*32*32 = 3072 features).
    img = jax.random.normal(k_img, (4, 3, 32, 32), jnp.float32)
    out = jax.block_until_ready(discriminator_forward(img, kparams))
    ref = reference_forward(img, raw)
    assert out.shape == (4, 1), out.shape
    assert jnp.allclose(out, ref, atol=5e-2, rtol=5e-2), (out, ref)

    # Larger ragged batch: exercises balanced multi-tile grid (2 tiles of 144 rows,
    # only 28 padded rows) plus the batch-padding path.
    img_big = jax.random.normal(k_big, (260, 3, 32, 32), jnp.float32)
    out_big = jax.block_until_ready(discriminator_forward(img_big, kparams))
    ref_big = reference_forward(img_big, raw)
    assert out_big.shape == (260, 1), out_big.shape
    assert jnp.allclose(out_big, ref_big, atol=5e-2, rtol=5e-2)

    print("KERNEL_OK")
</pallas_src>

<mosaic_0001>
module attributes {stable_mosaic.version = 11 : i64} {
  func.func @discriminator_kernel(%arg0: i32, %arg1: memref<16x3072xf32, #tpu.memory_space<vmem>>, %arg2: memref<3072x512xbf16, #tpu.memory_space<vmem>>, %arg3: memref<1x512xf32, #tpu.memory_space<vmem>>, %arg4: memref<512x512xbf16, #tpu.memory_space<vmem>>, %arg5: memref<1x512xf32, #tpu.memory_space<vmem>>, %arg6: memref<512x512xbf16, #tpu.memory_space<vmem>>, %arg7: memref<1x512xf32, #tpu.memory_space<vmem>>, %arg8: memref<512x128xbf16, #tpu.memory_space<vmem>>, %arg9: memref<1x128xf32, #tpu.memory_space<vmem>>, %arg10: memref<16x128xbf16, #tpu.memory_space<vmem>>) attributes {dimension_semantics = [#tpu.dimension_semantics<parallel>], iteration_bounds = array<i64: 1>, scalar_prefetch = 0 : i64, scratch_operands = 0 : i64, tpu.core_type = #tpu.core_type<tc>, window_params = [{transform_indices = @transform_0, window_bounds = array<i64: 16, 3072>}, {pipeline_mode = #tpu.pipeline_mode<synchronous>, transform_indices = @transform_1, window_bounds = array<i64: 3072, 512>}, {pipeline_mode = #tpu.pipeline_mode<synchronous>, transform_indices = @transform_2, window_bounds = array<i64: 1, 512>}, {pipeline_mode = #tpu.pipeline_mode<synchronous>, transform_indices = @transform_3, window_bounds = array<i64: 512, 512>}, {pipeline_mode = #tpu.pipeline_mode<synchronous>, transform_indices = @transform_4, window_bounds = array<i64: 1, 512>}, {pipeline_mode = #tpu.pipeline_mode<synchronous>, transform_indices = @transform_5, window_bounds = array<i64: 512, 512>}, {pipeline_mode = #tpu.pipeline_mode<synchronous>, transform_indices = @transform_6, window_bounds = array<i64: 1, 512>}, {pipeline_mode = #tpu.pipeline_mode<synchronous>, transform_indices = @transform_7, window_bounds = array<i64: 512, 128>}, {pipeline_mode = #tpu.pipeline_mode<synchronous>, transform_indices = @transform_8, window_bounds = array<i64: 1, 128>}, {transform_indices = @transform_9, window_bounds = array<i64: 16, 128>}]} {
    %c0 = arith.constant 0 : index
    %c0_0 = arith.constant 0 : index
    %0 = vector.load %arg1[%c0, %c0_0] : memref<16x3072xf32, #tpu.memory_space<vmem>>, vector<16x3072xf32>
    %1 = arith.truncf %0 : vector<16x3072xf32> to vector<16x3072xbf16>
    %c0_1 = arith.constant 0 : index
    %c0_2 = arith.constant 0 : index
    %2 = vector.load %arg2[%c0_1, %c0_2] : memref<3072x512xbf16, #tpu.memory_space<vmem>>, vector<3072x512xbf16>
    %cst = arith.constant dense<0.000000e+00> : vector<16x512xf32>
    %3 = tpu.matmul %1, %2, %cst {dimension_numbers = #tpu.dot_dimension_numbers<[1], [0], [0], [1], [0, 0, 1, 1], [], []>} : vector<16x3072xbf16>, vector<3072x512xbf16>, vector<16x512xf32> -> vector<16x512xf32>
    %c0_3 = arith.constant 0 : index
    %c0_4 = arith.constant 0 : index
    %4 = vector.load %arg3[%c0_3, %c0_4] : memref<1x512xf32, #tpu.memory_space<vmem>>, vector<1x512xf32>
    %5 = vector.broadcast %4 : vector<1x512xf32> to vector<16x512xf32>
    %6 = arith.addf %3, %5 : vector<16x512xf32>
    %cst_5 = arith.constant 0.000000e+00 : f32
    %7 = vector.broadcast %cst_5 : f32 to vector<16x512xf32>
    %8 = arith.cmpf oge, %6, %7 : vector<16x512xf32>
    %cst_6 = arith.constant 2.000000e-01 : f32
    %9 = vector.broadcast %cst_6 : f32 to vector<16x512xf32>
    %10 = arith.mulf %9, %6 : vector<16x512xf32>
    %11 = arith.select %8, %6, %10 : vector<16x512xi1>, vector<16x512xf32>
    %12 = arith.truncf %11 : vector<16x512xf32> to vector<16x512xbf16>
    %c0_7 = arith.constant 0 : index
    %c0_8 = arith.constant 0 : index
    %13 = vector.load %arg4[%c0_7, %c0_8] : memref<512x512xbf16, #tpu.memory_space<vmem>>, vector<512x512xbf16>
    %cst_9 = arith.constant dense<0.000000e+00> : vector<16x512xf32>
    %14 = tpu.matmul %12, %13, %cst_9 {dimension_numbers = #tpu.dot_dimension_numbers<[1], [0], [0], [1], [0, 0, 1, 1], [], []>} : vector<16x512xbf16>, vector<512x512xbf16>, vector<16x512xf32> -> vector<16x512xf32>
    %c0_10 = arith.constant 0 : index
    %c0_11 = arith.constant 0 : index
    %15 = vector.load %arg5[%c0_10, %c0_11] : memref<1x512xf32, #tpu.memory_space<vmem>>, vector<1x512xf32>
    %16 = vector.broadcast %15 : vector<1x512xf32> to vector<16x512xf32>
    %17 = arith.addf %14, %16 : vector<16x512xf32>
    %cst_12 = arith.constant 0.000000e+00 : f32
    %18 = vector.broadcast %cst_12 : f32 to vector<16x512xf32>
    %19 = arith.cmpf oge, %17, %18 : vector<16x512xf32>
    %cst_13 = arith.constant 2.000000e-01 : f32
    %20 = vector.broadcast %cst_13 : f32 to vector<16x512xf32>
    %21 = arith.mulf %20, %17 : vector<16x512xf32>
    %22 = arith.select %19, %17, %21 : vector<16x512xi1>, vector<16x512xf32>
    %23 = arith.truncf %22 : vector<16x512xf32> to vector<16x512xbf16>
    %c0_14 = arith.constant 0 : index
    %c0_15 = arith.constant 0 : index
    %24 = vector.load %arg6[%c0_14, %c0_15] : memref<512x512xbf16, #tpu.memory_space<vmem>>, vector<512x512xbf16>
    %cst_16 = arith.constant dense<0.000000e+00> : vector<16x512xf32>
    %25 = tpu.matmul %23, %24, %cst_16 {dimension_numbers = #tpu.dot_dimension_numbers<[1], [0], [0], [1], [0, 0, 1, 1], [], []>} : vector<16x512xbf16>, vector<512x512xbf16>, vector<16x512xf32> -> vector<16x512xf32>
    %c0_17 = arith.constant 0 : index
    %c0_18 = arith.constant 0 : index
    %26 = vector.load %arg7[%c0_17, %c0_18] : memref<1x512xf32, #tpu.memory_space<vmem>>, vector<1x512xf32>
    %27 = vector.broadcast %26 : vector<1x512xf32> to vector<16x512xf32>
    %28 = arith.addf %25, %27 : vector<16x512xf32>
    %cst_19 = arith.constant 0.000000e+00 : f32
    %29 = vector.broadcast %cst_19 : f32 to vector<16x512xf32>
    %30 = arith.cmpf oge, %28, %29 : vector<16x512xf32>
    %cst_20 = arith.constant 2.000000e-01 : f32
    %31 = vector.broadcast %cst_20 : f32 to vector<16x512xf32>
    %32 = arith.mulf %31, %28 : vector<16x512xf32>
    %33 = arith.select %30, %28, %32 : vector<16x512xi1>, vector<16x512xf32>
    %34 = arith.truncf %33 : vector<16x512xf32> to vector<16x512xbf16>
    %c0_21 = arith.constant 0 : index
    %c0_22 = arith.constant 0 : index
    %35 = vector.load %arg8[%c0_21, %c0_22] : memref<512x128xbf16, #tpu.memory_space<vmem>>, vector<512x128xbf16>
    %cst_23 = arith.constant dense<0.000000e+00> : vector<16x128xf32>
    %36 = tpu.matmul %34, %35, %cst_23 {dimension_numbers = #tpu.dot_dimension_numbers<[1], [0], [0], [1], [0, 0, 1, 1], [], []>} : vector<16x512xbf16>, vector<512x128xbf16>, vector<16x128xf32> -> vector<16x128xf32>
    %c0_24 = arith.constant 0 : index
    %c0_25 = arith.constant 0 : index
    %37 = vector.load %arg9[%c0_24, %c0_25] : memref<1x128xf32, #tpu.memory_space<vmem>>, vector<1x128xf32>
    %38 = vector.broadcast %37 : vector<1x128xf32> to vector<16x128xf32>
    %39 = arith.addf %36, %38 : vector<16x128xf32>
    %40 = arith.truncf %39 : vector<16x128xf32> to vector<16x128xbf16>
    %c0_26 = arith.constant 0 : index
    %c0_27 = arith.constant 0 : index
    %41 = vector.load %arg10[%c0_26, %c0_27] : memref<16x128xbf16, #tpu.memory_space<vmem>>, vector<16x128xbf16>
    tpu.vector_store %arg10[%c0_26, %c0_27], %40 {strides = array<i32>} : memref<16x128xbf16, #tpu.memory_space<vmem>>, vector<16x128xbf16>,
    return
  }
  func.func @transform_0(%arg0: i32) -> (i32, i32) {
    %c0_i32 = arith.constant 0 : i32
    %c0_i32_0 = arith.constant 0 : i32
    return %arg0, %c0_i32 : i32, i32
  }
  func.func @transform_1(%arg0: i32) -> (i32, i32) {
    %c0_i32 = arith.constant 0 : i32
    %c0_i32_0 = arith.constant 0 : i32
    %c0_i32_1 = arith.constant 0 : i32
    return %c0_i32, %c0_i32_0 : i32, i32
  }
  func.func @transform_2(%arg0: i32) -> (i32, i32) {
    %c0_i32 = arith.constant 0 : i32
    %c0_i32_0 = arith.constant 0 : i32
    %c0_i32_1 = arith.constant 0 : i32
    return %c0_i32, %c0_i32_0 : i32, i32
  }
  func.func @transform_3(%arg0: i32) -> (i32, i32) {
    %c0_i32 = arith.constant 0 : i32
    %c0_i32_0 = arith.constant 0 : i32
    %c0_i32_1 = arith.constant 0 : i32
    return %c0_i32, %c0_i32_0 : i32, i32
  }
  func.func @transform_4(%arg0: i32) -> (i32, i32) {
    %c0_i32 = arith.constant 0 : i32
    %c0_i32_0 = arith.constant 0 : i32
    %c0_i32_1 = arith.constant 0 : i32
    return %c0_i32, %c0_i32_0 : i32, i32
  }
  func.func @transform_5(%arg0: i32) -> (i32, i32) {
    %c0_i32 = arith.constant 0 : i32
    %c0_i32_0 = arith.constant 0 : i32
    %c0_i32_1 = arith.constant 0 : i32
    return %c0_i32, %c0_i32_0 : i32, i32
  }
  func.func @transform_6(%arg0: i32) -> (i32, i32) {
    %c0_i32 = arith.constant 0 : i32
    %c0_i32_0 = arith.constant 0 : i32
    %c0_i32_1 = arith.constant 0 : i32
    return %c0_i32, %c0_i32_0 : i32, i32
  }
  func.func @transform_7(%arg0: i32) -> (i32, i32) {
    %c0_i32 = arith.constant 0 : i32
    %c0_i32_0 = arith.constant 0 : i32
    %c0_i32_1 = arith.constant 0 : i32
    return %c0_i32, %c0_i32_0 : i32, i32
  }
  func.func @transform_8(%arg0: i32) -> (i32, i32) {
    %c0_i32 = arith.constant 0 : i32
    %c0_i32_0 = arith.constant 0 : i32
    %c0_i32_1 = arith.constant 0 : i32
    return %c0_i32, %c0_i32_0 : i32, i32
  }
  func.func @transform_9(%arg0: i32) -> (i32, i32) {
    %c0_i32 = arith.constant 0 : i32
    %c0_i32_0 = arith.constant 0 : i32
    return %arg0, %c0_i32 : i32, i32
  }
}

</mosaic_0001>

<llo_original>
// kernel: discriminator_forward.1
$region0: #{discriminator_forward.1}
  #allocation0 [shape = 'u32[]', space=smem, size = 0x4, offset = 0x4, fixed_abs, tag = 'smem constant byte address 0x4 - core index']
  #allocation1 [shape = 'u32[72,128]{1,0:T(1,128)}', space=vmem, size = 0x9000, scoped, tag = 'internal scratch']
  %s0 = inlined_call_operand.vmem [shape: f32[16,3072], index: 0, kind: input, shape index: {}]
  %s1 = inlined_call_operand.hbm [shape: bf16[3072,512], index: 1, kind: input, shape index: {}]
  %s2 = inlined_call_operand.hbm [shape: f32[1,512], index: 2, kind: input, shape index: {}]
  %s3 = inlined_call_operand.hbm [shape: bf16[512,512], index: 3, kind: input, shape index: {}]
  %s4 = inlined_call_operand.hbm [shape: f32[1,512], index: 4, kind: input, shape index: {}]
  %s5 = inlined_call_operand.hbm [shape: bf16[512,512], index: 5, kind: input, shape index: {}]
  %s6 = inlined_call_operand.hbm [shape: f32[1,512], index: 6, kind: input, shape index: {}]
  %s7 = inlined_call_operand.hbm [shape: bf16[512,128], index: 7, kind: input, shape index: {}]
  %s8 = inlined_call_operand.hbm [shape: f32[1,128], index: 8, kind: input, shape index: {}]
  %s9 = inlined_call_operand.vmem [shape: bf16[16,128], index: 9, kind: output, shape index: {}]
  %s10 = sld [smem:[#allocation0]]
  $region78: #{discriminator_forward.1} parent=0
    _
  %s12 = ssub.s32 1, %s10
  %s13 = scalar_select 0, %s12, %s10
  $region1: #{discriminator_forward.1} parent=0
    #allocation2 [shape = 'u8[3145728]{0}', space=vmem, size = 0x300000, scoped, tag = 'input window, operand 1, single buffered']
    #allocation3 [shape = 's32[1]{0}', space=sflag, size = 0x4, scoped, tag = 'scoped memory for discriminator_forward.1']
    #allocation4 [shape = 'u8[2048]{0}', space=vmem, size = 0x800, scoped, tag = 'input window, operand 2, single buffered']
    #allocation5 [shape = 's32[1]{0}', space=sflag, size = 0x4, scoped, tag = 'scoped memory for discriminator_forward.1']
    #allocation6 [shape = 'u8[524288]{0}', space=vmem, size = 0x80000, scoped, tag = 'input window, operand 3, single buffered']
    #allocation7 [shape = 'u8[2048]{0}', space=vmem, size = 0x800, scoped, tag = 'input window, operand 4, single buffered']
    #allocation8 [shape = 's32[1]{0}', space=sflag, size = 0x4, scoped, tag = 'scoped memory for discriminator_forward.1']
    #allocation9 [shape = 'u8[524288]{0}', space=vmem, size = 0x80000, scoped, tag = 'input window, operand 5, single buffered']
    #allocation10 [shape = 'u8[2048]{0}', space=vmem, size = 0x800, scoped, tag = 'input window, operand 6, single buffered']
    #allocation11 [shape = 's32[1]{0}', space=sflag, size = 0x4, scoped, tag = 'scoped memory for discriminator_forward.1']
    #allocation12 [shape = 'u8[131072]{0}', space=vmem, size = 0x20000, scoped, tag = 'input window, operand 7, single buffered']
    #allocation13 [shape = 'u8[512]{0}', space=vmem, size = 0x400, scoped, tag = 'input window, operand 8, single buffered']
    #allocation14 [shape = 's32[1]{0}', space=sflag, size = 0x4, scoped, tag = 'scoped memory for discriminator_forward.1']
    %14 = vsyncpa [#allocation3], 0
    %15 = vsyncpa [#allocation5], 0
    %16 = vsyncpa [#allocation8], 0
    %17 = vsyncpa [#allocation11], 0
    %18 = vsyncpa [#allocation14], 0
    // Predicated region
    $region2: #{discriminator_forward.1} parent=1 // pred_check
      _
    $region3: #{discriminator_forward.1} parent=1 // pred_check_branch
      %20 = sbr.rel (0) target = $region5
    $region4: #{discriminator_forward.1} parent=1 // pred_region
      _
    $region5: #{discriminator_forward.1} parent=1 // pred_fallthru
      _
    // Predicated region
    $region6: #{discriminator_forward.1} parent=1 // pred_check
      _
    $region7: #{discriminator_forward.1} parent=1 // pred_check_branch
      %22 = sbr.rel (0) target = $region9
    $region8: #{discriminator_forward.1} parent=1 // pred_region
      %24 = vsyncadd [#allocation3], 0
      %s25 = sshll.u32 %s1, 4
      %s26 = int_to_ptr.hbm [resolvable:$true] %s25
      %s27 = sshll.u32 [#allocation2], 4
      %s28 = int_to_ptr.vmem [resolvable:$true] %s27
      %33 = dma.hbm_to_vmem [thread:$0]  %s26, 98304, %s28, [#allocation3], 256, 256, 16
    $region9: #{discriminator_forward.1} parent=1 // pred_fallthru
      _
    // Predicated region
    $region10: #{discriminator_forward.1} parent=1 // pred_check
      _
    $region11: #{discriminator_forward.1} parent=1 // pred_check_branch
      %35 = sbr.rel (0) target = $region13
    $region12: #{discriminator_forward.1} parent=1 // pred_region
      %37 = vsyncadd [#allocation5], 0
      %s39 = sshll.u32 %s2, 4
      %s40 = int_to_ptr.hbm [resolvable:$true] %s39
      %s41 = sshll.u32 [#allocation4], 4
      %s42 = int_to_ptr.vmem [resolvable:$true] %s41
      %44 = dma.hbm_to_vmem [thread:$0]  %s40, 64, %s42, [#allocation5]
    $region13: #{discriminator_forward.1} parent=1 // pred_fallthru
      _
    // Predicated region
    $region14: #{discriminator_forward.1} parent=1 // pred_check
      _
    $region15: #{discriminator_forward.1} parent=1 // pred_check_branch
      %46 = sbr.rel (0) target = $region17
    $region16: #{discriminator_forward.1} parent=1 // pred_region
      %48 = vsyncadd [#allocation5], 0
      %s49 = sshll.u32 %s3, 4
      %s50 = int_to_ptr.hbm [resolvable:$true] %s49
      %s51 = sshll.u32 [#allocation6], 4
      %s52 = int_to_ptr.vmem [resolvable:$true] %s51
      %57 = dma.hbm_to_vmem [thread:$0]  %s50, 16384, %s52, [#allocation5], 256, 256, 16
    $region17: #{discriminator_forward.1} parent=1 // pred_fallthru
      _
    // Predicated region
    $region18: #{discriminator_forward.1} parent=1 // pred_check
      _
    $region19: #{discriminator_forward.1} parent=1 // pred_check_branch
      %59 = sbr.rel (0) target = $region21
    $region20: #{discriminator_forward.1} parent=1 // pred_region
      %61 = vsyncadd [#allocation8], 0
      %s63 = sshll.u32 %s4, 4
      %s64 = int_to_ptr.hbm [resolvable:$true] %s63
      %s65 = sshll.u32 [#allocation7], 4
      %s66 = int_to_ptr.vmem [resolvable:$true] %s65
      %68 = dma.hbm_to_vmem [thread:$0]  %s64, 64, %s66, [#allocation8]
    $region21: #{discriminator_forward.1} parent=1 // pred_fallthru
      _
    // Predicated region
    $region22: #{discriminator_forward.1} parent=1 // pred_check
      _
    $region23: #{discriminator_forward.1} parent=1 // pred_check_branch
      %70 = sbr.rel (0) target = $region25
    $region24: #{discriminator_forward.1} parent=1 // pred_region
      %72 = vsyncadd [#allocation8], 0
      %s73 = sshll.u32 %s5, 4
      %s74 = int_to_ptr.hbm [resolvable:$true] %s73
      %s75 = sshll.u32 [#allocation9], 4
      %s76 = int_to_ptr.vmem [resolvable:$true] %s75
      %81 = dma.hbm_to_vmem [thread:$0]  %s74, 16384, %s76, [#allocation8], 256, 256, 16
    $region25: #{discriminator_forward.1} parent=1 // pred_fallthru
      _
    // Predicated region
    $region26: #{discriminator_forward.1} parent=1 // pred_check
      _
    $region27: #{discriminator_forward.1} parent=1 // pred_check_branch
      %83 = sbr.rel (0) target = $region29
    $region28: #{discriminator_forward.1} parent=1 // pred_region
      %85 = vsyncadd [#allocation11], 0
      %s87 = sshll.u32 %s6, 4
      %s88 = int_to_ptr.hbm [resolvable:$true] %s87
      %s89 = sshll.u32 [#allocation10], 4
      %s90 = int_to_ptr.vmem [resolvable:$true] %s89
      %92 = dma.hbm_to_vmem [thread:$0]  %s88, 64, %s90, [#allocation11]
    $region29: #{discriminator_forward.1} parent=1 // pred_fallthru
      _
    // Predicated region
    $region30: #{discriminator_forward.1} parent=1 // pred_check
      _
    $region31: #{discriminator_forward.1} parent=1 // pred_check_branch
      %94 = sbr.rel (0) target = $region33
    $region32: #{discriminator_forward.1} parent=1 // pred_region
      %96 = vsyncadd [#allocation11], 0
      %s97 = sshll.u32 %s7, 4
      %s98 = int_to_ptr.hbm [resolvable:$true] %s97
      %s99 = sshll.u32 [#allocation12], 4
      %s100 = int_to_ptr.vmem [resolvable:$true] %s99
      %105 = dma.hbm_to_vmem [thread:$0]  %s98, 4096, %s100, [#allocation11], 64, 64, 4
    $region33: #{discriminator_forward.1} parent=1 // pred_fallthru
      _
    // Predicated region
    $region34: #{discriminator_forward.1} parent=1 // pred_check
      _
    $region35: #{discriminator_forward.1} parent=1 // pred_check_branch
      %107 = sbr.rel (0) target = $region37
    $region36: #{discriminator_forward.1} parent=1 // pred_region
      %109 = vsyncadd [#allocation14], 0
      %s111 = sshll.u32 %s8, 4
      %s112 = int_to_ptr.hbm [resolvable:$true] %s111
      %s113 = sshll.u32 [#allocation13], 4
      %s114 = int_to_ptr.vmem [resolvable:$true] %s113
      %116 = dma.hbm_to_vmem [thread:$0]  %s112, 16, %s114, [#allocation14]
    $region37: #{discriminator_forward.1} parent=1 // pred_fallthru
      _
    // Predicated region
    $region38: #{discriminator_forward.1} parent=1 // pred_check
      _
    $region39: #{discriminator_forward.1} parent=1 // pred_check_branch
      %118 = sbr.rel (0) target = $region41
    $region40: #{discriminator_forward.1} parent=1 // pred_region
      %120 = dma.done [#allocation3], 98304
    $region41: #{discriminator_forward.1} parent=1 // pred_fallthru
      _
    // Predicated region
    $region42: #{discriminator_forward.1} parent=1 // pred_check
      _
    $region43: #{discriminator_forward.1} parent=1 // pred_check_branch
      %122 = sbr.rel (0) target = $region45
    $region44: #{discriminator_forward.1} parent=1 // pred_region
      %124 = dma.done [#allocation5], 64
    $region45: #{discriminator_forward.1} parent=1 // pred_fallthru
      _
    // Predicated region
    $region46: #{discriminator_forward.1} parent=1 // pred_check
      _
    $region47: #{discriminator_forward.1} parent=1 // pred_check_branch
      %126 = sbr.rel (0) target = $region49
    $region48: #{discriminator_forward.1} parent=1 // pred_region
      %128 = dma.done [#allocation5], 16384
    $region49: #{discriminator_forward.1} parent=1 // pred_fallthru
      _
    // Predicated region
    $region50: #{discriminator_forward.1} parent=1 // pred_check
      _
    $region51: #{discriminator_forward.1} parent=1 // pred_check_branch
      %130 = sbr.rel (0) target = $region53
    $region52: #{discriminator_forward.1} parent=1 // pred_region
      %132 = dma.done [#allocation8], 64
    $region53: #{discriminator_forward.1} parent=1 // pred_fallthru
      _
    // Predicated region
    $region54: #{discriminator_forward.1} parent=1 // pred_check
      _
    $region55: #{discriminator_forward.1} parent=1 // pred_check_branch
      %134 = sbr.rel (0) target = $region57
    $region56: #{discriminator_forward.1} parent=1 // pred_region
      %136 = dma.done [#allocation8], 16384
    $region57: #{discriminator_forward.1} parent=1 // pred_fallthru
      _
    // Predicated region
    $region58: #{discriminator_forward.1} parent=1 // pred_check
      _
    $region59: #{discriminator_forward.1} parent=1 // pred_check_branch
      %138 = sbr.rel (0) target = $region61
    $region60: #{discriminator_forward.1} parent=1 // pred_region
      %140 = dma.done [#allocation11], 64
    $region61: #{discriminator_forward.1} parent=1 // pred_fallthru
      _
    // Predicated region
    $region62: #{discriminator_forward.1} parent=1 // pred_check
      _
    $region63: #{discriminator_forward.1} parent=1 // pred_check_branch
      %142 = sbr.rel (0) target = $region65
    $region64: #{discriminator_forward.1} parent=1 // pred_region
      %144 = dma.done [#allocation11], 4096
    $region65: #{discriminator_forward.1} parent=1 // pred_fallthru
      _
    // Predicated region
    $region66: #{discriminator_forward.1} parent=1 // pred_check
      _
    $region67: #{discriminator_forward.1} parent=1 // pred_check_branch
      %146 = sbr.rel (0) target = $region69
    $region68: #{discriminator_forward.1} parent=1 // pred_region
      %148 = dma.done [#allocation14], 16
    $region69: #{discriminator_forward.1} parent=1 // pred_fallthru
      _
    %v149 = vld [vmem:[%s0] sm:$0xff]
    %v150 = vld [vmem:[%s0 + $0x8] sm:$0xff]
    %v151 = vld [vmem:[%s0 + $0x10] sm:$0xff]
    %v152 = vld [vmem:[%s0 + $0x18] sm:$0xff]
    %v153 = vld [vmem:[%s0 + $0x20] sm:$0xff]
    %v154 = vld [vmem:[%s0 + $0x28] sm:$0xff]
    %v155 = vld [vmem:[%s0 + $0x30] sm:$0xff]
    %v156 = vld [vmem:[%s0 + $0x38] sm:$0xff]
    %v157 = vld [vmem:[%s0 + $0x40] sm:$0xff]
    %v158 = vld [vmem:[%s0 + $0x48] sm:$0xff]
    %v159 = vld [vmem:[%s0 + $0x50] sm:$0xff]
    %v160 = vld [vmem:[%s0 + $0x58] sm:$0xff]
    %v161 = vld [vmem:[%s0 + $0x60] sm:$0xff]
    %v162 = vld [vmem:[%s0 + $0x68] sm:$0xff]
    %v163 = vld [vmem:[%s0 + $0x70] sm:$0xff]
    %v164 = vld [vmem:[%s0 + $0x78] sm:$0xff]
    %v165 = vld [vmem:[%s0 + $0x80] sm:$0xff]
    %v166 = vld [vmem:[%s0 + $0x88] sm:$0xff]
    %v167 = vld [vmem:[%s0 + $0x90] sm:$0xff]
    %v168 = vld [vmem:[%s0 + $0x98] sm:$0xff]
    %v169 = vld [vmem:[%s0 + $0xa0] sm:$0xff]
    %v170 = vld [vmem:[%s0 + $0xa8] sm:$0xff]
    %v171 = vld [vmem:[%s0 + $0xb0] sm:$0xff]
    %v172 = vld [vmem:[%s0 + $0xb8] sm:$0xff]
    %v173 = vld [vmem:[%s0 + $0xc0] sm:$0xff]
    %v174 = vld [vmem:[%s0 + $0xc8] sm:$0xff]
    %v175 = vld [vmem:[%s0 + $0xd0] sm:$0xff]
    %v176 = vld [vmem:[%s0 + $0xd8] sm:$0xff]
    %v177 = vld [vmem:[%s0 + $0xe0] sm:$0xff]
    %v178 = vld [vmem:[%s0 + $0xe8] sm:$0xff]
    %v179 = vld [vmem:[%s0 + $0xf0] sm:$0xff]
    %v180 = vld [vmem:[%s0 + $0xf8] sm:$0xff]
    %v181 = vld [vmem:[%s0 + $0x100] sm:$0xff]
    %v182 = vld [vmem:[%s0 + $0x108] sm:$0xff]
    %v183 = vld [vmem:[%s0 + $0x110] sm:$0xff]
    %v184 = vld [vmem:[%s0 + $0x118] sm:$0xff]
    %v185 = vld [vmem:[%s0 + $0x120] sm:$0xff]
    %v186 = vld [vmem:[%s0 + $0x128] sm:$0xff]
    %v187 = vld [vmem:[%s0 + $0x130] sm:$0xff]
    %v188 = vld [vmem:[%s0 + $0x138] sm:$0xff]
    %v189 = vld [vmem:[%s0 + $0x140] sm:$0xff]
    %v190 = vld [vmem:[%s0 + $0x148] sm:$0xff]
    %v191 = vld [vmem:[%s0 + $0x150] sm:$0xff]
    %v192 = vld [vmem:[%s0 + $0x158] sm:$0xff]
    %v193 = vld [vmem:[%s0 + $0x160] sm:$0xff]
    %v194 = vld [vmem:[%s0 + $0x168] sm:$0xff]
    %v195 = vld [vmem:[%s0 + $0x170] sm:$0xff]
    %v196 = vld [vmem:[%s0 + $0x178] sm:$0xff]
    %v197 = vpack.c.bf16 %v173, %v149
    %v198 = vpack.c.bf16 %v174, %v150
    %v199 = vpack.c.bf16 %v175, %v151
    %v200 = vpack.c.bf16 %v176, %v152
    %v201 = vpack.c.bf16 %v177, %v153
    %v202 = vpack.c.bf16 %v178, %v154
    %v203 = vpack.c.bf16 %v179, %v155
    %v204 = vpack.c.bf16 %v180, %v156
    %v205 = vpack.c.bf16 %v181, %v157
    %v206 = vpack.c.bf16 %v182, %v158
    %v207 = vpack.c.bf16 %v183, %v159
    %v208 = vpack.c.bf16 %v184, %v160
    %v209 = vpack.c.bf16 %v185, %v161
    %v210 = vpack.c.bf16 %v186, %v162
    %v211 = vpack.c.bf16 %v187, %v163
    %v212 = vpack.c.bf16 %v188, %v164
    %v213 = vpack.c.bf16 %v189, %v165
    %v214 = vpack.c.bf16 %v190, %v166
    %v215 = vpack.c.bf16 %v191, %v167
    %v216 = vpack.c.bf16 %v192, %v168
    %v217 = vpack.c.bf16 %v193, %v169
    %v218 = vpack.c.bf16 %v194, %v170
    %v219 = vpack.c.bf16 %v195, %v171
    %v220 = vpack.c.bf16 %v196, %v172
    %v221 = vld [vmem:[#allocation2] sm:$0xff]
    %v222 = vld [vmem:[#allocation2 + $0x8] sm:$0xff]
    %v223 = vld [vmem:[#allocation2 + $0x10] sm:$0xff]
    %v224 = vld [vmem:[#allocation2 + $0x18] sm:$0xff]
    %v225 = vld [vmem:[#allocation2 + $0x20] sm:$0xff]
    %v226 = vld [vmem:[#allocation2 + $0x28] sm:$0xff]
    %v227 = vld [vmem:[#allocation2 + $0x30] sm:$0xff]
    %v228 = vld [vmem:[#allocation2 + $0x38] sm:$0xff]
    %v229 = vld [vmem:[#allocation2 + $0x40] sm:$0xff]
    %v230 = vld [vmem:[#allocation2 + $0x48] sm:$0xff]
    %v231 = vld [vmem:[#allocation2 + $0x50] sm:$0xff]
    %v232 = vld [vmem:[#allocation2 + $0x58] sm:$0xff]
    %v233 = vld [vmem:[#allocation2 + $0x60] sm:$0xff]
    %v234 = vld [vmem:[#allocation2 + $0x68] sm:$0xff]
    %v235 = vld [vmem:[#allocation2 + $0x70] sm:$0xff]
    %v236 = vld [vmem:[#allocation2 + $0x78] sm:$0xff]
    %v237 = vld [vmem:[#allocation2 + $0x80] sm:$0xff]
    %v238 = vld [vmem:[#allocation2 + $0x88] sm:$0xff]
    %v239 = vld [vmem:[#allocation2 + $0x90] sm:$0xff]
    %v240 = vld [vmem:[#allocation2 + $0x98] sm:$0xff]
    %v241 = vld [vmem:[#allocation2 + $0xa0] sm:$0xff]
    %v242 = vld [vmem:[#allocation2 + $0xa8] sm:$0xff]
    %v243 = vld [vmem:[#allocation2 + $0xb0] sm:$0xff]
    %v244 = vld [vmem:[#allocation2 + $0xb8] sm:$0xff]
    %v245 = vld [vmem:[#allocation2 + $0xc0] sm:$0xff]
    %v246 = vld [vmem:[#allocation2 + $0xc8] sm:$0xff]
    %v247 = vld [vmem:[#allocation2 + $0xd0] sm:$0xff]
    %v248 = vld [vmem:[#allocation2 + $0xd8] sm:$0xff]
    %v249 = vld [vmem:[#allocation2 + $0xe0] sm:$0xff]
    %v250 = vld [vmem:[#allocation2 + $0xe8] sm:$0xff]
    %v251 = vld [vmem:[#allocation2 + $0xf0] sm:$0xff]
    %v252 = vld [vmem:[#allocation2 + $0xf8] sm:$0xff]
    %v253 = vld [vmem:[#allocation2 + $0x100] sm:$0xff]
    %v254 = vld [vmem:[#allocation2 + $0x108] sm:$0xff]
    %v255 = vld [vmem:[#allocation2 + $0x110] sm:$0xff]
    %v256 = vld [vmem:[#allocation2 + $0x118] sm:$0xff]
    %v257 = vld [vmem:[#allocation2 + $0x120] sm:$0xff]
    %v258 = vld [vmem:[#allocation2 + $0x128] sm:$0xff]
    %v259 = vld [vmem:[#allocation2 + $0x130] sm:$0xff]
    %v260 = vld [vmem:[#allocation2 + $0x138] sm:$0xff]
    %v261 = vld [vmem:[#allocation2 + $0x140] sm:$0xff]
    %v262 = vld [vmem:[#allocation2 + $0x148] sm:$0xff]
    %v263 = vld [vmem:[#allocation2 + $0x150] sm:$0xff]
    %v264 = vld [vmem:[#allocation2 + $0x158] sm:$0xff]
    %v265 = vld [vmem:[#allocation2 + $0x160] sm:$0xff]
    %v266 = vld [vmem:[#allocation2 + $0x168] sm:$0xff]
    %v267 = vld [vmem:[#allocation2 + $0x170] sm:$0xff]
    %v268 = vld [vmem:[#allocation2 + $0x178] sm:$0xff]
    %v269 = vld [vmem:[#allocation2 + $0x180] sm:$0xff]
    %v270 = vld [vmem:[#allocation2 + $0x188] sm:$0xff]
    %v271 = vld [vmem:[#allocation2 + $0x190] sm:$0xff]
    %v272 = vld [vmem:[#allocation2 + $0x198] sm:$0xff]
    %v273 = vld [vmem:[#allocation2 + $0x1a0] sm:$0xff]
    %v274 = vld [vmem:[#allocation2 + $0x1a8] sm:$0xff]
    %v275 = vld [vmem:[#allocation2 + $0x1b0] sm:$0xff]
    %v276 = vld [vmem:[#allocation2 + $0x1b8] sm:$0xff]
    %v277 = vld [vmem:[#allocation2 + $0x1c0] sm:$0xff]
    %v278 = vld [vmem:[#allocation2 + $0x1c8] sm:$0xff]
    %v279 = vld [vmem:[#allocation2 + $0x1d0] sm:$0xff]
    %v280 = vld [vmem:[#allocation2 + $0x1d8] sm:$0xff]
    %v281 = vld [vmem:[#allocation2 + $0x1e0] sm:$0xff]
    %v282 = vld [vmem:[#allocation2 + $0x1e8] sm:$0xff]
    %v283 = vld [vmem:[#allocation2 + $0x1f0] sm:$0xff]
    %v284 = vld [vmem:[#allocation2 + $0x1f8] sm:$0xff]
    %v285 = vld [vmem:[#allocation2 + $0x200] sm:$0xff]
    %v286 = vld [vmem:[#allocation2 + $0x208] sm:$0xff]
    %v287 = vld [vmem:[#allocation2 + $0x210] sm:$0xff]
    %v288 = vld [vmem:[#allocation2 + $0x218] sm:$0xff]
    %v289 = vld [vmem:[#allocation2 + $0x220] sm:$0xff]
    %v290 = vld [vmem:[#allocation2 + $0x228] sm:$0xff]
    %v291 = vld [vmem:[#allocation2 + $0x230] sm:$0xff]
    %v292 = vld [vmem:[#allocation2 + $0x238] sm:$0xff]
    %v293 = vld [vmem:[#allocation2 + $0x240] sm:$0xff]
    %v294 = vld [vmem:[#allocation2 + $0x248] sm:$0xff]
    %v295 = vld [vmem:[#allocation2 + $0x250] sm:$0xff]
    %v296 = vld [vmem:[#allocation2 + $0x258] sm:$0xff]
    %v297 = vld [vmem:[#allocation2 + $0x260] sm:$0xff]
    %v298 = vld [vmem:[#allocation2 + $0x268] sm:$0xff]
    %v299 = vld [vmem:[#allocation2 + $0x270] sm:$0xff]
    %v300 = vld [vmem:[#allocation2 + $0x278] sm:$0xff]
    %v301 = vld [vmem:[#allocation2 + $0x280] sm:$0xff]
    %v302 = vld [vmem:[#allocation2 + $0x288] sm:$0xff]
    %v303 = vld [vmem:[#allocation2 + $0x290] sm:$0xff]
    %v304 = vld [vmem:[#allocation2 + $0x298] sm:$0xff]
    %v305 = vld [vmem:[#allocation2 + $0x2a0] sm:$0xff]
    %v306 = vld [vmem:[#allocation2 + $0x2a8] sm:$0xff]
    %v307 = vld [vmem:[#allocation2 + $0x2b0] sm:$0xff]
    %v308 = vld [vmem:[#allocation2 + $0x2b8] sm:$0xff]
    %v309 = vld [vmem:[#allocation2 + $0x2c0] sm:$0xff]
    %v310 = vld [vmem:[#allocation2 + $0x2c8] sm:$0xff]
    %v311 = vld [vmem:[#allocation2 + $0x2d0] sm:$0xff]
    %v312 = vld [vmem:[#allocation2 + $0x2d8] sm:$0xff]
    %v313 = vld [vmem:[#allocation2 + $0x2e0] sm:$0xff]
    %v314 = vld [vmem:[#allocation2 + $0x2e8] sm:$0xff]
    %v315 = vld [vmem:[#allocation2 + $0x2f0] sm:$0xff]
    %v316 = vld [vmem:[#allocation2 + $0x2f8] sm:$0xff]
    %v317 = vld [vmem:[#allocation2 + $0x300] sm:$0xff]
    %v318 = vld [vmem:[#allocation2 + $0x308] sm:$0xff]
    %v319 = vld [vmem:[#allocation2 + $0x310] sm:$0xff]
    %v320 = vld [vmem:[#allocation2 + $0x318] sm:$0xff]
    %v321 = vld [vmem:[#allocation2 + $0x320] sm:$0xff]
    %v322 = vld [vmem:[#allocation2 + $0x328] sm:$0xff]
    %v323 = vld [vmem:[#allocation2 + $0x330] sm:$0xff]
    %v324 = vld [vmem:[#allocation2 + $0x338] sm:$0xff]
    %v325 = vld [vmem:[#allocation2 + $0x340] sm:$0xff]
    %v326 = vld [vmem:[#allocation2 + $0x348] sm:$0xff]
    %v327 = vld [vmem:[#allocation2 + $0x350] sm:$0xff]
    %v328 = vld [vmem:[#allocation2 + $0x358] sm:$0xff]
    %v329 = vld [vmem:[#allocation2 + $0x360] sm:$0xff]
    %v330 = vld [vmem:[#allocation2 + $0x368] sm:$0xff]
    %v331 = vld [vmem:[#allocation2 + $0x370] sm:$0xff]
    %v332 = vld [vmem:[#allocation2 + $0x378] sm:$0xff]
    %v333 = vld [vmem:[#allocation2 + $0x380] sm:$0xff]
    %v334 = vld [vmem:[#allocation2 + $0x388] sm:$0xff]
    %v335 = vld [vmem:[#allocation2 + $0x390] sm:$0xff]
    %v336 = vld [vmem:[#allocation2 + $0x398] sm:$0xff]
    %v337 = vld [vmem:[#allocation2 + $0x3a0] sm:$0xff]
    %v338 = vld [vmem:[#allocation2 + $0x3a8] sm:$0xff]
    %v339 = vld [vmem:[#allocation2 + $0x3b0] sm:$0xff]
    %v340 = vld [vmem:[#allocation2 + $0x3b8] sm:$0xff]
    %v341 = vld [vmem:[#allocation2 + $0x3c0] sm:$0xff]
    %v342 = vld [vmem:[#allocation2 + $0x3c8] sm:$0xff]
    %v343 = vld [vmem:[#allocation2 + $0x3d0] sm:$0xff]
    %v344 = vld [vmem:[#allocation2 + $0x3d8] sm:$0xff]
    %v345 = vld [vmem:[#allocation2 + $0x3e0] sm:$0xff]
    %v346 = vld [vmem:[#allocation2 + $0x3e8] sm:$0xff]
    %v347 = vld [vmem:[#allocation2 + $0x3f0] sm:$0xff]
    %v348 = vld [vmem:[#allocation2 + $0x3f8] sm:$0xff]
    %v349 = vld [vmem:[#allocation2 + $0x400] sm:$0xff]
    %v350 = vld [vmem:[#allocation2 + $0x408] sm:$0xff]
    %v351 = vld [vmem:[#allocation2 + $0x410] sm:$0xff]
    %v352 = vld [vmem:[#allocation2 + $0x418] sm:$0xff]
    %v353 = vld [vmem:[#allocation2 + $0x420] sm:$0xff]
    %v354 = vld [vmem:[#allocation2 + $0x428] sm:$0xff]
    %v355 = vld [vmem:[#allocation2 + $0x430] sm:$0xff]
    %v356 = vld [vmem:[#allocation2 + $0x438] sm:$0xff]
    %v357 = vld [vmem:[#allocation2 + $0x440] sm:$0xff]
    %v358 = vld [vmem:[#allocation2 + $0x448] sm:$0xff]
    %v359 = vld [vmem:[#allocation2 + $0x450] sm:$0xff]
    %v360 = vld [vmem:[#allocation2 + $0x458] sm:$0xff]
    %v361 = vld [vmem:[#allocation2 + $0x460] sm:$0xff]
    %v362 = vld [vmem:[#allocation2 + $0x468] sm:$0xff]
    %v363 = vld [vmem:[#allocation2 + $0x470] sm:$0xff]
    %v364 = vld [vmem:[#allocation2 + $0x478] sm:$0xff]
    %v365 = vld [vmem:[#allocation2 + $0x480] sm:$0xff]
    %v366 = vld [vmem:[#allocation2 + $0x488] sm:$0xff]
    %v367 = vld [vmem:[#allocation2 + $0x490] sm:$0xff]
    %v368 = vld [vmem:[#allocation2 + $0x498] sm:$0xff]
    %v369 = vld [vmem:[#allocation2 + $0x4a0] sm:$0xff]
    %v370 = vld [vmem:[#allocation2 + $0x4a8] sm:$0xff]
    %v371 = vld [vmem:[#allocation2 + $0x4b0] sm:$0xff]
    %v372 = vld [vmem:[#allocation2 + $0x4b8] sm:$0xff]
    %v373 = vld [vmem:[#allocation2 + $0x4c0] sm:$0xff]
    %v374 = vld [vmem:[#allocation2 + $0x4c8] sm:$0xff]
    %v375 = vld [vmem:[#allocation2 + $0x4d0] sm:$0xff]
    %v376 = vld [vmem:[#allocation2 + $0x4d8] sm:$0xff]
    %v377 = vld [vmem:[#allocation2 + $0x4e0] sm:$0xff]
    %v378 = vld [vmem:[#allocation2 + $0x4e8] sm:$0xff]
    %v379 = vld [vmem:[#allocation2 + $0x4f0] sm:$0xff]
    %v380 = vld [vmem:[#allocation2 + $0x4f8] sm:$0xff]
    %v381 = vld [vmem:[#allocation2 + $0x500] sm:$0xff]
    %v382 = vld [vmem:[#allocation2 + $0x508] sm:$0xff]
    %v383 = vld [vmem:[#allocation2 + $0x510] sm:$0xff]
    %v384 = vld [vmem:[#allocation2 + $0x518] sm:$0xff]
    %v385 = vld [vmem:[#allocation2 + $0x520] sm:$0xff]
    %v386 = vld [vmem:[#allocation2 + $0x528] sm:$0xff]
    %v387 = vld [vmem:[#allocation2 + $0x530] sm:$0xff]
    %v388 = vld [vmem:[#allocation2 + $0x538] sm:$0xff]
    %v389 = vld [vmem:[#allocation2 + $0x540] sm:$0xff]
    %v390 = vld [vmem:[#allocation2 + $0x548] sm:$0xff]
    %v391 = vld [vmem:[#allocation2 + $0x550] sm:$0xff]
    %v392 = vld [vmem:[#allocation2 + $0x558] sm:$0xff]
    %v393 = vld [vmem:[#allocation2 + $0x560] sm:$0xff]
    %v394 = vld [vmem:[#allocation2 + $0x568] sm:$0xff]
    %v395 = vld [vmem:[#allocation2 + $0x570] sm:$0xff]
    %v396 = vld [vmem:[#allocation2 + $0x578] sm:$0xff]
    %v397 = vld [vmem:[#allocation2 + $0x580] sm:$0xff]
    %v398 = vld [vmem:[#allocation2 + $0x588] sm:$0xff]
    %v399 = vld [vmem:[#allocation2 + $0x590] sm:$0xff]
    %v400 = vld [vmem:[#allocation2 + $0x598] sm:$0xff]
    %v401 = vld [vmem:[#allocation2 + $0x5a0] sm:$0xff]
    %v402 = vld [vmem:[#allocation2 + $0x5a8] sm:$0xff]
    %v403 = vld [vmem:[#allocation2 + $0x5b0] sm:$0xff]
    %v404 = vld [vmem:[#allocation2 + $0x5b8] sm:$0xff]
    %v405 = vld [vmem:[#allocation2 + $0x5c0] sm:$0xff]
    %v406 = vld [vmem:[#allocation2 + $0x5c8] sm:$0xff]
    %v407 = vld [vmem:[#allocation2 + $0x5d0] sm:$0xff]
    %v408 = vld [vmem:[#allocation2 + $0x5d8] sm:$0xff]
    %v409 = vld [vmem:[#allocation2 + $0x5e0] sm:$0xff]
    %v410 = vld [vmem:[#allocation2 + $0x5e8] sm:$0xff]
    %v411 = vld [vmem:[#allocation2 + $0x5f0] sm:$0xff]
    %v412 = vld [vmem:[#allocation2 + $0x5f8] sm:$0xff]
    %v413 = vld [vmem:[#allocation2 + $0x600] sm:$0xff]
    %v414 = vld [vmem:[#allocation2 + $0x608] sm:$0xff]
    %v415 = vld [vmem:[#allocation2 + $0x610] sm:$0xff]
    %v416 = vld [vmem:[#allocation2 + $0x618] sm:$0xff]
    %v417 = vld [vmem:[#allocation2 + $0x620] sm:$0xff]
    %v418 = vld [vmem:[#allocation2 + $0x628] sm:$0xff]
    %v419 = vld [vmem:[#allocation2 + $0x630] sm:$0xff]
    %v420 = vld [vmem:[#allocation2 + $0x638] sm:$0xff]
    %v421 = vld [vmem:[#allocation2 + $0x640] sm:$0xff]
    %v422 = vld [vmem:[#allocation2 + $0x648] sm:$0xff]
    %v423 = vld [vmem:[#allocation2 + $0x650] sm:$0xff]
    %v424 = vld [vmem:[#allocation2 + $0x658] sm:$0xff]
    %v425 = vld [vmem:[#allocation2 + $0x660] sm:$0xff]
    %v426 = vld [vmem:[#allocation2 + $0x668] sm:$0xff]
    %v427 = vld [vmem:[#allocation2 + $0x670] sm:$0xff]
    %v428 = vld [vmem:[#allocation2 + $0x678] sm:$0xff]
    %v429 = vld [vmem:[#allocation2 + $0x680] sm:$0xff]
    %v430 = vld [vmem:[#allocation2 + $0x688] sm:$0xff]
    %v431 = vld [vmem:[#allocation2 + $0x690] sm:$0xff]
    %v432 = vld [vmem:[#allocation2 + $0x698] sm:$0xff]
    %v433 = vld [vmem:[#allocation2 + $0x6a0] sm:$0xff]
    %v434 = vld [vmem:[#allocation2 + $0x6a8] sm:$0xff]
    %v435 = vld [vmem:[#allocation2 + $0x6b0] sm:$0xff]
    %v436 = vld [vmem:[#allocation2 + $0x6b8] sm:$0xff]
    %v437 = vld [vmem:[#allocation2 + $0x6c0] sm:$0xff]
    %v438 = vld [vmem:[#allocation2 + $0x6c8] sm:$0xff]
    %v439 = vld [vmem:[#allocation2 + $0x6d0] sm:$0xff]
    %v440 = vld [vmem:[#allocation2 + $0x6d8] sm:$0xff]
    %v441 = vld [vmem:[#allocation2 + $0x6e0] sm:$0xff]
    %v442 = vld [vmem:[#allocation2 + $0x6e8] sm:$0xff]
    %v443 = vld [vmem:[#allocation2 + $0x6f0] sm:$0xff]
    %v444 = vld [vmem:[#allocation2 + $0x6f8] sm:$0xff]
    %v445 = vld [vmem:[#allocation2 + $0x700] sm:$0xff]
    %v446 = vld [vmem:[#allocation2 + $0x708] sm:$0xff]
    %v447 = vld [vmem:[#allocation2 + $0x710] sm:$0xff]
    %v448 = vld [vmem:[#allocation2 + $0x718] sm:$0xff]
    %v449 = vld [vmem:[#allocation2 + $0x720] sm:$0xff]
    %v450 = vld [vmem:[#allocation2 + $0x728] sm:$0xff]
    %v451 = vld [vmem:[#allocation2 + $0x730] sm:$0xff]
    %v452 = vld [vmem:[#allocation2 + $0x738] sm:$0xff]
    %v453 = vld [vmem:[#allocation2 + $0x740] sm:$0xff]
    %v454 = vld [vmem:[#allocation2 + $0x748] sm:$0xff]
    %v455 = vld [vmem:[#allocation2 + $0x750] sm:$0xff]
    %v456 = vld [vmem:[#allocation2 + $0x758] sm:$0xff]
    %v457 = vld [vmem:[#allocation2 + $0x760] sm:$0xff]
    %v458 = vld [vmem:[#allocation2 + $0x768] sm:$0xff]
    %v459 = vld [vmem:[#allocation2 + $0x770] sm:$0xff]
    %v460 = vld [vmem:[#allocation2 + $0x778] sm:$0xff]
    %v461 = vld [vmem:[#allocation2 + $0x780] sm:$0xff]
    %v462 = vld [vmem:[#allocation2 + $0x788] sm:$0xff]
    %v463 = vld [vmem:[#allocation2 + $0x790] sm:$0xff]
    %v464 = vld [vmem:[#allocation2 + $0x798] sm:$0xff]
    %v465 = vld [vmem:[#allocation2 + $0x7a0] sm:$0xff]
    %v466 = vld [vmem:[#allocation2 + $0x7a8] sm:$0xff]
    %v467 = vld [vmem:[#allocation2 + $0x7b0] sm:$0xff]
    %v468 = vld [vmem:[#allocation2 + $0x7b8] sm:$0xff]
    %v469 = vld [vmem:[#allocation2 + $0x7c0] sm:$0xff]
    %v470 = vld [vmem:[#allocation2 + $0x7c8] sm:$0xff]
    %v471 = vld [vmem:[#allocation2 + $0x7d0] sm:$0xff]
    %v472 = vld [vmem:[#allocation2 + $0x7d8] sm:$0xff]
    %v473 = vld [vmem:[#allocation2 + $0x7e0] sm:$0xff]
    %v474 = vld [vmem:[#allocation2 + $0x7e8] sm:$0xff]
    %v475 = vld [vmem:[#allocation2 + $0x7f0] sm:$0xff]
    %v476 = vld [vmem:[#allocation2 + $0x7f8] sm:$0xff]
    %v477 = vld [vmem:[#allocation2 + $0x800] sm:$0xff]
    %v478 = vld [vmem:[#allocation2 + $0x808] sm:$0xff]
    %v479 = vld [vmem:[#allocation2 + $0x810] sm:$0xff]
    %v480 = vld [vmem:[#allocation2 + $0x818] sm:$0xff]
    %v481 = vld [vmem:[#allocation2 + $0x820] sm:$0xff]
    %v482 = vld [vmem:[#allocation2 + $0x828] sm:$0xff]
    %v483 = vld [vmem:[#allocation2 + $0x830] sm:$0xff]
    %v484 = vld [vmem:[#allocation2 + $0x838] sm:$0xff]
    %v485 = vld [vmem:[#allocation2 + $0x840] sm:$0xff]
    %v486 = vld [vmem:[#allocation2 + $0x848] sm:$0xff]
    %v487 = vld [vmem:[#allocation2 + $0x850] sm:$0xff]
    %v488 = vld [vmem:[#allocation2 + $0x858] sm:$0xff]
    %v489 = vld [vmem:[#allocation2 + $0x860] sm:$0xff]
    %v490 = vld [vmem:[#allocation2 + $0x868] sm:$0xff]
    %v491 = vld [vmem:[#allocation2 + $0x870] sm:$0xff]
    %v492 = vld [vmem:[#allocation2 + $0x878] sm:$0xff]
    %v493 = vld [vmem:[#allocation2 + $0x880] sm:$0xff]
    %v494 = vld [vmem:[#allocation2 + $0x888] sm:$0xff]
    %v495 = vld [vmem:[#allocation2 + $0x890] sm:$0xff]
    %v496 = vld [vmem:[#allocation2 + $0x898] sm:$0xff]
    %v497 = vld [vmem:[#allocation2 + $0x8a0] sm:$0xff]
    %v498 = vld [vmem:[#allocation2 + $0x8a8] sm:$0xff]
    %v499 = vld [vmem:[#allocation2 + $0x8b0] sm:$0xff]
    %v500 = vld [vmem:[#allocation2 + $0x8b8] sm:$0xff]
    %v501 = vld [vmem:[#allocation2 + $0x8c0] sm:$0xff]
    %v502 = vld [vmem:[#allocation2 + $0x8c8] sm:$0xff]
    %v503 = vld [vmem:[#allocation2 + $0x8d0] sm:$0xff]
    %v504 = vld [vmem:[#allocation2 + $0x8d8] sm:$0xff]
    %v505 = vld [vmem:[#allocation2 + $0x8e0] sm:$0xff]
    %v506 = vld [vmem:[#allocation2 + $0x8e8] sm:$0xff]
    %v507 = vld [vmem:[#allocation2 + $0x8f0] sm:$0xff]
    %v508 = vld [vmem:[#allocation2 + $0x8f8] sm:$0xff]
    %v509 = vld [vmem:[#allocation2 + $0x900] sm:$0xff]
    %v510 = vld [vmem:[#allocation2 + $0x908] sm:$0xff]
    %v511 = vld [vmem:[#allocation2 + $0x910] sm:$0xff]
    %v512 = vld [vmem:[#allocation2 + $0x918] sm:$0xff]
    %v513 = vld [vmem:[#allocation2 + $0x920] sm:$0xff]
    %v514 = vld [vmem:[#allocation2 + $0x928] sm:$0xff]
    %v515 = vld [vmem:[#allocation2 + $0x930] sm:$0xff]
    %v516 = vld [vmem:[#allocation2 + $0x938] sm:$0xff]
    %v517 = vld [vmem:[#allocation2 + $0x940] sm:$0xff]
    %v518 = vld [vmem:[#allocation2 + $0x948] sm:$0xff]
    %v519 = vld [vmem:[#allocation2 + $0x950] sm:$0xff]
    %v520 = vld [vmem:[#allocation2 + $0x958] sm:$0xff]
    %v521 = vld [vmem:[#allocation2 + $0x960] sm:$0xff]
    %v522 = vld [vmem:[#allocation2 + $0x968] sm:$0xff]
    %v523 = vld [vmem:[#allocation2 + $0x970] sm:$0xff]
    %v524 = vld [vmem:[#allocation2 + $0x978] sm:$0xff]
    %v525 = vld [vmem:[#allocation2 + $0x980] sm:$0xff]
    %v526 = vld [vmem:[#allocation2 + $0x988] sm:$0xff]
    %v527 = vld [vmem:[#allocation2 + $0x990] sm:$0xff]
    %v528 = vld [vmem:[#allocation2 + $0x998] sm:$0xff]
    %v529 = vld [vmem:[#allocation2 + $0x9a0] sm:$0xff]
    %v530 = vld [vmem:[#allocation2 + $0x9a8] sm:$0xff]
    %v531 = vld [vmem:[#allocation2 + $0x9b0] sm:$0xff]
    %v532 = vld [vmem:[#allocation2 + $0x9b8] sm:$0xff]
    %v533 = vld [vmem:[#allocation2 + $0x9c0] sm:$0xff]
    %v534 = vld [vmem:[#allocation2 + $0x9c8] sm:$0xff]
    %v535 = vld [vmem:[#allocation2 + $0x9d0] sm:$0xff]
    %v536 = vld [vmem:[#allocation2 + $0x9d8] sm:$0xff]
    %v537 = vld [vmem:[#allocation2 + $0x9e0] sm:$0xff]
    %v538 = vld [vmem:[#allocation2 + $0x9e8] sm:$0xff]
    %v539 = vld [vmem:[#allocation2 + $0x9f0] sm:$0xff]
    %v540 = vld [vmem:[#allocation2 + $0x9f8] sm:$0xff]
    %v541 = vld [vmem:[#allocation2 + $0xa00] sm:$0xff]
    %v542 = vld [vmem:[#allocation2 + $0xa08] sm:$0xff]
    %v543 = vld [vmem:[#allocation2 + $0xa10] sm:$0xff]
    %v544 = vld [vmem:[#allocation2 + $0xa18] sm:$0xff]
    %v545 = vld [vmem:[#allocation2 + $0xa20] sm:$0xff]
    %v546 = vld [vmem:[#allocation2 + $0xa28] sm:$0xff]
    %v547 = vld [vmem:[#allocation2 + $0xa30] sm:$0xff]
    %v548 = vld [vmem:[#allocation2 + $0xa38] sm:$0xff]
    %v549 = vld [vmem:[#allocation2 + $0xa40] sm:$0xff]
    %v550 = vld [vmem:[#allocation2 + $0xa48] sm:$0xff]
    %v551 = vld [vmem:[#allocation2 + $0xa50] sm:$0xff]
    %v552 = vld [vmem:[#allocation2 + $0xa58] sm:$0xff]
    %v553 = vld [vmem:[#allocation2 + $0xa60] sm:$0xff]
    %v554 = vld [vmem:[#allocation2 + $0xa68] sm:$0xff]
    %v555 = vld [vmem:[#allocation2 + $0xa70] sm:$0xff]
    %v556 = vld [vmem:[#allocation2 + $0xa78] sm:$0xff]
    %v557 = vld [vmem:[#allocation2 + $0xa80] sm:$0xff]
    %v558 = vld [vmem:[#allocation2 + $0xa88] sm:$0xff]
    %v559 = vld [vmem:[#allocation2 + $0xa90] sm:$0xff]
    %v560 = vld [vmem:[#allocation2 + $0xa98] sm:$0xff]
    %v561 = vld [vmem:[#allocation2 + $0xaa0] sm:$0xff]
    %v562 = vld [vmem:[#allocation2 + $0xaa8] sm:$0xff]
    %v563 = vld [vmem:[#allocation2 + $0xab0] sm:$0xff]
    %v564 = vld [vmem:[#allocation2 + $0xab8] sm:$0xff]
    %v565 = vld [vmem:[#allocation2 + $0xac0] sm:$0xff]
    %v566 = vld [vmem:[#allocation2 + $0xac8] sm:$0xff]
    %v567 = vld [vmem:[#allocation2 + $0xad0] sm:$0xff]
    %v568 = vld [vmem:[#allocation2 + $0xad8] sm:$0xff]
    %v569 = vld [vmem:[#allocation2 + $0xae0] sm:$0xff]
    %v570 = vld [vmem:[#allocation2 + $0xae8] sm:$0xff]
    %v571 = vld [vmem:[#allocation2 + $0xaf0] sm:$0xff]
    %v572 = vld [vmem:[#allocation2 + $0xaf8] sm:$0xff]
    %v573 = vld [vmem:[#allocation2 + $0xb00] sm:$0xff]
    %v574 = vld [vmem:[#allocation2 + $0xb08] sm:$0xff]
    %v575 = vld [vmem:[#allocation2 + $0xb10] sm:$0xff]
    %v576 = vld [vmem:[#allocation2 + $0xb18] sm:$0xff]
    %v577 = vld [vmem:[#allocation2 + $0xb20] sm:$0xff]
    %v578 = vld [vmem:[#allocation2 + $0xb28] sm:$0xff]
    %v579 = vld [vmem:[#allocation2 + $0xb30] sm:$0xff]
    %v580 = vld [vmem:[#allocation2 + $0xb38] sm:$0xff]
    %v581 = vld [vmem:[#allocation2 + $0xb40] sm:$0xff]
    %v582 = vld [vmem:[#allocation2 + $0xb48] sm:$0xff]
    %v583 = vld [vmem:[#allocation2 + $0xb50] sm:$0xff]
    %v584 = vld [vmem:[#allocation2 + $0xb58] sm:$0xff]
    %v585 = vld [vmem:[#allocation2 + $0xb60] sm:$0xff]
    %v586 = vld [vmem:[#allocation2 + $0xb68] sm:$0xff]
    %v587 = vld [vmem:[#allocation2 + $0xb70] sm:$0xff]
    %v588 = vld [vmem:[#allocation2 + $0xb78] sm:$0xff]
    %v589 = vld [vmem:[#allocation2 + $0xb80] sm:$0xff]
    %v590 = vld [vmem:[#allocation2 + $0xb88] sm:$0xff]
    %v591 = vld [vmem:[#allocation2 + $0xb90] sm:$0xff]
    %v592 = vld [vmem:[#allocation2 + $0xb98] sm:$0xff]
    %v593 = vld [vmem:[#allocation2 + $0xba0] sm:$0xff]
    %v594 = vld [vmem:[#allocation2 + $0xba8] sm:$0xff]
    %v595 = vld [vmem:[#allocation2 + $0xbb0] sm:$0xff]
    %v596 = vld [vmem:[#allocation2 + $0xbb8] sm:$0xff]
    %v597 = vld [vmem:[#allocation2 + $0xbc0] sm:$0xff]
    %v598 = vld [vmem:[#allocation2 + $0xbc8] sm:$0xff]
    %v599 = vld [vmem:[#allocation2 + $0xbd0] sm:$0xff]
    %v600 = vld [vmem:[#allocation2 + $0xbd8] sm:$0xff]
    %v601 = vld [vmem:[#allocation2 + $0xbe0] sm:$0xff]
    %v602 = vld [vmem:[#allocation2 + $0xbe8] sm:$0xff]
    %v603 = vld [vmem:[#allocation2 + $0xbf0] sm:$0xff]
    %v604 = vld [vmem:[#allocation2 + $0xbf8] sm:$0xff]
    %v605 = vld [vmem:[#allocation2 + $0xc00] sm:$0xff]
    %v606 = vld [vmem:[#allocation2 + $0xc08] sm:$0xff]
    %v607 = vld [vmem:[#allocation2 + $0xc10] sm:$0xff]
    %v608 = vld [vmem:[#allocation2 + $0xc18] sm:$0xff]
    %v609 = vld [vmem:[#allocation2 + $0xc20] sm:$0xff]
    %v610 = vld [vmem:[#allocation2 + $0xc28] sm:$0xff]
    %v611 = vld [vmem:[#allocation2 + $0xc30] sm:$0xff]
    %v612 = vld [vmem:[#allocation2 + $0xc38] sm:$0xff]
    %v613 = vld [vmem:[#allocation2 + $0xc40] sm:$0xff]
    %v614 = vld [vmem:[#allocation2 + $0xc48] sm:$0xff]
    %v615 = vld [vmem:[#allocation2 + $0xc50] sm:$0xff]
    %v616 = vld [vmem:[#allocation2 + $0xc58] sm:$0xff]
    %v617 = vld [vmem:[#allocation2 + $0xc60] sm:$0xff]
    %v618 = vld [vmem:[#allocation2 + $0xc68] sm:$0xff]
    %v619 = vld [vmem:[#allocation2 + $0xc70] sm:$0xff]
    %v620 = vld [vmem:[#allocation2 + $0xc78] sm:$0xff]
    %v621 = vld [vmem:[#allocation2 + $0xc80] sm:$0xff]
    %v622 = vld [vmem:[#allocation2 + $0xc88] sm:$0xff]
    %v623 = vld [vmem:[#allocation2 + $0xc90] sm:$0xff]
    %v624 = vld [vmem:[#allocation2 + $0xc98] sm:$0xff]
    %v625 = vld [vmem:[#allocation2 + $0xca0] sm:$0xff]
    %v626 = vld [vmem:[#allocation2 + $0xca8] sm:$0xff]
    %v627 = vld [vmem:[#allocation2 + $0xcb0] sm:$0xff]
    %v628 = vld [vmem:[#allocation2 + $0xcb8] sm:$0xff]
    %v629 = vld [vmem:[#allocation2 + $0xcc0] sm:$0xff]
    %v630 = vld [vmem:[#allocation2 + $0xcc8] sm:$0xff]
    %v631 = vld [vmem:[#allocation2 + $0xcd0] sm:$0xff]
    %v632 = vld [vmem:[#allocation2 + $0xcd8] sm:$0xff]
    %v633 = vld [vmem:[#allocation2 + $0xce0] sm:$0xff]
    %v634 = vld [vmem:[#allocation2 + $0xce8] sm:$0xff]
    %v635 = vld [vmem:[#allocation2 + $0xcf0] sm:$0xff]
    %v636 = vld [vmem:[#allocation2 + $0xcf8] sm:$0xff]
    %v637 = vld [vmem:[#allocation2 + $0xd00] sm:$0xff]
    %v638 = vld [vmem:[#allocation2 + $0xd08] sm:$0xff]
    %v639 = vld [vmem:[#allocation2 + $0xd10] sm:$0xff]
    %v640 = vld [vmem:[#allocation2 + $0xd18] sm:$0xff]
    %v641 = vld [vmem:[#allocation2 + $0xd20] sm:$0xff]
    %v642 = vld [vmem:[#allocation2 + $0xd28] sm:$0xff]
    %v643 = vld [vmem:[#allocation2 + $0xd30] sm:$0xff]
    %v644 = vld [vmem:[#allocation2 + $0xd38] sm:$0xff]
    %v645 = vld [vmem:[#allocation2 + $0xd40] sm:$0xff]
    %v646 = vld [vmem:[#allocation2 + $0xd48] sm:$0xff]
    %v647 = vld [vmem:[#allocation2 + $0xd50] sm:$0xff]
    %v648 = vld [vmem:[#allocation2 + $0xd58] sm:$0xff]
    %v649 = vld [vmem:[#allocation2 + $0xd60] sm:$0xff]
    %v650 = vld [vmem:[#allocation2 + $0xd68] sm:$0xff]
    %v651 = vld [vmem:[#allocation2 + $0xd70] sm:$0xff]
    %v652 = vld [vmem:[#allocation2 + $0xd78] sm:$0xff]
    %v653 = vld [vmem:[#allocation2 + $0xd80] sm:$0xff]
    %v654 = vld [vmem:[#allocation2 + $0xd88] sm:$0xff]
    %v655 = vld [vmem:[#allocation2 + $0xd90] sm:$0xff]
    %v656 = vld [vmem:[#allocation2 + $0xd98] sm:$0xff]
    %v657 = vld [vmem:[#allocation2 + $0xda0] sm:$0xff]
    %v658 = vld [vmem:[#allocation2 + $0xda8] sm:$0xff]
    %v659 = vld [vmem:[#allocation2 + $0xdb0] sm:$0xff]
    %v660 = vld [vmem:[#allocation2 + $0xdb8] sm:$0xff]
    %v661 = vld [vmem:[#allocation2 + $0xdc0] sm:$0xff]
    %v662 = vld [vmem:[#allocation2 + $0xdc8] sm:$0xff]
    %v663 = vld [vmem:[#allocation2 + $0xdd0] sm:$0xff]
    %v664 = vld [vmem:[#allocation2 + $0xdd8] sm:$0xff]
    %v665 = vld [vmem:[#allocation2 + $0xde0] sm:$0xff]
    %v666 = vld [vmem:[#allocation2 + $0xde8] sm:$0xff]
    %v667 = vld [vmem:[#allocation2 + $0xdf0] sm:$0xff]
    %v668 = vld [vmem:[#allocation2 + $0xdf8] sm:$0xff]
    %v669 = vld [vmem:[#allocation2 + $0xe00] sm:$0xff]
    %v670 = vld [vmem:[#allocation2 + $0xe08] sm:$0xff]
    %v671 = vld [vmem:[#allocation2 + $0xe10] sm:$0xff]
    %v672 = vld [vmem:[#allocation2 + $0xe18] sm:$0xff]
    %v673 = vld [vmem:[#allocation2 + $0xe20] sm:$0xff]
    %v674 = vld [vmem:[#allocation2 + $0xe28] sm:$0xff]
    %v675 = vld [vmem:[#allocation2 + $0xe30] sm:$0xff]
    %v676 = vld [vmem:[#allocation2 + $0xe38] sm:$0xff]
    %v677 = vld [vmem:[#allocation2 + $0xe40] sm:$0xff]
    %v678 = vld [vmem:[#allocation2 + $0xe48] sm:$0xff]
    %v679 = vld [vmem:[#allocation2 + $0xe50] sm:$0xff]
    %v680 = vld [vmem:[#allocation2 + $0xe58] sm:$0xff]
    %v681 = vld [vmem:[#allocation2 + $0xe60] sm:$0xff]
    %v682 = vld [vmem:[#allocation2 + $0xe68] sm:$0xff]
    %v683 = vld [vmem:[#allocation2 + $0xe70] sm:$0xff]
    %v684 = vld [vmem:[#allocation2 + $0xe78] sm:$0xff]
    %v685 = vld [vmem:[#allocation2 + $0xe80] sm:$0xff]
    %v686 = vld [vmem:[#allocation2 + $0xe88] sm:$0xff]
    %v687 = vld [vmem:[#allocation2 + $0xe90] sm:$0xff]
    %v688 = vld [vmem:[#allocation2 + $0xe98] sm:$0xff]
    %v689 = vld [vmem:[#allocation2 + $0xea0] sm:$0xff]
    %v690 = vld [vmem:[#allocation2 + $0xea8] sm:$0xff]
    %v691 = vld [vmem:[#allocation2 + $0xeb0] sm:$0xff]
    %v692 = vld [vmem:[#allocation2 + $0xeb8] sm:$0xff]
    %v693 = vld [vmem:[#allocation2 + $0xec0] sm:$0xff]
    %v694 = vld [vmem:[#allocation2 + $0xec8] sm:$0xff]
    %v695 = vld [vmem:[#allocation2 + $0xed0] sm:$0xff]
    %v696 = vld [vmem:[#allocation2 + $0xed8] sm:$0xff]
    %v697 = vld [vmem:[#allocation2 + $0xee0] sm:$0xff]
    %v698 = vld [vmem:[#allocation2 + $0xee8] sm:$0xff]
    %v699 = vld [vmem:[#allocation2 + $0xef0] sm:$0xff]
    %v700 = vld [vmem:[#allocation2 + $0xef8] sm:$0xff]
    %v701 = vld [vmem:[#allocation2 + $0xf00] sm:$0xff]
    %v702 = vld [vmem:[#allocation2 + $0xf08] sm:$0xff]
    %v703 = vld [vmem:[#allocation2 + $0xf10] sm:$0xff]
    %v704 = vld [vmem:[#allocation2 + $0xf18] sm:$0xff]
    %v705 = vld [vmem:[#allocation2 + $0xf20] sm:$0xff]
    %v706 = vld [vmem:[#allocation2 + $0xf28] sm:$0xff]
    %v707 = vld [vmem:[#allocation2 + $0xf30] sm:$0xff]
    %v708 = vld [vmem:[#allocation2 + $0xf38] sm:$0xff]
    %v709 = vld [vmem:[#allocation2 + $0xf40] sm:$0xff]
    %v710 = vld [vmem:[#allocation2 + $0xf48] sm:$0xff]
    %v711 = vld [vmem:[#allocation2 + $0xf50] sm:$0xff]
    %v712 = vld [vmem:[#allocation2 + $0xf58] sm:$0xff]
    %v713 = vld [vmem:[#allocation2 + $0xf60] sm:$0xff]
    %v714 = vld [vmem:[#allocation2 + $0xf68] sm:$0xff]
    %v715 = vld [vmem:[#allocation2 + $0xf70] sm:$0xff]
    %v716 = vld [vmem:[#allocation2 + $0xf78] sm:$0xff]
    %v717 = vld [vmem:[#allocation2 + $0xf80] sm:$0xff]
    %v718 = vld [vmem:[#allocation2 + $0xf88] sm:$0xff]
    %v719 = vld [vmem:[#allocation2 + $0xf90] sm:$0xff]
    %v720 = vld [vmem:[#allocation2 + $0xf98] sm:$0xff]
    %v721 = vld [vmem:[#allocation2 + $0xfa0] sm:$0xff]
    %v722 = vld [vmem:[#allocation2 + $0xfa8] sm:$0xff]
    %v723 = vld [vmem:[#allocation2 + $0xfb0] sm:$0xff]
    %v724 = vld [vmem:[#allocation2 + $0xfb8] sm:$0xff]
    %v725 = vld [vmem:[#allocation2 + $0xfc0] sm:$0xff]
    %v726 = vld [vmem:[#allocation2 + $0xfc8] sm:$0xff]
    %v727 = vld [vmem:[#allocation2 + $0xfd0] sm:$0xff]
    %v728 = vld [vmem:[#allocation2 + $0xfd8] sm:$0xff]
    %v729 = vld [vmem:[#allocation2 + $0xfe0] sm:$0xff]
    %v730 = vld [vmem:[#allocation2 + $0xfe8] sm:$0xff]
    %v731 = vld [vmem:[#allocation2 + $0xff0] sm:$0xff]
    %v732 = vld [vmem:[#allocation2 + $0xff8] sm:$0xff]
    %v733 = vld [vmem:[#allocation2 + $0x1000] sm:$0xff]
    %v734 = vld [vmem:[#allocation2 + $0x1008] sm:$0xff]
    %v735 = vld [vmem:[#allocation2 + $0x1010] sm:$0xff]
    %v736 = vld [vmem:[#allocation2 + $0x1018] sm:$0xff]
    %v737 = vld [vmem:[#allocation2 + $0x1020] sm:$0xff]
    %v738 = vld [vmem:[#allocation2 + $0x1028] sm:$0xff]
    %v739 = vld [vmem:[#allocation2 + $0x1030] sm:$0xff]
    %v740 = vld [vmem:[#allocation2 + $0x1038] sm:$0xff]
    %v741 = vld [vmem:[#allocation2 + $0x1040] sm:$0xff]
    %v742 = vld [vmem:[#allocation2 + $0x1048] sm:$0xff]
    %v743 = vld [vmem:[#allocation2 + $0x1050] sm:$0xff]
    %v744 = vld [vmem:[#allocation2 + $0x1058] sm:$0xff]
    %v745 = vld [vmem:[#allocation2 + $0x1060] sm:$0xff]
    %v746 = vld [vmem:[#allocation2 + $0x1068] sm:$0xff]
    %v747 = vld [vmem:[#allocation2 + $0x1070] sm:$0xff]
    %v748 = vld [vmem:[#allocation2 + $0x1078] sm:$0xff]
    %v749 = vld [vmem:[#allocation2 + $0x1080] sm:$0xff]
    %v750 = vld [vmem:[#allocation2 + $0x1088] sm:$0xff]
    %v751 = vld [vmem:[#allocation2 + $0x1090] sm:$0xff]
    %v752 = vld [vmem:[#allocation2 + $0x1098] sm:$0xff]
    %v753 = vld [vmem:[#allocation2 + $0x10a0] sm:$0xff]
    %v754 = vld [vmem:[#allocation2 + $0x10a8] sm:$0xff]
    %v755 = vld [vmem:[#allocation2 + $0x10b0] sm:$0xff]
    %v756 = vld [vmem:[#allocation2 + $0x10b8] sm:$0xff]
    %v757 = vld [vmem:[#allocation2 + $0x10c0] sm:$0xff]
    %v758 = vld [vmem:[#allocation2 + $0x10c8] sm:$0xff]
    %v759 = vld [vmem:[#allocation2 + $0x10d0] sm:$0xff]
    %v760 = vld [vmem:[#allocation2 + $0x10d8] sm:$0xff]
    %v761 = vld [vmem:[#allocation2 + $0x10e0] sm:$0xff]
    %v762 = vld [vmem:[#allocation2 + $0x10e8] sm:$0xff]
    %v763 = vld [vmem:[#allocation2 + $0x10f0] sm:$0xff]
    %v764 = vld [vmem:[#allocation2 + $0x10f8] sm:$0xff]
    %v765 = vld [vmem:[#allocation2 + $0x1100] sm:$0xff]
    %v766 = vld [vmem:[#allocation2 + $0x1108] sm:$0xff]
    %v767 = vld [vmem:[#allocation2 + $0x1110] sm:$0xff]
    %v768 = vld [vmem:[#allocation2 + $0x1118] sm:$0xff]
    %v769 = vld [vmem:[#allocation2 + $0x1120] sm:$0xff]
    %v770 = vld [vmem:[#allocation2 + $0x1128] sm:$0xff]
    %v771 = vld [vmem:[#allocation2 + $0x1130] sm:$0xff]
    %v772 = vld [vmem:[#allocation2 + $0x1138] sm:$0xff]
    %v773 = vld [vmem:[#allocation2 + $0x1140] sm:$0xff]
    %v774 = vld [vmem:[#allocation2 + $0x1148] sm:$0xff]
    %v775 = vld [vmem:[#allocation2 + $0x1150] sm:$0xff]
    %v776 = vld [vmem:[#allocation2 + $0x1158] sm:$0xff]
    %v777 = vld [vmem:[#allocation2 + $0x1160] sm:$0xff]
    %v778 = vld [vmem:[#allocation2 + $0x1168] sm:$0xff]
    %v779 = vld [vmem:[#allocation2 + $0x1170] sm:$0xff]
    %v780 = vld [vmem:[#allocation2 + $0x1178] sm:$0xff]
    %v781 = vld [vmem:[#allocation2 + $0x1180] sm:$0xff]
    %v782 = vld [vmem:[#allocation2 + $0x1188] sm:$0xff]
    %v783 = vld [vmem:[#allocation2 + $0x1190] sm:$0xff]
    %v784 = vld [vmem:[#allocation2 + $0x1198] sm:$0xff]
    %v785 = vld [vmem:[#allocation2 + $0x11a0] sm:$0xff]
    %v786 = vld [vmem:[#allocation2 + $0x11a8] sm:$0xff]
    %v787 = vld [vmem:[#allocation2 + $0x11b0] sm:$0xff]
    %v788 = vld [vmem:[#allocation2 + $0x11b8] sm:$0xff]
    %v789 = vld [vmem:[#allocation2 + $0x11c0] sm:$0xff]
    %v790 = vld [vmem:[#allocation2 + $0x11c8] sm:$0xff]
    %v791 = vld [vmem:[#allocation2 + $0x11d0] sm:$0xff]
    %v792 = vld [vmem:[#allocation2 + $0x11d8] sm:$0xff]
    %v793 = vld [vmem:[#allocation2 + $0x11e0] sm:$0xff]
    %v794 = vld [vmem:[#allocation2 + $0x11e8] sm:$0xff]
    %v795 = vld [vmem:[#allocation2 + $0x11f0] sm:$0xff]
    %v796 = vld [vmem:[#allocation2 + $0x11f8] sm:$0xff]
    %v797 = vld [vmem:[#allocation2 + $0x1200] sm:$0xff]
    %v798 = vld [vmem:[#allocation2 + $0x1208] sm:$0xff]
    %v799 = vld [vmem:[#allocation2 + $0x1210] sm:$0xff]
    %v800 = vld [vmem:[#allocation2 + $0x1218] sm:$0xff]
    %v801 = vld [vmem:[#allocation2 + $0x1220] sm:$0xff]
    %v802 = vld [vmem:[#allocation2 + $0x1228] sm:$0xff]
    %v803 = vld [vmem:[#allocation2 + $0x1230] sm:$0xff]
    %v804 = vld [vmem:[#allocation2 + $0x1238] sm:$0xff]
    %v805 = vld [vmem:[#allocation2 + $0x1240] sm:$0xff]
    %v806 = vld [vmem:[#allocation2 + $0x1248] sm:$0xff]
    %v807 = vld [vmem:[#allocation2 + $0x1250] sm:$0xff]
    %v808 = vld [vmem:[#allocation2 + $0x1258] sm:$0xff]
    %v809 = vld [vmem:[#allocation2 + $0x1260] sm:$0xff]
    %v810 = vld [vmem:[#allocation2 + $0x1268] sm:$0xff]
    %v811 = vld [vmem:[#allocation2 + $0x1270] sm:$0xff]
    %v812 = vld [vmem:[#allocation2 + $0x1278] sm:$0xff]
    %v813 = vld [vmem:[#allocation2 + $0x1280] sm:$0xff]
    %v814 = vld [vmem:[#allocation2 + $0x1288] sm:$0xff]
    %v815 = vld [vmem:[#allocation2 + $0x1290] sm:$0xff]
    %v816 = vld [vmem:[#allocation2 + $0x1298] sm:$0xff]
    %v817 = vld [vmem:[#allocation2 + $0x12a0] sm:$0xff]
    %v818 = vld [vmem:[#allocation2 + $0x12a8] sm:$0xff]
    %v819 = vld [vmem:[#allocation2 + $0x12b0] sm:$0xff]
    %v820 = vld [vmem:[#allocation2 + $0x12b8] sm:$0xff]
    %v821 = vld [vmem:[#allocation2 + $0x12c0] sm:$0xff]
    %v822 = vld [vmem:[#allocation2 + $0x12c8] sm:$0xff]
    %v823 = vld [vmem:[#allocation2 + $0x12d0] sm:$0xff]
    %v824 = vld [vmem:[#allocation2 + $0x12d8] sm:$0xff]
    %v825 = vld [vmem:[#allocation2 + $0x12e0] sm:$0xff]
    %v826 = vld [vmem:[#allocation2 + $0x12e8] sm:$0xff]
    %v827 = vld [vmem:[#allocation2 + $0x12f0] sm:$0xff]
    %v828 = vld [vmem:[#allocation2 + $0x12f8] sm:$0xff]
    %v829 = vld [vmem:[#allocation2 + $0x1300] sm:$0xff]
    %v830 = vld [vmem:[#allocation2 + $0x1308] sm:$0xff]
    %v831 = vld [vmem:[#allocation2 + $0x1310] sm:$0xff]
    %v832 = vld [vmem:[#allocation2 + $0x1318] sm:$0xff]
    %v833 = vld [vmem:[#allocation2 + $0x1320] sm:$0xff]
    %v834 = vld [vmem:[#allocation2 + $0x1328] sm:$0xff]
    %v835 = vld [vmem:[#allocation2 + $0x1330] sm:$0xff]
    %v836 = vld [vmem:[#allocation2 + $0x1338] sm:$0xff]
    %v837 = vld [vmem:[#allocation2 + $0x1340] sm:$0xff]
    %v838 = vld [vmem:[#allocation2 + $0x1348] sm:$0xff]
    %v839 = vld [vmem:[#allocation2 + $0x1350] sm:$0xff]
    %v840 = vld [vmem:[#allocation2 + $0x1358] sm:$0xff]
    %v841 = vld [vmem:[#allocation2 + $0x1360] sm:$0xff]
    %v842 = vld [vmem:[#allocation2 + $0x1368] sm:$0xff]
    %v843 = vld [vmem:[#allocation2 + $0x1370] sm:$0xff]
    %v844 = vld [vmem:[#allocation2 + $0x1378] sm:$0xff]
    %v845 = vld [vmem:[#allocation2 + $0x1380] sm:$0xff]
    %v846 = vld [vmem:[#allocation2 + $0x1388] sm:$0xff]
    %v847 = vld [vmem:[#allocation2 + $0x1390] sm:$0xff]
    %v848 = vld [vmem:[#allocation2 + $0x1398] sm:$0xff]
    %v849 = vld [vmem:[#allocation2 + $0x13a0] sm:$0xff]
    %v850 = vld [vmem:[#allocation2 + $0x13a8] sm:$0xff]
    %v851 = vld [vmem:[#allocation2 + $0x13b0] sm:$0xff]
    %v852 = vld [vmem:[#allocation2 + $0x13b8] sm:$0xff]
    %v853 = vld [vmem:[#allocation2 + $0x13c0] sm:$0xff]
    %v854 = vld [vmem:[#allocation2 + $0x13c8] sm:$0xff]
    %v855 = vld [vmem:[#allocation2 + $0x13d0] sm:$0xff]
    %v856 = vld [vmem:[#allocation2 + $0x13d8] sm:$0xff]
    %v857 = vld [vmem:[#allocation2 + $0x13e0] sm:$0xff]
    %v858 = vld [vmem:[#allocation2 + $0x13e8] sm:$0xff]
    %v859 = vld [vmem:[#allocation2 + $0x13f0] sm:$0xff]
    %v860 = vld [vmem:[#allocation2 + $0x13f8] sm:$0xff]
    %v861 = vld [vmem:[#allocation2 + $0x1400] sm:$0xff]
    %v862 = vld [vmem:[#allocation2 + $0x1408] sm:$0xff]
    %v863 = vld [vmem:[#allocation2 + $0x1410] sm:$0xff]
    %v864 = vld [vmem:[#allocation2 + $0x1418] sm:$0xff]
    %v865 = vld [vmem:[#allocation2 + $0x1420] sm:$0xff]
    %v866 = vld [vmem:[#allocation2 + $0x1428] sm:$0xff]
    %v867 = vld [vmem:[#allocation2 + $0x1430] sm:$0xff]
    %v868 = vld [vmem:[#allocation2 + $0x1438] sm:$0xff]
    %v869 = vld [vmem:[#allocation2 + $0x1440] sm:$0xff]
    %v870 = vld [vmem:[#allocation2 + $0x1448] sm:$0xff]
    %v871 = vld [vmem:[#allocation2 + $0x1450] sm:$0xff]
    %v872 = vld [vmem:[#allocation2 + $0x1458] sm:$0xff]
    %v873 = vld [vmem:[#allocation2 + $0x1460] sm:$0xff]
    %v874 = vld [vmem:[#allocation2 + $0x1468] sm:$0xff]
    %v875 = vld [vmem:[#allocation2 + $0x1470] sm:$0xff]
    %v876 = vld [vmem:[#allocation2 + $0x1478] sm:$0xff]
    %v877 = vld [vmem:[#allocation2 + $0x1480] sm:$0xff]
    %v878 = vld [vmem:[#allocation2 + $0x1488] sm:$0xff]
    %v879 = vld [vmem:[#allocation2 + $0x1490] sm:$0xff]
    %v880 = vld [vmem:[#allocation2 + $0x1498] sm:$0xff]
    %v881 = vld [vmem:[#allocation2 + $0x14a0] sm:$0xff]
    %v882 = vld [vmem:[#allocation2 + $0x14a8] sm:$0xff]
    %v883 = vld [vmem:[#allocation2 + $0x14b0] sm:$0xff]
    %v884 = vld [vmem:[#allocation2 + $0x14b8] sm:$0xff]
    %v885 = vld [vmem:[#allocation2 + $0x14c0] sm:$0xff]
    %v886 = vld [vmem:[#allocation2 + $0x14c8] sm:$0xff]
    %v887 = vld [vmem:[#allocation2 + $0x14d0] sm:$0xff]
    %v888 = vld [vmem:[#allocation2 + $0x14d8] sm:$0xff]
    %v889 = vld [vmem:[#allocation2 + $0x14e0] sm:$0xff]
    %v890 = vld [vmem:[#allocation2 + $0x14e8] sm:$0xff]
    %v891 = vld [vmem:[#allocation2 + $0x14f0] sm:$0xff]
    %v892 = vld [vmem:[#allocation2 + $0x14f8] sm:$0xff]
    %v893 = vld [vmem:[#allocation2 + $0x1500] sm:$0xff]
    %v894 = vld [vmem:[#allocation2 + $0x1508] sm:$0xff]
    %v895 = vld [vmem:[#allocation2 + $0x1510] sm:$0xff]
    %v896 = vld [vmem:[#allocation2 + $0x1518] sm:$0xff]
    %v897 = vld [vmem:[#allocation2 + $0x1520] sm:$0xff]
    %v898 = vld [vmem:[#allocation2 + $0x1528] sm:$0xff]
    %v899 = vld [vmem:[#allocation2 + $0x1530] sm:$0xff]
    %v900 = vld [vmem:[#allocation2 + $0x1538] sm:$0xff]
    %v901 = vld [vmem:[#allocation2 + $0x1540] sm:$0xff]
    %v902 = vld [vmem:[#allocation2 + $0x1548] sm:$0xff]
    %v903 = vld [vmem:[#allocation2 + $0x1550] sm:$0xff]
    %v904 = vld [vmem:[#allocation2 + $0x1558] sm:$0xff]
    %v905 = vld [vmem:[#allocation2 + $0x1560] sm:$0xff]
    %v906 = vld [vmem:[#allocation2 + $0x1568] sm:$0xff]
    %v907 = vld [vmem:[#allocation2 + $0x1570] sm:$0xff]
    %v908 = vld [vmem:[#allocation2 + $0x1578] sm:$0xff]
    %v909 = vld [vmem:[#allocation2 + $0x1580] sm:$0xff]
    %v910 = vld [vmem:[#allocation2 + $0x1588] sm:$0xff]
    %v911 = vld [vmem:[#allocation2 + $0x1590] sm:$0xff]
    %v912 = vld [vmem:[#allocation2 + $0x1598] sm:$0xff]
    %v913 = vld [vmem:[#allocation2 + $0x15a0] sm:$0xff]
    %v914 = vld [vmem:[#allocation2 + $0x15a8] sm:$0xff]
    %v915 = vld [vmem:[#allocation2 + $0x15b0] sm:$0xff]
    %v916 = vld [vmem:[#allocation2 + $0x15b8] sm:$0xff]
    %v917 = vld [vmem:[#allocation2 + $0x15c0] sm:$0xff]
    %v918 = vld [vmem:[#allocation2 + $0x15c8] sm:$0xff]
    %v919 = vld [vmem:[#allocation2 + $0x15d0] sm:$0xff]
    %v920 = vld [vmem:[#allocation2 + $0x15d8] sm:$0xff]
    %v921 = vld [vmem:[#allocation2 + $0x15e0] sm:$0xff]
    %v922 = vld [vmem:[#allocation2 + $0x15e8] sm:$0xff]
    %v923 = vld [vmem:[#allocation2 + $0x15f0] sm:$0xff]
    %v924 = vld [vmem:[#allocation2 + $0x15f8] sm:$0xff]
    %v925 = vld [vmem:[#allocation2 + $0x1600] sm:$0xff]
    %v926 = vld [vmem:[#allocation2 + $0x1608] sm:$0xff]
    %v927 = vld [vmem:[#allocation2 + $0x1610] sm:$0xff]
    %v928 = vld [vmem:[#allocation2 + $0x1618] sm:$0xff]
    %v929 = vld [vmem:[#allocation2 + $0x1620] sm:$0xff]
    %v930 = vld [vmem:[#allocation2 + $0x1628] sm:$0xff]
    %v931 = vld [vmem:[#allocation2 + $0x1630] sm:$0xff]
    %v932 = vld [vmem:[#allocation2 + $0x1638] sm:$0xff]
    %v933 = vld [vmem:[#allocation2 + $0x1640] sm:$0xff]
    %v934 = vld [vmem:[#allocation2 + $0x1648] sm:$0xff]
    %v935 = vld [vmem:[#allocation2 + $0x1650] sm:$0xff]
    %v936 = vld [vmem:[#allocation2 + $0x1658] sm:$0xff]
    %v937 = vld [vmem:[#allocation2 + $0x1660] sm:$0xff]
    %v938 = vld [vmem:[#allocation2 + $0x1668] sm:$0xff]
    %v939 = vld [vmem:[#allocation2 + $0x1670] sm:$0xff]
    %v940 = vld [vmem:[#allocation2 + $0x1678] sm:$0xff]
    %v941 = vld [vmem:[#allocation2 + $0x1680] sm:$0xff]
    %v942 = vld [vmem:[#allocation2 + $0x1688] sm:$0xff]
    %v943 = vld [vmem:[#allocation2 + $0x1690] sm:$0xff]
    %v944 = vld [vmem:[#allocation2 + $0x1698] sm:$0xff]
    %v945 = vld [vmem:[#allocation2 + $0x16a0] sm:$0xff]
    %v946 = vld [vmem:[#allocation2 + $0x16a8] sm:$0xff]
    %v947 = vld [vmem:[#allocation2 + $0x16b0] sm:$0xff]
    %v948 = vld [vmem:[#allocation2 + $0x16b8] sm:$0xff]
    %v949 = vld [vmem:[#allocation2 + $0x16c0] sm:$0xff]
    %v950 = vld [vmem:[#allocation2 + $0x16c8] sm:$0xff]
    %v951 = vld [vmem:[#allocation2 + $0x16d0] sm:$0xff]
    %v952 = vld [vmem:[#allocation2 + $0x16d8] sm:$0xff]
    %v953 = vld [vmem:[#allocation2 + $0x16e0] sm:$0xff]
    %v954 = vld [vmem:[#allocation2 + $0x16e8] sm:$0xff]
    %v955 = vld [vmem:[#allocation2 + $0x16f0] sm:$0xff]
    %v956 = vld [vmem:[#allocation2 + $0x16f8] sm:$0xff]
    %v957 = vld [vmem:[#allocation2 + $0x1700] sm:$0xff]
    %v958 = vld [vmem:[#allocation2 + $0x1708] sm:$0xff]
    %v959 = vld [vmem:[#allocation2 + $0x1710] sm:$0xff]
    %v960 = vld [vmem:[#allocation2 + $0x1718] sm:$0xff]
    %v961 = vld [vmem:[#allocation2 + $0x1720] sm:$0xff]
    %v962 = vld [vmem:[#allocation2 + $0x1728] sm:$0xff]
    %v963 = vld [vmem:[#allocation2 + $0x1730] sm:$0xff]
    %v964 = vld [vmem:[#allocation2 + $0x1738] sm:$0xff]
    %v965 = vld [vmem:[#allocation2 + $0x1740] sm:$0xff]
    %v966 = vld [vmem:[#allocation2 + $0x1748] sm:$0xff]
    %v967 = vld [vmem:[#allocation2 + $0x1750] sm:$0xff]
    %v968 = vld [vmem:[#allocation2 + $0x1758] sm:$0xff]
    %v969 = vld [vmem:[#allocation2 + $0x1760] sm:$0xff]
    %v970 = vld [vmem:[#allocation2 + $0x1768] sm:$0xff]
    %v971 = vld [vmem:[#allocation2 + $0x1770] sm:$0xff]
    %v972 = vld [vmem:[#allocation2 + $0x1778] sm:$0xff]
    %v973 = vld [vmem:[#allocation2 + $0x1780] sm:$0xff]
    %v974 = vld [vmem:[#allocation2 + $0x1788] sm:$0xff]
    %v975 = vld [vmem:[#allocation2 + $0x1790] sm:$0xff]
    %v976 = vld [vmem:[#allocation2 + $0x1798] sm:$0xff]
    %v977 = vld [vmem:[#allocation2 + $0x17a0] sm:$0xff]
    %v978 = vld [vmem:[#allocation2 + $0x17a8] sm:$0xff]
    %v979 = vld [vmem:[#allocation2 + $0x17b0] sm:$0xff]
    %v980 = vld [vmem:[#allocation2 + $0x17b8] sm:$0xff]
    %v981 = vld [vmem:[#allocation2 + $0x17c0] sm:$0xff]
    %v982 = vld [vmem:[#allocation2 + $0x17c8] sm:$0xff]
    %v983 = vld [vmem:[#allocation2 + $0x17d0] sm:$0xff]
    %v984 = vld [vmem:[#allocation2 + $0x17d8] sm:$0xff]
    %v985 = vld [vmem:[#allocation2 + $0x17e0] sm:$0xff]
    %v986 = vld [vmem:[#allocation2 + $0x17e8] sm:$0xff]
    %v987 = vld [vmem:[#allocation2 + $0x17f0] sm:$0xff]
    %v988 = vld [vmem:[#allocation2 + $0x17f8] sm:$0xff]
    %v989 = vld [vmem:[#allocation4] sm:$0xf]
    %v991 = vperm.slane %v989, 0
    %v992 = vperm.slane %v989, 1
    %v993 = vperm.slane %v989, 2
    %v994 = vperm.slane %v989, 3
    %v1767 = vunpack.c.l.b16 %v221
    %v1768 = vunpack.c.h.b16 %v221
    %v1769 = vunpack.c.l.b16 %v222
    %v1770 = vunpack.c.h.b16 %v222
    %v1771 = vunpack.c.l.b16 %v223
    %v1772 = vunpack.c.h.b16 %v223
    %v1773 = vunpack.c.l.b16 %v224
    %v1774 = vunpack.c.h.b16 %v224
    %v1775 = vunpack.c.l.b16 %v225
    %v1776 = vunpack.c.h.b16 %v225
    %v1777 = vunpack.c.l.b16 %v226
    %v1778 = vunpack.c.h.b16 %v226
    %v1779 = vunpack.c.l.b16 %v227
    %v1780 = vunpack.c.h.b16 %v227
    %v1781 = vunpack.c.l.b16 %v228
    %v1782 = vunpack.c.h.b16 %v228
    %v1783 = vunpack.c.l.b16 %v229
    %v1784 = vunpack.c.h.b16 %v229
    %v1785 = vunpack.c.l.b16 %v230
    %v1786 = vunpack.c.h.b16 %v230
    %v1787 = vunpack.c.l.b16 %v231
    %v1788 = vunpack.c.h.b16 %v231
    %v1789 = vunpack.c.l.b16 %v232
    %v1790 = vunpack.c.h.b16 %v232
    %v1791 = vunpack.c.l.b16 %v233
    %v1792 = vunpack.c.h.b16 %v233
    %v1793 = vunpack.c.l.b16 %v234
    %v1794 = vunpack.c.h.b16 %v234
    %v1795 = vunpack.c.l.b16 %v235
    %v1796 = vunpack.c.h.b16 %v235
    %v1797 = vunpack.c.l.b16 %v236
    %v1798 = vunpack.c.h.b16 %v236
    %v1799 = vunpack.c.l.b16 %v237
    %v1800 = vunpack.c.h.b16 %v237
    %v1801 = vunpack.c.l.b16 %v238
    %v1802 = vunpack.c.h.b16 %v238
    %v1803 = vunpack.c.l.b16 %v239
    %v1804 = vunpack.c.h.b16 %v239
    %v1805 = vunpack.c.l.b16 %v240
    %v1806 = vunpack.c.h.b16 %v240
    %v1807 = vunpack.c.l.b16 %v241
    %v1808 = vunpack.c.h.b16 %v241
    %v1809 = vunpack.c.l.b16 %v242
    %v1810 = vunpack.c.h.b16 %v242
    %v1811 = vunpack.c.l.b16 %v243
    %v1812 = vunpack.c.h.b16 %v243
    %v1813 = vunpack.c.l.b16 %v244
    %v1814 = vunpack.c.h.b16 %v244
    %v1815 = vunpack.c.l.b16 %v245
    %v1816 = vunpack.c.h.b16 %v245
    %v1817 = vunpack.c.l.b16 %v246
    %v1818 = vunpack.c.h.b16 %v246
    %v1819 = vunpack.c.l.b16 %v247
    %v1820 = vunpack.c.h.b16 %v247
    %v1821 = vunpack.c.l.b16 %v248
    %v1822 = vunpack.c.h.b16 %v248
    %v1823 = vunpack.c.l.b16 %v249
    %v1824 = vunpack.c.h.b16 %v249
    %v1825 = vunpack.c.l.b16 %v250
    %v1826 = vunpack.c.h.b16 %v250
    %v1827 = vunpack.c.l.b16 %v251
    %v1828 = vunpack.c.h.b16 %v251
    %v1829 = vunpack.c.l.b16 %v252
    %v1830 = vunpack.c.h.b16 %v252
    %v1831 = vunpack.c.l.b16 %v253
    %v1832 = vunpack.c.h.b16 %v253
    %v1833 = vunpack.c.l.b16 %v254
    %v1834 = vunpack.c.h.b16 %v254
    %v1835 = vunpack.c.l.b16 %v255
    %v1836 = vunpack.c.h.b16 %v255
    %v1837 = vunpack.c.l.b16 %v256
    %v1838 = vunpack.c.h.b16 %v256
    %v1839 = vunpack.c.l.b16 %v257
    %v1840 = vunpack.c.h.b16 %v257
    %v1841 = vunpack.c.l.b16 %v258
    %v1842 = vunpack.c.h.b16 %v258
    %v1843 = vunpack.c.l.b16 %v259
    %v1844 = vunpack.c.h.b16 %v259
    %v1845 = vunpack.c.l.b16 %v260
    %v1846 = vunpack.c.h.b16 %v260
    %v1847 = vunpack.c.l.b16 %v261
    %v1848 = vunpack.c.h.b16 %v261
    %v1849 = vunpack.c.l.b16 %v262
    %v1850 = vunpack.c.h.b16 %v262
    %v1851 = vunpack.c.l.b16 %v263
    %v1852 = vunpack.c.h.b16 %v263
    %v1853 = vunpack.c.l.b16 %v264
    %v1854 = vunpack.c.h.b16 %v264
    %v1855 = vunpack.c.l.b16 %v265
    %v1856 = vunpack.c.h.b16 %v265
    %v1857 = vunpack.c.l.b16 %v266
    %v1858 = vunpack.c.h.b16 %v266
    %v1859 = vunpack.c.l.b16 %v267
    %v1860 = vunpack.c.h.b16 %v267
    %v1861 = vunpack.c.l.b16 %v268
    %v1862 = vunpack.c.h.b16 %v268
    %v1863 = vunpack.c.l.b16 %v269
    %v1864 = vunpack.c.h.b16 %v269
    %v1865 = vunpack.c.l.b16 %v270
    %v1866 = vunpack.c.h.b16 %v270
    %v1867 = vunpack.c.l.b16 %v271
    %v1868 = vunpack.c.h.b16 %v271
    %v1869 = vunpack.c.l.b16 %v272
    %v1870 = vunpack.c.h.b16 %v272
    %v1871 = vunpack.c.l.b16 %v273
    %v1872 = vunpack.c.h.b16 %v273
    %v1873 = vunpack.c.l.b16 %v274
    %v1874 = vunpack.c.h.b16 %v274
    %v1875 = vunpack.c.l.b16 %v275
    %v1876 = vunpack.c.h.b16 %v275
    %v1877 = vunpack.c.l.b16 %v276
    %v1878 = vunpack.c.h.b16 %v276
    %v1879 = vunpack.c.l.b16 %v277
    %v1880 = vunpack.c.h.b16 %v277
    %v1881 = vunpack.c.l.b16 %v278
    %v1882 = vunpack.c.h.b16 %v278
    %v1883 = vunpack.c.l.b16 %v279
    %v1884 = vunpack.c.h.b16 %v279
    %v1885 = vunpack.c.l.b16 %v280
    %v1886 = vunpack.c.h.b16 %v280
    %v1887 = vunpack.c.l.b16 %v281
    %v1888 = vunpack.c.h.b16 %v281
    %v1889 = vunpack.c.l.b16 %v282
    %v1890 = vunpack.c.h.b16 %v282
    %v1891 = vunpack.c.l.b16 %v283
    %v1892 = vunpack.c.h.b16 %v283
    %v1893 = vunpack.c.l.b16 %v284
    %v1894 = vunpack.c.h.b16 %v284
    %v1895 = vunpack.c.l.b16 %v285
    %v1896 = vunpack.c.h.b16 %v285
    %v1897 = vunpack.c.l.b16 %v286
    %v1898 = vunpack.c.h.b16 %v286
    %v1899 = vunpack.c.l.b16 %v287
    %v1900 = vunpack.c.h.b16 %v287
    %v1901 = vunpack.c.l.b16 %v288
    %v1902 = vunpack.c.h.b16 %v288
    %v1903 = vunpack.c.l.b16 %v289
    %v1904 = vunpack.c.h.b16 %v289
    %v1905 = vunpack.c.l.b16 %v290
    %v1906 = vunpack.c.h.b16 %v290
    %v1907 = vunpack.c.l.b16 %v291
    %v1908 = vunpack.c.h.b16 %v291
    %v1909 = vunpack.c.l.b16 %v292
    %v1910 = vunpack.c.h.b16 %v292
    %v1911 = vunpack.c.l.b16 %v293
    %v1912 = vunpack.c.h.b16 %v293
    %v1913 = vunpack.c.l.b16 %v294
    %v1914 = vunpack.c.h.b16 %v294
    %v1915 = vunpack.c.l.b16 %v295
    %v1916 = vunpack.c.h.b16 %v295
    %v1917 = vunpack.c.l.b16 %v296
    %v1918 = vunpack.c.h.b16 %v296
    %v1919 = vunpack.c.l.b16 %v297
    %v1920 = vunpack.c.h.b16 %v297
    %v1921 = vunpack.c.l.b16 %v298
    %v1922 = vunpack.c.h.b16 %v298
    %v1923 = vunpack.c.l.b16 %v299
    %v1924 = vunpack.c.h.b16 %v299
    %v1925 = vunpack.c.l.b16 %v300
    %v1926 = vunpack.c.h.b16 %v300
    %v1927 = vunpack.c.l.b16 %v301
    %v1928 = vunpack.c.h.b16 %v301
    %v1929 = vunpack.c.l.b16 %v302
    %v1930 = vunpack.c.h.b16 %v302
    %v1931 = vunpack.c.l.b16 %v303
    %v1932 = vunpack.c.h.b16 %v303
    %v1933 = vunpack.c.l.b16 %v304
    %v1934 = vunpack.c.h.b16 %v304
    %v1935 = vunpack.c.l.b16 %v305
    %v1936 = vunpack.c.h.b16 %v305
    %v1937 = vunpack.c.l.b16 %v306
    %v1938 = vunpack.c.h.b16 %v306
    %v1939 = vunpack.c.l.b16 %v307
    %v1940 = vunpack.c.h.b16 %v307
    %v1941 = vunpack.c.l.b16 %v308
    %v1942 = vunpack.c.h.b16 %v308
    %v1943 = vunpack.c.l.b16 %v309
    %v1944 = vunpack.c.h.b16 %v309
    %v1945 = vunpack.c.l.b16 %v310
    %v1946 = vunpack.c.h.b16 %v310
    %v1947 = vunpack.c.l.b16 %v311
    %v1948 = vunpack.c.h.b16 %v311
    %v1949 = vunpack.c.l.b16 %v312
    %v1950 = vunpack.c.h.b16 %v312
    %v1951 = vunpack.c.l.b16 %v313
    %v1952 = vunpack.c.h.b16 %v313
    %v1953 = vunpack.c.l.b16 %v314
    %v1954 = vunpack.c.h.b16 %v314
    %v1955 = vunpack.c.l.b16 %v315
    %v1956 = vunpack.c.h.b16 %v315
    %v1957 = vunpack.c.l.b16 %v316
    %v1958 = vunpack.c.h.b16 %v316
    %v1959 = vunpack.c.l.b16 %v317
    %v1960 = vunpack.c.h.b16 %v317
    %v1961 = vunpack.c.l.b16 %v318
    %v1962 = vunpack.c.h.b16 %v318
    %v1963 = vunpack.c.l.b16 %v319
    %v1964 = vunpack.c.h.b16 %v319
    %v1965 = vunpack.c.l.b16 %v320
    %v1966 = vunpack.c.h.b16 %v320
    %v1967 = vunpack.c.l.b16 %v321
    %v1968 = vunpack.c.h.b16 %v321
    %v1969 = vunpack.c.l.b16 %v322
    %v1970 = vunpack.c.h.b16 %v322
    %v1971 = vunpack.c.l.b16 %v323
    %v1972 = vunpack.c.h.b16 %v323
    %v1973 = vunpack.c.l.b16 %v324
    %v1974 = vunpack.c.h.b16 %v324
    %v1975 = vunpack.c.l.b16 %v325
    %v1976 = vunpack.c.h.b16 %v325
    %v1977 = vunpack.c.l.b16 %v326
    %v1978 = vunpack.c.h.b16 %v326
    %v1979 = vunpack.c.l.b16 %v327
    %v1980 = vunpack.c.h.b16 %v327
    %v1981 = vunpack.c.l.b16 %v328
    %v1982 = vunpack.c.h.b16 %v328
    %v1983 = vunpack.c.l.b16 %v329
    %v1984 = vunpack.c.h.b16 %v329
    %v1985 = vunpack.c.l.b16 %v330
    %v1986 = vunpack.c.h.b16 %v330
    %v1987 = vunpack.c.l.b16 %v331
    %v1988 = vunpack.c.h.b16 %v331
    %v1989 = vunpack.c.l.b16 %v332
    %v1990 = vunpack.c.h.b16 %v332
    %v1991 = vunpack.c.l.b16 %v333
    %v1992 = vunpack.c.h.b16 %v333
    %v1993 = vunpack.c.l.b16 %v334
    %v1994 = vunpack.c.h.b16 %v334
    %v1995 = vunpack.c.l.b16 %v335
    %v1996 = vunpack.c.h.b16 %v335
    %v1997 = vunpack.c.l.b16 %v336
    %v1998 = vunpack.c.h.b16 %v336
    %v1999 = vunpack.c.l.b16 %v337
    %v2000 = vunpack.c.h.b16 %v337
    %v2001 = vunpack.c.l.b16 %v338
    %v2002 = vunpack.c.h.b16 %v338
    %v2003 = vunpack.c.l.b16 %v339
    %v2004 = vunpack.c.h.b16 %v339
    %v2005 = vunpack.c.l.b16 %v340
    %v2006 = vunpack.c.h.b16 %v340
    %v2007 = vunpack.c.l.b16 %v341
    %v2008 = vunpack.c.h.b16 %v341
    %v2009 = vunpack.c.l.b16 %v342
    %v2010 = vunpack.c.h.b16 %v342
    %v2011 = vunpack.c.l.b16 %v343
    %v2012 = vunpack.c.h.b16 %v343
    %v2013 = vunpack.c.l.b16 %v344
    %v2014 = vunpack.c.h.b16 %v344
    %v2015 = vunpack.c.l.b16 %v345
    %v2016 = vunpack.c.h.b16 %v345
    %v2017 = vunpack.c.l.b16 %v346
    %v2018 = vunpack.c.h.b16 %v346
    %v2019 = vunpack.c.l.b16 %v347
    %v2020 = vunpack.c.h.b16 %v347
    %v2021 = vunpack.c.l.b16 %v348
    %v2022 = vunpack.c.h.b16 %v348
    %v2023 = vunpack.c.l.b16 %v349
    %v2024 = vunpack.c.h.b16 %v349
    %v2025 = vunpack.c.l.b16 %v350
    %v2026 = vunpack.c.h.b16 %v350
    %v2027 = vunpack.c.l.b16 %v351
    %v2028 = vunpack.c.h.b16 %v351
    %v2029 = vunpack.c.l.b16 %v352
    %v2030 = vunpack.c.h.b16 %v352
    %v2031 = vunpack.c.l.b16 %v353
    %v2032 = vunpack.c.h.b16 %v353
    %v2033 = vunpack.c.l.b16 %v354
    %v2034 = vunpack.c.h.b16 %v354
    %v2035 = vunpack.c.l.b16 %v355
    %v2036 = vunpack.c.h.b16 %v355
    %v2037 = vunpack.c.l.b16 %v356
    %v2038 = vunpack.c.h.b16 %v356
    %v2039 = vunpack.c.l.b16 %v357
    %v2040 = vunpack.c.h.b16 %v357
    %v2041 = vunpack.c.l.b16 %v358
    %v2042 = vunpack.c.h.b16 %v358
    %v2043 = vunpack.c.l.b16 %v359
    %v2044 = vunpack.c.h.b16 %v359
    %v2045 = vunpack.c.l.b16 %v360
    %v2046 = vunpack.c.h.b16 %v360
    %v2047 = vunpack.c.l.b16 %v361
    %v2048 = vunpack.c.h.b16 %v361
    %v2049 = vunpack.c.l.b16 %v362
    %v2050 = vunpack.c.h.b16 %v362
    %v2051 = vunpack.c.l.b16 %v363
    %v2052 = vunpack.c.h.b16 %v363
    %v2053 = vunpack.c.l.b16 %v364
    %v2054 = vunpack.c.h.b16 %v364
    %v2055 = vunpack.c.l.b16 %v365
    %v2056 = vunpack.c.h.b16 %v365
    %v2057 = vunpack.c.l.b16 %v366
    %v2058 = vunpack.c.h.b16 %v366
    %v2059 = vunpack.c.l.b16 %v367
    %v2060 = vunpack.c.h.b16 %v367
    %v2061 = vunpack.c.l.b16 %v368
    %v2062 = vunpack.c.h.b16 %v368
    %v2063 = vunpack.c.l.b16 %v369
    %v2064 = vunpack.c.h.b16 %v369
    %v2065 = vunpack.c.l.b16 %v370
    %v2066 = vunpack.c.h.b16 %v370
    %v2067 = vunpack.c.l.b16 %v371
    %v2068 = vunpack.c.h.b16 %v371
    %v2069 = vunpack.c.l.b16 %v372
    %v2070 = vunpack.c.h.b16 %v372
    %v2071 = vunpack.c.l.b16 %v373
    %v2072 = vunpack.c.h.b16 %v373
    %v2073 = vunpack.c.l.b16 %v374
    %v2074 = vunpack.c.h.b16 %v374
    %v2075 = vunpack.c.l.b16 %v375
    %v2076 = vunpack.c.h.b16 %v375
    %v2077 = vunpack.c.l.b16 %v376
    %v2078 = vunpack.c.h.b16 %v376
    %v2079 = vunpack.c.l.b16 %v377
    %v2080 = vunpack.c.h.b16 %v377
    %v2081 = vunpack.c.l.b16 %v378
    %v2082 = vunpack.c.h.b16 %v378
    %v2083 = vunpack.c.l.b16 %v379
    %v2084 = vunpack.c.h.b16 %v379
    %v2085 = vunpack.c.l.b16 %v380
    %v2086 = vunpack.c.h.b16 %v380
    %v2087 = vunpack.c.l.b16 %v381
    %v2088 = vunpack.c.h.b16 %v381
    %v2089 = vunpack.c.l.b16 %v382
    %v2090 = vunpack.c.h.b16 %v382
    %v2091 = vunpack.c.l.b16 %v383
    %v2092 = vunpack.c.h.b16 %v383
    %v2093 = vunpack.c.l.b16 %v384
    %v2094 = vunpack.c.h.b16 %v384
    %v2095 = vunpack.c.l.b16 %v385
    %v2096 = vunpack.c.h.b16 %v385
    %v2097 = vunpack.c.l.b16 %v386
    %v2098 = vunpack.c.h.b16 %v386
    %v2099 = vunpack.c.l.b16 %v387
    %v2100 = vunpack.c.h.b16 %v387
    %v2101 = vunpack.c.l.b16 %v388
    %v2102 = vunpack.c.h.b16 %v388
    %v2103 = vunpack.c.l.b16 %v389
    %v2104 = vunpack.c.h.b16 %v389
    %v2105 = vunpack.c.l.b16 %v390
    %v2106 = vunpack.c.h.b16 %v390
    %v2107 = vunpack.c.l.b16 %v391
    %v2108 = vunpack.c.h.b16 %v391
    %v2109 = vunpack.c.l.b16 %v392
    %v2110 = vunpack.c.h.b16 %v392
    %v2111 = vunpack.c.l.b16 %v393
    %v2112 = vunpack.c.h.b16 %v393
    %v2113 = vunpack.c.l.b16 %v394
    %v2114 = vunpack.c.h.b16 %v394
    %v2115 = vunpack.c.l.b16 %v395
    %v2116 = vunpack.c.h.b16 %v395
    %v2117 = vunpack.c.l.b16 %v396
    %v2118 = vunpack.c.h.b16 %v396
    %v2119 = vunpack.c.l.b16 %v397
    %v2120 = vunpack.c.h.b16 %v397
    %v2121 = vunpack.c.l.b16 %v398
    %v2122 = vunpack.c.h.b16 %v398
    %v2123 = vunpack.c.l.b16 %v399
    %v2124 = vunpack.c.h.b16 %v399
    %v2125 = vunpack.c.l.b16 %v400
    %v2126 = vunpack.c.h.b16 %v400
    %v2127 = vunpack.c.l.b16 %v401
    %v2128 = vunpack.c.h.b16 %v401
    %v2129 = vunpack.c.l.b16 %v402
    %v2130 = vunpack.c.h.b16 %v402
    %v2131 = vunpack.c.l.b16 %v403
    %v2132 = vunpack.c.h.b16 %v403
    %v2133 = vunpack.c.l.b16 %v404
    %v2134 = vunpack.c.h.b16 %v404
    %v2135 = vunpack.c.l.b16 %v405
    %v2136 = vunpack.c.h.b16 %v405
    %v2137 = vunpack.c.l.b16 %v406
    %v2138 = vunpack.c.h.b16 %v406
    %v2139 = vunpack.c.l.b16 %v407
    %v2140 = vunpack.c.h.b16 %v407
    %v2141 = vunpack.c.l.b16 %v408
    %v2142 = vunpack.c.h.b16 %v408
    %v2143 = vunpack.c.l.b16 %v409
    %v2144 = vunpack.c.h.b16 %v409
    %v2145 = vunpack.c.l.b16 %v410
    %v2146 = vunpack.c.h.b16 %v410
    %v2147 = vunpack.c.l.b16 %v411
    %v2148 = vunpack.c.h.b16 %v411
    %v2149 = vunpack.c.l.b16 %v412
    %v2150 = vunpack.c.h.b16 %v412
    %v2151 = vunpack.c.l.b16 %v413
    %v2152 = vunpack.c.h.b16 %v413
    %v2153 = vunpack.c.l.b16 %v414
    %v2154 = vunpack.c.h.b16 %v414
    %v2155 = vunpack.c.l.b16 %v415
    %v2156 = vunpack.c.h.b16 %v415
    %v2157 = vunpack.c.l.b16 %v416
    %v2158 = vunpack.c.h.b16 %v416
    %v2159 = vunpack.c.l.b16 %v417
    %v2160 = vunpack.c.h.b16 %v417
    %v2161 = vunpack.c.l.b16 %v418
    %v2162 = vunpack.c.h.b16 %v418
    %v2163 = vunpack.c.l.b16 %v419
    %v2164 = vunpack.c.h.b16 %v419
    %v2165 = vunpack.c.l.b16 %v420
    %v2166 = vunpack.c.h.b16 %v420
    %v2167 = vunpack.c.l.b16 %v421
    %v2168 = vunpack.c.h.b16 %v421
    %v2169 = vunpack.c.l.b16 %v422
    %v2170 = vunpack.c.h.b16 %v422
    %v2171 = vunpack.c.l.b16 %v423
    %v2172 = vunpack.c.h.b16 %v423
    %v2173 = vunpack.c.l.b16 %v424
    %v2174 = vunpack.c.h.b16 %v424
    %v2175 = vunpack.c.l.b16 %v425
    %v2176 = vunpack.c.h.b16 %v425
    %v2177 = vunpack.c.l.b16 %v426
    %v2178 = vunpack.c.h.b16 %v426
    %v2179 = vunpack.c.l.b16 %v427
    %v2180 = vunpack.c.h.b16 %v427
    %v2181 = vunpack.c.l.b16 %v428
    %v2182 = vunpack.c.h.b16 %v428
    %v2183 = vunpack.c.l.b16 %v429
    %v2184 = vunpack.c.h.b16 %v429
    %v2185 = vunpack.c.l.b16 %v430
    %v2186 = vunpack.c.h.b16 %v430
    %v2187 = vunpack.c.l.b16 %v431
    %v2188 = vunpack.c.h.b16 %v431
    %v2189 = vunpack.c.l.b16 %v432
    %v2190 = vunpack.c.h.b16 %v432
    %v2191 = vunpack.c.l.b16 %v433
    %v2192 = vunpack.c.h.b16 %v433
    %v2193 = vunpack.c.l.b16 %v434
    %v2194 = vunpack.c.h.b16 %v434
    %v2195 = vunpack.c.l.b16 %v435
    %v2196 = vunpack.c.h.b16 %v435
    %v2197 = vunpack.c.l.b16 %v436
    %v2198 = vunpack.c.h.b16 %v436
    %v2199 = vunpack.c.l.b16 %v437
    %v2200 = vunpack.c.h.b16 %v437
    %v2201 = vunpack.c.l.b16 %v438
    %v2202 = vunpack.c.h.b16 %v438
    %v2203 = vunpack.c.l.b16 %v439
    %v2204 = vunpack.c.h.b16 %v439
    %v2205 = vunpack.c.l.b16 %v440
    %v2206 = vunpack.c.h.b16 %v440
    %v2207 = vunpack.c.l.b16 %v441
    %v2208 = vunpack.c.h.b16 %v441
    %v2209 = vunpack.c.l.b16 %v442
    %v2210 = vunpack.c.h.b16 %v442
    %v2211 = vunpack.c.l.b16 %v443
    %v2212 = vunpack.c.h.b16 %v443
    %v2213 = vunpack.c.l.b16 %v444
    %v2214 = vunpack.c.h.b16 %v444
    %v2215 = vunpack.c.l.b16 %v445
    %v2216 = vunpack.c.h.b16 %v445
    %v2217 = vunpack.c.l.b16 %v446
    %v2218 = vunpack.c.h.b16 %v446
    %v2219 = vunpack.c.l.b16 %v447
    %v2220 = vunpack.c.h.b16 %v447
    %v2221 = vunpack.c.l.b16 %v448
    %v2222 = vunpack.c.h.b16 %v448
    %v2223 = vunpack.c.l.b16 %v449
    %v2224 = vunpack.c.h.b16 %v449
    %v2225 = vunpack.c.l.b16 %v450
    %v2226 = vunpack.c.h.b16 %v450
    %v2227 = vunpack.c.l.b16 %v451
    %v2228 = vunpack.c.h.b16 %v451
    %v2229 = vunpack.c.l.b16 %v452
    %v2230 = vunpack.c.h.b16 %v452
    %v2231 = vunpack.c.l.b16 %v453
    %v2232 = vunpack.c.h.b16 %v453
    %v2233 = vunpack.c.l.b16 %v454
    %v2234 = vunpack.c.h.b16 %v454
    %v2235 = vunpack.c.l.b16 %v455
    %v2236 = vunpack.c.h.b16 %v455
    %v2237 = vunpack.c.l.b16 %v456
    %v2238 = vunpack.c.h.b16 %v456
    %v2239 = vunpack.c.l.b16 %v457
    %v2240 = vunpack.c.h.b16 %v457
    %v2241 = vunpack.c.l.b16 %v458
    %v2242 = vunpack.c.h.b16 %v458
    %v2243 = vunpack.c.l.b16 %v459
    %v2244 = vunpack.c.h.b16 %v459
    %v2245 = vunpack.c.l.b16 %v460
    %v2246 = vunpack.c.h.b16 %v460
    %v2247 = vunpack.c.l.b16 %v461
    %v2248 = vunpack.c.h.b16 %v461
    %v2249 = vunpack.c.l.b16 %v462
    %v2250 = vunpack.c.h.b16 %v462
    %v2251 = vunpack.c.l.b16 %v463
    %v2252 = vunpack.c.h.b16 %v463
    %v2253 = vunpack.c.l.b16 %v464
    %v2254 = vunpack.c.h.b16 %v464
    %v2255 = vunpack.c.l.b16 %v465
    %v2256 = vunpack.c.h.b16 %v465
    %v2257 = vunpack.c.l.b16 %v466
    %v2258 = vunpack.c.h.b16 %v466
    %v2259 = vunpack.c.l.b16 %v467
    %v2260 = vunpack.c.h.b16 %v467
    %v2261 = vunpack.c.l.b16 %v468
    %v2262 = vunpack.c.h.b16 %v468
    %v2263 = vunpack.c.l.b16 %v469
    %v2264 = vunpack.c.h.b16 %v469
    %v2265 = vunpack.c.l.b16 %v470
    %v2266 = vunpack.c.h.b16 %v470
    %v2267 = vunpack.c.l.b16 %v471
    %v2268 = vunpack.c.h.b16 %v471
    %v2269 = vunpack.c.l.b16 %v472
    %v2270 = vunpack.c.h.b16 %v472
    %v2271 = vunpack.c.l.b16 %v473
    %v2272 = vunpack.c.h.b16 %v473
    %v2273 = vunpack.c.l.b16 %v474
    %v2274 = vunpack.c.h.b16 %v474
    %v2275 = vunpack.c.l.b16 %v475
    %v2276 = vunpack.c.h.b16 %v475
    %v2277 = vunpack.c.l.b16 %v476
    %v2278 = vunpack.c.h.b16 %v476
    %v2279 = vunpack.c.l.b16 %v477
    %v2280 = vunpack.c.h.b16 %v477
    %v2281 = vunpack.c.l.b16 %v478
    %v2282 = vunpack.c.h.b16 %v478
    %v2283 = vunpack.c.l.b16 %v479
    %v2284 = vunpack.c.h.b16 %v479
    %v2285 = vunpack.c.l.b16 %v480
    %v2286 = vunpack.c.h.b16 %v480
    %v2287 = vunpack.c.l.b16 %v481
    %v2288 = vunpack.c.h.b16 %v481
    %v2289 = vunpack.c.l.b16 %v482
    %v2290 = vunpack.c.h.b16 %v482
    %v2291 = vunpack.c.l.b16 %v483
    %v2292 = vunpack.c.h.b16 %v483
    %v2293 = vunpack.c.l.b16 %v484
    %v2294 = vunpack.c.h.b16 %v484
    %v2295 = vunpack.c.l.b16 %v485
    %v2296 = vunpack.c.h.b16 %v485
    %v2297 = vunpack.c.l.b16 %v486
    %v2298 = vunpack.c.h.b16 %v486
    %v2299 = vunpack.c.l.b16 %v487
    %v2300 = vunpack.c.h.b16 %v487
    %v2301 = vunpack.c.l.b16 %v488
    %v2302 = vunpack.c.h.b16 %v488
    %v2303 = vunpack.c.l.b16 %v489
    %v2304 = vunpack.c.h.b16 %v489
    %v2305 = vunpack.c.l.b16 %v490
    %v2306 = vunpack.c.h.b16 %v490
    %v2307 = vunpack.c.l.b16 %v491
    %v2308 = vunpack.c.h.b16 %v491
    %v2309 = vunpack.c.l.b16 %v492
    %v2310 = vunpack.c.h.b16 %v492
    %v2311 = vunpack.c.l.b16 %v493
    %v2312 = vunpack.c.h.b16 %v493
    %v2313 = vunpack.c.l.b16 %v494
    %v2314 = vunpack.c.h.b16 %v494
    %v2315 = vunpack.c.l.b16 %v495
    %v2316 = vunpack.c.h.b16 %v495
    %v2317 = vunpack.c.l.b16 %v496
    %v2318 = vunpack.c.h.b16 %v496
    %v2319 = vunpack.c.l.b16 %v497
    %v2320 = vunpack.c.h.b16 %v497
    %v2321 = vunpack.c.l.b16 %v498
    %v2322 = vunpack.c.h.b16 %v498
    %v2323 = vunpack.c.l.b16 %v499
    %v2324 = vunpack.c.h.b16 %v499
    %v2325 = vunpack.c.l.b16 %v500
    %v2326 = vunpack.c.h.b16 %v500
    %v2327 = vunpack.c.l.b16 %v501
    %v2328 = vunpack.c.h.b16 %v501
    %v2329 = vunpack.c.l.b16 %v502
    %v2330 = vunpack.c.h.b16 %v502
    %v2331 = vunpack.c.l.b16 %v503
    %v2332 = vunpack.c.h.b16 %v503
    %v2333 = vunpack.c.l.b16 %v504
    %v2334 = vunpack.c.h.b16 %v504
    %v2335 = vunpack.c.l.b16 %v505
    %v2336 = vunpack.c.h.b16 %v505
    %v2337 = vunpack.c.l.b16 %v506
    %v2338 = vunpack.c.h.b16 %v506
    %v2339 = vunpack.c.l.b16 %v507
    %v2340 = vunpack.c.h.b16 %v507
    %v2341 = vunpack.c.l.b16 %v508
    %v2342 = vunpack.c.h.b16 %v508
    %v2343 = vunpack.c.l.b16 %v509
    %v2344 = vunpack.c.h.b16 %v509
    %v2345 = vunpack.c.l.b16 %v510
    %v2346 = vunpack.c.h.b16 %v510
    %v2347 = vunpack.c.l.b16 %v511
    %v2348 = vunpack.c.h.b16 %v511
    %v2349 = vunpack.c.l.b16 %v512
    %v2350 = vunpack.c.h.b16 %v512
    %v2351 = vunpack.c.l.b16 %v513
    %v2352 = vunpack.c.h.b16 %v513
    %v2353 = vunpack.c.l.b16 %v514
    %v2354 = vunpack.c.h.b16 %v514
    %v2355 = vunpack.c.l.b16 %v515
    %v2356 = vunpack.c.h.b16 %v515
    %v2357 = vunpack.c.l.b16 %v516
    %v2358 = vunpack.c.h.b16 %v516
    %v2359 = vunpack.c.l.b16 %v517
    %v2360 = vunpack.c.h.b16 %v517
    %v2361 = vunpack.c.l.b16 %v518
    %v2362 = vunpack.c.h.b16 %v518
    %v2363 = vunpack.c.l.b16 %v519
    %v2364 = vunpack.c.h.b16 %v519
    %v2365 = vunpack.c.l.b16 %v520
    %v2366 = vunpack.c.h.b16 %v520
    %v2367 = vunpack.c.l.b16 %v521
    %v2368 = vunpack.c.h.b16 %v521
    %v2369 = vunpack.c.l.b16 %v522
    %v2370 = vunpack.c.h.b16 %v522
    %v2371 = vunpack.c.l.b16 %v523
    %v2372 = vunpack.c.h.b16 %v523
    %v2373 = vunpack.c.l.b16 %v524
    %v2374 = vunpack.c.h.b16 %v524
    %v2375 = vunpack.c.l.b16 %v525
    %v2376 = vunpack.c.h.b16 %v525
    %v2377 = vunpack.c.l.b16 %v526
    %v2378 = vunpack.c.h.b16 %v526
    %v2379 = vunpack.c.l.b16 %v527
    %v2380 = vunpack.c.h.b16 %v527
    %v2381 = vunpack.c.l.b16 %v528
    %v2382 = vunpack.c.h.b16 %v528
    %v2383 = vunpack.c.l.b16 %v529
    %v2384 = vunpack.c.h.b16 %v529
    %v2385 = vunpack.c.l.b16 %v530
    %v2386 = vunpack.c.h.b16 %v530
    %v2387 = vunpack.c.l.b16 %v531
    %v2388 = vunpack.c.h.b16 %v531
    %v2389 = vunpack.c.l.b16 %v532
    %v2390 = vunpack.c.h.b16 %v532
    %v2391 = vunpack.c.l.b16 %v533
    %v2392 = vunpack.c.h.b16 %v533
    %v2393 = vunpack.c.l.b16 %v534
    %v2394 = vunpack.c.h.b16 %v534
    %v2395 = vunpack.c.l.b16 %v535
    %v2396 = vunpack.c.h.b16 %v535
    %v2397 = vunpack.c.l.b16 %v536
    %v2398 = vunpack.c.h.b16 %v536
    %v2399 = vunpack.c.l.b16 %v537
    %v2400 = vunpack.c.h.b16 %v537
    %v2401 = vunpack.c.l.b16 %v538
    %v2402 = vunpack.c.h.b16 %v538
    %v2403 = vunpack.c.l.b16 %v539
    %v2404 = vunpack.c.h.b16 %v539
    %v2405 = vunpack.c.l.b16 %v540
    %v2406 = vunpack.c.h.b16 %v540
    %v2407 = vunpack.c.l.b16 %v541
    %v2408 = vunpack.c.h.b16 %v541
    %v2409 = vunpack.c.l.b16 %v542
    %v2410 = vunpack.c.h.b16 %v542
    %v2411 = vunpack.c.l.b16 %v543
    %v2412 = vunpack.c.h.b16 %v543
    %v2413 = vunpack.c.l.b16 %v544
    %v2414 = vunpack.c.h.b16 %v544
    %v2415 = vunpack.c.l.b16 %v545
    %v2416 = vunpack.c.h.b16 %v545
    %v2417 = vunpack.c.l.b16 %v546
    %v2418 = vunpack.c.h.b16 %v546
    %v2419 = vunpack.c.l.b16 %v547
    %v2420 = vunpack.c.h.b16 %v547
    %v2421 = vunpack.c.l.b16 %v548
    %v2422 = vunpack.c.h.b16 %v548
    %v2423 = vunpack.c.l.b16 %v549
    %v2424 = vunpack.c.h.b16 %v549
    %v2425 = vunpack.c.l.b16 %v550
    %v2426 = vunpack.c.h.b16 %v550
    %v2427 = vunpack.c.l.b16 %v551
    %v2428 = vunpack.c.h.b16 %v551
    %v2429 = vunpack.c.l.b16 %v552
    %v2430 = vunpack.c.h.b16 %v552
    %v2431 = vunpack.c.l.b16 %v553
    %v2432 = vunpack.c.h.b16 %v553
    %v2433 = vunpack.c.l.b16 %v554
    %v2434 = vunpack.c.h.b16 %v554
    %v2435 = vunpack.c.l.b16 %v555
    %v2436 = vunpack.c.h.b16 %v555
    %v2437 = vunpack.c.l.b16 %v556
    %v2438 = vunpack.c.h.b16 %v556
    %v2439 = vunpack.c.l.b16 %v557
    %v2440 = vunpack.c.h.b16 %v557
    %v2441 = vunpack.c.l.b16 %v558
    %v2442 = vunpack.c.h.b16 %v558
    %v2443 = vunpack.c.l.b16 %v559
    %v2444 = vunpack.c.h.b16 %v559
    %v2445 = vunpack.c.l.b16 %v560
    %v2446 = vunpack.c.h.b16 %v560
    %v2447 = vunpack.c.l.b16 %v561
    %v2448 = vunpack.c.h.b16 %v561
    %v2449 = vunpack.c.l.b16 %v562
    %v2450 = vunpack.c.h.b16 %v562
    %v2451 = vunpack.c.l.b16 %v563
    %v2452 = vunpack.c.h.b16 %v563
    %v2453 = vunpack.c.l.b16 %v564
    %v2454 = vunpack.c.h.b16 %v564
    %v2455 = vunpack.c.l.b16 %v565
    %v2456 = vunpack.c.h.b16 %v565
    %v2457 = vunpack.c.l.b16 %v566
    %v2458 = vunpack.c.h.b16 %v566
    %v2459 = vunpack.c.l.b16 %v567
    %v2460 = vunpack.c.h.b16 %v567
    %v2461 = vunpack.c.l.b16 %v568
    %v2462 = vunpack.c.h.b16 %v568
    %v2463 = vunpack.c.l.b16 %v569
    %v2464 = vunpack.c.h.b16 %v569
    %v2465 = vunpack.c.l.b16 %v570
    %v2466 = vunpack.c.h.b16 %v570
    %v2467 = vunpack.c.l.b16 %v571
    %v2468 = vunpack.c.h.b16 %v571
    %v2469 = vunpack.c.l.b16 %v572
    %v2470 = vunpack.c.h.b16 %v572
    %v2471 = vunpack.c.l.b16 %v573
    %v2472 = vunpack.c.h.b16 %v573
    %v2473 = vunpack.c.l.b16 %v574
    %v2474 = vunpack.c.h.b16 %v574
    %v2475 = vunpack.c.l.b16 %v575
    %v2476 = vunpack.c.h.b16 %v575
    %v2477 = vunpack.c.l.b16 %v576
    %v2478 = vunpack.c.h.b16 %v576
    %v2479 = vunpack.c.l.b16 %v577
    %v2480 = vunpack.c.h.b16 %v577
    %v2481 = vunpack.c.l.b16 %v578
    %v2482 = vunpack.c.h.b16 %v578
    %v2483 = vunpack.c.l.b16 %v579
    %v2484 = vunpack.c.h.b16 %v579
    %v2485 = vunpack.c.l.b16 %v580
    %v2486 = vunpack.c.h.b16 %v580
    %v2487 = vunpack.c.l.b16 %v581
    %v2488 = vunpack.c.h.b16 %v581
    %v2489 = vunpack.c.l.b16 %v582
    %v2490 = vunpack.c.h.b16 %v582
    %v2491 = vunpack.c.l.b16 %v583
    %v2492 = vunpack.c.h.b16 %v583
    %v2493 = vunpack.c.l.b16 %v584
    %v2494 = vunpack.c.h.b16 %v584
    %v2495 = vunpack.c.l.b16 %v585
    %v2496 = vunpack.c.h.b16 %v585
    %v2497 = vunpack.c.l.b16 %v586
    %v2498 = vunpack.c.h.b16 %v586
    %v2499 = vunpack.c.l.b16 %v587
    %v2500 = vunpack.c.h.b16 %v587
    %v2501 = vunpack.c.l.b16 %v588
    %v2502 = vunpack.c.h.b16 %v588
    %v2503 = vunpack.c.l.b16 %v589
    %v2504 = vunpack.c.h.b16 %v589
    %v2505 = vunpack.c.l.b16 %v590
    %v2506 = vunpack.c.h.b16 %v590
    %v2507 = vunpack.c.l.b16 %v591
    %v2508 = vunpack.c.h.b16 %v591
    %v2509 = vunpack.c.l.b16 %v592
    %v2510 = vunpack.c.h.b16 %v592
    %v2511 = vunpack.c.l.b16 %v593
    %v2512 = vunpack.c.h.b16 %v593
    %v2513 = vunpack.c.l.b16 %v594
    %v2514 = vunpack.c.h.b16 %v594
    %v2515 = vunpack.c.l.b16 %v595
    %v2516 = vunpack.c.h.b16 %v595
    %v2517 = vunpack.c.l.b16 %v596
    %v2518 = vunpack.c.h.b16 %v596
    %v2519 = vunpack.c.l.b16 %v597
    %v2520 = vunpack.c.h.b16 %v597
    %v2521 = vunpack.c.l.b16 %v598
    %v2522 = vunpack.c.h.b16 %v598
    %v2523 = vunpack.c.l.b16 %v599
    %v2524 = vunpack.c.h.b16 %v599
    %v2525 = vunpack.c.l.b16 %v600
    %v2526 = vunpack.c.h.b16 %v600
    %v2527 = vunpack.c.l.b16 %v601
    %v2528 = vunpack.c.h.b16 %v601
    %v2529 = vunpack.c.l.b16 %v602
    %v2530 = vunpack.c.h.b16 %v602
    %v2531 = vunpack.c.l.b16 %v603
    %v2532 = vunpack.c.h.b16 %v603
    %v2533 = vunpack.c.l.b16 %v604
    %v2534 = vunpack.c.h.b16 %v604
    %v2535 = vunpack.c.l.b16 %v605
    %v2536 = vunpack.c.h.b16 %v605
    %v2537 = vunpack.c.l.b16 %v606
    %v2538 = vunpack.c.h.b16 %v606
    %v2539 = vunpack.c.l.b16 %v607
    %v2540 = vunpack.c.h.b16 %v607
    %v2541 = vunpack.c.l.b16 %v608
    %v2542 = vunpack.c.h.b16 %v608
    %v2543 = vunpack.c.l.b16 %v609
    %v2544 = vunpack.c.h.b16 %v609
    %v2545 = vunpack.c.l.b16 %v610
    %v2546 = vunpack.c.h.b16 %v610
    %v2547 = vunpack.c.l.b16 %v611
    %v2548 = vunpack.c.h.b16 %v611
    %v2549 = vunpack.c.l.b16 %v612
    %v2550 = vunpack.c.h.b16 %v612
    %v2551 = vunpack.c.l.b16 %v613
    %v2552 = vunpack.c.h.b16 %v613
    %v2553 = vunpack.c.l.b16 %v614
    %v2554 = vunpack.c.h.b16 %v614
    %v2555 = vunpack.c.l.b16 %v615
    %v2556 = vunpack.c.h.b16 %v615
    %v2557 = vunpack.c.l.b16 %v616
    %v2558 = vunpack.c.h.b16 %v616
    %v2559 = vunpack.c.l.b16 %v617
    %v2560 = vunpack.c.h.b16 %v617
    %v2561 = vunpack.c.l.b16 %v618
    %v2562 = vunpack.c.h.b16 %v618
    %v2563 = vunpack.c.l.b16 %v619
    %v2564 = vunpack.c.h.b16 %v619
    %v2565 = vunpack.c.l.b16 %v620
    %v2566 = vunpack.c.h.b16 %v620
    %v2567 = vunpack.c.l.b16 %v621
    %v2568 = vunpack.c.h.b16 %v621
    %v2569 = vunpack.c.l.b16 %v622
    %v2570 = vunpack.c.h.b16 %v622
    %v2571 = vunpack.c.l.b16 %v623
    %v2572 = vunpack.c.h.b16 %v623
    %v2573 = vunpack.c.l.b16 %v624
    %v2574 = vunpack.c.h.b16 %v624
    %v2575 = vunpack.c.l.b16 %v625
    %v2576 = vunpack.c.h.b16 %v625
    %v2577 = vunpack.c.l.b16 %v626
    %v2578 = vunpack.c.h.b16 %v626
    %v2579 = vunpack.c.l.b16 %v627
    %v2580 = vunpack.c.h.b16 %v627
    %v2581 = vunpack.c.l.b16 %v628
    %v2582 = vunpack.c.h.b16 %v628
    %v2583 = vunpack.c.l.b16 %v629
    %v2584 = vunpack.c.h.b16 %v629
    %v2585 = vunpack.c.l.b16 %v630
    %v2586 = vunpack.c.h.b16 %v630
    %v2587 = vunpack.c.l.b16 %v631
    %v2588 = vunpack.c.h.b16 %v631
    %v2589 = vunpack.c.l.b16 %v632
    %v2590 = vunpack.c.h.b16 %v632
    %v2591 = vunpack.c.l.b16 %v633
    %v2592 = vunpack.c.h.b16 %v633
    %v2593 = vunpack.c.l.b16 %v634
    %v2594 = vunpack.c.h.b16 %v634
    %v2595 = vunpack.c.l.b16 %v635
    %v2596 = vunpack.c.h.b16 %v635
    %v2597 = vunpack.c.l.b16 %v636
    %v2598 = vunpack.c.h.b16 %v636
    %v2599 = vunpack.c.l.b16 %v637
    %v2600 = vunpack.c.h.b16 %v637
    %v2601 = vunpack.c.l.b16 %v638
    %v2602 = vunpack.c.h.b16 %v638
    %v2603 = vunpack.c.l.b16 %v639
    %v2604 = vunpack.c.h.b16 %v639
    %v2605 = vunpack.c.l.b16 %v640
    %v2606 = vunpack.c.h.b16 %v640
    %v2607 = vunpack.c.l.b16 %v641
    %v2608 = vunpack.c.h.b16 %v641
    %v2609 = vunpack.c.l.b16 %v642
    %v2610 = vunpack.c.h.b16 %v642
    %v2611 = vunpack.c.l.b16 %v643
    %v2612 = vunpack.c.h.b16 %v643
    %v2613 = vunpack.c.l.b16 %v644
    %v2614 = vunpack.c.h.b16 %v644
    %v2615 = vunpack.c.l.b16 %v645
    %v2616 = vunpack.c.h.b16 %v645
    %v2617 = vunpack.c.l.b16 %v646
    %v2618 = vunpack.c.h.b16 %v646
    %v2619 = vunpack.c.l.b16 %v647
    %v2620 = vunpack.c.h.b16 %v647
    %v2621 = vunpack.c.l.b16 %v648
    %v2622 = vunpack.c.h.b16 %v648
    %v2623 = vunpack.c.l.b16 %v649
    %v2624 = vunpack.c.h.b16 %v649
    %v2625 = vunpack.c.l.b16 %v650
    %v2626 = vunpack.c.h.b16 %v650
    %v2627 = vunpack.c.l.b16 %v651
    %v2628 = vunpack.c.h.b16 %v651
    %v2629 = vunpack.c.l.b16 %v652
    %v2630 = vunpack.c.h.b16 %v652
    %v2631 = vunpack.c.l.b16 %v653
    %v2632 = vunpack.c.h.b16 %v653
    %v2633 = vunpack.c.l.b16 %v654
    %v2634 = vunpack.c.h.b16 %v654
    %v2635 = vunpack.c.l.b16 %v655
    %v2636 = vunpack.c.h.b16 %v655
    %v2637 = vunpack.c.l.b16 %v656
    %v2638 = vunpack.c.h.b16 %v656
    %v2639 = vunpack.c.l.b16 %v657
    %v2640 = vunpack.c.h.b16 %v657
    %v2641 = vunpack.c.l.b16 %v658
    %v2642 = vunpack.c.h.b16 %v658
    %v2643 = vunpack.c.l.b16 %v659
    %v2644 = vunpack.c.h.b16 %v659
    %v2645 = vunpack.c.l.b16 %v660
    %v2646 = vunpack.c.h.b16 %v660
    %v2647 = vunpack.c.l.b16 %v661
    %v2648 = vunpack.c.h.b16 %v661
    %v2649 = vunpack.c.l.b16 %v662
    %v2650 = vunpack.c.h.b16 %v662
    %v2651 = vunpack.c.l.b16 %v663
    %v2652 = vunpack.c.h.b16 %v663
    %v2653 = vunpack.c.l.b16 %v664
    %v2654 = vunpack.c.h.b16 %v664
    %v2655 = vunpack.c.l.b16 %v665
    %v2656 = vunpack.c.h.b16 %v665
    %v2657 = vunpack.c.l.b16 %v666
    %v2658 = vunpack.c.h.b16 %v666
    %v2659 = vunpack.c.l.b16 %v667
    %v2660 = vunpack.c.h.b16 %v667
    %v2661 = vunpack.c.l.b16 %v668
    %v2662 = vunpack.c.h.b16 %v668
    %v2663 = vunpack.c.l.b16 %v669
    %v2664 = vunpack.c.h.b16 %v669
    %v2665 = vunpack.c.l.b16 %v670
    %v2666 = vunpack.c.h.b16 %v670
    %v2667 = vunpack.c.l.b16 %v671
    %v2668 = vunpack.c.h.b16 %v671
    %v2669 = vunpack.c.l.b16 %v672
    %v2670 = vunpack.c.h.b16 %v672
    %v2671 = vunpack.c.l.b16 %v673
    %v2672 = vunpack.c.h.b16 %v673
    %v2673 = vunpack.c.l.b16 %v674
    %v2674 = vunpack.c.h.b16 %v674
    %v2675 = vunpack.c.l.b16 %v675
    %v2676 = vunpack.c.h.b16 %v675
    %v2677 = vunpack.c.l.b16 %v676
    %v2678 = vunpack.c.h.b16 %v676
    %v2679 = vunpack.c.l.b16 %v677
    %v2680 = vunpack.c.h.b16 %v677
    %v2681 = vunpack.c.l.b16 %v678
    %v2682 = vunpack.c.h.b16 %v678
    %v2683 = vunpack.c.l.b16 %v679
    %v2684 = vunpack.c.h.b16 %v679
    %v2685 = vunpack.c.l.b16 %v680
    %v2686 = vunpack.c.h.b16 %v680
    %v2687 = vunpack.c.l.b16 %v681
    %v2688 = vunpack.c.h.b16 %v681
    %v2689 = vunpack.c.l.b16 %v682
    %v2690 = vunpack.c.h.b16 %v682
    %v2691 = vunpack.c.l.b16 %v683
    %v2692 = vunpack.c.h.b16 %v683
    %v2693 = vunpack.c.l.b16 %v684
    %v2694 = vunpack.c.h.b16 %v684
    %v2695 = vunpack.c.l.b16 %v685
    %v2696 = vunpack.c.h.b16 %v685
    %v2697 = vunpack.c.l.b16 %v686
    %v2698 = vunpack.c.h.b16 %v686
    %v2699 = vunpack.c.l.b16 %v687
    %v2700 = vunpack.c.h.b16 %v687
    %v2701 = vunpack.c.l.b16 %v688
    %v2702 = vunpack.c.h.b16 %v688
    %v2703 = vunpack.c.l.b16 %v689
    %v2704 = vunpack.c.h.b16 %v689
    %v2705 = vunpack.c.l.b16 %v690
    %v2706 = vunpack.c.h.b16 %v690
    %v2707 = vunpack.c.l.b16 %v691
    %v2708 = vunpack.c.h.b16 %v691
    %v2709 = vunpack.c.l.b16 %v692
    %v2710 = vunpack.c.h.b16 %v692
    %v2711 = vunpack.c.l.b16 %v693
    %v2712 = vunpack.c.h.b16 %v693
    %v2713 = vunpack.c.l.b16 %v694
    %v2714 = vunpack.c.h.b16 %v694
    %v2715 = vunpack.c.l.b16 %v695
    %v2716 = vunpack.c.h.b16 %v695
    %v2717 = vunpack.c.l.b16 %v696
    %v2718 = vunpack.c.h.b16 %v696
    %v2719 = vunpack.c.l.b16 %v697
    %v2720 = vunpack.c.h.b16 %v697
    %v2721 = vunpack.c.l.b16 %v698
    %v2722 = vunpack.c.h.b16 %v698
    %v2723 = vunpack.c.l.b16 %v699
    %v2724 = vunpack.c.h.b16 %v699
    %v2725 = vunpack.c.l.b16 %v700
    %v2726 = vunpack.c.h.b16 %v700
    %v2727 = vunpack.c.l.b16 %v701
    %v2728 = vunpack.c.h.b16 %v701
    %v2729 = vunpack.c.l.b16 %v702
    %v2730 = vunpack.c.h.b16 %v702
    %v2731 = vunpack.c.l.b16 %v703
    %v2732 = vunpack.c.h.b16 %v703
    %v2733 = vunpack.c.l.b16 %v704
    %v2734 = vunpack.c.h.b16 %v704
    %v2735 = vunpack.c.l.b16 %v705
    %v2736 = vunpack.c.h.b16 %v705
    %v2737 = vunpack.c.l.b16 %v706
    %v2738 = vunpack.c.h.b16 %v706
    %v2739 = vunpack.c.l.b16 %v707
    %v2740 = vunpack.c.h.b16 %v707
    %v2741 = vunpack.c.l.b16 %v708
    %v2742 = vunpack.c.h.b16 %v708
    %v2743 = vunpack.c.l.b16 %v709
    %v2744 = vunpack.c.h.b16 %v709
    %v2745 = vunpack.c.l.b16 %v710
    %v2746 = vunpack.c.h.b16 %v710
    %v2747 = vunpack.c.l.b16 %v711
    %v2748 = vunpack.c.h.b16 %v711
    %v2749 = vunpack.c.l.b16 %v712
    %v2750 = vunpack.c.h.b16 %v712
    %v2751 = vunpack.c.l.b16 %v713
    %v2752 = vunpack.c.h.b16 %v713
    %v2753 = vunpack.c.l.b16 %v714
    %v2754 = vunpack.c.h.b16 %v714
    %v2755 = vunpack.c.l.b16 %v715
    %v2756 = vunpack.c.h.b16 %v715
    %v2757 = vunpack.c.l.b16 %v716
    %v2758 = vunpack.c.h.b16 %v716
    %v2759 = vunpack.c.l.b16 %v717
    %v2760 = vunpack.c.h.b16 %v717
    %v2761 = vunpack.c.l.b16 %v718
    %v2762 = vunpack.c.h.b16 %v718
    %v2763 = vunpack.c.l.b16 %v719
    %v2764 = vunpack.c.h.b16 %v719
    %v2765 = vunpack.c.l.b16 %v720
    %v2766 = vunpack.c.h.b16 %v720
    %v2767 = vunpack.c.l.b16 %v721
    %v2768 = vunpack.c.h.b16 %v721
    %v2769 = vunpack.c.l.b16 %v722
    %v2770 = vunpack.c.h.b16 %v722
    %v2771 = vunpack.c.l.b16 %v723
    %v2772 = vunpack.c.h.b16 %v723
    %v2773 = vunpack.c.l.b16 %v724
    %v2774 = vunpack.c.h.b16 %v724
    %v2775 = vunpack.c.l.b16 %v725
    %v2776 = vunpack.c.h.b16 %v725
    %v2777 = vunpack.c.l.b16 %v726
    %v2778 = vunpack.c.h.b16 %v726
    %v2779 = vunpack.c.l.b16 %v727
    %v2780 = vunpack.c.h.b16 %v727
    %v2781 = vunpack.c.l.b16 %v728
    %v2782 = vunpack.c.h.b16 %v728
    %v2783 = vunpack.c.l.b16 %v729
    %v2784 = vunpack.c.h.b16 %v729
    %v2785 = vunpack.c.l.b16 %v730
    %v2786 = vunpack.c.h.b16 %v730
    %v2787 = vunpack.c.l.b16 %v731
    %v2788 = vunpack.c.h.b16 %v731
    %v2789 = vunpack.c.l.b16 %v732
    %v2790 = vunpack.c.h.b16 %v732
    %v2791 = vunpack.c.l.b16 %v733
    %v2792 = vunpack.c.h.b16 %v733
    %v2793 = vunpack.c.l.b16 %v734
    %v2794 = vunpack.c.h.b16 %v734
    %v2795 = vunpack.c.l.b16 %v735
    %v2796 = vunpack.c.h.b16 %v735
    %v2797 = vunpack.c.l.b16 %v736
    %v2798 = vunpack.c.h.b16 %v736
    %v2799 = vunpack.c.l.b16 %v737
    %v2800 = vunpack.c.h.b16 %v737
    %v2801 = vunpack.c.l.b16 %v738
    %v2802 = vunpack.c.h.b16 %v738
    %v2803 = vunpack.c.l.b16 %v739
    %v2804 = vunpack.c.h.b16 %v739
    %v2805 = vunpack.c.l.b16 %v740
    %v2806 = vunpack.c.h.b16 %v740
    %v2807 = vunpack.c.l.b16 %v741
    %v2808 = vunpack.c.h.b16 %v741
    %v2809 = vunpack.c.l.b16 %v742
    %v2810 = vunpack.c.h.b16 %v742
    %v2811 = vunpack.c.l.b16 %v743
    %v2812 = vunpack.c.h.b16 %v743
    %v2813 = vunpack.c.l.b16 %v744
    %v2814 = vunpack.c.h.b16 %v744
    %v2815 = vunpack.c.l.b16 %v745
    %v2816 = vunpack.c.h.b16 %v745
    %v2817 = vunpack.c.l.b16 %v746
    %v2818 = vunpack.c.h.b16 %v746
    %v2819 = vunpack.c.l.b16 %v747
    %v2820 = vunpack.c.h.b16 %v747
    %v2821 = vunpack.c.l.b16 %v748
    %v2822 = vunpack.c.h.b16 %v748
    %v2823 = vunpack.c.l.b16 %v749
    %v2824 = vunpack.c.h.b16 %v749
    %v2825 = vunpack.c.l.b16 %v750
    %v2826 = vunpack.c.h.b16 %v750
    %v2827 = vunpack.c.l.b16 %v751
    %v2828 = vunpack.c.h.b16 %v751
    %v2829 = vunpack.c.l.b16 %v752
    %v2830 = vunpack.c.h.b16 %v752
    %v2831 = vunpack.c.l.b16 %v753
    %v2832 = vunpack.c.h.b16 %v753
    %v2833 = vunpack.c.l.b16 %v754
    %v2834 = vunpack.c.h.b16 %v754
    %v2835 = vunpack.c.l.b16 %v755
    %v2836 = vunpack.c.h.b16 %v755
    %v2837 = vunpack.c.l.b16 %v756
    %v2838 = vunpack.c.h.b16 %v756
    %v2839 = vunpack.c.l.b16 %v757
    %v2840 = vunpack.c.h.b16 %v757
    %v2841 = vunpack.c.l.b16 %v758
    %v2842 = vunpack.c.h.b16 %v758
    %v2843 = vunpack.c.l.b16 %v759
    %v2844 = vunpack.c.h.b16 %v759
    %v2845 = vunpack.c.l.b16 %v760
    %v2846 = vunpack.c.h.b16 %v760
    %v2847 = vunpack.c.l.b16 %v761
    %v2848 = vunpack.c.h.b16 %v761
    %v2849 = vunpack.c.l.b16 %v762
    %v2850 = vunpack.c.h.b16 %v762
    %v2851 = vunpack.c.l.b16 %v763
    %v2852 = vunpack.c.h.b16 %v763
    %v2853 = vunpack.c.l.b16 %v764
    %v2854 = vunpack.c.h.b16 %v764
    %v2855 = vunpack.c.l.b16 %v765
    %v2856 = vunpack.c.h.b16 %v765
    %v2857 = vunpack.c.l.b16 %v766
    %v2858 = vunpack.c.h.b16 %v766
    %v2859 = vunpack.c.l.b16 %v767
    %v2860 = vunpack.c.h.b16 %v767
    %v2861 = vunpack.c.l.b16 %v768
    %v2862 = vunpack.c.h.b16 %v768
    %v2863 = vunpack.c.l.b16 %v769
    %v2864 = vunpack.c.h.b16 %v769
    %v2865 = vunpack.c.l.b16 %v770
    %v2866 = vunpack.c.h.b16 %v770
    %v2867 = vunpack.c.l.b16 %v771
    %v2868 = vunpack.c.h.b16 %v771
    %v2869 = vunpack.c.l.b16 %v772
    %v2870 = vunpack.c.h.b16 %v772
    %v2871 = vunpack.c.l.b16 %v773
    %v2872 = vunpack.c.h.b16 %v773
    %v2873 = vunpack.c.l.b16 %v774
    %v2874 = vunpack.c.h.b16 %v774
    %v2875 = vunpack.c.l.b16 %v775
    %v2876 = vunpack.c.h.b16 %v775
    %v2877 = vunpack.c.l.b16 %v776
    %v2878 = vunpack.c.h.b16 %v776
    %v2879 = vunpack.c.l.b16 %v777
    %v2880 = vunpack.c.h.b16 %v777
    %v2881 = vunpack.c.l.b16 %v778
    %v2882 = vunpack.c.h.b16 %v778
    %v2883 = vunpack.c.l.b16 %v779
    %v2884 = vunpack.c.h.b16 %v779
    %v2885 = vunpack.c.l.b16 %v780
    %v2886 = vunpack.c.h.b16 %v780
    %v2887 = vunpack.c.l.b16 %v781
    %v2888 = vunpack.c.h.b16 %v781
    %v2889 = vunpack.c.l.b16 %v782
    %v2890 = vunpack.c.h.b16 %v782
    %v2891 = vunpack.c.l.b16 %v783
    %v2892 = vunpack.c.h.b16 %v783
    %v2893 = vunpack.c.l.b16 %v784
    %v2894 = vunpack.c.h.b16 %v784
    %v2895 = vunpack.c.l.b16 %v785
    %v2896 = vunpack.c.h.b16 %v785
    %v2897 = vunpack.c.l.b16 %v786
    %v2898 = vunpack.c.h.b16 %v786
    %v2899 = vunpack.c.l.b16 %v787
    %v2900 = vunpack.c.h.b16 %v787
    %v2901 = vunpack.c.l.b16 %v788
    %v2902 = vunpack.c.h.b16 %v788
    %v2903 = vunpack.c.l.b16 %v789
    %v2904 = vunpack.c.h.b16 %v789
    %v2905 = vunpack.c.l.b16 %v790
    %v2906 = vunpack.c.h.b16 %v790
    %v2907 = vunpack.c.l.b16 %v791
    %v2908 = vunpack.c.h.b16 %v791
    %v2909 = vunpack.c.l.b16 %v792
    %v2910 = vunpack.c.h.b16 %v792
    %v2911 = vunpack.c.l.b16 %v793
    %v2912 = vunpack.c.h.b16 %v793
    %v2913 = vunpack.c.l.b16 %v794
    %v2914 = vunpack.c.h.b16 %v794
    %v2915 = vunpack.c.l.b16 %v795
    %v2916 = vunpack.c.h.b16 %v795
    %v2917 = vunpack.c.l.b16 %v796
    %v2918 = vunpack.c.h.b16 %v796
    %v2919 = vunpack.c.l.b16 %v797
    %v2920 = vunpack.c.h.b16 %v797
    %v2921 = vunpack.c.l.b16 %v798
    %v2922 = vunpack.c.h.b16 %v798
    %v2923 = vunpack.c.l.b16 %v799
    %v2924 = vunpack.c.h.b16 %v799
    %v2925 = vunpack.c.l.b16 %v800
    %v2926 = vunpack.c.h.b16 %v800
    %v2927 = vunpack.c.l.b16 %v801
    %v2928 = vunpack.c.h.b16 %v801
    %v2929 = vunpack.c.l.b16 %v802
    %v2930 = vunpack.c.h.b16 %v802
    %v2931 = vunpack.c.l.b16 %v803
    %v2932 = vunpack.c.h.b16 %v803
    %v2933 = vunpack.c.l.b16 %v804
    %v2934 = vunpack.c.h.b16 %v804
    %v2935 = vunpack.c.l.b16 %v805
    %v2936 = vunpack.c.h.b16 %v805
    %v2937 = vunpack.c.l.b16 %v806
    %v2938 = vunpack.c.h.b16 %v806
    %v2939 = vunpack.c.l.b16 %v807
    %v2940 = vunpack.c.h.b16 %v807
    %v2941 = vunpack.c.l.b16 %v808
    %v2942 = vunpack.c.h.b16 %v808
    %v2943 = vunpack.c.l.b16 %v809
    %v2944 = vunpack.c.h.b16 %v809
    %v2945 = vunpack.c.l.b16 %v810
    %v2946 = vunpack.c.h.b16 %v810
    %v2947 = vunpack.c.l.b16 %v811
    %v2948 = vunpack.c.h.b16 %v811
    %v2949 = vunpack.c.l.b16 %v812
    %v2950 = vunpack.c.h.b16 %v812
    %v2951 = vunpack.c.l.b16 %v813
    %v2952 = vunpack.c.h.b16 %v813
    %v2953 = vunpack.c.l.b16 %v814
    %v2954 = vunpack.c.h.b16 %v814
    %v2955 = vunpack.c.l.b16 %v815
    %v2956 = vunpack.c.h.b16 %v815
    %v2957 = vunpack.c.l.b16 %v816
    %v2958 = vunpack.c.h.b16 %v816
    %v2959 = vunpack.c.l.b16 %v817
    %v2960 = vunpack.c.h.b16 %v817
    %v2961 = vunpack.c.l.b16 %v818
    %v2962 = vunpack.c.h.b16 %v818
    %v2963 = vunpack.c.l.b16 %v819
    %v2964 = vunpack.c.h.b16 %v819
    %v2965 = vunpack.c.l.b16 %v820
    %v2966 = vunpack.c.h.b16 %v820
    %v2967 = vunpack.c.l.b16 %v821
    %v2968 = vunpack.c.h.b16 %v821
    %v2969 = vunpack.c.l.b16 %v822
    %v2970 = vunpack.c.h.b16 %v822
    %v2971 = vunpack.c.l.b16 %v823
    %v2972 = vunpack.c.h.b16 %v823
    %v2973 = vunpack.c.l.b16 %v824
    %v2974 = vunpack.c.h.b16 %v824
    %v2975 = vunpack.c.l.b16 %v825
    %v2976 = vunpack.c.h.b16 %v825
    %v2977 = vunpack.c.l.b16 %v826
    %v2978 = vunpack.c.h.b16 %v826
    %v2979 = vunpack.c.l.b16 %v827
    %v2980 = vunpack.c.h.b16 %v827
    %v2981 = vunpack.c.l.b16 %v828
    %v2982 = vunpack.c.h.b16 %v828
    %v2983 = vunpack.c.l.b16 %v829
    %v2984 = vunpack.c.h.b16 %v829
    %v2985 = vunpack.c.l.b16 %v830
    %v2986 = vunpack.c.h.b16 %v830
    %v2987 = vunpack.c.l.b16 %v831
    %v2988 = vunpack.c.h.b16 %v831
    %v2989 = vunpack.c.l.b16 %v832
    %v2990 = vunpack.c.h.b16 %v832
    %v2991 = vunpack.c.l.b16 %v833
    %v2992 = vunpack.c.h.b16 %v833
    %v2993 = vunpack.c.l.b16 %v834
    %v2994 = vunpack.c.h.b16 %v834
    %v2995 = vunpack.c.l.b16 %v835
    %v2996 = vunpack.c.h.b16 %v835
    %v2997 = vunpack.c.l.b16 %v836
    %v2998 = vunpack.c.h.b16 %v836
    %v2999 = vunpack.c.l.b16 %v837
    %v3000 = vunpack.c.h.b16 %v837
    %v3001 = vunpack.c.l.b16 %v838
    %v3002 = vunpack.c.h.b16 %v838
    %v3003 = vunpack.c.l.b16 %v839
    %v3004 = vunpack.c.h.b16 %v839
    %v3005 = vunpack.c.l.b16 %v840
    %v3006 = vunpack.c.h.b16 %v840
    %v3007 = vunpack.c.l.b16 %v841
    %v3008 = vunpack.c.h.b16 %v841
    %v3009 = vunpack.c.l.b16 %v842
    %v3010 = vunpack.c.h.b16 %v842
    %v3011 = vunpack.c.l.b16 %v843
    %v3012 = vunpack.c.h.b16 %v843
    %v3013 = vunpack.c.l.b16 %v844
    %v3014 = vunpack.c.h.b16 %v844
    %v3015 = vunpack.c.l.b16 %v845
    %v3016 = vunpack.c.h.b16 %v845
    %v3017 = vunpack.c.l.b16 %v846
    %v3018 = vunpack.c.h.b16 %v846
    %v3019 = vunpack.c.l.b16 %v847
    %v3020 = vunpack.c.h.b16 %v847
    %v3021 = vunpack.c.l.b16 %v848
    %v3022 = vunpack.c.h.b16 %v848
    %v3023 = vunpack.c.l.b16 %v849
    %v3024 = vunpack.c.h.b16 %v849
    %v3025 = vunpack.c.l.b16 %v850
    %v3026 = vunpack.c.h.b16 %v850
    %v3027 = vunpack.c.l.b16 %v851
    %v3028 = vunpack.c.h.b16 %v851
    %v3029 = vunpack.c.l.b16 %v852
    %v3030 = vunpack.c.h.b16 %v852
    %v3031 = vunpack.c.l.b16 %v853
    %v3032 = vunpack.c.h.b16 %v853
    %v3033 = vunpack.c.l.b16 %v854
    %v3034 = vunpack.c.h.b16 %v854
    %v3035 = vunpack.c.l.b16 %v855
    %v3036 = vunpack.c.h.b16 %v855
    %v3037 = vunpack.c.l.b16 %v856
    %v3038 = vunpack.c.h.b16 %v856
    %v3039 = vunpack.c.l.b16 %v857
    %v3040 = vunpack.c.h.b16 %v857
    %v3041 = vunpack.c.l.b16 %v858
    %v3042 = vunpack.c.h.b16 %v858
    %v3043 = vunpack.c.l.b16 %v859
    %v3044 = vunpack.c.h.b16 %v859
    %v3045 = vunpack.c.l.b16 %v860
    %v3046 = vunpack.c.h.b16 %v860
    %v3047 = vunpack.c.l.b16 %v861
    %v3048 = vunpack.c.h.b16 %v861
    %v3049 = vunpack.c.l.b16 %v862
    %v3050 = vunpack.c.h.b16 %v862
    %v3051 = vunpack.c.l.b16 %v863
    %v3052 = vunpack.c.h.b16 %v863
    %v3053 = vunpack.c.l.b16 %v864
    %v3054 = vunpack.c.h.b16 %v864
    %v3055 = vunpack.c.l.b16 %v865
    %v3056 = vunpack.c.h.b16 %v865
    %v3057 = vunpack.c.l.b16 %v866
    %v3058 = vunpack.c.h.b16 %v866
    %v3059 = vunpack.c.l.b16 %v867
    %v3060 = vunpack.c.h.b16 %v867
    %v3061 = vunpack.c.l.b16 %v868
    %v3062 = vunpack.c.h.b16 %v868
    %v3063 = vunpack.c.l.b16 %v869
    %v3064 = vunpack.c.h.b16 %v869
    %v3065 = vunpack.c.l.b16 %v870
    %v3066 = vunpack.c.h.b16 %v870
    %v3067 = vunpack.c.l.b16 %v871
    %v3068 = vunpack.c.h.b16 %v871
    %v3069 = vunpack.c.l.b16 %v872
    %v3070 = vunpack.c.h.b16 %v872
    %v3071 = vunpack.c.l.b16 %v873
    %v3072 = vunpack.c.h.b16 %v873
    %v3073 = vunpack.c.l.b16 %v874
    %v3074 = vunpack.c.h.b16 %v874
    %v3075 = vunpack.c.l.b16 %v875
    %v3076 = vunpack.c.h.b16 %v875
    %v3077 = vunpack.c.l.b16 %v876
    %v3078 = vunpack.c.h.b16 %v876
    %v3079 = vunpack.c.l.b16 %v877
    %v3080 = vunpack.c.h.b16 %v877
    %v3081 = vunpack.c.l.b16 %v878
    %v3082 = vunpack.c.h.b16 %v878
    %v3083 = vunpack.c.l.b16 %v879
    %v3084 = vunpack.c.h.b16 %v879
    %v3085 = vunpack.c.l.b16 %v880
    %v3086 = vunpack.c.h.b16 %v880
    %v3087 = vunpack.c.l.b16 %v881
    %v3088 = vunpack.c.h.b16 %v881
    %v3089 = vunpack.c.l.b16 %v882
    %v3090 = vunpack.c.h.b16 %v882
    %v3091 = vunpack.c.l.b16 %v883
    %v3092 = vunpack.c.h.b16 %v883
    %v3093 = vunpack.c.l.b16 %v884
    %v3094 = vunpack.c.h.b16 %v884
    %v3095 = vunpack.c.l.b16 %v885
    %v3096 = vunpack.c.h.b16 %v885
    %v3097 = vunpack.c.l.b16 %v886
    %v3098 = vunpack.c.h.b16 %v886
    %v3099 = vunpack.c.l.b16 %v887
    %v3100 = vunpack.c.h.b16 %v887
    %v3101 = vunpack.c.l.b16 %v888
    %v3102 = vunpack.c.h.b16 %v888
    %v3103 = vunpack.c.l.b16 %v889
    %v3104 = vunpack.c.h.b16 %v889
    %v3105 = vunpack.c.l.b16 %v890
    %v3106 = vunpack.c.h.b16 %v890
    %v3107 = vunpack.c.l.b16 %v891
    %v3108 = vunpack.c.h.b16 %v891
    %v3109 = vunpack.c.l.b16 %v892
    %v3110 = vunpack.c.h.b16 %v892
    %v3111 = vunpack.c.l.b16 %v893
    %v3112 = vunpack.c.h.b16 %v893
    %v3113 = vunpack.c.l.b16 %v894
    %v3114 = vunpack.c.h.b16 %v894
    %v3115 = vunpack.c.l.b16 %v895
    %v3116 = vunpack.c.h.b16 %v895
    %v3117 = vunpack.c.l.b16 %v896
    %v3118 = vunpack.c.h.b16 %v896
    %v3119 = vunpack.c.l.b16 %v897
    %v3120 = vunpack.c.h.b16 %v897
    %v3121 = vunpack.c.l.b16 %v898
    %v3122 = vunpack.c.h.b16 %v898
    %v3123 = vunpack.c.l.b16 %v899
    %v3124 = vunpack.c.h.b16 %v899
    %v3125 = vunpack.c.l.b16 %v900
    %v3126 = vunpack.c.h.b16 %v900
    %v3127 = vunpack.c.l.b16 %v901
    %v3128 = vunpack.c.h.b16 %v901
    %v3129 = vunpack.c.l.b16 %v902
    %v3130 = vunpack.c.h.b16 %v902
    %v3131 = vunpack.c.l.b16 %v903
    %v3132 = vunpack.c.h.b16 %v903
    %v3133 = vunpack.c.l.b16 %v904
    %v3134 = vunpack.c.h.b16 %v904
    %v3135 = vunpack.c.l.b16 %v905
    %v3136 = vunpack.c.h.b16 %v905
    %v3137 = vunpack.c.l.b16 %v906
    %v3138 = vunpack.c.h.b16 %v906
    %v3139 = vunpack.c.l.b16 %v907
    %v3140 = vunpack.c.h.b16 %v907
    %v3141 = vunpack.c.l.b16 %v908
    %v3142 = vunpack.c.h.b16 %v908
    %v3143 = vunpack.c.l.b16 %v909
    %v3144 = vunpack.c.h.b16 %v909
    %v3145 = vunpack.c.l.b16 %v910
    %v3146 = vunpack.c.h.b16 %v910
    %v3147 = vunpack.c.l.b16 %v911
    %v3148 = vunpack.c.h.b16 %v911
    %v3149 = vunpack.c.l.b16 %v912
    %v3150 = vunpack.c.h.b16 %v912
    %v3151 = vunpack.c.l.b16 %v913
    %v3152 = vunpack.c.h.b16 %v913
    %v3153 = vunpack.c.l.b16 %v914
    %v3154 = vunpack.c.h.b16 %v914
    %v3155 = vunpack.c.l.b16 %v915
    %v3156 = vunpack.c.h.b16 %v915
    %v3157 = vunpack.c.l.b16 %v916
    %v3158 = vunpack.c.h.b16 %v916
    %v3159 = vunpack.c.l.b16 %v917
    %v3160 = vunpack.c.h.b16 %v917
    %v3161 = vunpack.c.l.b16 %v918
    %v3162 = vunpack.c.h.b16 %v918
    %v3163 = vunpack.c.l.b16 %v919
    %v3164 = vunpack.c.h.b16 %v919
    %v3165 = vunpack.c.l.b16 %v920
    %v3166 = vunpack.c.h.b16 %v920
    %v3167 = vunpack.c.l.b16 %v921
    %v3168 = vunpack.c.h.b16 %v921
    %v3169 = vunpack.c.l.b16 %v922
    %v3170 = vunpack.c.h.b16 %v922
    %v3171 = vunpack.c.l.b16 %v923
    %v3172 = vunpack.c.h.b16 %v923
    %v3173 = vunpack.c.l.b16 %v924
    %v3174 = vunpack.c.h.b16 %v924
    %v3175 = vunpack.c.l.b16 %v925
    %v3176 = vunpack.c.h.b16 %v925
    %v3177 = vunpack.c.l.b16 %v926
    %v3178 = vunpack.c.h.b16 %v926
    %v3179 = vunpack.c.l.b16 %v927
    %v3180 = vunpack.c.h.b16 %v927
    %v3181 = vunpack.c.l.b16 %v928
    %v3182 = vunpack.c.h.b16 %v928
    %v3183 = vunpack.c.l.b16 %v929
    %v3184 = vunpack.c.h.b16 %v929
    %v3185 = vunpack.c.l.b16 %v930
    %v3186 = vunpack.c.h.b16 %v930
    %v3187 = vunpack.c.l.b16 %v931
    %v3188 = vunpack.c.h.b16 %v931
    %v3189 = vunpack.c.l.b16 %v932
    %v3190 = vunpack.c.h.b16 %v932
    %v3191 = vunpack.c.l.b16 %v933
    %v3192 = vunpack.c.h.b16 %v933
    %v3193 = vunpack.c.l.b16 %v934
    %v3194 = vunpack.c.h.b16 %v934
    %v3195 = vunpack.c.l.b16 %v935
    %v3196 = vunpack.c.h.b16 %v935
    %v3197 = vunpack.c.l.b16 %v936
    %v3198 = vunpack.c.h.b16 %v936
    %v3199 = vunpack.c.l.b16 %v937
    %v3200 = vunpack.c.h.b16 %v937
    %v3201 = vunpack.c.l.b16 %v938
    %v3202 = vunpack.c.h.b16 %v938
    %v3203 = vunpack.c.l.b16 %v939
    %v3204 = vunpack.c.h.b16 %v939
    %v3205 = vunpack.c.l.b16 %v940
    %v3206 = vunpack.c.h.b16 %v940
    %v3207 = vunpack.c.l.b16 %v941
    %v3208 = vunpack.c.h.b16 %v941
    %v3209 = vunpack.c.l.b16 %v942
    %v3210 = vunpack.c.h.b16 %v942
    %v3211 = vunpack.c.l.b16 %v943
    %v3212 = vunpack.c.h.b16 %v943
    %v3213 = vunpack.c.l.b16 %v944
    %v3214 = vunpack.c.h.b16 %v944
    %v3215 = vunpack.c.l.b16 %v945
    %v3216 = vunpack.c.h.b16 %v945
    %v3217 = vunpack.c.l.b16 %v946
    %v3218 = vunpack.c.h.b16 %v946
    %v3219 = vunpack.c.l.b16 %v947
    %v3220 = vunpack.c.h.b16 %v947
    %v3221 = vunpack.c.l.b16 %v948
    %v3222 = vunpack.c.h.b16 %v948
    %v3223 = vunpack.c.l.b16 %v949
    %v3224 = vunpack.c.h.b16 %v949
    %v3225 = vunpack.c.l.b16 %v950
    %v3226 = vunpack.c.h.b16 %v950
    %v3227 = vunpack.c.l.b16 %v951
    %v3228 = vunpack.c.h.b16 %v951
    %v3229 = vunpack.c.l.b16 %v952
    %v3230 = vunpack.c.h.b16 %v952
    %v3231 = vunpack.c.l.b16 %v953
    %v3232 = vunpack.c.h.b16 %v953
    %v3233 = vunpack.c.l.b16 %v954
    %v3234 = vunpack.c.h.b16 %v954
    %v3235 = vunpack.c.l.b16 %v955
    %v3236 = vunpack.c.h.b16 %v955
    %v3237 = vunpack.c.l.b16 %v956
    %v3238 = vunpack.c.h.b16 %v956
    %v3239 = vunpack.c.l.b16 %v957
    %v3240 = vunpack.c.h.b16 %v957
    %v3241 = vunpack.c.l.b16 %v958
    %v3242 = vunpack.c.h.b16 %v958
    %v3243 = vunpack.c.l.b16 %v959
    %v3244 = vunpack.c.h.b16 %v959
    %v3245 = vunpack.c.l.b16 %v960
    %v3246 = vunpack.c.h.b16 %v960
    %v3247 = vunpack.c.l.b16 %v961
    %v3248 = vunpack.c.h.b16 %v961
    %v3249 = vunpack.c.l.b16 %v962
    %v3250 = vunpack.c.h.b16 %v962
    %v3251 = vunpack.c.l.b16 %v963
    %v3252 = vunpack.c.h.b16 %v963
    %v3253 = vunpack.c.l.b16 %v964
    %v3254 = vunpack.c.h.b16 %v964
    %v3255 = vunpack.c.l.b16 %v965
    %v3256 = vunpack.c.h.b16 %v965
    %v3257 = vunpack.c.l.b16 %v966
    %v3258 = vunpack.c.h.b16 %v966
    %v3259 = vunpack.c.l.b16 %v967
    %v3260 = vunpack.c.h.b16 %v967
    %v3261 = vunpack.c.l.b16 %v968
    %v3262 = vunpack.c.h.b16 %v968
    %v3263 = vunpack.c.l.b16 %v969
    %v3264 = vunpack.c.h.b16 %v969
    %v3265 = vunpack.c.l.b16 %v970
    %v3266 = vunpack.c.h.b16 %v970
    %v3267 = vunpack.c.l.b16 %v971
    %v3268 = vunpack.c.h.b16 %v971
    %v3269 = vunpack.c.l.b16 %v972
    %v3270 = vunpack.c.h.b16 %v972
    %v3271 = vunpack.c.l.b16 %v973
    %v3272 = vunpack.c.h.b16 %v973
    %v3273 = vunpack.c.l.b16 %v974
    %v3274 = vunpack.c.h.b16 %v974
    %v3275 = vunpack.c.l.b16 %v975
    %v3276 = vunpack.c.h.b16 %v975
    %v3277 = vunpack.c.l.b16 %v976
    %v3278 = vunpack.c.h.b16 %v976
    %v3279 = vunpack.c.l.b16 %v977
    %v3280 = vunpack.c.h.b16 %v977
    %v3281 = vunpack.c.l.b16 %v978
    %v3282 = vunpack.c.h.b16 %v978
    %v3283 = vunpack.c.l.b16 %v979
    %v3284 = vunpack.c.h.b16 %v979
    %v3285 = vunpack.c.l.b16 %v980
    %v3286 = vunpack.c.h.b16 %v980
    %v3287 = vunpack.c.l.b16 %v981
    %v3288 = vunpack.c.h.b16 %v981
    %v3289 = vunpack.c.l.b16 %v982
    %v3290 = vunpack.c.h.b16 %v982
    %v3291 = vunpack.c.l.b16 %v983
    %v3292 = vunpack.c.h.b16 %v983
    %v3293 = vunpack.c.l.b16 %v984
    %v3294 = vunpack.c.h.b16 %v984
    %v3295 = vunpack.c.l.b16 %v985
    %v3296 = vunpack.c.h.b16 %v985
    %v3297 = vunpack.c.l.b16 %v986
    %v3298 = vunpack.c.h.b16 %v986
    %v3299 = vunpack.c.l.b16 %v987
    %v3300 = vunpack.c.h.b16 %v987
    %v3301 = vunpack.c.l.b16 %v988
    %v3302 = vunpack.c.h.b16 %v988
    %v3303 = vpack.c.b16 %v1771, %v1767
    %v3304 = vpack.c.b16 %v1772, %v1768
    %v3305 = vpack.c.b16 %v1773, %v1769
    %v3306 = vpack.c.b16 %v1774, %v1770
    %v3307 = vpack.c.b16 %v1779, %v1775
    %v3308 = vpack.c.b16 %v1780, %v1776
    %v3309 = vpack.c.b16 %v1781, %v1777
    %v3310 = vpack.c.b16 %v1782, %v1778
    %v3311 = vpack.c.b16 %v1787, %v1783
    %v3312 = vpack.c.b16 %v1788, %v1784
    %v3313 = vpack.c.b16 %v1789, %v1785
    %v3314 = vpack.c.b16 %v1790, %v1786
    %v3315 = vpack.c.b16 %v1795, %v1791
    %v3316 = vpack.c.b16 %v1796, %v1792
    %v3317 = vpack.c.b16 %v1797, %v1793
    %v3318 = vpack.c.b16 %v1798, %v1794
    %v3319 = vpack.c.b16 %v1803, %v1799
    %v3320 = vpack.c.b16 %v1804, %v1800
    %v3321 = vpack.c.b16 %v1805, %v1801
    %v3322 = vpack.c.b16 %v1806, %v1802
    %v3323 = vpack.c.b16 %v1811, %v1807
    %v3324 = vpack.c.b16 %v1812, %v1808
    %v3325 = vpack.c.b16 %v1813, %v1809
    %v3326 = vpack.c.b16 %v1814, %v1810
    %v3327 = vpack.c.b16 %v1819, %v1815
    %v3328 = vpack.c.b16 %v1820, %v1816
    %v3329 = vpack.c.b16 %v1821, %v1817
    %v3330 = vpack.c.b16 %v1822, %v1818
    %v3331 = vpack.c.b16 %v1827, %v1823
    %v3332 = vpack.c.b16 %v1828, %v1824
    %v3333 = vpack.c.b16 %v1829, %v1825
    %v3334 = vpack.c.b16 %v1830, %v1826
    %v3335 = vpack.c.b16 %v1835, %v1831
    %v3336 = vpack.c.b16 %v1836, %v1832
    %v3337 = vpack.c.b16 %v1837, %v1833
    %v3338 = vpack.c.b16 %v1838, %v1834
    %v3339 = vpack.c.b16 %v1843, %v1839
    %v3340 = vpack.c.b16 %v1844, %v1840
    %v3341 = vpack.c.b16 %v1845, %v1841
    %v3342 = vpack.c.b16 %v1846, %v1842
    %v3343 = vpack.c.b16 %v1851, %v1847
    %v3344 = vpack.c.b16 %v1852, %v1848
    %v3345 = vpack.c.b16 %v1853, %v1849
    %v3346 = vpack.c.b16 %v1854, %v1850
    %v3347 = vpack.c.b16 %v1859, %v1855
    %v3348 = vpack.c.b16 %v1860, %v1856
    %v3349 = vpack.c.b16 %v1861, %v1857
    %v3350 = vpack.c.b16 %v1862, %v1858
    %v3351 = vpack.c.b16 %v1867, %v1863
    %v3352 = vpack.c.b16 %v1868, %v1864
    %v3353 = vpack.c.b16 %v1869, %v1865
    %v3354 = vpack.c.b16 %v1870, %v1866
    %v3355 = vpack.c.b16 %v1875, %v1871
    %v3356 = vpack.c.b16 %v1876, %v1872
    %v3357 = vpack.c.b16 %v1877, %v1873
    %v3358 = vpack.c.b16 %v1878, %v1874
    %v3359 = vpack.c.b16 %v1883, %v1879
    %v3360 = vpack.c.b16 %v1884, %v1880
    %v3361 = vpack.c.b16 %v1885, %v1881
    %v3362 = vpack.c.b16 %v1886, %v1882
    %v3363 = vpack.c.b16 %v1891, %v1887
    %v3364 = vpack.c.b16 %v1892, %v1888
    %v3365 = vpack.c.b16 %v1893, %v1889
    %v3366 = vpack.c.b16 %v1894, %v1890
    %v3367 = vpack.c.b16 %v1899, %v1895
    %v3368 = vpack.c.b16 %v1900, %v1896
    %v3369 = vpack.c.b16 %v1901, %v1897
    %v3370 = vpack.c.b16 %v1902, %v1898
    %v3371 = vpack.c.b16 %v1907, %v1903
    %v3372 = vpack.c.b16 %v1908, %v1904
    %v3373 = vpack.c.b16 %v1909, %v1905
    %v3374 = vpack.c.b16 %v1910, %v1906
    %v3375 = vpack.c.b16 %v1915, %v1911
    %v3376 = vpack.c.b16 %v1916, %v1912
    %v3377 = vpack.c.b16 %v1917, %v1913
    %v3378 = vpack.c.b16 %v1918, %v1914
    %v3379 = vpack.c.b16 %v1923, %v1919
    %v3380 = vpack.c.b16 %v1924, %v1920
    %v3381 = vpack.c.b16 %v1925, %v1921
    %v3382 = vpack.c.b16 %v1926, %v1922
    %v3383 = vpack.c.b16 %v1931, %v1927
    %v3384 = vpack.c.b16 %v1932, %v1928
    %v3385 = vpack.c.b16 %v1933, %v1929
    %v3386 = vpack.c.b16 %v1934, %v1930
    %v3387 = vpack.c.b16 %v1939, %v1935
    %v3388 = vpack.c.b16 %v1940, %v1936
    %v3389 = vpack.c.b16 %v1941, %v1937
    %v3390 = vpack.c.b16 %v1942, %v1938
    %v3391 = vpack.c.b16 %v1947, %v1943
    %v3392 = vpack.c.b16 %v1948, %v1944
    %v3393 = vpack.c.b16 %v1949, %v1945
    %v3394 = vpack.c.b16 %v1950, %v1946
    %v3395 = vpack.c.b16 %v1955, %v1951
    %v3396 = vpack.c.b16 %v1956, %v1952
    %v3397 = vpack.c.b16 %v1957, %v1953
    %v3398 = vpack.c.b16 %v1958, %v1954
    %v3399 = vpack.c.b16 %v1963, %v1959
    %v3400 = vpack.c.b16 %v1964, %v1960
    %v3401 = vpack.c.b16 %v1965, %v1961
    %v3402 = vpack.c.b16 %v1966, %v1962
    %v3403 = vpack.c.b16 %v1971, %v1967
    %v3404 = vpack.c.b16 %v1972, %v1968
    %v3405 = vpack.c.b16 %v1973, %v1969
    %v3406 = vpack.c.b16 %v1974, %v1970
    %v3407 = vpack.c.b16 %v1979, %v1975
    %v3408 = vpack.c.b16 %v1980, %v1976
    %v3409 = vpack.c.b16 %v1981, %v1977
    %v3410 = vpack.c.b16 %v1982, %v1978
    %v3411 = vpack.c.b16 %v1987, %v1983
    %v3412 = vpack.c.b16 %v1988, %v1984
    %v3413 = vpack.c.b16 %v1989, %v1985
    %v3414 = vpack.c.b16 %v1990, %v1986
    %v3415 = vpack.c.b16 %v1995, %v1991
    %v3416 = vpack.c.b16 %v1996, %v1992
    %v3417 = vpack.c.b16 %v1997, %v1993
    %v3418 = vpack.c.b16 %v1998, %v1994
    %v3419 = vpack.c.b16 %v2003, %v1999
    %v3420 = vpack.c.b16 %v2004, %v2000
    %v3421 = vpack.c.b16 %v2005, %v2001
    %v3422 = vpack.c.b16 %v2006, %v2002
    %v3423 = vpack.c.b16 %v2011, %v2007
    %v3424 = vpack.c.b16 %v2012, %v2008
    %v3425 = vpack.c.b16 %v2013, %v2009
    %v3426 = vpack.c.b16 %v2014, %v2010
    %v3427 = vpack.c.b16 %v2019, %v2015
    %v3428 = vpack.c.b16 %v2020, %v2016
    %v3429 = vpack.c.b16 %v2021, %v2017
    %v3430 = vpack.c.b16 %v2022, %v2018
    %v3431 = vpack.c.b16 %v2027, %v2023
    %v3432 = vpack.c.b16 %v2028, %v2024
    %v3433 = vpack.c.b16 %v2029, %v2025
    %v3434 = vpack.c.b16 %v2030, %v2026
    %v3435 = vpack.c.b16 %v2035, %v2031
    %v3436 = vpack.c.b16 %v2036, %v2032
    %v3437 = vpack.c.b16 %v2037, %v2033
    %v3438 = vpack.c.b16 %v2038, %v2034
    %v3439 = vpack.c.b16 %v2043, %v2039
    %v3440 = vpack.c.b16 %v2044, %v2040
    %v3441 = vpack.c.b16 %v2045, %v2041
    %v3442 = vpack.c.b16 %v2046, %v2042
    %v3443 = vpack.c.b16 %v2051, %v2047
    %v3444 = vpack.c.b16 %v2052, %v2048
    %v3445 = vpack.c.b16 %v2053, %v2049
    %v3446 = vpack.c.b16 %v2054, %v2050
    %v3447 = vpack.c.b16 %v2059, %v2055
    %v3448 = vpack.c.b16 %v2060, %v2056
    %v3449 = vpack.c.b16 %v2061, %v2057
    %v3450 = vpack.c.b16 %v2062, %v2058
    %v3451 = vpack.c.b16 %v2067, %v2063
    %v3452 = vpack.c.b16 %v2068, %v2064
    %v3453 = vpack.c.b16 %v2069, %v2065
    %v3454 = vpack.c.b16 %v2070, %v2066
    %v3455 = vpack.c.b16 %v2075, %v2071
    %v3456 = vpack.c.b16 %v2076, %v2072
    %v3457 = vpack.c.b16 %v2077, %v2073
    %v3458 = vpack.c.b16 %v2078, %v2074
    %v3459 = vpack.c.b16 %v2083, %v2079
    %v3460 = vpack.c.b16 %v2084, %v2080
    %v3461 = vpack.c.b16 %v2085, %v2081
    %v3462 = vpack.c.b16 %v2086, %v2082
    %v3463 = vpack.c.b16 %v2091, %v2087
    %v3464 = vpack.c.b16 %v2092, %v2088
    %v3465 = vpack.c.b16 %v2093, %v2089
    %v3466 = vpack.c.b16 %v2094, %v2090
    %v3467 = vpack.c.b16 %v2099, %v2095
    %v3468 = vpack.c.b16 %v2100, %v2096
    %v3469 = vpack.c.b16 %v2101, %v2097
    %v3470 = vpack.c.b16 %v2102, %v2098
    %v3471 = vpack.c.b16 %v2107, %v2103
    %v3472 = vpack.c.b16 %v2108, %v2104
    %v3473 = vpack.c.b16 %v2109, %v2105
    %v3474 = vpack.c.b16 %v2110, %v2106
    %v3475 = vpack.c.b16 %v2115, %v2111
    %v3476 = vpack.c.b16 %v2116, %v2112
    %v3477 = vpack.c.b16 %v2117, %v2113
    %v3478 = vpack.c.b16 %v2118, %v2114
    %v3479 = vpack.c.b16 %v2123, %v2119
    %v3480 = vpack.c.b16 %v2124, %v2120
    %v3481 = vpack.c.b16 %v2125, %v2121
    %v3482 = vpack.c.b16 %v2126, %v2122
    %v3483 = vpack.c.b16 %v2131, %v2127
    %v3484 = vpack.c.b16 %v2132, %v2128
    %v3485 = vpack.c.b16 %v2133, %v2129
    %v3486 = vpack.c.b16 %v2134, %v2130
    %v3487 = vpack.c.b16 %v2139, %v2135
    %v3488 = vpack.c.b16 %v2140, %v2136
    %v3489 = vpack.c.b16 %v2141, %v2137
    %v3490 = vpack.c.b16 %v2142, %v2138
    %v3491 = vpack.c.b16 %v2147, %v2143
    %v3492 = vpack.c.b16 %v2148, %v2144
    %v3493 = vpack.c.b16 %v2149, %v2145
    %v3494 = vpack.c.b16 %v2150, %v2146
    %v3495 = vpack.c.b16 %v2155, %v2151
    %v3496 = vpack.c.b16 %v2156, %v2152
    %v3497 = vpack.c.b16 %v2157, %v2153
    %v3498 = vpack.c.b16 %v2158, %v2154
    %v3499 = vpack.c.b16 %v2163, %v2159
    %v3500 = vpack.c.b16 %v2164, %v2160
    %v3501 = vpack.c.b16 %v2165, %v2161
    %v3502 = vpack.c.b16 %v2166, %v2162
    %v3503 = vpack.c.b16 %v2171, %v2167
    %v3504 = vpack.c.b16 %v2172, %v2168
    %v3505 = vpack.c.b16 %v2173, %v2169
    %v3506 = vpack.c.b16 %v2174, %v2170
    %v3507 = vpack.c.b16 %v2179, %v2175
    %v3508 = vpack.c.b16 %v2180, %v2176
    %v3509 = vpack.c.b16 %v2181, %v2177
    %v3510 = vpack.c.b16 %v2182, %v2178
    %v3511 = vpack.c.b16 %v2187, %v2183
    %v3512 = vpack.c.b16 %v2188, %v2184
    %v3513 = vpack.c.b16 %v2189, %v2185
    %v3514 = vpack.c.b16 %v2190, %v2186
    %v3515 = vpack.c.b16 %v2195, %v2191
    %v3516 = vpack.c.b16 %v2196, %v2192
    %v3517 = vpack.c.b16 %v2197, %v2193
    %v3518 = vpack.c.b16 %v2198, %v2194
    %v3519 = vpack.c.b16 %v2203, %v2199
    %v3520 = vpack.c.b16 %v2204, %v2200
    %v3521 = vpack.c.b16 %v2205, %v2201
    %v3522 = vpack.c.b16 %v2206, %v2202
    %v3523 = vpack.c.b16 %v2211, %v2207
    %v3524 = vpack.c.b16 %v2212, %v2208
    %v3525 = vpack.c.b16 %v2213, %v2209
    %v3526 = vpack.c.b16 %v2214, %v2210
    %v3527 = vpack.c.b16 %v2219, %v2215
    %v3528 = vpack.c.b16 %v2220, %v2216
    %v3529 = vpack.c.b16 %v2221, %v2217
    %v3530 = vpack.c.b16 %v2222, %v2218
    %v3531 = vpack.c.b16 %v2227, %v2223
    %v3532 = vpack.c.b16 %v2228, %v2224
    %v3533 = vpack.c.b16 %v2229, %v2225
    %v3534 = vpack.c.b16 %v2230, %v2226
    %v3535 = vpack.c.b16 %v2235, %v2231
    %v3536 = vpack.c.b16 %v2236, %v2232
    %v3537 = vpack.c.b16 %v2237, %v2233
    %v3538 = vpack.c.b16 %v2238, %v2234
    %v3539 = vpack.c.b16 %v2243, %v2239
    %v3540 = vpack.c.b16 %v2244, %v2240
    %v3541 = vpack.c.b16 %v2245, %v2241
    %v3542 = vpack.c.b16 %v2246, %v2242
    %v3543 = vpack.c.b16 %v2251, %v2247
    %v3544 = vpack.c.b16 %v2252, %v2248
    %v3545 = vpack.c.b16 %v2253, %v2249
    %v3546 = vpack.c.b16 %v2254, %v2250
    %v3547 = vpack.c.b16 %v2259, %v2255
    %v3548 = vpack.c.b16 %v2260, %v2256
    %v3549 = vpack.c.b16 %v2261, %v2257
    %v3550 = vpack.c.b16 %v2262, %v2258
    %v3551 = vpack.c.b16 %v2267, %v2263
    %v3552 = vpack.c.b16 %v2268, %v2264
    %v3553 = vpack.c.b16 %v2269, %v2265
    %v3554 = vpack.c.b16 %v2270, %v2266
    %v3555 = vpack.c.b16 %v2275, %v2271
    %v3556 = vpack.c.b16 %v2276, %v2272
    %v3557 = vpack.c.b16 %v2277, %v2273
    %v3558 = vpack.c.b16 %v2278, %v2274
    %v3559 = vpack.c.b16 %v2283, %v2279
    %v3560 = vpack.c.b16 %v2284, %v2280
    %v3561 = vpack.c.b16 %v2285, %v2281
    %v3562 = vpack.c.b16 %v2286, %v2282
    %v3563 = vpack.c.b16 %v2291, %v2287
    %v3564 = vpack.c.b16 %v2292, %v2288
    %v3565 = vpack.c.b16 %v2293, %v2289
    %v3566 = vpack.c.b16 %v2294, %v2290
    %v3567 = vpack.c.b16 %v2299, %v2295
    %v3568 = vpack.c.b16 %v2300, %v2296
    %v3569 = vpack.c.b16 %v2301, %v2297
    %v3570 = vpack.c.b16 %v2302, %v2298
    %v3571 = vpack.c.b16 %v2307, %v2303
    %v3572 = vpack.c.b16 %v2308, %v2304
    %v3573 = vpack.c.b16 %v2309, %v2305
    %v3574 = vpack.c.b16 %v2310, %v2306
    %v3575 = vpack.c.b16 %v2315, %v2311
    %v3576 = vpack.c.b16 %v2316, %v2312
    %v3577 = vpack.c.b16 %v2317, %v2313
    %v3578 = vpack.c.b16 %v2318, %v2314
    %v3579 = vpack.c.b16 %v2323, %v2319
    %v3580 = vpack.c.b16 %v2324, %v2320
    %v3581 = vpack.c.b16 %v2325, %v2321
    %v3582 = vpack.c.b16 %v2326, %v2322
    %v3583 = vpack.c.b16 %v2331, %v2327
    %v3584 = vpack.c.b16 %v2332, %v2328
    %v3585 = vpack.c.b16 %v2333, %v2329
    %v3586 = vpack.c.b16 %v2334, %v2330
    %v3587 = vpack.c.b16 %v2339, %v2335
    %v3588 = vpack.c.b16 %v2340, %v2336
    %v3589 = vpack.c.b16 %v2341, %v2337
    %v3590 = vpack.c.b16 %v2342, %v2338
    %v3591 = vpack.c.b16 %v2347, %v2343
    %v3592 = vpack.c.b16 %v2348, %v2344
    %v3593 = vpack.c.b16 %v2349, %v2345
    %v3594 = vpack.c.b16 %v2350, %v2346
    %v3595 = vpack.c.b16 %v2355, %v2351
    %v3596 = vpack.c.b16 %v2356, %v2352
    %v3597 = vpack.c.b16 %v2357, %v2353
    %v3598 = vpack.c.b16 %v2358, %v2354
    %v3599 = vpack.c.b16 %v2363, %v2359
    %v3600 = vpack.c.b16 %v2364, %v2360
    %v3601 = vpack.c.b16 %v2365, %v2361
    %v3602 = vpack.c.b16 %v2366, %v2362
    %v3603 = vpack.c.b16 %v2371, %v2367
    %v3604 = vpack.c.b16 %v2372, %v2368
    %v3605 = vpack.c.b16 %v2373, %v2369
    %v3606 = vpack.c.b16 %v2374, %v2370
    %v3607 = vpack.c.b16 %v2379, %v2375
    %v3608 = vpack.c.b16 %v2380, %v2376
    %v3609 = vpack.c.b16 %v2381, %v2377
    %v3610 = vpack.c.b16 %v2382, %v2378
    %v3611 = vpack.c.b16 %v2387, %v2383
    %v3612 = vpack.c.b16 %v2388, %v2384
    %v3613 = vpack.c.b16 %v2389, %v2385
    %v3614 = vpack.c.b16 %v2390, %v2386
    %v3615 = vpack.c.b16 %v2395, %v2391
    %v3616 = vpack.c.b16 %v2396, %v2392
    %v3617 = vpack.c.b16 %v2397, %v2393
    %v3618 = vpack.c.b16 %v2398, %v2394
    %v3619 = vpack.c.b16 %v2403, %v2399
    %v3620 = vpack.c.b16 %v2404, %v2400
    %v3621 = vpack.c.b16 %v2405, %v2401
    %v3622 = vpack.c.b16 %v2406, %v2402
    %v3623 = vpack.c.b16 %v2411, %v2407
    %v3624 = vpack.c.b16 %v2412, %v2408
    %v3625 = vpack.c.b16 %v2413, %v2409
    %v3626 = vpack.c.b16 %v2414, %v2410
    %v3627 = vpack.c.b16 %v2419, %v2415
    %v3628 = vpack.c.b16 %v2420, %v2416
    %v3629 = vpack.c.b16 %v2421, %v2417
    %v3630 = vpack.c.b16 %v2422, %v2418
    %v3631 = vpack.c.b16 %v2427, %v2423
    %v3632 = vpack.c.b16 %v2428, %v2424
    %v3633 = vpack.c.b16 %v2429, %v2425
    %v3634 = vpack.c.b16 %v2430, %v2426
    %v3635 = vpack.c.b16 %v2435, %v2431
    %v3636 = vpack.c.b16 %v2436, %v2432
    %v3637 = vpack.c.b16 %v2437, %v2433
    %v3638 = vpack.c.b16 %v2438, %v2434
    %v3639 = vpack.c.b16 %v2443, %v2439
    %v3640 = vpack.c.b16 %v2444, %v2440
    %v3641 = vpack.c.b16 %v2445, %v2441
    %v3642 = vpack.c.b16 %v2446, %v2442
    %v3643 = vpack.c.b16 %v2451, %v2447
    %v3644 = vpack.c.b16 %v2452, %v2448
    %v3645 = vpack.c.b16 %v2453, %v2449
    %v3646 = vpack.c.b16 %v2454, %v2450
    %v3647 = vpack.c.b16 %v2459, %v2455
    %v3648 = vpack.c.b16 %v2460, %v2456
    %v3649 = vpack.c.b16 %v2461, %v2457
    %v3650 = vpack.c.b16 %v2462, %v2458
    %v3651 = vpack.c.b16 %v2467, %v2463
    %v3652 = vpack.c.b16 %v2468, %v2464
    %v3653 = vpack.c.b16 %v2469, %v2465
    %v3654 = vpack.c.b16 %v2470, %v2466
    %v3655 = vpack.c.b16 %v2475, %v2471
    %v3656 = vpack.c.b16 %v2476, %v2472
    %v3657 = vpack.c.b16 %v2477, %v2473
    %v3658 = vpack.c.b16 %v2478, %v2474
    %v3659 = vpack.c.b16 %v2483, %v2479
    %v3660 = vpack.c.b16 %v2484, %v2480
    %v3661 = vpack.c.b16 %v2485, %v2481
    %v3662 = vpack.c.b16 %v2486, %v2482
    %v3663 = vpack.c.b16 %v2491, %v2487
    %v3664 = vpack.c.b16 %v2492, %v2488
    %v3665 = vpack.c.b16 %v2493, %v2489
    %v3666 = vpack.c.b16 %v2494, %v2490
    %v3667 = vpack.c.b16 %v2499, %v2495
    %v3668 = vpack.c.b16 %v2500, %v2496
    %v3669 = vpack.c.b16 %v2501, %v2497
    %v3670 = vpack.c.b16 %v2502, %v2498
    %v3671 = vpack.c.b16 %v2507, %v2503
    %v3672 = vpack.c.b16 %v2508, %v2504
    %v3673 = vpack.c.b16 %v2509, %v2505
    %v3674 = vpack.c.b16 %v2510, %v2506
    %v3675 = vpack.c.b16 %v2515, %v2511
    %v3676 = vpack.c.b16 %v2516, %v2512
    %v3677 = vpack.c.b16 %v2517, %v2513
    %v3678 = vpack.c.b16 %v2518, %v2514
    %v3679 = vpack.c.b16 %v2523, %v2519
    %v3680 = vpack.c.b16 %v2524, %v2520
    %v3681 = vpack.c.b16 %v2525, %v2521
    %v3682 = vpack.c.b16 %v2526, %v2522
    %v3683 = vpack.c.b16 %v2531, %v2527
    %v3684 = vpack.c.b16 %v2532, %v2528
    %v3685 = vpack.c.b16 %v2533, %v2529
    %v3686 = vpack.c.b16 %v2534, %v2530
    %v3687 = vpack.c.b16 %v2539, %v2535
    %v3688 = vpack.c.b16 %v2540, %v2536
    %v3689 = vpack.c.b16 %v2541, %v2537
    %v3690 = vpack.c.b16 %v2542, %v2538
    %v3691 = vpack.c.b16 %v2547, %v2543
    %v3692 = vpack.c.b16 %v2548, %v2544
    %v3693 = vpack.c.b16 %v2549, %v2545
    %v3694 = vpack.c.b16 %v2550, %v2546
    %v3695 = vpack.c.b16 %v2555, %v2551
    %v3696 = vpack.c.b16 %v2556, %v2552
    %v3697 = vpack.c.b16 %v2557, %v2553
    %v3698 = vpack.c.b16 %v2558, %v2554
    %v3699 = vpack.c.b16 %v2563, %v2559
    %v3700 = vpack.c.b16 %v2564, %v2560
    %v3701 = vpack.c.b16 %v2565, %v2561
    %v3702 = vpack.c.b16 %v2566, %v2562
    %v3703 = vpack.c.b16 %v2571, %v2567
    %v3704 = vpack.c.b16 %v2572, %v2568
    %v3705 = vpack.c.b16 %v2573, %v2569
    %v3706 = vpack.c.b16 %v2574, %v2570
    %v3707 = vpack.c.b16 %v2579, %v2575
    %v3708 = vpack.c.b16 %v2580, %v2576
    %v3709 = vpack.c.b16 %v2581, %v2577
    %v3710 = vpack.c.b16 %v2582, %v2578
    %v3711 = vpack.c.b16 %v2587, %v2583
    %v3712 = vpack.c.b16 %v2588, %v2584
    %v3713 = vpack.c.b16 %v2589, %v2585
    %v3714 = vpack.c.b16 %v2590, %v2586
    %v3715 = vpack.c.b16 %v2595, %v2591
    %v3716 = vpack.c.b16 %v2596, %v2592
    %v3717 = vpack.c.b16 %v2597, %v2593
    %v3718 = vpack.c.b16 %v2598, %v2594
    %v3719 = vpack.c.b16 %v2603, %v2599
    %v3720 = vpack.c.b16 %v2604, %v2600
    %v3721 = vpack.c.b16 %v2605, %v2601
    %v3722 = vpack.c.b16 %v2606, %v2602
    %v3723 = vpack.c.b16 %v2611, %v2607
    %v3724 = vpack.c.b16 %v2612, %v2608
    %v3725 = vpack.c.b16 %v2613, %v2609
    %v3726 = vpack.c.b16 %v2614, %v2610
    %v3727 = vpack.c.b16 %v2619, %v2615
    %v3728 = vpack.c.b16 %v2620, %v2616
    %v3729 = vpack.c.b16 %v2621, %v2617
    %v3730 = vpack.c.b16 %v2622, %v2618
    %v3731 = vpack.c.b16 %v2627, %v2623
    %v3732 = vpack.c.b16 %v2628, %v2624
    %v3733 = vpack.c.b16 %v2629, %v2625
    %v3734 = vpack.c.b16 %v2630, %v2626
    %v3735 = vpack.c.b16 %v2635, %v2631
    %v3736 = vpack.c.b16 %v2636, %v2632
    %v3737 = vpack.c.b16 %v2637, %v2633
    %v3738 = vpack.c.b16 %v2638, %v2634
    %v3739 = vpack.c.b16 %v2643, %v2639
    %v3740 = vpack.c.b16 %v2644, %v2640
    %v3741 = vpack.c.b16 %v2645, %v2641
    %v3742 = vpack.c.b16 %v2646, %v2642
    %v3743 = vpack.c.b16 %v2651, %v2647
    %v3744 = vpack.c.b16 %v2652, %v2648
    %v3745 = vpack.c.b16 %v2653, %v2649
    %v3746 = vpack.c.b16 %v2654, %v2650
    %v3747 = vpack.c.b16 %v2659, %v2655
    %v3748 = vpack.c.b16 %v2660, %v2656
    %v3749 = vpack.c.b16 %v2661, %v2657
    %v3750 = vpack.c.b16 %v2662, %v2658
    %v3751 = vpack.c.b16 %v2667, %v2663
    %v3752 = vpack.c.b16 %v2668, %v2664
    %v3753 = vpack.c.b16 %v2669, %v2665
    %v3754 = vpack.c.b16 %v2670, %v2666
    %v3755 = vpack.c.b16 %v2675, %v2671
    %v3756 = vpack.c.b16 %v2676, %v2672
    %v3757 = vpack.c.b16 %v2677, %v2673
    %v3758 = vpack.c.b16 %v2678, %v2674
    %v3759 = vpack.c.b16 %v2683, %v2679
    %v3760 = vpack.c.b16 %v2684, %v2680
    %v3761 = vpack.c.b16 %v2685, %v2681
    %v3762 = vpack.c.b16 %v2686, %v2682
    %v3763 = vpack.c.b16 %v2691, %v2687
    %v3764 = vpack.c.b16 %v2692, %v2688
    %v3765 = vpack.c.b16 %v2693, %v2689
    %v3766 = vpack.c.b16 %v2694, %v2690
    %v3767 = vpack.c.b16 %v2699, %v2695
    %v3768 = vpack.c.b16 %v2700, %v2696
    %v3769 = vpack.c.b16 %v2701, %v2697
    %v3770 = vpack.c.b16 %v2702, %v2698
    %v3771 = vpack.c.b16 %v2707, %v2703
    %v3772 = vpack.c.b16 %v2708, %v2704
    %v3773 = vpack.c.b16 %v2709, %v2705
    %v3774 = vpack.c.b16 %v2710, %v2706
    %v3775 = vpack.c.b16 %v2715, %v2711
    %v3776 = vpack.c.b16 %v2716, %v2712
    %v3777 = vpack.c.b16 %v2717, %v2713
    %v3778 = vpack.c.b16 %v2718, %v2714
    %v3779 = vpack.c.b16 %v2723, %v2719
    %v3780 = vpack.c.b16 %v2724, %v2720
    %v3781 = vpack.c.b16 %v2725, %v2721
    %v3782 = vpack.c.b16 %v2726, %v2722
    %v3783 = vpack.c.b16 %v2731, %v2727
    %v3784 = vpack.c.b16 %v2732, %v2728
    %v3785 = vpack.c.b16 %v2733, %v2729
    %v3786 = vpack.c.b16 %v2734, %v2730
    %v3787 = vpack.c.b16 %v2739, %v2735
    %v3788 = vpack.c.b16 %v2740, %v2736
    %v3789 = vpack.c.b16 %v2741, %v2737
    %v3790 = vpack.c.b16 %v2742, %v2738
    %v3791 = vpack.c.b16 %v2747, %v2743
    %v3792 = vpack.c.b16 %v2748, %v2744
    %v3793 = vpack.c.b16 %v2749, %v2745
    %v3794 = vpack.c.b16 %v2750, %v2746
    %v3795 = vpack.c.b16 %v2755, %v2751
    %v3796 = vpack.c.b16 %v2756, %v2752
    %v3797 = vpack.c.b16 %v2757, %v2753
    %v3798 = vpack.c.b16 %v2758, %v2754
    %v3799 = vpack.c.b16 %v2763, %v2759
    %v3800 = vpack.c.b16 %v2764, %v2760
    %v3801 = vpack.c.b16 %v2765, %v2761
    %v3802 = vpack.c.b16 %v2766, %v2762
    %v3803 = vpack.c.b16 %v2771, %v2767
    %v3804 = vpack.c.b16 %v2772, %v2768
    %v3805 = vpack.c.b16 %v2773, %v2769
    %v3806 = vpack.c.b16 %v2774, %v2770
    %v3807 = vpack.c.b16 %v2779, %v2775
    %v3808 = vpack.c.b16 %v2780, %v2776
    %v3809 = vpack.c.b16 %v2781, %v2777
    %v3810 = vpack.c.b16 %v2782, %v2778
    %v3811 = vpack.c.b16 %v2787, %v2783
    %v3812 = vpack.c.b16 %v2788, %v2784
    %v3813 = vpack.c.b16 %v2789, %v2785
    %v3814 = vpack.c.b16 %v2790, %v2786
    %v3815 = vpack.c.b16 %v2795, %v2791
    %v3816 = vpack.c.b16 %v2796, %v2792
    %v3817 = vpack.c.b16 %v2797, %v2793
    %v3818 = vpack.c.b16 %v2798, %v2794
    %v3819 = vpack.c.b16 %v2803, %v2799
    %v3820 = vpack.c.b16 %v2804, %v2800
    %v3821 = vpack.c.b16 %v2805, %v2801
    %v3822 = vpack.c.b16 %v2806, %v2802
    %v3823 = vpack.c.b16 %v2811, %v2807
    %v3824 = vpack.c.b16 %v2812, %v2808
    %v3825 = vpack.c.b16 %v2813, %v2809
    %v3826 = vpack.c.b16 %v2814, %v2810
    %v3827 = vpack.c.b16 %v2819, %v2815
    %v3828 = vpack.c.b16 %v2820, %v2816
    %v3829 = vpack.c.b16 %v2821, %v2817
    %v3830 = vpack.c.b16 %v2822, %v2818
    %v3831 = vpack.c.b16 %v2827, %v2823
    %v3832 = vpack.c.b16 %v2828, %v2824
    %v3833 = vpack.c.b16 %v2829, %v2825
    %v3834 = vpack.c.b16 %v2830, %v2826
    %v3835 = vpack.c.b16 %v2835, %v2831
    %v3836 = vpack.c.b16 %v2836, %v2832
    %v3837 = vpack.c.b16 %v2837, %v2833
    %v3838 = vpack.c.b16 %v2838, %v2834
    %v3839 = vpack.c.b16 %v2843, %v2839
    %v3840 = vpack.c.b16 %v2844, %v2840
    %v3841 = vpack.c.b16 %v2845, %v2841
    %v3842 = vpack.c.b16 %v2846, %v2842
    %v3843 = vpack.c.b16 %v2851, %v2847
    %v3844 = vpack.c.b16 %v2852, %v2848
    %v3845 = vpack.c.b16 %v2853, %v2849
    %v3846 = vpack.c.b16 %v2854, %v2850
    %v3847 = vpack.c.b16 %v2859, %v2855
    %v3848 = vpack.c.b16 %v2860, %v2856
    %v3849 = vpack.c.b16 %v2861, %v2857
    %v3850 = vpack.c.b16 %v2862, %v2858
    %v3851 = vpack.c.b16 %v2867, %v2863
    %v3852 = vpack.c.b16 %v2868, %v2864
    %v3853 = vpack.c.b16 %v2869, %v2865
    %v3854 = vpack.c.b16 %v2870, %v2866
    %v3855 = vpack.c.b16 %v2875, %v2871
    %v3856 = vpack.c.b16 %v2876, %v2872
    %v3857 = vpack.c.b16 %v2877, %v2873
    %v3858 = vpack.c.b16 %v2878, %v2874
    %v3859 = vpack.c.b16 %v2883, %v2879
    %v3860 = vpack.c.b16 %v2884, %v2880
    %v3861 = vpack.c.b16 %v2885, %v2881
    %v3862 = vpack.c.b16 %v2886, %v2882
    %v3863 = vpack.c.b16 %v2891, %v2887
    %v3864 = vpack.c.b16 %v2892, %v2888
    %v3865 = vpack.c.b16 %v2893, %v2889
    %v3866 = vpack.c.b16 %v2894, %v2890
    %v3867 = vpack.c.b16 %v2899, %v2895
    %v3868 = vpack.c.b16 %v2900, %v2896
    %v3869 = vpack.c.b16 %v2901, %v2897
    %v3870 = vpack.c.b16 %v2902, %v2898
    %v3871 = vpack.c.b16 %v2907, %v2903
    %v3872 = vpack.c.b16 %v2908, %v2904
    %v3873 = vpack.c.b16 %v2909, %v2905
    %v3874 = vpack.c.b16 %v2910, %v2906
    %v3875 = vpack.c.b16 %v2915, %v2911
    %v3876 = vpack.c.b16 %v2916, %v2912
    %v3877 = vpack.c.b16 %v2917, %v2913
    %v3878 = vpack.c.b16 %v2918, %v2914
    %v3879 = vpack.c.b16 %v2923, %v2919
    %v3880 = vpack.c.b16 %v2924, %v2920
    %v3881 = vpack.c.b16 %v2925, %v2921
    %v3882 = vpack.c.b16 %v2926, %v2922
    %v3883 = vpack.c.b16 %v2931, %v2927
    %v3884 = vpack.c.b16 %v2932, %v2928
    %v3885 = vpack.c.b16 %v2933, %v2929
    %v3886 = vpack.c.b16 %v2934, %v2930
    %v3887 = vpack.c.b16 %v2939, %v2935
    %v3888 = vpack.c.b16 %v2940, %v2936
    %v3889 = vpack.c.b16 %v2941, %v2937
    %v3890 = vpack.c.b16 %v2942, %v2938
    %v3891 = vpack.c.b16 %v2947, %v2943
    %v3892 = vpack.c.b16 %v2948, %v2944
    %v3893 = vpack.c.b16 %v2949, %v2945
    %v3894 = vpack.c.b16 %v2950, %v2946
    %v3895 = vpack.c.b16 %v2955, %v2951
    %v3896 = vpack.c.b16 %v2956, %v2952
    %v3897 = vpack.c.b16 %v2957, %v2953
    %v3898 = vpack.c.b16 %v2958, %v2954
    %v3899 = vpack.c.b16 %v2963, %v2959
    %v3900 = vpack.c.b16 %v2964, %v2960
    %v3901 = vpack.c.b16 %v2965, %v2961
    %v3902 = vpack.c.b16 %v2966, %v2962
    %v3903 = vpack.c.b16 %v2971, %v2967
    %v3904 = vpack.c.b16 %v2972, %v2968
    %v3905 = vpack.c.b16 %v2973, %v2969
    %v3906 = vpack.c.b16 %v2974, %v2970
    %v3907 = vpack.c.b16 %v2979, %v2975
    %v3908 = vpack.c.b16 %v2980, %v2976
    %v3909 = vpack.c.b16 %v2981, %v2977
    %v3910 = vpack.c.b16 %v2982, %v2978
    %v3911 = vpack.c.b16 %v2987, %v2983
    %v3912 = vpack.c.b16 %v2988, %v2984
    %v3913 = vpack.c.b16 %v2989, %v2985
    %v3914 = vpack.c.b16 %v2990, %v2986
    %v3915 = vpack.c.b16 %v2995, %v2991
    %v3916 = vpack.c.b16 %v2996, %v2992
    %v3917 = vpack.c.b16 %v2997, %v2993
    %v3918 = vpack.c.b16 %v2998, %v2994
    %v3919 = vpack.c.b16 %v3003, %v2999
    %v3920 = vpack.c.b16 %v3004, %v3000
    %v3921 = vpack.c.b16 %v3005, %v3001
    %v3922 = vpack.c.b16 %v3006, %v3002
    %v3923 = vpack.c.b16 %v3011, %v3007
    %v3924 = vpack.c.b16 %v3012, %v3008
    %v3925 = vpack.c.b16 %v3013, %v3009
    %v3926 = vpack.c.b16 %v3014, %v3010
    %v3927 = vpack.c.b16 %v3019, %v3015
    %v3928 = vpack.c.b16 %v3020, %v3016
    %v3929 = vpack.c.b16 %v3021, %v3017
    %v3930 = vpack.c.b16 %v3022, %v3018
    %v3931 = vpack.c.b16 %v3027, %v3023
    %v3932 = vpack.c.b16 %v3028, %v3024
    %v3933 = vpack.c.b16 %v3029, %v3025
    %v3934 = vpack.c.b16 %v3030, %v3026
    %v3935 = vpack.c.b16 %v3035, %v3031
    %v3936 = vpack.c.b16 %v3036, %v3032
    %v3937 = vpack.c.b16 %v3037, %v3033
    %v3938 = vpack.c.b16 %v3038, %v3034
    %v3939 = vpack.c.b16 %v3043, %v3039
    %v3940 = vpack.c.b16 %v3044, %v3040
    %v3941 = vpack.c.b16 %v3045, %v3041
    %v3942 = vpack.c.b16 %v3046, %v3042
    %v3943 = vpack.c.b16 %v3051, %v3047
    %v3944 = vpack.c.b16 %v3052, %v3048
    %v3945 = vpack.c.b16 %v3053, %v3049
    %v3946 = vpack.c.b16 %v3054, %v3050
    %v3947 = vpack.c.b16 %v3059, %v3055
    %v3948 = vpack.c.b16 %v3060, %v3056
    %v3949 = vpack.c.b16 %v3061, %v3057
    %v3950 = vpack.c.b16 %v3062, %v3058
    %v3951 = vpack.c.b16 %v3067, %v3063
    %v3952 = vpack.c.b16 %v3068, %v3064
    %v3953 = vpack.c.b16 %v3069, %v3065
    %v3954 = vpack.c.b16 %v3070, %v3066
    %v3955 = vpack.c.b16 %v3075, %v3071
    %v3956 = vpack.c.b16 %v3076, %v3072
    %v3957 = vpack.c.b16 %v3077, %v3073
    %v3958 = vpack.c.b16 %v3078, %v3074
    %v3959 = vpack.c.b16 %v3083, %v3079
    %v3960 = vpack.c.b16 %v3084, %v3080
    %v3961 = vpack.c.b16 %v3085, %v3081
    %v3962 = vpack.c.b16 %v3086, %v3082
    %v3963 = vpack.c.b16 %v3091, %v3087
    %v3964 = vpack.c.b16 %v3092, %v3088
    %v3965 = vpack.c.b16 %v3093, %v3089
    %v3966 = vpack.c.b16 %v3094, %v3090
    %v3967 = vpack.c.b16 %v3099, %v3095
    %v3968 = vpack.c.b16 %v3100, %v3096
    %v3969 = vpack.c.b16 %v3101, %v3097
    %v3970 = vpack.c.b16 %v3102, %v3098
    %v3971 = vpack.c.b16 %v3107, %v3103
    %v3972 = vpack.c.b16 %v3108, %v3104
    %v3973 = vpack.c.b16 %v3109, %v3105
    %v3974 = vpack.c.b16 %v3110, %v3106
    %v3975 = vpack.c.b16 %v3115, %v3111
    %v3976 = vpack.c.b16 %v3116, %v3112
    %v3977 = vpack.c.b16 %v3117, %v3113
    %v3978 = vpack.c.b16 %v3118, %v3114
    %v3979 = vpack.c.b16 %v3123, %v3119
    %v3980 = vpack.c.b16 %v3124, %v3120
    %v3981 = vpack.c.b16 %v3125, %v3121
    %v3982 = vpack.c.b16 %v3126, %v3122
    %v3983 = vpack.c.b16 %v3131, %v3127
    %v3984 = vpack.c.b16 %v3132, %v3128
    %v3985 = vpack.c.b16 %v3133, %v3129
    %v3986 = vpack.c.b16 %v3134, %v3130
    %v3987 = vpack.c.b16 %v3139, %v3135
    %v3988 = vpack.c.b16 %v3140, %v3136
    %v3989 = vpack.c.b16 %v3141, %v3137
    %v3990 = vpack.c.b16 %v3142, %v3138
    %v3991 = vpack.c.b16 %v3147, %v3143
    %v3992 = vpack.c.b16 %v3148, %v3144
    %v3993 = vpack.c.b16 %v3149, %v3145
    %v3994 = vpack.c.b16 %v3150, %v3146
    %v3995 = vpack.c.b16 %v3155, %v3151
    %v3996 = vpack.c.b16 %v3156, %v3152
    %v3997 = vpack.c.b16 %v3157, %v3153
    %v3998 = vpack.c.b16 %v3158, %v3154
    %v3999 = vpack.c.b16 %v3163, %v3159
    %v4000 = vpack.c.b16 %v3164, %v3160
    %v4001 = vpack.c.b16 %v3165, %v3161
    %v4002 = vpack.c.b16 %v3166, %v3162
    %v4003 = vpack.c.b16 %v3171, %v3167
    %v4004 = vpack.c.b16 %v3172, %v3168
    %v4005 = vpack.c.b16 %v3173, %v3169
    %v4006 = vpack.c.b16 %v3174, %v3170
    %v4007 = vpack.c.b16 %v3179, %v3175
    %v4008 = vpack.c.b16 %v3180, %v3176
    %v4009 = vpack.c.b16 %v3181, %v3177
    %v4010 = vpack.c.b16 %v3182, %v3178
    %v4011 = vpack.c.b16 %v3187, %v3183
    %v4012 = vpack.c.b16 %v3188, %v3184
    %v4013 = vpack.c.b16 %v3189, %v3185
    %v4014 = vpack.c.b16 %v3190, %v3186
    %v4015 = vpack.c.b16 %v3195, %v3191
    %v4016 = vpack.c.b16 %v3196, %v3192
    %v4017 = vpack.c.b16 %v3197, %v3193
    %v4018 = vpack.c.b16 %v3198, %v3194
    %v4019 = vpack.c.b16 %v3203, %v3199
    %v4020 = vpack.c.b16 %v3204, %v3200
    %v4021 = vpack.c.b16 %v3205, %v3201
    %v4022 = vpack.c.b16 %v3206, %v3202
    %v4023 = vpack.c.b16 %v3211, %v3207
    %v4024 = vpack.c.b16 %v3212, %v3208
    %v4025 = vpack.c.b16 %v3213, %v3209
    %v4026 = vpack.c.b16 %v3214, %v3210
    %v4027 = vpack.c.b16 %v3219, %v3215
    %v4028 = vpack.c.b16 %v3220, %v3216
    %v4029 = vpack.c.b16 %v3221, %v3217
    %v4030 = vpack.c.b16 %v3222, %v3218
    %v4031 = vpack.c.b16 %v3227, %v3223
    %v4032 = vpack.c.b16 %v3228, %v3224
    %v4033 = vpack.c.b16 %v3229, %v3225
    %v4034 = vpack.c.b16 %v3230, %v3226
    %v4035 = vpack.c.b16 %v3235, %v3231
    %v4036 = vpack.c.b16 %v3236, %v3232
    %v4037 = vpack.c.b16 %v3237, %v3233
    %v4038 = vpack.c.b16 %v3238, %v3234
    %v4039 = vpack.c.b16 %v3243, %v3239
    %v4040 = vpack.c.b16 %v3244, %v3240
    %v4041 = vpack.c.b16 %v3245, %v3241
    %v4042 = vpack.c.b16 %v3246, %v3242
    %v4043 = vpack.c.b16 %v3251, %v3247
    %v4044 = vpack.c.b16 %v3252, %v3248
    %v4045 = vpack.c.b16 %v3253, %v3249
    %v4046 = vpack.c.b16 %v3254, %v3250
    %v4047 = vpack.c.b16 %v3259, %v3255
    %v4048 = vpack.c.b16 %v3260, %v3256
    %v4049 = vpack.c.b16 %v3261, %v3257
    %v4050 = vpack.c.b16 %v3262, %v3258
    %v4051 = vpack.c.b16 %v3267, %v3263
    %v4052 = vpack.c.b16 %v3268, %v3264
    %v4053 = vpack.c.b16 %v3269, %v3265
    %v4054 = vpack.c.b16 %v3270, %v3266
    %v4055 = vpack.c.b16 %v3275, %v3271
    %v4056 = vpack.c.b16 %v3276, %v3272
    %v4057 = vpack.c.b16 %v3277, %v3273
    %v4058 = vpack.c.b16 %v3278, %v3274
    %v4059 = vpack.c.b16 %v3283, %v3279
    %v4060 = vpack.c.b16 %v3284, %v3280
    %v4061 = vpack.c.b16 %v3285, %v3281
    %v4062 = vpack.c.b16 %v3286, %v3282
    %v4063 = vpack.c.b16 %v3291, %v3287
    %v4064 = vpack.c.b16 %v3292, %v3288
    %v4065 = vpack.c.b16 %v3293, %v3289
    %v4066 = vpack.c.b16 %v3294, %v3290
    %v4067 = vpack.c.b16 %v3299, %v3295
    %v4068 = vpack.c.b16 %v3300, %v3296
    %v4069 = vpack.c.b16 %v3301, %v3297
    %v4070 = vpack.c.b16 %v3302, %v3298
    %4839 = vmatpush.bf16.msra.mxu0 %v3331
    %4840 = vmatpush.bf16.msra.mxu0 %v3327
    %4841 = vmatpush.bf16.msra.mxu0 %v3323
    %4842 = vmatpush.bf16.msra.mxu0 %v3319
    %4843 = vmatpush.bf16.msra.mxu0 %v3315
    %4844 = vmatpush.bf16.msra.mxu0 %v3311
    %4845 = vmatpush.bf16.msra.mxu0 %v3307
    %4846 = vmatpush.bf16.msra.mxu0 %v3303
    %4847 = vmatmul.bf16.gmra.mxu0 %v197
    %v4848 = vpop.f32.mrf.mxu0
    %v4849 = vadd.f32 %v991, %v4848
    %v4850 = vpop.f32.mrf.mxu0
    %v4851 = vadd.f32 %v991, %v4850
    %4852 = vdwg.mxu0
    %4853 = vmatpush.bf16.msra.mxu0 %v3363
    %4854 = vmatpush.bf16.msra.mxu0 %v3359
    %4855 = vmatpush.bf16.msra.mxu0 %v3355
    %4856 = vmatpush.bf16.msra.mxu0 %v3351
    %4857 = vmatpush.bf16.msra.mxu0 %v3347
    %4858 = vmatpush.bf16.msra.mxu0 %v3343
    %4859 = vmatpush.bf16.msra.mxu0 %v3339
    %4860 = vmatpush.bf16.msra.mxu0 %v3335
    %4861 = vmatmul.bf16.gmra.mxu0 %v198
    %v4862 = vpop.f32.mrf.mxu0
    %v4863 = vadd.f32 %v4849, %v4862
    %v4864 = vpop.f32.mrf.mxu0
    %v4865 = vadd.f32 %v4851, %v4864
    %4866 = vdwg.mxu0
    %4867 = vmatpush.bf16.msra.mxu0 %v3395
    %4868 = vmatpush.bf16.msra.mxu0 %v3391
    %4869 = vmatpush.bf16.msra.mxu0 %v3387
    %4870 = vmatpush.bf16.msra.mxu0 %v3383
    %4871 = vmatpush.bf16.msra.mxu0 %v3379
    %4872 = vmatpush.bf16.msra.mxu0 %v3375
    %4873 = vmatpush.bf16.msra.mxu0 %v3371
    %4874 = vmatpush.bf16.msra.mxu0 %v3367
    %4875 = vmatmul.bf16.gmra.mxu0 %v199
    %v4876 = vpop.f32.mrf.mxu0
    %v4877 = vadd.f32 %v4863, %v4876
    %v4878 = vpop.f32.mrf.mxu0
    %v4879 = vadd.f32 %v4865, %v4878
    %4880 = vdwg.mxu0
    %4881 = vmatpush.bf16.msra.mxu0 %v3427
    %4882 = vmatpush.bf16.msra.mxu0 %v3423
    %4883 = vmatpush.bf16.msra.mxu0 %v3419
    %4884 = vmatpush.bf16.msra.mxu0 %v3415
    %4885 = vmatpush.bf16.msra.mxu0 %v3411
    %4886 = vmatpush.bf16.msra.mxu0 %v3407
    %4887 = vmatpush.bf16.msra.mxu0 %v3403
    %4888 = vmatpush.bf16.msra.mxu0 %v3399
    %4889 = vmatmul.bf16.gmra.mxu0 %v200
    %v4890 = vpop.f32.mrf.mxu0
    %v4891 = vadd.f32 %v4877, %v4890
    %v4892 = vpop.f32.mrf.mxu0
    %v4893 = vadd.f32 %v4879, %v4892
    %4894 = vdwg.mxu0
    %4895 = vmatpush.bf16.msra.mxu0 %v3459
    %4896 = vmatpush.bf16.msra.mxu0 %v3455
    %4897 = vmatpush.bf16.msra.mxu0 %v3451
    %4898 = vmatpush.bf16.msra.mxu0 %v3447
    %4899 = vmatpush.bf16.msra.mxu0 %v3443
    %4900 = vmatpush.bf16.msra.mxu0 %v3439
    %4901 = vmatpush.bf16.msra.mxu0 %v3435
    %4902 = vmatpush.bf16.msra.mxu0 %v3431
    %4903 = vmatmul.bf16.gmra.mxu0 %v201
    %v4904 = vpop.f32.mrf.mxu0
    %v4905 = vadd.f32 %v4891, %v4904
    %v4906 = vpop.f32.mrf.mxu0
    %v4907 = vadd.f32 %v4893, %v4906
    %4908 = vdwg.mxu0
    %4909 = vmatpush.bf16.msra.mxu0 %v3491
    %4910 = vmatpush.bf16.msra.mxu0 %v3487
    %4911 = vmatpush.bf16.msra.mxu0 %v3483
    %4912 = vmatpush.bf16.msra.mxu0 %v3479
    %4913 = vmatpush.bf16.msra.mxu0 %v3475
    %4914 = vmatpush.bf16.msra.mxu0 %v3471
    %4915 = vmatpush.bf16.msra.mxu0 %v3467
    %4916 = vmatpush.bf16.msra.mxu0 %v3463
    %4917 = vmatmul.bf16.gmra.mxu0 %v202
    %v4918 = vpop.f32.mrf.mxu0
    %v4919 = vadd.f32 %v4905, %v4918
    %v4920 = vpop.f32.mrf.mxu0
    %v4921 = vadd.f32 %v4907, %v4920
    %4922 = vdwg.mxu0
    %4923 = vmatpush.bf16.msra.mxu0 %v3523
    %4924 = vmatpush.bf16.msra.mxu0 %v3519
    %4925 = vmatpush.bf16.msra.mxu0 %v3515
    %4926 = vmatpush.bf16.msra.mxu0 %v3511
    %4927 = vmatpush.bf16.msra.mxu0 %v3507
    %4928 = vmatpush.bf16.msra.mxu0 %v3503
    %4929 = vmatpush.bf16.msra.mxu0 %v3499
    %4930 = vmatpush.bf16.msra.mxu0 %v3495
    %4931 = vmatmul.bf16.gmra.mxu0 %v203
    %v4932 = vpop.f32.mrf.mxu0
    %v4933 = vadd.f32 %v4919, %v4932
    %v4934 = vpop.f32.mrf.mxu0
    %v4935 = vadd.f32 %v4921, %v4934
    %4936 = vdwg.mxu0
    %4937 = vmatpush.bf16.msra.mxu0 %v3555
    %4938 = vmatpush.bf16.msra.mxu0 %v3551
    %4939 = vmatpush.bf16.msra.mxu0 %v3547
    %4940 = vmatpush.bf16.msra.mxu0 %v3543
    %4941 = vmatpush.bf16.msra.mxu0 %v3539
    %4942 = vmatpush.bf16.msra.mxu0 %v3535
    %4943 = vmatpush.bf16.msra.mxu0 %v3531
    %4944 = vmatpush.bf16.msra.mxu0 %v3527
    %4945 = vmatmul.bf16.gmra.mxu0 %v204
    %v4946 = vpop.f32.mrf.mxu0
    %v4947 = vadd.f32 %v4933, %v4946
    %v4948 = vpop.f32.mrf.mxu0
    %v4949 = vadd.f32 %v4935, %v4948
    %4950 = vdwg.mxu0
    %4951 = vmatpush.bf16.msra.mxu0 %v3587
    %4952 = vmatpush.bf16.msra.mxu0 %v3583
    %4953 = vmatpush.bf16.msra.mxu0 %v3579
    %4954 = vmatpush.bf16.msra.mxu0 %v3575
    %4955 = vmatpush.bf16.msra.mxu0 %v3571
    %4956 = vmatpush.bf16.msra.mxu0 %v3567
    %4957 = vmatpush.bf16.msra.mxu0 %v3563
    %4958 = vmatpush.bf16.msra.mxu0 %v3559
    %4959 = vmatmul.bf16.gmra.mxu0 %v205
    %v4960 = vpop.f32.mrf.mxu0
    %v4961 = vadd.f32 %v4947, %v4960
    %v4962 = vpop.f32.mrf.mxu0
    %v4963 = vadd.f32 %v4949, %v4962
    %4964 = vdwg.mxu0
    %4965 = vmatpush.bf16.msra.mxu0 %v3619
    %4966 = vmatpush.bf16.msra.mxu0 %v3615
    %4967 = vmatpush.bf16.msra.mxu0 %v3611
    %4968 = vmatpush.bf16.msra.mxu0 %v3607
    %4969 = vmatpush.bf16.msra.mxu0 %v3603
    %4970 = vmatpush.bf16.msra.mxu0 %v3599
    %4971 = vmatpush.bf16.msra.mxu0 %v3595
    %4972 = vmatpush.bf16.msra.mxu0 %v3591
    %4973 = vmatmul.bf16.gmra.mxu0 %v206
    %v4974 = vpop.f32.mrf.mxu0
    %v4975 = vadd.f32 %v4961, %v4974
    %v4976 = vpop.f32.mrf.mxu0
    %v4977 = vadd.f32 %v4963, %v4976
    %4978 = vdwg.mxu0
    %4979 = vmatpush.bf16.msra.mxu0 %v3651
    %4980 = vmatpush.bf16.msra.mxu0 %v3647
    %4981 = vmatpush.bf16.msra.mxu0 %v3643
    %4982 = vmatpush.bf16.msra.mxu0 %v3639
    %4983 = vmatpush.bf16.msra.mxu0 %v3635
    %4984 = vmatpush.bf16.msra.mxu0 %v3631
    %4985 = vmatpush.bf16.msra.mxu0 %v3627
    %4986 = vmatpush.bf16.msra.mxu0 %v3623
    %4987 = vmatmul.bf16.gmra.mxu0 %v207
    %v4988 = vpop.f32.mrf.mxu0
    %v4989 = vadd.f32 %v4975, %v4988
    %v4990 = vpop.f32.mrf.mxu0
    %v4991 = vadd.f32 %v4977, %v4990
    %4992 = vdwg.mxu0
    %4993 = vmatpush.bf16.msra.mxu0 %v3683
    %4994 = vmatpush.bf16.msra.mxu0 %v3679
    %4995 = vmatpush.bf16.msra.mxu0 %v3675
    %4996 = vmatpush.bf16.msra.mxu0 %v3671
    %4997 = vmatpush.bf16.msra.mxu0 %v3667
    %4998 = vmatpush.bf16.msra.mxu0 %v3663
    %4999 = vmatpush.bf16.msra.mxu0 %v3659
    %5000 = vmatpush.bf16.msra.mxu0 %v3655
    %5001 = vmatmul.bf16.gmra.mxu0 %v208
    %v5002 = vpop.f32.mrf.mxu0
    %v5003 = vadd.f32 %v4989, %v5002
    %v5004 = vpop.f32.mrf.mxu0
    %v5005 = vadd.f32 %v4991, %v5004
    %5006 = vdwg.mxu0
    %5007 = vmatpush.bf16.msra.mxu0 %v3715
    %5008 = vmatpush.bf16.msra.mxu0 %v3711
    %5009 = vmatpush.bf16.msra.mxu0 %v3707
    %5010 = vmatpush.bf16.msra.mxu0 %v3703
    %5011 = vmatpush.bf16.msra.mxu0 %v3699
    %5012 = vmatpush.bf16.msra.mxu0 %v3695
    %5013 = vmatpush.bf16.msra.mxu0 %v3691
    %5014 = vmatpush.bf16.msra.mxu0 %v3687
    %5015 = vmatmul.bf16.gmra.mxu0 %v209
    %v5016 = vpop.f32.mrf.mxu0
    %v5017 = vadd.f32 %v5003, %v5016
    %v5018 = vpop.f32.mrf.mxu0
    %v5019 = vadd.f32 %v5005, %v5018
    %5020 = vdwg.mxu0
    %5021 = vmatpush.bf16.msra.mxu0 %v3747
    %5022 = vmatpush.bf16.msra.mxu0 %v3743
    %5023 = vmatpush.bf16.msra.mxu0 %v3739
    %5024 = vmatpush.bf16.msra.mxu0 %v3735
    %5025 = vmatpush.bf16.msra.mxu0 %v3731
    %5026 = vmatpush.bf16.msra.mxu0 %v3727
    %5027 = vmatpush.bf16.msra.mxu0 %v3723
    %5028 = vmatpush.bf16.msra.mxu0 %v3719
    %5029 = vmatmul.bf16.gmra.mxu0 %v210
    %v5030 = vpop.f32.mrf.mxu0
    %v5031 = vadd.f32 %v5017, %v5030
    %v5032 = vpop.f32.mrf.mxu0
    %v5033 = vadd.f32 %v5019, %v5032
    %5034 = vdwg.mxu0
    %5035 = vmatpush.bf16.msra.mxu0 %v3779
    %5036 = vmatpush.bf16.msra.mxu0 %v3775
    %5037 = vmatpush.bf16.msra.mxu0 %v3771
    %5038 = vmatpush.bf16.msra.mxu0 %v3767
    %5039 = vmatpush.bf16.msra.mxu0 %v3763
    %5040 = vmatpush.bf16.msra.mxu0 %v3759
    %5041 = vmatpush.bf16.msra.mxu0 %v3755
    %5042 = vmatpush.bf16.msra.mxu0 %v3751
    %5043 = vmatmul.bf16.gmra.mxu0 %v211
    %v5044 = vpop.f32.mrf.mxu0
    %v5045 = vadd.f32 %v5031, %v5044
    %v5046 = vpop.f32.mrf.mxu0
    %v5047 = vadd.f32 %v5033, %v5046
    %5048 = vdwg.mxu0
    %5049 = vmatpush.bf16.msra.mxu0 %v3811
    %5050 = vmatpush.bf16.msra.mxu0 %v3807
    %5051 = vmatpush.bf16.msra.mxu0 %v3803
    %5052 = vmatpush.bf16.msra.mxu0 %v3799
    %5053 = vmatpush.bf16.msra.mxu0 %v3795
    %5054 = vmatpush.bf16.msra.mxu0 %v3791
    %5055 = vmatpush.bf16.msra.mxu0 %v3787
    %5056 = vmatpush.bf16.msra.mxu0 %v3783
    %5057 = vmatmul.bf16.gmra.mxu0 %v212
    %v5058 = vpop.f32.mrf.mxu0
    %v5059 = vadd.f32 %v5045, %v5058
    %v5060 = vpop.f32.mrf.mxu0
    %v5061 = vadd.f32 %v5047, %v5060
    %5062 = vdwg.mxu0
    %5063 = vmatpush.bf16.msra.mxu0 %v3843
    %5064 = vmatpush.bf16.msra.mxu0 %v3839
    %5065 = vmatpush.bf16.msra.mxu0 %v3835
    %5066 = vmatpush.bf16.msra.mxu0 %v3831
    %5067 = vmatpush.bf16.msra.mxu0 %v3827
    %5068 = vmatpush.bf16.msra.mxu0 %v3823
    %5069 = vmatpush.bf16.msra.mxu0 %v3819
    %5070 = vmatpush.bf16.msra.mxu0 %v3815
    %5071 = vmatmul.bf16.gmra.mxu0 %v213
    %v5072 = vpop.f32.mrf.mxu0
    %v5073 = vadd.f32 %v5059, %v5072
    %v5074 = vpop.f32.mrf.mxu0
    %v5075 = vadd.f32 %v5061, %v5074
    %5076 = vdwg.mxu0
    %5077 = vmatpush.bf16.msra.mxu0 %v3875
    %5078 = vmatpush.bf16.msra.mxu0 %v3871
    %5079 = vmatpush.bf16.msra.mxu0 %v3867
    %5080 = vmatpush.bf16.msra.mxu0 %v3863
    %5081 = vmatpush.bf16.msra.mxu0 %v3859
    %5082 = vmatpush.bf16.msra.mxu0 %v3855
    %5083 = vmatpush.bf16.msra.mxu0 %v3851
    %5084 = vmatpush.bf16.msra.mxu0 %v3847
    %5085 = vmatmul.bf16.gmra.mxu0 %v214
    %v5086 = vpop.f32.mrf.mxu0
    %v5087 = vadd.f32 %v5073, %v5086
    %v5088 = vpop.f32.mrf.mxu0
    %v5089 = vadd.f32 %v5075, %v5088
    %5090 = vdwg.mxu0
    %5091 = vmatpush.bf16.msra.mxu0 %v3907
    %5092 = vmatpush.bf16.msra.mxu0 %v3903
    %5093 = vmatpush.bf16.msra.mxu0 %v3899
    %5094 = vmatpush.bf16.msra.mxu0 %v3895
    %5095 = vmatpush.bf16.msra.mxu0 %v3891
    %5096 = vmatpush.bf16.msra.mxu0 %v3887
    %5097 = vmatpush.bf16.msra.mxu0 %v3883
    %5098 = vmatpush.bf16.msra.mxu0 %v3879
    %5099 = vmatmul.bf16.gmra.mxu0 %v215
    %v5100 = vpop.f32.mrf.mxu0
    %v5101 = vadd.f32 %v5087, %v5100
    %v5102 = vpop.f32.mrf.mxu0
    %v5103 = vadd.f32 %v5089, %v5102
    %5104 = vdwg.mxu0
    %5105 = vmatpush.bf16.msra.mxu0 %v3939
    %5106 = vmatpush.bf16.msra.mxu0 %v3935
    %5107 = vmatpush.bf16.msra.mxu0 %v3931
    %5108 = vmatpush.bf16.msra.mxu0 %v3927
    %5109 = vmatpush.bf16.msra.mxu0 %v3923
    %5110 = vmatpush.bf16.msra.mxu0 %v3919
    %5111 = vmatpush.bf16.msra.mxu0 %v3915
    %5112 = vmatpush.bf16.msra.mxu0 %v3911
    %5113 = vmatmul.bf16.gmra.mxu0 %v216
    %v5114 = vpop.f32.mrf.mxu0
    %v5115 = vadd.f32 %v5101, %v5114
    %v5116 = vpop.f32.mrf.mxu0
    %v5117 = vadd.f32 %v5103, %v5116
    %5118 = vdwg.mxu0
    %5119 = vmatpush.bf16.msra.mxu0 %v3971
    %5120 = vmatpush.bf16.msra.mxu0 %v3967
    %5121 = vmatpush.bf16.msra.mxu0 %v3963
    %5122 = vmatpush.bf16.msra.mxu0 %v3959
    %5123 = vmatpush.bf16.msra.mxu0 %v3955
    %5124 = vmatpush.bf16.msra.mxu0 %v3951
    %5125 = vmatpush.bf16.msra.mxu0 %v3947
    %5126 = vmatpush.bf16.msra.mxu0 %v3943
    %5127 = vmatmul.bf16.gmra.mxu0 %v217
    %v5128 = vpop.f32.mrf.mxu0
    %v5129 = vadd.f32 %v5115, %v5128
    %v5130 = vpop.f32.mrf.mxu0
    %v5131 = vadd.f32 %v5117, %v5130
    %5132 = vdwg.mxu0
    %5133 = vmatpush.bf16.msra.mxu0 %v4003
    %5134 = vmatpush.bf16.msra.mxu0 %v3999
    %5135 = vmatpush.bf16.msra.mxu0 %v3995
    %5136 = vmatpush.bf16.msra.mxu0 %v3991
    %5137 = vmatpush.bf16.msra.mxu0 %v3987
    %5138 = vmatpush.bf16.msra.mxu0 %v3983
    %5139 = vmatpush.bf16.msra.mxu0 %v3979
    %5140 = vmatpush.bf16.msra.mxu0 %v3975
    %5141 = vmatmul.bf16.gmra.mxu0 %v218
    %v5142 = vpop.f32.mrf.mxu0
    %v5143 = vadd.f32 %v5129, %v5142
    %v5144 = vpop.f32.mrf.mxu0
    %v5145 = vadd.f32 %v5131, %v5144
    %5146 = vdwg.mxu0
    %5147 = vmatpush.bf16.msra.mxu0 %v4035
    %5148 = vmatpush.bf16.msra.mxu0 %v4031
    %5149 = vmatpush.bf16.msra.mxu0 %v4027
    %5150 = vmatpush.bf16.msra.mxu0 %v4023
    %5151 = vmatpush.bf16.msra.mxu0 %v4019
    %5152 = vmatpush.bf16.msra.mxu0 %v4015
    %5153 = vmatpush.bf16.msra.mxu0 %v4011
    %5154 = vmatpush.bf16.msra.mxu0 %v4007
    %5155 = vmatmul.bf16.gmra.mxu0 %v219
    %v5156 = vpop.f32.mrf.mxu0
    %v5157 = vadd.f32 %v5143, %v5156
    %v5158 = vpop.f32.mrf.mxu0
    %v5159 = vadd.f32 %v5145, %v5158
    %5160 = vdwg.mxu0
    %5161 = vmatpush.bf16.msra.mxu0 %v4067
    %5162 = vmatpush.bf16.msra.mxu0 %v4063
    %5163 = vmatpush.bf16.msra.mxu0 %v4059
    %5164 = vmatpush.bf16.msra.mxu0 %v4055
    %5165 = vmatpush.bf16.msra.mxu0 %v4051
    %5166 = vmatpush.bf16.msra.mxu0 %v4047
    %5167 = vmatpush.bf16.msra.mxu0 %v4043
    %5168 = vmatpush.bf16.msra.mxu0 %v4039
    %5169 = vmatmul.bf16.gmra.mxu0 %v220
    %v5170 = vpop.f32.mrf.mxu0
    %v5171 = vadd.f32 %v5157, %v5170
    %v5172 = vpop.f32.mrf.mxu0
    %v5173 = vadd.f32 %v5159, %v5172
    %5174 = vdwg.mxu0
    %5175 = vmatpush.bf16.msra.mxu0 %v3332
    %5176 = vmatpush.bf16.msra.mxu0 %v3328
    %5177 = vmatpush.bf16.msra.mxu0 %v3324
    %5178 = vmatpush.bf16.msra.mxu0 %v3320
    %5179 = vmatpush.bf16.msra.mxu0 %v3316
    %5180 = vmatpush.bf16.msra.mxu0 %v3312
    %5181 = vmatpush.bf16.msra.mxu0 %v3308
    %5182 = vmatpush.bf16.msra.mxu0 %v3304
    %5183 = vmatmul.bf16.gmra.mxu0 %v197
    %v5184 = vpop.f32.mrf.mxu0
    %v5185 = vadd.f32 %v992, %v5184
    %v5186 = vpop.f32.mrf.mxu0
    %v5187 = vadd.f32 %v992, %v5186
    %5188 = vdwg.mxu0
    %5189 = vmatpush.bf16.msra.mxu0 %v3364
    %5190 = vmatpush.bf16.msra.mxu0 %v3360
    %5191 = vmatpush.bf16.msra.mxu0 %v3356
    %5192 = vmatpush.bf16.msra.mxu0 %v3352
    %5193 = vmatpush.bf16.msra.mxu0 %v3348
    %5194 = vmatpush.bf16.msra.mxu0 %v3344
    %5195 = vmatpush.bf16.msra.mxu0 %v3340
    %5196 = vmatpush.bf16.msra.mxu0 %v3336
    %5197 = vmatmul.bf16.gmra.mxu0 %v198
    %v5198 = vpop.f32.mrf.mxu0
    %v5199 = vadd.f32 %v5185, %v5198
    %v5200 = vpop.f32.mrf.mxu0
    %v5201 = vadd.f32 %v5187, %v5200
    %5202 = vdwg.mxu0
    %5203 = vmatpush.bf16.msra.mxu0 %v3396
    %5204 = vmatpush.bf16.msra.mxu0 %v3392
    %5205 = vmatpush.bf16.msra.mxu0 %v3388
    %5206 = vmatpush.bf16.msra.mxu0 %v3384
    %5207 = vmatpush.bf16.msra.mxu0 %v3380
    %5208 = vmatpush.bf16.msra.mxu0 %v3376
    %5209 = vmatpush.bf16.msra.mxu0 %v3372
    %5210 = vmatpush.bf16.msra.mxu0 %v3368
    %5211 = vmatmul.bf16.gmra.mxu0 %v199
    %v5212 = vpop.f32.mrf.mxu0
    %v5213 = vadd.f32 %v5199, %v5212
    %v5214 = vpop.f32.mrf.mxu0
    %v5215 = vadd.f32 %v5201, %v5214
    %5216 = vdwg.mxu0
    %5217 = vmatpush.bf16.msra.mxu0 %v3428
    %5218 = vmatpush.bf16.msra.mxu0 %v3424
    %5219 = vmatpush.bf16.msra.mxu0 %v3420
    %5220 = vmatpush.bf16.msra.mxu0 %v3416
    %5221 = vmatpush.bf16.msra.mxu0 %v3412
    %5222 = vmatpush.bf16.msra.mxu0 %v3408
    %5223 = vmatpush.bf16.msra.mxu0 %v3404
    %5224 = vmatpush.bf16.msra.mxu0 %v3400
    %5225 = vmatmul.bf16.gmra.mxu0 %v200
    %v5226 = vpop.f32.mrf.mxu0
    %v5227 = vadd.f32 %v5213, %v5226
    %v5228 = vpop.f32.mrf.mxu0
    %v5229 = vadd.f32 %v5215, %v5228
    %5230 = vdwg.mxu0
    %5231 = vmatpush.bf16.msra.mxu0 %v3460
    %5232 = vmatpush.bf16.msra.mxu0 %v3456
    %5233 = vmatpush.bf16.msra.mxu0 %v3452
    %5234 = vmatpush.bf16.msra.mxu0 %v3448
    %5235 = vmatpush.bf16.msra.mxu0 %v3444
    %5236 = vmatpush.bf16.msra.mxu0 %v3440
    %5237 = vmatpush.bf16.msra.mxu0 %v3436
    %5238 = vmatpush.bf16.msra.mxu0 %v3432
    %5239 = vmatmul.bf16.gmra.mxu0 %v201
    %v5240 = vpop.f32.mrf.mxu0
    %v5241 = vadd.f32 %v5227, %v5240
    %v5242 = vpop.f32.mrf.mxu0
    %v5243 = vadd.f32 %v5229, %v5242
    %5244 = vdwg.mxu0
    %5245 = vmatpush.bf16.msra.mxu0 %v3492
    %5246 = vmatpush.bf16.msra.mxu0 %v3488
    %5247 = vmatpush.bf16.msra.mxu0 %v3484
    %5248 = vmatpush.bf16.msra.mxu0 %v3480
    %5249 = vmatpush.bf16.msra.mxu0 %v3476
    %5250 = vmatpush.bf16.msra.mxu0 %v3472
    %5251 = vmatpush.bf16.msra.mxu0 %v3468
    %5252 = vmatpush.bf16.msra.mxu0 %v3464
    %5253 = vmatmul.bf16.gmra.mxu0 %v202
    %v5254 = vpop.f32.mrf.mxu0
    %v5255 = vadd.f32 %v5241, %v5254
    %v5256 = vpop.f32.mrf.mxu0
    %v5257 = vadd.f32 %v5243, %v5256
    %5258 = vdwg.mxu0
    %5259 = vmatpush.bf16.msra.mxu0 %v3524
    %5260 = vmatpush.bf16.msra.mxu0 %v3520
    %5261 = vmatpush.bf16.msra.mxu0 %v3516
    %5262 = vmatpush.bf16.msra.mxu0 %v3512
    %5263 = vmatpush.bf16.msra.mxu0 %v3508
    %5264 = vmatpush.bf16.msra.mxu0 %v3504
    %5265 = vmatpush.bf16.msra.mxu0 %v3500
    %5266 = vmatpush.bf16.msra.mxu0 %v3496
    %5267 = vmatmul.bf16.gmra.mxu0 %v203
    %v5268 = vpop.f32.mrf.mxu0
    %v5269 = vadd.f32 %v5255, %v5268
    %v5270 = vpop.f32.mrf.mxu0
    %v5271 = vadd.f32 %v5257, %v5270
    %5272 = vdwg.mxu0
    %5273 = vmatpush.bf16.msra.mxu0 %v3556
    %5274 = vmatpush.bf16.msra.mxu0 %v3552
    %5275 = vmatpush.bf16.msra.mxu0 %v3548
    %5276 = vmatpush.bf16.msra.mxu0 %v3544
    %5277 = vmatpush.bf16.msra.mxu0 %v3540
    %5278 = vmatpush.bf16.msra.mxu0 %v3536
    %5279 = vmatpush.bf16.msra.mxu0 %v3532
    %5280 = vmatpush.bf16.msra.mxu0 %v3528
    %5281 = vmatmul.bf16.gmra.mxu0 %v204
    %v5282 = vpop.f32.mrf.mxu0
    %v5283 = vadd.f32 %v5269, %v5282
    %v5284 = vpop.f32.mrf.mxu0
    %v5285 = vadd.f32 %v5271, %v5284
    %5286 = vdwg.mxu0
    %5287 = vmatpush.bf16.msra.mxu0 %v3588
    %5288 = vmatpush.bf16.msra.mxu0 %v3584
    %5289 = vmatpush.bf16.msra.mxu0 %v3580
    %5290 = vmatpush.bf16.msra.mxu0 %v3576
    %5291 = vmatpush.bf16.msra.mxu0 %v3572
    %5292 = vmatpush.bf16.msra.mxu0 %v3568
    %5293 = vmatpush.bf16.msra.mxu0 %v3564
    %5294 = vmatpush.bf16.msra.mxu0 %v3560
    %5295 = vmatmul.bf16.gmra.mxu0 %v205
    %v5296 = vpop.f32.mrf.mxu0
    %v5297 = vadd.f32 %v5283, %v5296
    %v5298 = vpop.f32.mrf.mxu0
    %v5299 = vadd.f32 %v5285, %v5298
    %5300 = vdwg.mxu0
    %5301 = vmatpush.bf16.msra.mxu0 %v3620
    %5302 = vmatpush.bf16.msra.mxu0 %v3616
    %5303 = vmatpush.bf16.msra.mxu0 %v3612
    %5304 = vmatpush.bf16.msra.mxu0 %v3608
    %5305 = vmatpush.bf16.msra.mxu0 %v3604
    %5306 = vmatpush.bf16.msra.mxu0 %v3600
    %5307 = vmatpush.bf16.msra.mxu0 %v3596
    %5308 = vmatpush.bf16.msra.mxu0 %v3592
    %5309 = vmatmul.bf16.gmra.mxu0 %v206
    %v5310 = vpop.f32.mrf.mxu0
    %v5311 = vadd.f32 %v5297, %v5310
    %v5312 = vpop.f32.mrf.mxu0
    %v5313 = vadd.f32 %v5299, %v5312
    %5314 = vdwg.mxu0
    %5315 = vmatpush.bf16.msra.mxu0 %v3652
    %5316 = vmatpush.bf16.msra.mxu0 %v3648
    %5317 = vmatpush.bf16.msra.mxu0 %v3644
    %5318 = vmatpush.bf16.msra.mxu0 %v3640
    %5319 = vmatpush.bf16.msra.mxu0 %v3636
    %5320 = vmatpush.bf16.msra.mxu0 %v3632
    %5321 = vmatpush.bf16.msra.mxu0 %v3628
    %5322 = vmatpush.bf16.msra.mxu0 %v3624
    %5323 = vmatmul.bf16.gmra.mxu0 %v207
    %v5324 = vpop.f32.mrf.mxu0
    %v5325 = vadd.f32 %v5311, %v5324
    %v5326 = vpop.f32.mrf.mxu0
    %v5327 = vadd.f32 %v5313, %v5326
    %5328 = vdwg.mxu0
    %5329 = vmatpush.bf16.msra.mxu0 %v3684
    %5330 = vmatpush.bf16.msra.mxu0 %v3680
    %5331 = vmatpush.bf16.msra.mxu0 %v3676
    %5332 = vmatpush.bf16.msra.mxu0 %v3672
    %5333 = vmatpush.bf16.msra.mxu0 %v3668
    %5334 = vmatpush.bf16.msra.mxu0 %v3664
    %5335 = vmatpush.bf16.msra.mxu0 %v3660
    %5336 = vmatpush.bf16.msra.mxu0 %v3656
    %5337 = vmatmul.bf16.gmra.mxu0 %v208
    %v5338 = vpop.f32.mrf.mxu0
    %v5339 = vadd.f32 %v5325, %v5338
    %v5340 = vpop.f32.mrf.mxu0
    %v5341 = vadd.f32 %v5327, %v5340
    %5342 = vdwg.mxu0
    %5343 = vmatpush.bf16.msra.mxu0 %v3716
    %5344 = vmatpush.bf16.msra.mxu0 %v3712
    %5345 = vmatpush.bf16.msra.mxu0 %v3708
    %5346 = vmatpush.bf16.msra.mxu0 %v3704
    %5347 = vmatpush.bf16.msra.mxu0 %v3700
    %5348 = vmatpush.bf16.msra.mxu0 %v3696
    %5349 = vmatpush.bf16.msra.mxu0 %v3692
    %5350 = vmatpush.bf16.msra.mxu0 %v3688
    %5351 = vmatmul.bf16.gmra.mxu0 %v209
    %v5352 = vpop.f32.mrf.mxu0
    %v5353 = vadd.f32 %v5339, %v5352
    %v5354 = vpop.f32.mrf.mxu0
    %v5355 = vadd.f32 %v5341, %v5354
    %5356 = vdwg.mxu0
    %5357 = vmatpush.bf16.msra.mxu0 %v3748
    %5358 = vmatpush.bf16.msra.mxu0 %v3744
    %5359 = vmatpush.bf16.msra.mxu0 %v3740
    %5360 = vmatpush.bf16.msra.mxu0 %v3736
    %5361 = vmatpush.bf16.msra.mxu0 %v3732
    %5362 = vmatpush.bf16.msra.mxu0 %v3728
    %5363 = vmatpush.bf16.msra.mxu0 %v3724
    %5364 = vmatpush.bf16.msra.mxu0 %v3720
    %5365 = vmatmul.bf16.gmra.mxu0 %v210
    %v5366 = vpop.f32.mrf.mxu0
    %v5367 = vadd.f32 %v5353, %v5366
    %v5368 = vpop.f32.mrf.mxu0
    %v5369 = vadd.f32 %v5355, %v5368
    %5370 = vdwg.mxu0
    %5371 = vmatpush.bf16.msra.mxu0 %v3780
    %5372 = vmatpush.bf16.msra.mxu0 %v3776
    %5373 = vmatpush.bf16.msra.mxu0 %v3772
    %5374 = vmatpush.bf16.msra.mxu0 %v3768
    %5375 = vmatpush.bf16.msra.mxu0 %v3764
    %5376 = vmatpush.bf16.msra.mxu0 %v3760
    %5377 = vmatpush.bf16.msra.mxu0 %v3756
    %5378 = vmatpush.bf16.msra.mxu0 %v3752
    %5379 = vmatmul.bf16.gmra.mxu0 %v211
    %v5380 = vpop.f32.mrf.mxu0
    %v5381 = vadd.f32 %v5367, %v5380
    %v5382 = vpop.f32.mrf.mxu0
    %v5383 = vadd.f32 %v5369, %v5382
    %5384 = vdwg.mxu0
    %5385 = vmatpush.bf16.msra.mxu0 %v3812
    %5386 = vmatpush.bf16.msra.mxu0 %v3808
    %5387 = vmatpush.bf16.msra.mxu0 %v3804
    %5388 = vmatpush.bf16.msra.mxu0 %v3800
    %5389 = vmatpush.bf16.msra.mxu0 %v3796
    %5390 = vmatpush.bf16.msra.mxu0 %v3792
    %5391 = vmatpush.bf16.msra.mxu0 %v3788
    %5392 = vmatpush.bf16.msra.mxu0 %v3784
    %5393 = vmatmul.bf16.gmra.mxu0 %v212
    %v5394 = vpop.f32.mrf.mxu0
    %v5395 = vadd.f32 %v5381, %v5394
    %v5396 = vpop.f32.mrf.mxu0
    %v5397 = vadd.f32 %v5383, %v5396
    %5398 = vdwg.mxu0
    %5399 = vmatpush.bf16.msra.mxu0 %v3844
    %5400 = vmatpush.bf16.msra.mxu0 %v3840
    %5401 = vmatpush.bf16.msra.mxu0 %v3836
    %5402 = vmatpush.bf16.msra.mxu0 %v3832
    %5403 = vmatpush.bf16.msra.mxu0 %v3828
    %5404 = vmatpush.bf16.msra.mxu0 %v3824
    %5405 = vmatpush.bf16.msra.mxu0 %v3820
    %5406 = vmatpush.bf16.msra.mxu0 %v3816
    %5407 = vmatmul.bf16.gmra.mxu0 %v213
    %v5408 = vpop.f32.mrf.mxu0
    %v5409 = vadd.f32 %v5395, %v5408
    %v5410 = vpop.f32.mrf.mxu0
    %v5411 = vadd.f32 %v5397, %v5410
    %5412 = vdwg.mxu0
    %5413 = vmatpush.bf16.msra.mxu0 %v3876
    %5414 = vmatpush.bf16.msra.mxu0 %v3872
    %5415 = vmatpush.bf16.msra.mxu0 %v3868
    %5416 = vmatpush.bf16.msra.mxu0 %v3864
    %5417 = vmatpush.bf16.msra.mxu0 %v3860
    %5418 = vmatpush.bf16.msra.mxu0 %v3856
    %5419 = vmatpush.bf16.msra.mxu0 %v3852
    %5420 = vmatpush.bf16.msra.mxu0 %v3848
    %5421 = vmatmul.bf16.gmra.mxu0 %v214
    %v5422 = vpop.f32.mrf.mxu0
    %v5423 = vadd.f32 %v5409, %v5422
    %v5424 = vpop.f32.mrf.mxu0
    %v5425 = vadd.f32 %v5411, %v5424
    %5426 = vdwg.mxu0
    %5427 = vmatpush.bf16.msra.mxu0 %v3908
    %5428 = vmatpush.bf16.msra.mxu0 %v3904
    %5429 = vmatpush.bf16.msra.mxu0 %v3900
    %5430 = vmatpush.bf16.msra.mxu0 %v3896
    %5431 = vmatpush.bf16.msra.mxu0 %v3892
    %5432 = vmatpush.bf16.msra.mxu0 %v3888
    %5433 = vmatpush.bf16.msra.mxu0 %v3884
    %5434 = vmatpush.bf16.msra.mxu0 %v3880
    %5435 = vmatmul.bf16.gmra.mxu0 %v215
    %v5436 = vpop.f32.mrf.mxu0
    %v5437 = vadd.f32 %v5423, %v5436
    %v5438 = vpop.f32.mrf.mxu0
    %v5439 = vadd.f32 %v5425, %v5438
    %5440 = vdwg.mxu0
    %5441 = vmatpush.bf16.msra.mxu0 %v3940
    %5442 = vmatpush.bf16.msra.mxu0 %v3936
    %5443 = vmatpush.bf16.msra.mxu0 %v3932
    %5444 = vmatpush.bf16.msra.mxu0 %v3928
    %5445 = vmatpush.bf16.msra.mxu0 %v3924
    %5446 = vmatpush.bf16.msra.mxu0 %v3920
    %5447 = vmatpush.bf16.msra.mxu0 %v3916
    %5448 = vmatpush.bf16.msra.mxu0 %v3912
    %5449 = vmatmul.bf16.gmra.mxu0 %v216
    %v5450 = vpop.f32.mrf.mxu0
    %v5451 = vadd.f32 %v5437, %v5450
    %v5452 = vpop.f32.mrf.mxu0
    %v5453 = vadd.f32 %v5439, %v5452
    %5454 = vdwg.mxu0
    %5455 = vmatpush.bf16.msra.mxu0 %v3972
    %5456 = vmatpush.bf16.msra.mxu0 %v3968
    %5457 = vmatpush.bf16.msra.mxu0 %v3964
    %5458 = vmatpush.bf16.msra.mxu0 %v3960
    %5459 = vmatpush.bf16.msra.mxu0 %v3956
    %5460 = vmatpush.bf16.msra.mxu0 %v3952
    %5461 = vmatpush.bf16.msra.mxu0 %v3948
    %5462 = vmatpush.bf16.msra.mxu0 %v3944
    %5463 = vmatmul.bf16.gmra.mxu0 %v217
    %v5464 = vpop.f32.mrf.mxu0
    %v5465 = vadd.f32 %v5451, %v5464
    %v5466 = vpop.f32.mrf.mxu0
    %v5467 = vadd.f32 %v5453, %v5466
    %5468 = vdwg.mxu0
    %5469 = vmatpush.bf16.msra.mxu0 %v4004
    %5470 = vmatpush.bf16.msra.mxu0 %v4000
    %5471 = vmatpush.bf16.msra.mxu0 %v3996
    %5472 = vmatpush.bf16.msra.mxu0 %v3992
    %5473 = vmatpush.bf16.msra.mxu0 %v3988
    %5474 = vmatpush.bf16.msra.mxu0 %v3984
    %5475 = vmatpush.bf16.msra.mxu0 %v3980
    %5476 = vmatpush.bf16.msra.mxu0 %v3976
    %5477 = vmatmul.bf16.gmra.mxu0 %v218
    %v5478 = vpop.f32.mrf.mxu0
    %v5479 = vadd.f32 %v5465, %v5478
    %v5480 = vpop.f32.mrf.mxu0
    %v5481 = vadd.f32 %v5467, %v5480
    %5482 = vdwg.mxu0
    %5483 = vmatpush.bf16.msra.mxu0 %v4036
    %5484 = vmatpush.bf16.msra.mxu0 %v4032
    %5485 = vmatpush.bf16.msra.mxu0 %v4028
    %5486 = vmatpush.bf16.msra.mxu0 %v4024
    %5487 = vmatpush.bf16.msra.mxu0 %v4020
    %5488 = vmatpush.bf16.msra.mxu0 %v4016
    %5489 = vmatpush.bf16.msra.mxu0 %v4012
    %5490 = vmatpush.bf16.msra.mxu0 %v4008
    %5491 = vmatmul.bf16.gmra.mxu0 %v219
    %v5492 = vpop.f32.mrf.mxu0
    %v5493 = vadd.f32 %v5479, %v5492
    %v5494 = vpop.f32.mrf.mxu0
    %v5495 = vadd.f32 %v5481, %v5494
    %5496 = vdwg.mxu0
    %5497 = vmatpush.bf16.msra.mxu0 %v4068
    %5498 = vmatpush.bf16.msra.mxu0 %v4064
    %5499 = vmatpush.bf16.msra.mxu0 %v4060
    %5500 = vmatpush.bf16.msra.mxu0 %v4056
    %5501 = vmatpush.bf16.msra.mxu0 %v4052
    %5502 = vmatpush.bf16.msra.mxu0 %v4048
    %5503 = vmatpush.bf16.msra.mxu0 %v4044
    %5504 = vmatpush.bf16.msra.mxu0 %v4040
    %5505 = vmatmul.bf16.gmra.mxu0 %v220
    %v5506 = vpop.f32.mrf.mxu0
    %v5507 = vadd.f32 %v5493, %v5506
    %v5508 = vpop.f32.mrf.mxu0
    %v5509 = vadd.f32 %v5495, %v5508
    %5510 = vdwg.mxu0
    %5511 = vmatpush.bf16.msra.mxu0 %v3333
    %5512 = vmatpush.bf16.msra.mxu0 %v3329
    %5513 = vmatpush.bf16.msra.mxu0 %v3325
    %5514 = vmatpush.bf16.msra.mxu0 %v3321
    %5515 = vmatpush.bf16.msra.mxu0 %v3317
    %5516 = vmatpush.bf16.msra.mxu0 %v3313
    %5517 = vmatpush.bf16.msra.mxu0 %v3309
    %5518 = vmatpush.bf16.msra.mxu0 %v3305
    %5519 = vmatmul.bf16.gmra.mxu0 %v197
    %v5520 = vpop.f32.mrf.mxu0
    %v5521 = vadd.f32 %v993, %v5520
    %v5522 = vpop.f32.mrf.mxu0
    %v5523 = vadd.f32 %v993, %v5522
    %5524 = vdwg.mxu0
    %5525 = vmatpush.bf16.msra.mxu0 %v3365
    %5526 = vmatpush.bf16.msra.mxu0 %v3361
    %5527 = vmatpush.bf16.msra.mxu0 %v3357
    %5528 = vmatpush.bf16.msra.mxu0 %v3353
    %5529 = vmatpush.bf16.msra.mxu0 %v3349
    %5530 = vmatpush.bf16.msra.mxu0 %v3345
    %5531 = vmatpush.bf16.msra.mxu0 %v3341
    %5532 = vmatpush.bf16.msra.mxu0 %v3337
    %5533 = vmatmul.bf16.gmra.mxu0 %v198
    %v5534 = vpop.f32.mrf.mxu0
    %v5535 = vadd.f32 %v5521, %v5534
    %v5536 = vpop.f32.mrf.mxu0
    %v5537 = vadd.f32 %v5523, %v5536
    %5538 = vdwg.mxu0
    %5539 = vmatpush.bf16.msra.mxu0 %v3397
    %5540 = vmatpush.bf16.msra.mxu0 %v3393
    %5541 = vmatpush.bf16.msra.mxu0 %v3389
    %5542 = vmatpush.bf16.msra.mxu0 %v3385
    %5543 = vmatpush.bf16.msra.mxu0 %v3381
    %5544 = vmatpush.bf16.msra.mxu0 %v3377
    %5545 = vmatpush.bf16.msra.mxu0 %v3373
    %5546 = vmatpush.bf16.msra.mxu0 %v3369
    %5547 = vmatmul.bf16.gmra.mxu0 %v199
    %v5548 = vpop.f32.mrf.mxu0
    %v5549 = vadd.f32 %v5535, %v5548
    %v5550 = vpop.f32.mrf.mxu0
    %v5551 = vadd.f32 %v5537, %v5550
    %5552 = vdwg.mxu0
    %5553 = vmatpush.bf16.msra.mxu0 %v3429
    %5554 = vmatpush.bf16.msra.mxu0 %v3425
    %5555 = vmatpush.bf16.msra.mxu0 %v3421
    %5556 = vmatpush.bf16.msra.mxu0 %v3417
    %5557 = vmatpush.bf16.msra.mxu0 %v3413
    %5558 = vmatpush.bf16.msra.mxu0 %v3409
    %5559 = vmatpush.bf16.msra.mxu0 %v3405
    %5560 = vmatpush.bf16.msra.mxu0 %v3401
    %5561 = vmatmul.bf16.gmra.mxu0 %v200
    %v5562 = vpop.f32.mrf.mxu0
    %v5563 = vadd.f32 %v5549, %v5562
    %v5564 = vpop.f32.mrf.mxu0
    %v5565 = vadd.f32 %v5551, %v5564
    %5566 = vdwg.mxu0
    %5567 = vmatpush.bf16.msra.mxu0 %v3461
    %5568 = vmatpush.bf16.msra.mxu0 %v3457
    %5569 = vmatpush.bf16.msra.mxu0 %v3453
    %5570 = vmatpush.bf16.msra.mxu0 %v3449
    %5571 = vmatpush.bf16.msra.mxu0 %v3445
    %5572 = vmatpush.bf16.msra.mxu0 %v3441
    %5573 = vmatpush.bf16.msra.mxu0 %v3437
    %5574 = vmatpush.bf16.msra.mxu0 %v3433
    %5575 = vmatmul.bf16.gmra.mxu0 %v201
    %v5576 = vpop.f32.mrf.mxu0
    %v5577 = vadd.f32 %v5563, %v5576
    %v5578 = vpop.f32.mrf.mxu0
    %v5579 = vadd.f32 %v5565, %v5578
    %5580 = vdwg.mxu0
    %5581 = vmatpush.bf16.msra.mxu0 %v3493
    %5582 = vmatpush.bf16.msra.mxu0 %v3489
    %5583 = vmatpush.bf16.msra.mxu0 %v3485
    %5584 = vmatpush.bf16.msra.mxu0 %v3481
    %5585 = vmatpush.bf16.msra.mxu0 %v3477
    %5586 = vmatpush.bf16.msra.mxu0 %v3473
    %5587 = vmatpush.bf16.msra.mxu0 %v3469
    %5588 = vmatpush.bf16.msra.mxu0 %v3465
    %5589 = vmatmul.bf16.gmra.mxu0 %v202
    %v5590 = vpop.f32.mrf.mxu0
    %v5591 = vadd.f32 %v5577, %v5590
    %v5592 = vpop.f32.mrf.mxu0
    %v5593 = vadd.f32 %v5579, %v5592
    %5594 = vdwg.mxu0
    %5595 = vmatpush.bf16.msra.mxu0 %v3525
    %5596 = vmatpush.bf16.msra.mxu0 %v3521
    %5597 = vmatpush.bf16.msra.mxu0 %v3517
    %5598 = vmatpush.bf16.msra.mxu0 %v3513
    %5599 = vmatpush.bf16.msra.mxu0 %v3509
    %5600 = vmatpush.bf16.msra.mxu0 %v3505
    %5601 = vmatpush.bf16.msra.mxu0 %v3501
    %5602 = vmatpush.bf16.msra.mxu0 %v3497
    %5603 = vmatmul.bf16.gmra.mxu0 %v203
    %v5604 = vpop.f32.mrf.mxu0
    %v5605 = vadd.f32 %v5591, %v5604
    %v5606 = vpop.f32.mrf.mxu0
    %v5607 = vadd.f32 %v5593, %v5606
    %5608 = vdwg.mxu0
    %5609 = vmatpush.bf16.msra.mxu0 %v3557
    %5610 = vmatpush.bf16.msra.mxu0 %v3553
    %5611 = vmatpush.bf16.msra.mxu0 %v3549
    %5612 = vmatpush.bf16.msra.mxu0 %v3545
    %5613 = vmatpush.bf16.msra.mxu0 %v3541
    %5614 = vmatpush.bf16.msra.mxu0 %v3537
    %5615 = vmatpush.bf16.msra.mxu0 %v3533
    %5616 = vmatpush.bf16.msra.mxu0 %v3529
    %5617 = vmatmul.bf16.gmra.mxu0 %v204
    %v5618 = vpop.f32.mrf.mxu0
    %v5619 = vadd.f32 %v5605, %v5618
    %v5620 = vpop.f32.mrf.mxu0
    %v5621 = vadd.f32 %v5607, %v5620
    %5622 = vdwg.mxu0
    %5623 = vmatpush.bf16.msra.mxu0 %v3589
    %5624 = vmatpush.bf16.msra.mxu0 %v3585
    %5625 = vmatpush.bf16.msra.mxu0 %v3581
    %5626 = vmatpush.bf16.msra.mxu0 %v3577
    %5627 = vmatpush.bf16.msra.mxu0 %v3573
    %5628 = vmatpush.bf16.msra.mxu0 %v3569
    %5629 = vmatpush.bf16.msra.mxu0 %v3565
    %5630 = vmatpush.bf16.msra.mxu0 %v3561
    %5631 = vmatmul.bf16.gmra.mxu0 %v205
    %v5632 = vpop.f32.mrf.mxu0
    %v5633 = vadd.f32 %v5619, %v5632
    %v5634 = vpop.f32.mrf.mxu0
    %v5635 = vadd.f32 %v5621, %v5634
    %5636 = vdwg.mxu0
    %5637 = vmatpush.bf16.msra.mxu0 %v3621
    %5638 = vmatpush.bf16.msra.mxu0 %v3617
    %5639 = vmatpush.bf16.msra.mxu0 %v3613
    %5640 = vmatpush.bf16.msra.mxu0 %v3609
    %5641 = vmatpush.bf16.msra.mxu0 %v3605
    %5642 = vmatpush.bf16.msra.mxu0 %v3601
    %5643 = vmatpush.bf16.msra.mxu0 %v3597
    %5644 = vmatpush.bf16.msra.mxu0 %v3593
    %5645 = vmatmul.bf16.gmra.mxu0 %v206
    %v5646 = vpop.f32.mrf.mxu0
    %v5647 = vadd.f32 %v5633, %v5646
    %v5648 = vpop.f32.mrf.mxu0
    %v5649 = vadd.f32 %v5635, %v5648
    %5650 = vdwg.mxu0
    %5651 = vmatpush.bf16.msra.mxu0 %v3653
    %5652 = vmatpush.bf16.msra.mxu0 %v3649
    %5653 = vmatpush.bf16.msra.mxu0 %v3645
    %5654 = vmatpush.bf16.msra.mxu0 %v3641
    %5655 = vmatpush.bf16.msra.mxu0 %v3637
    %5656 = vmatpush.bf16.msra.mxu0 %v3633
    %5657 = vmatpush.bf16.msra.mxu0 %v3629
    %5658 = vmatpush.bf16.msra.mxu0 %v3625
    %5659 = vmatmul.bf16.gmra.mxu0 %v207
    %v5660 = vpop.f32.mrf.mxu0
    %v5661 = vadd.f32 %v5647, %v5660
    %v5662 = vpop.f32.mrf.mxu0
    %v5663 = vadd.f32 %v5649, %v5662
    %5664 = vdwg.mxu0
    %5665 = vmatpush.bf16.msra.mxu0 %v3685
    %5666 = vmatpush.bf16.msra.mxu0 %v3681
    %5667 = vmatpush.bf16.msra.mxu0 %v3677
    %5668 = vmatpush.bf16.msra.mxu0 %v3673
    %5669 = vmatpush.bf16.msra.mxu0 %v3669
    %5670 = vmatpush.bf16.msra.mxu0 %v3665
    %5671 = vmatpush.bf16.msra.mxu0 %v3661
    %5672 = vmatpush.bf16.msra.mxu0 %v3657
    %5673 = vmatmul.bf16.gmra.mxu0 %v208
    %v5674 = vpop.f32.mrf.mxu0
    %v5675 = vadd.f32 %v5661, %v5674
    %v5676 = vpop.f32.mrf.mxu0
    %v5677 = vadd.f32 %v5663, %v5676
    %5678 = vdwg.mxu0
    %5679 = vmatpush.bf16.msra.mxu0 %v3717
    %5680 = vmatpush.bf16.msra.mxu0 %v3713
    %5681 = vmatpush.bf16.msra.mxu0 %v3709
    %5682 = vmatpush.bf16.msra.mxu0 %v3705
    %5683 = vmatpush.bf16.msra.mxu0 %v3701
    %5684 = vmatpush.bf16.msra.mxu0 %v3697
    %5685 = vmatpush.bf16.msra.mxu0 %v3693
    %5686 = vmatpush.bf16.msra.mxu0 %v3689
    %5687 = vmatmul.bf16.gmra.mxu0 %v209
    %v5688 = vpop.f32.mrf.mxu0
    %v5689 = vadd.f32 %v5675, %v5688
    %v5690 = vpop.f32.mrf.mxu0
    %v5691 = vadd.f32 %v5677, %v5690
    %5692 = vdwg.mxu0
    %5693 = vmatpush.bf16.msra.mxu0 %v3749
    %5694 = vmatpush.bf16.msra.mxu0 %v3745
    %5695 = vmatpush.bf16.msra.mxu0 %v3741
    %5696 = vmatpush.bf16.msra.mxu0 %v3737
    %5697 = vmatpush.bf16.msra.mxu0 %v3733
    %5698 = vmatpush.bf16.msra.mxu0 %v3729
    %5699 = vmatpush.bf16.msra.mxu0 %v3725
    %5700 = vmatpush.bf16.msra.mxu0 %v3721
    %5701 = vmatmul.bf16.gmra.mxu0 %v210
    %v5702 = vpop.f32.mrf.mxu0
    %v5703 = vadd.f32 %v5689, %v5702
    %v5704 = vpop.f32.mrf.mxu0
    %v5705 = vadd.f32 %v5691, %v5704
    %5706 = vdwg.mxu0
    %5707 = vmatpush.bf16.msra.mxu0 %v3781
    %5708 = vmatpush.bf16.msra.mxu0 %v3777
    %5709 = vmatpush.bf16.msra.mxu0 %v3773
    %5710 = vmatpush.bf16.msra.mxu0 %v3769
    %5711 = vmatpush.bf16.msra.mxu0 %v3765
    %5712 = vmatpush.bf16.msra.mxu0 %v3761
    %5713 = vmatpush.bf16.msra.mxu0 %v3757
    %5714 = vmatpush.bf16.msra.mxu0 %v3753
    %5715 = vmatmul.bf16.gmra.mxu0 %v211
    %v5716 = vpop.f32.mrf.mxu0
    %v5717 = vadd.f32 %v5703, %v5716
    %v5718 = vpop.f32.mrf.mxu0
    %v5719 = vadd.f32 %v5705, %v5718
    %5720 = vdwg.mxu0
    %5721 = vmatpush.bf16.msra.mxu0 %v3813
    %5722 = vmatpush.bf16.msra.mxu0 %v3809
    %5723 = vmatpush.bf16.msra.mxu0 %v3805
    %5724 = vmatpush.bf16.msra.mxu0 %v3801
    %5725 = vmatpush.bf16.msra.mxu0 %v3797
    %5726 = vmatpush.bf16.msra.mxu0 %v3793
    %5727 = vmatpush.bf16.msra.mxu0 %v3789
    %5728 = vmatpush.bf16.msra.mxu0 %v3785
    %5729 = vmatmul.bf16.gmra.mxu0 %v212
    %v5730 = vpop.f32.mrf.mxu0
    %v5731 = vadd.f32 %v5717, %v5730
    %v5732 = vpop.f32.mrf.mxu0
    %v5733 = vadd.f32 %v5719, %v5732
    %5734 = vdwg.mxu0
    %5735 = vmatpush.bf16.msra.mxu0 %v3845
    %5736 = vmatpush.bf16.msra.mxu0 %v3841
    %5737 = vmatpush.bf16.msra.mxu0 %v3837
    %5738 = vmatpush.bf16.msra.mxu0 %v3833
    %5739 = vmatpush.bf16.msra.mxu0 %v3829
    %5740 = vmatpush.bf16.msra.mxu0 %v3825
    %5741 = vmatpush.bf16.msra.mxu0 %v3821
    %5742 = vmatpush.bf16.msra.mxu0 %v3817
    %5743 = vmatmul.bf16.gmra.mxu0 %v213
    %v5744 = vpop.f32.mrf.mxu0
    %v5745 = vadd.f32 %v5731, %v5744
    %v5746 = vpop.f32.mrf.mxu0
    %v5747 = vadd.f32 %v5733, %v5746
    %5748 = vdwg.mxu0
    %5749 = vmatpush.bf16.msra.mxu0 %v3877
    %5750 = vmatpush.bf16.msra.mxu0 %v3873
    %5751 = vmatpush.bf16.msra.mxu0 %v3869
    %5752 = vmatpush.bf16.msra.mxu0 %v3865
    %5753 = vmatpush.bf16.msra.mxu0 %v3861
    %5754 = vmatpush.bf16.msra.mxu0 %v3857
    %5755 = vmatpush.bf16.msra.mxu0 %v3853
    %5756 = vmatpush.bf16.msra.mxu0 %v3849
    %5757 = vmatmul.bf16.gmra.mxu0 %v214
    %v5758 = vpop.f32.mrf.mxu0
    %v5759 = vadd.f32 %v5745, %v5758
    %v5760 = vpop.f32.mrf.mxu0
    %v5761 = vadd.f32 %v5747, %v5760
    %5762 = vdwg.mxu0
    %5763 = vmatpush.bf16.msra.mxu0 %v3909
    %5764 = vmatpush.bf16.msra.mxu0 %v3905
    %5765 = vmatpush.bf16.msra.mxu0 %v3901
    %5766 = vmatpush.bf16.msra.mxu0 %v3897
    %5767 = vmatpush.bf16.msra.mxu0 %v3893
    %5768 = vmatpush.bf16.msra.mxu0 %v3889
    %5769 = vmatpush.bf16.msra.mxu0 %v3885
    %5770 = vmatpush.bf16.msra.mxu0 %v3881
    %5771 = vmatmul.bf16.gmra.mxu0 %v215
    %v5772 = vpop.f32.mrf.mxu0
    %v5773 = vadd.f32 %v5759, %v5772
    %v5774 = vpop.f32.mrf.mxu0
    %v5775 = vadd.f32 %v5761, %v5774
    %5776 = vdwg.mxu0
    %5777 = vmatpush.bf16.msra.mxu0 %v3941
    %5778 = vmatpush.bf16.msra.mxu0 %v3937
    %5779 = vmatpush.bf16.msra.mxu0 %v3933
    %5780 = vmatpush.bf16.msra.mxu0 %v3929
    %5781 = vmatpush.bf16.msra.mxu0 %v3925
    %5782 = vmatpush.bf16.msra.mxu0 %v3921
    %5783 = vmatpush.bf16.msra.mxu0 %v3917
    %5784 = vmatpush.bf16.msra.mxu0 %v3913
    %5785 = vmatmul.bf16.gmra.mxu0 %v216
    %v5786 = vpop.f32.mrf.mxu0
    %v5787 = vadd.f32 %v5773, %v5786
    %v5788 = vpop.f32.mrf.mxu0
    %v5789 = vadd.f32 %v5775, %v5788
    %5790 = vdwg.mxu0
    %5791 = vmatpush.bf16.msra.mxu0 %v3973
    %5792 = vmatpush.bf16.msra.mxu0 %v3969
    %5793 = vmatpush.bf16.msra.mxu0 %v3965
    %5794 = vmatpush.bf16.msra.mxu0 %v3961
    %5795 = vmatpush.bf16.msra.mxu0 %v3957
    %5796 = vmatpush.bf16.msra.mxu0 %v3953
    %5797 = vmatpush.bf16.msra.mxu0 %v3949
    %5798 = vmatpush.bf16.msra.mxu0 %v3945
    %5799 = vmatmul.bf16.gmra.mxu0 %v217
    %v5800 = vpop.f32.mrf.mxu0
    %v5801 = vadd.f32 %v5787, %v5800
    %v5802 = vpop.f32.mrf.mxu0
    %v5803 = vadd.f32 %v5789, %v5802
    %5804 = vdwg.mxu0
    %5805 = vmatpush.bf16.msra.mxu0 %v4005
    %5806 = vmatpush.bf16.msra.mxu0 %v4001
    %5807 = vmatpush.bf16.msra.mxu0 %v3997
    %5808 = vmatpush.bf16.msra.mxu0 %v3993
    %5809 = vmatpush.bf16.msra.mxu0 %v3989
    %5810 = vmatpush.bf16.msra.mxu0 %v3985
    %5811 = vmatpush.bf16.msra.mxu0 %v3981
    %5812 = vmatpush.bf16.msra.mxu0 %v3977
    %5813 = vmatmul.bf16.gmra.mxu0 %v218
    %v5814 = vpop.f32.mrf.mxu0
    %v5815 = vadd.f32 %v5801, %v5814
    %v5816 = vpop.f32.mrf.mxu0
    %v5817 = vadd.f32 %v5803, %v5816
    %5818 = vdwg.mxu0
    %5819 = vmatpush.bf16.msra.mxu0 %v4037
    %5820 = vmatpush.bf16.msra.mxu0 %v4033
    %5821 = vmatpush.bf16.msra.mxu0 %v4029
    %5822 = vmatpush.bf16.msra.mxu0 %v4025
    %5823 = vmatpush.bf16.msra.mxu0 %v4021
    %5824 = vmatpush.bf16.msra.mxu0 %v4017
    %5825 = vmatpush.bf16.msra.mxu0 %v4013
    %5826 = vmatpush.bf16.msra.mxu0 %v4009
    %5827 = vmatmul.bf16.gmra.mxu0 %v219
    %v5828 = vpop.f32.mrf.mxu0
    %v5829 = vadd.f32 %v5815, %v5828
    %v5830 = vpop.f32.mrf.mxu0
    %v5831 = vadd.f32 %v5817, %v5830
    %5832 = vdwg.mxu0
    %5833 = vmatpush.bf16.msra.mxu0 %v4069
    %5834 = vmatpush.bf16.msra.mxu0 %v4065
    %5835 = vmatpush.bf16.msra.mxu0 %v4061
    %5836 = vmatpush.bf16.msra.mxu0 %v4057
    %5837 = vmatpush.bf16.msra.mxu0 %v4053
    %5838 = vmatpush.bf16.msra.mxu0 %v4049
    %5839 = vmatpush.bf16.msra.mxu0 %v4045
    %5840 = vmatpush.bf16.msra.mxu0 %v4041
    %5841 = vmatmul.bf16.gmra.mxu0 %v220
    %v5842 = vpop.f32.mrf.mxu0
    %v5843 = vadd.f32 %v5829, %v5842
    %v5844 = vpop.f32.mrf.mxu0
    %v5845 = vadd.f32 %v5831, %v5844
    %5846 = vdwg.mxu0
    %5847 = vmatpush.bf16.msra.mxu0 %v3334
    %5848 = vmatpush.bf16.msra.mxu0 %v3330
    %5849 = vmatpush.bf16.msra.mxu0 %v3326
    %5850 = vmatpush.bf16.msra.mxu0 %v3322
    %5851 = vmatpush.bf16.msra.mxu0 %v3318
    %5852 = vmatpush.bf16.msra.mxu0 %v3314
    %5853 = vmatpush.bf16.msra.mxu0 %v3310
    %5854 = vmatpush.bf16.msra.mxu0 %v3306
    %5855 = vmatmul.bf16.gmra.mxu0 %v197
    %v5856 = vpop.f32.mrf.mxu0
    %v5857 = vadd.f32 %v994, %v5856
    %v5858 = vpop.f32.mrf.mxu0
    %v5859 = vadd.f32 %v994, %v5858
    %5860 = vdwg.mxu0
    %5861 = vmatpush.bf16.msra.mxu0 %v3366
    %5862 = vmatpush.bf16.msra.mxu0 %v3362
    %5863 = vmatpush.bf16.msra.mxu0 %v3358
    %5864 = vmatpush.bf16.msra.mxu0 %v3354
    %5865 = vmatpush.bf16.msra.mxu0 %v3350
    %5866 = vmatpush.bf16.msra.mxu0 %v3346
    %5867 = vmatpush.bf16.msra.mxu0 %v3342
    %5868 = vmatpush.bf16.msra.mxu0 %v3338
    %5869 = vmatmul.bf16.gmra.mxu0 %v198
    %v5870 = vpop.f32.mrf.mxu0
    %v5871 = vadd.f32 %v5857, %v5870
    %v5872 = vpop.f32.mrf.mxu0
    %v5873 = vadd.f32 %v5859, %v5872
    %5874 = vdwg.mxu0
    %5875 = vmatpush.bf16.msra.mxu0 %v3398
    %5876 = vmatpush.bf16.msra.mxu0 %v3394
    %5877 = vmatpush.bf16.msra.mxu0 %v3390
    %5878 = vmatpush.bf16.msra.mxu0 %v3386
    %5879 = vmatpush.bf16.msra.mxu0 %v3382
    %5880 = vmatpush.bf16.msra.mxu0 %v3378
    %5881 = vmatpush.bf16.msra.mxu0 %v3374
    %5882 = vmatpush.bf16.msra.mxu0 %v3370
    %5883 = vmatmul.bf16.gmra.mxu0 %v199
    %v5884 = vpop.f32.mrf.mxu0
    %v5885 = vadd.f32 %v5871, %v5884
    %v5886 = vpop.f32.mrf.mxu0
    %v5887 = vadd.f32 %v5873, %v5886
    %5888 = vdwg.mxu0
    %5889 = vmatpush.bf16.msra.mxu0 %v3430
    %5890 = vmatpush.bf16.msra.mxu0 %v3426
    %5891 = vmatpush.bf16.msra.mxu0 %v3422
    %5892 = vmatpush.bf16.msra.mxu0 %v3418
    %5893 = vmatpush.bf16.msra.mxu0 %v3414
    %5894 = vmatpush.bf16.msra.mxu0 %v3410
    %5895 = vmatpush.bf16.msra.mxu0 %v3406
    %5896 = vmatpush.bf16.msra.mxu0 %v3402
    %5897 = vmatmul.bf16.gmra.mxu0 %v200
    %v5898 = vpop.f32.mrf.mxu0
    %v5899 = vadd.f32 %v5885, %v5898
    %v5900 = vpop.f32.mrf.mxu0
    %v5901 = vadd.f32 %v5887, %v5900
    %5902 = vdwg.mxu0
    %5903 = vmatpush.bf16.msra.mxu0 %v3462
    %5904 = vmatpush.bf16.msra.mxu0 %v3458
    %5905 = vmatpush.bf16.msra.mxu0 %v3454
    %5906 = vmatpush.bf16.msra.mxu0 %v3450
    %5907 = vmatpush.bf16.msra.mxu0 %v3446
    %5908 = vmatpush.bf16.msra.mxu0 %v3442
    %5909 = vmatpush.bf16.msra.mxu0 %v3438
    %5910 = vmatpush.bf16.msra.mxu0 %v3434
    %5911 = vmatmul.bf16.gmra.mxu0 %v201
    %v5912 = vpop.f32.mrf.mxu0
    %v5913 = vadd.f32 %v5899, %v5912
    %v5914 = vpop.f32.mrf.mxu0
    %v5915 = vadd.f32 %v5901, %v5914
    %5916 = vdwg.mxu0
    %5917 = vmatpush.bf16.msra.mxu0 %v3494
    %5918 = vmatpush.bf16.msra.mxu0 %v3490
    %5919 = vmatpush.bf16.msra.mxu0 %v3486
    %5920 = vmatpush.bf16.msra.mxu0 %v3482
    %5921 = vmatpush.bf16.msra.mxu0 %v3478
    %5922 = vmatpush.bf16.msra.mxu0 %v3474
    %5923 = vmatpush.bf16.msra.mxu0 %v3470
    %5924 = vmatpush.bf16.msra.mxu0 %v3466
    %5925 = vmatmul.bf16.gmra.mxu0 %v202
    %v5926 = vpop.f32.mrf.mxu0
    %v5927 = vadd.f32 %v5913, %v5926
    %v5928 = vpop.f32.mrf.mxu0
    %v5929 = vadd.f32 %v5915, %v5928
    %5930 = vdwg.mxu0
    %5931 = vmatpush.bf16.msra.mxu0 %v3526
    %5932 = vmatpush.bf16.msra.mxu0 %v3522
    %5933 = vmatpush.bf16.msra.mxu0 %v3518
    %5934 = vmatpush.bf16.msra.mxu0 %v3514
    %5935 = vmatpush.bf16.msra.mxu0 %v3510
    %5936 = vmatpush.bf16.msra.mxu0 %v3506
    %5937 = vmatpush.bf16.msra.mxu0 %v3502
    %5938 = vmatpush.bf16.msra.mxu0 %v3498
    %5939 = vmatmul.bf16.gmra.mxu0 %v203
    %v5940 = vpop.f32.mrf.mxu0
    %v5941 = vadd.f32 %v5927, %v5940
    %v5942 = vpop.f32.mrf.mxu0
    %v5943 = vadd.f32 %v5929, %v5942
    %5944 = vdwg.mxu0
    %5945 = vmatpush.bf16.msra.mxu0 %v3558
    %5946 = vmatpush.bf16.msra.mxu0 %v3554
    %5947 = vmatpush.bf16.msra.mxu0 %v3550
    %5948 = vmatpush.bf16.msra.mxu0 %v3546
    %5949 = vmatpush.bf16.msra.mxu0 %v3542
    %5950 = vmatpush.bf16.msra.mxu0 %v3538
    %5951 = vmatpush.bf16.msra.mxu0 %v3534
    %5952 = vmatpush.bf16.msra.mxu0 %v3530
    %5953 = vmatmul.bf16.gmra.mxu0 %v204
    %v5954 = vpop.f32.mrf.mxu0
    %v5955 = vadd.f32 %v5941, %v5954
    %v5956 = vpop.f32.mrf.mxu0
    %v5957 = vadd.f32 %v5943, %v5956
    %5958 = vdwg.mxu0
    %5959 = vmatpush.bf16.msra.mxu0 %v3590
    %5960 = vmatpush.bf16.msra.mxu0 %v3586
    %5961 = vmatpush.bf16.msra.mxu0 %v3582
    %5962 = vmatpush.bf16.msra.mxu0 %v3578
    %5963 = vmatpush.bf16.msra.mxu0 %v3574
    %5964 = vmatpush.bf16.msra.mxu0 %v3570
    %5965 = vmatpush.bf16.msra.mxu0 %v3566
    %5966 = vmatpush.bf16.msra.mxu0 %v3562
    %5967 = vmatmul.bf16.gmra.mxu0 %v205
    %v5968 = vpop.f32.mrf.mxu0
    %v5969 = vadd.f32 %v5955, %v5968
    %v5970 = vpop.f32.mrf.mxu0
    %v5971 = vadd.f32 %v5957, %v5970
    %5972 = vdwg.mxu0
    %5973 = vmatpush.bf16.msra.mxu0 %v3622
    %5974 = vmatpush.bf16.msra.mxu0 %v3618
    %5975 = vmatpush.bf16.msra.mxu0 %v3614
    %5976 = vmatpush.bf16.msra.mxu0 %v3610
    %5977 = vmatpush.bf16.msra.mxu0 %v3606
    %5978 = vmatpush.bf16.msra.mxu0 %v3602
    %5979 = vmatpush.bf16.msra.mxu0 %v3598
    %5980 = vmatpush.bf16.msra.mxu0 %v3594
    %5981 = vmatmul.bf16.gmra.mxu0 %v206
    %v5982 = vpop.f32.mrf.mxu0
    %v5983 = vadd.f32 %v5969, %v5982
    %v5984 = vpop.f32.mrf.mxu0
    %v5985 = vadd.f32 %v5971, %v5984
    %5986 = vdwg.mxu0
    %5987 = vmatpush.bf16.msra.mxu0 %v3654
    %5988 = vmatpush.bf16.msra.mxu0 %v3650
    %5989 = vmatpush.bf16.msra.mxu0 %v3646
    %5990 = vmatpush.bf16.msra.mxu0 %v3642
    %5991 = vmatpush.bf16.msra.mxu0 %v3638
    %5992 = vmatpush.bf16.msra.mxu0 %v3634
    %5993 = vmatpush.bf16.msra.mxu0 %v3630
    %5994 = vmatpush.bf16.msra.mxu0 %v3626
    %5995 = vmatmul.bf16.gmra.mxu0 %v207
    %v5996 = vpop.f32.mrf.mxu0
    %v5997 = vadd.f32 %v5983, %v5996
    %v5998 = vpop.f32.mrf.mxu0
    %v5999 = vadd.f32 %v5985, %v5998
    %6000 = vdwg.mxu0
    %6001 = vmatpush.bf16.msra.mxu0 %v3686
    %6002 = vmatpush.bf16.msra.mxu0 %v3682
    %6003 = vmatpush.bf16.msra.mxu0 %v3678
    %6004 = vmatpush.bf16.msra.mxu0 %v3674
    %6005 = vmatpush.bf16.msra.mxu0 %v3670
    %6006 = vmatpush.bf16.msra.mxu0 %v3666
    %6007 = vmatpush.bf16.msra.mxu0 %v3662
    %6008 = vmatpush.bf16.msra.mxu0 %v3658
    %6009 = vmatmul.bf16.gmra.mxu0 %v208
    %v6010 = vpop.f32.mrf.mxu0
    %v6011 = vadd.f32 %v5997, %v6010
    %v6012 = vpop.f32.mrf.mxu0
    %v6013 = vadd.f32 %v5999, %v6012
    %6014 = vdwg.mxu0
    %6015 = vmatpush.bf16.msra.mxu0 %v3718
    %6016 = vmatpush.bf16.msra.mxu0 %v3714
    %6017 = vmatpush.bf16.msra.mxu0 %v3710
    %6018 = vmatpush.bf16.msra.mxu0 %v3706
    %6019 = vmatpush.bf16.msra.mxu0 %v3702
    %6020 = vmatpush.bf16.msra.mxu0 %v3698
    %6021 = vmatpush.bf16.msra.mxu0 %v3694
    %6022 = vmatpush.bf16.msra.mxu0 %v3690
    %6023 = vmatmul.bf16.gmra.mxu0 %v209
    %v6024 = vpop.f32.mrf.mxu0
    %v6025 = vadd.f32 %v6011, %v6024
    %v6026 = vpop.f32.mrf.mxu0
    %v6027 = vadd.f32 %v6013, %v6026
    %6028 = vdwg.mxu0
    %6029 = vmatpush.bf16.msra.mxu0 %v3750
    %6030 = vmatpush.bf16.msra.mxu0 %v3746
    %6031 = vmatpush.bf16.msra.mxu0 %v3742
    %6032 = vmatpush.bf16.msra.mxu0 %v3738
    %6033 = vmatpush.bf16.msra.mxu0 %v3734
    %6034 = vmatpush.bf16.msra.mxu0 %v3730
    %6035 = vmatpush.bf16.msra.mxu0 %v3726
    %6036 = vmatpush.bf16.msra.mxu0 %v3722
    %6037 = vmatmul.bf16.gmra.mxu0 %v210
    %v6038 = vpop.f32.mrf.mxu0
    %v6039 = vadd.f32 %v6025, %v6038
    %v6040 = vpop.f32.mrf.mxu0
    %v6041 = vadd.f32 %v6027, %v6040
    %6042 = vdwg.mxu0
    %6043 = vmatpush.bf16.msra.mxu0 %v3782
    %6044 = vmatpush.bf16.msra.mxu0 %v3778
    %6045 = vmatpush.bf16.msra.mxu0 %v3774
    %6046 = vmatpush.bf16.msra.mxu0 %v3770
    %6047 = vmatpush.bf16.msra.mxu0 %v3766
    %6048 = vmatpush.bf16.msra.mxu0 %v3762
    %6049 = vmatpush.bf16.msra.mxu0 %v3758
    %6050 = vmatpush.bf16.msra.mxu0 %v3754
    %6051 = vmatmul.bf16.gmra.mxu0 %v211
    %v6052 = vpop.f32.mrf.mxu0
    %v6053 = vadd.f32 %v6039, %v6052
    %v6054 = vpop.f32.mrf.mxu0
    %v6055 = vadd.f32 %v6041, %v6054
    %6056 = vdwg.mxu0
    %6057 = vmatpush.bf16.msra.mxu0 %v3814
    %6058 = vmatpush.bf16.msra.mxu0 %v3810
    %6059 = vmatpush.bf16.msra.mxu0 %v3806
    %6060 = vmatpush.bf16.msra.mxu0 %v3802
    %6061 = vmatpush.bf16.msra.mxu0 %v3798
    %6062 = vmatpush.bf16.msra.mxu0 %v3794
    %6063 = vmatpush.bf16.msra.mxu0 %v3790
    %6064 = vmatpush.bf16.msra.mxu0 %v3786
    %6065 = vmatmul.bf16.gmra.mxu0 %v212
    %v6066 = vpop.f32.mrf.mxu0
    %v6067 = vadd.f32 %v6053, %v6066
    %v6068 = vpop.f32.mrf.mxu0
    %v6069 = vadd.f32 %v6055, %v6068
    %6070 = vdwg.mxu0
    %6071 = vmatpush.bf16.msra.mxu0 %v3846
    %6072 = vmatpush.bf16.msra.mxu0 %v3842
    %6073 = vmatpush.bf16.msra.mxu0 %v3838
    %6074 = vmatpush.bf16.msra.mxu0 %v3834
    %6075 = vmatpush.bf16.msra.mxu0 %v3830
    %6076 = vmatpush.bf16.msra.mxu0 %v3826
    %6077 = vmatpush.bf16.msra.mxu0 %v3822
    %6078 = vmatpush.bf16.msra.mxu0 %v3818
    %6079 = vmatmul.bf16.gmra.mxu0 %v213
    %v6080 = vpop.f32.mrf.mxu0
    %v6081 = vadd.f32 %v6067, %v6080
    %v6082 = vpop.f32.mrf.mxu0
    %v6083 = vadd.f32 %v6069, %v6082
    %6084 = vdwg.mxu0
    %6085 = vmatpush.bf16.msra.mxu0 %v3878
    %6086 = vmatpush.bf16.msra.mxu0 %v3874
    %6087 = vmatpush.bf16.msra.mxu0 %v3870
    %6088 = vmatpush.bf16.msra.mxu0 %v3866
    %6089 = vmatpush.bf16.msra.mxu0 %v3862
    %6090 = vmatpush.bf16.msra.mxu0 %v3858
    %6091 = vmatpush.bf16.msra.mxu0 %v3854
    %6092 = vmatpush.bf16.msra.mxu0 %v3850
    %6093 = vmatmul.bf16.gmra.mxu0 %v214
    %v6094 = vpop.f32.mrf.mxu0
    %v6095 = vadd.f32 %v6081, %v6094
    %v6096 = vpop.f32.mrf.mxu0
    %v6097 = vadd.f32 %v6083, %v6096
    %6098 = vdwg.mxu0
    %6099 = vmatpush.bf16.msra.mxu0 %v3910
    %6100 = vmatpush.bf16.msra.mxu0 %v3906
    %6101 = vmatpush.bf16.msra.mxu0 %v3902
    %6102 = vmatpush.bf16.msra.mxu0 %v3898
    %6103 = vmatpush.bf16.msra.mxu0 %v3894
    %6104 = vmatpush.bf16.msra.mxu0 %v3890
    %6105 = vmatpush.bf16.msra.mxu0 %v3886
    %6106 = vmatpush.bf16.msra.mxu0 %v3882
    %6107 = vmatmul.bf16.gmra.mxu0 %v215
    %v6108 = vpop.f32.mrf.mxu0
    %v6109 = vadd.f32 %v6095, %v6108
    %v6110 = vpop.f32.mrf.mxu0
    %v6111 = vadd.f32 %v6097, %v6110
    %6112 = vdwg.mxu0
    %6113 = vmatpush.bf16.msra.mxu0 %v3942
    %6114 = vmatpush.bf16.msra.mxu0 %v3938
    %6115 = vmatpush.bf16.msra.mxu0 %v3934
    %6116 = vmatpush.bf16.msra.mxu0 %v3930
    %6117 = vmatpush.bf16.msra.mxu0 %v3926
    %6118 = vmatpush.bf16.msra.mxu0 %v3922
    %6119 = vmatpush.bf16.msra.mxu0 %v3918
    %6120 = vmatpush.bf16.msra.mxu0 %v3914
    %6121 = vmatmul.bf16.gmra.mxu0 %v216
    %v6122 = vpop.f32.mrf.mxu0
    %v6123 = vadd.f32 %v6109, %v6122
    %v6124 = vpop.f32.mrf.mxu0
    %v6125 = vadd.f32 %v6111, %v6124
    %6126 = vdwg.mxu0
    %6127 = vmatpush.bf16.msra.mxu0 %v3974
    %6128 = vmatpush.bf16.msra.mxu0 %v3970
    %6129 = vmatpush.bf16.msra.mxu0 %v3966
    %6130 = vmatpush.bf16.msra.mxu0 %v3962
    %6131 = vmatpush.bf16.msra.mxu0 %v3958
    %6132 = vmatpush.bf16.msra.mxu0 %v3954
    %6133 = vmatpush.bf16.msra.mxu0 %v3950
    %6134 = vmatpush.bf16.msra.mxu0 %v3946
    %6135 = vmatmul.bf16.gmra.mxu0 %v217
    %v6136 = vpop.f32.mrf.mxu0
    %v6137 = vadd.f32 %v6123, %v6136
    %v6138 = vpop.f32.mrf.mxu0
    %v6139 = vadd.f32 %v6125, %v6138
    %6140 = vdwg.mxu0
    %6141 = vmatpush.bf16.msra.mxu0 %v4006
    %6142 = vmatpush.bf16.msra.mxu0 %v4002
    %6143 = vmatpush.bf16.msra.mxu0 %v3998
    %6144 = vmatpush.bf16.msra.mxu0 %v3994
    %6145 = vmatpush.bf16.msra.mxu0 %v3990
    %6146 = vmatpush.bf16.msra.mxu0 %v3986
    %6147 = vmatpush.bf16.msra.mxu0 %v3982
    %6148 = vmatpush.bf16.msra.mxu0 %v3978
    %6149 = vmatmul.bf16.gmra.mxu0 %v218
    %v6150 = vpop.f32.mrf.mxu0
    %v6151 = vadd.f32 %v6137, %v6150
    %v6152 = vpop.f32.mrf.mxu0
    %v6153 = vadd.f32 %v6139, %v6152
    %6154 = vdwg.mxu0
    %6155 = vmatpush.bf16.msra.mxu0 %v4038
    %6156 = vmatpush.bf16.msra.mxu0 %v4034
    %6157 = vmatpush.bf16.msra.mxu0 %v4030
    %6158 = vmatpush.bf16.msra.mxu0 %v4026
    %6159 = vmatpush.bf16.msra.mxu0 %v4022
    %6160 = vmatpush.bf16.msra.mxu0 %v4018
    %6161 = vmatpush.bf16.msra.mxu0 %v4014
    %6162 = vmatpush.bf16.msra.mxu0 %v4010
    %6163 = vmatmul.bf16.gmra.mxu0 %v219
    %v6164 = vpop.f32.mrf.mxu0
    %v6165 = vadd.f32 %v6151, %v6164
    %v6166 = vpop.f32.mrf.mxu0
    %v6167 = vadd.f32 %v6153, %v6166
    %6168 = vdwg.mxu0
    %6169 = vmatpush.bf16.msra.mxu0 %v4070
    %6170 = vmatpush.bf16.msra.mxu0 %v4066
    %6171 = vmatpush.bf16.msra.mxu0 %v4062
    %6172 = vmatpush.bf16.msra.mxu0 %v4058
    %6173 = vmatpush.bf16.msra.mxu0 %v4054
    %6174 = vmatpush.bf16.msra.mxu0 %v4050
    %6175 = vmatpush.bf16.msra.mxu0 %v4046
    %6176 = vmatpush.bf16.msra.mxu0 %v4042
    %6177 = vmatmul.bf16.gmra.mxu0 %v220
    %v6178 = vpop.f32.mrf.mxu0
    %v6179 = vadd.f32 %v6165, %v6178
    %v6180 = vpop.f32.mrf.mxu0
    %v6181 = vadd.f32 %v6167, %v6180
    %6182 = vdwg.mxu0
    %vm6183 = vcmp.ge.f32.partialorder %v5171, 0.0
    %vm6184 = vcmp.ge.f32.partialorder %v5507, 0.0
    %vm6185 = vcmp.ge.f32.partialorder %v5843, 0.0
    %vm6186 = vcmp.ge.f32.partialorder %v6179, 0.0
    %vm6187 = vcmp.ge.f32.partialorder %v5173, 0.0
    %vm6188 = vcmp.ge.f32.partialorder %v5509, 0.0
    %vm6189 = vcmp.ge.f32.partialorder %v5845, 0.0
    %vm6190 = vcmp.ge.f32.partialorder %v6181, 0.0
    %v6191 = vmul.f32 %v5171, 0.2
    %v6192 = vmul.f32 %v5507, 0.2
    %v6193 = vmul.f32 %v5843, 0.2
    %v6194 = vmul.f32 %v6179, 0.2
    %v6195 = vmul.f32 %v5173, 0.2
    %v6196 = vmul.f32 %v5509, 0.2
    %v6197 = vmul.f32 %v5845, 0.2
    %v6198 = vmul.f32 %v6181, 0.2
    %v6199 = vsel %vm6183, %v5171, %v6191
    %v6200 = vsel %vm6184, %v5507, %v6192
    %v6201 = vsel %vm6185, %v5843, %v6193
    %v6202 = vsel %vm6186, %v6179, %v6194
    %v6203 = vsel %vm6187, %v5173, %v6195
    %v6204 = vsel %vm6188, %v5509, %v6196
    %v6205 = vsel %vm6189, %v5845, %v6197
    %v6206 = vsel %vm6190, %v6181, %v6198
    %v6207 = vpack.c.bf16 %v6203, %v6199
    %v6208 = vpack.c.bf16 %v6204, %v6200
    %v6209 = vpack.c.bf16 %v6205, %v6201
    %v6210 = vpack.c.bf16 %v6206, %v6202
    %v6211 = vld [vmem:[#allocation6] sm:$0xff]
    %v6212 = vld [vmem:[#allocation6 + $0x8] sm:$0xff]
    %v6213 = vld [vmem:[#allocation6 + $0x10] sm:$0xff]
    %v6214 = vld [vmem:[#allocation6 + $0x18] sm:$0xff]
    %v6215 = vld [vmem:[#allocation6 + $0x20] sm:$0xff]
    %v6216 = vld [vmem:[#allocation6 + $0x28] sm:$0xff]
    %v6217 = vld [vmem:[#allocation6 + $0x30] sm:$0xff]
    %v6218 = vld [vmem:[#allocation6 + $0x38] sm:$0xff]
    %v6219 = vld [vmem:[#allocation6 + $0x40] sm:$0xff]
    %v6220 = vld [vmem:[#allocation6 + $0x48] sm:$0xff]
    %v6221 = vld [vmem:[#allocation6 + $0x50] sm:$0xff]
    %v6222 = vld [vmem:[#allocation6 + $0x58] sm:$0xff]
    %v6223 = vld [vmem:[#allocation6 + $0x60] sm:$0xff]
    %v6224 = vld [vmem:[#allocation6 + $0x68] sm:$0xff]
    %v6225 = vld [vmem:[#allocation6 + $0x70] sm:$0xff]
    %v6226 = vld [vmem:[#allocation6 + $0x78] sm:$0xff]
    %v6227 = vld [vmem:[#allocation6 + $0x80] sm:$0xff]
    %v6228 = vld [vmem:[#allocation6 + $0x88] sm:$0xff]
    %v6229 = vld [vmem:[#allocation6 + $0x90] sm:$0xff]
    %v6230 = vld [vmem:[#allocation6 + $0x98] sm:$0xff]
    %v6231 = vld [vmem:[#allocation6 + $0xa0] sm:$0xff]
    %v6232 = vld [vmem:[#allocation6 + $0xa8] sm:$0xff]
    %v6233 = vld [vmem:[#allocation6 + $0xb0] sm:$0xff]
    %v6234 = vld [vmem:[#allocation6 + $0xb8] sm:$0xff]
    %v6235 = vld [vmem:[#allocation6 + $0xc0] sm:$0xff]
    %v6236 = vld [vmem:[#allocation6 + $0xc8] sm:$0xff]
    %v6237 = vld [vmem:[#allocation6 + $0xd0] sm:$0xff]
    %v6238 = vld [vmem:[#allocation6 + $0xd8] sm:$0xff]
    %v6239 = vld [vmem:[#allocation6 + $0xe0] sm:$0xff]
    %v6240 = vld [vmem:[#allocation6 + $0xe8] sm:$0xff]
    %v6241 = vld [vmem:[#allocation6 + $0xf0] sm:$0xff]
    %v6242 = vld [vmem:[#allocation6 + $0xf8] sm:$0xff]
    %v6243 = vld [vmem:[#allocation6 + $0x100] sm:$0xff]
    %v6244 = vld [vmem:[#allocation6 + $0x108] sm:$0xff]
    %v6245 = vld [vmem:[#allocation6 + $0x110] sm:$0xff]
    %v6246 = vld [vmem:[#allocation6 + $0x118] sm:$0xff]
    %v6247 = vld [vmem:[#allocation6 + $0x120] sm:$0xff]
    %v6248 = vld [vmem:[#allocation6 + $0x128] sm:$0xff]
    %v6249 = vld [vmem:[#allocation6 + $0x130] sm:$0xff]
    %v6250 = vld [vmem:[#allocation6 + $0x138] sm:$0xff]
    %v6251 = vld [vmem:[#allocation6 + $0x140] sm:$0xff]
    %v6252 = vld [vmem:[#allocation6 + $0x148] sm:$0xff]
    %v6253 = vld [vmem:[#allocation6 + $0x150] sm:$0xff]
    %v6254 = vld [vmem:[#allocation6 + $0x158] sm:$0xff]
    %v6255 = vld [vmem:[#allocation6 + $0x160] sm:$0xff]
    %v6256 = vld [vmem:[#allocation6 + $0x168] sm:$0xff]
    %v6257 = vld [vmem:[#allocation6 + $0x170] sm:$0xff]
    %v6258 = vld [vmem:[#allocation6 + $0x178] sm:$0xff]
    %v6259 = vld [vmem:[#allocation6 + $0x180] sm:$0xff]
    %v6260 = vld [vmem:[#allocation6 + $0x188] sm:$0xff]
    %v6261 = vld [vmem:[#allocation6 + $0x190] sm:$0xff]
    %v6262 = vld [vmem:[#allocation6 + $0x198] sm:$0xff]
    %v6263 = vld [vmem:[#allocation6 + $0x1a0] sm:$0xff]
    %v6264 = vld [vmem:[#allocation6 + $0x1a8] sm:$0xff]
    %v6265 = vld [vmem:[#allocation6 + $0x1b0] sm:$0xff]
    %v6266 = vld [vmem:[#allocation6 + $0x1b8] sm:$0xff]
    %v6267 = vld [vmem:[#allocation6 + $0x1c0] sm:$0xff]
    %v6268 = vld [vmem:[#allocation6 + $0x1c8] sm:$0xff]
    %v6269 = vld [vmem:[#allocation6 + $0x1d0] sm:$0xff]
    %v6270 = vld [vmem:[#allocation6 + $0x1d8] sm:$0xff]
    %v6271 = vld [vmem:[#allocation6 + $0x1e0] sm:$0xff]
    %v6272 = vld [vmem:[#allocation6 + $0x1e8] sm:$0xff]
    %v6273 = vld [vmem:[#allocation6 + $0x1f0] sm:$0xff]
    %v6274 = vld [vmem:[#allocation6 + $0x1f8] sm:$0xff]
    %v6275 = vld [vmem:[#allocation6 + $0x200] sm:$0xff]
    %v6276 = vld [vmem:[#allocation6 + $0x208] sm:$0xff]
    %v6277 = vld [vmem:[#allocation6 + $0x210] sm:$0xff]
    %v6278 = vld [vmem:[#allocation6 + $0x218] sm:$0xff]
    %v6279 = vld [vmem:[#allocation6 + $0x220] sm:$0xff]
    %v6280 = vld [vmem:[#allocation6 + $0x228] sm:$0xff]
    %v6281 = vld [vmem:[#allocation6 + $0x230] sm:$0xff]
    %v6282 = vld [vmem:[#allocation6 + $0x238] sm:$0xff]
    %v6283 = vld [vmem:[#allocation6 + $0x240] sm:$0xff]
    %v6284 = vld [vmem:[#allocation6 + $0x248] sm:$0xff]
    %v6285 = vld [vmem:[#allocation6 + $0x250] sm:$0xff]
    %v6286 = vld [vmem:[#allocation6 + $0x258] sm:$0xff]
    %v6287 = vld [vmem:[#allocation6 + $0x260] sm:$0xff]
    %v6288 = vld [vmem:[#allocation6 + $0x268] sm:$0xff]
    %v6289 = vld [vmem:[#allocation6 + $0x270] sm:$0xff]
    %v6290 = vld [vmem:[#allocation6 + $0x278] sm:$0xff]
    %v6291 = vld [vmem:[#allocation6 + $0x280] sm:$0xff]
    %v6292 = vld [vmem:[#allocation6 + $0x288] sm:$0xff]
    %v6293 = vld [vmem:[#allocation6 + $0x290] sm:$0xff]
    %v6294 = vld [vmem:[#allocation6 + $0x298] sm:$0xff]
    %v6295 = vld [vmem:[#allocation6 + $0x2a0] sm:$0xff]
    %v6296 = vld [vmem:[#allocation6 + $0x2a8] sm:$0xff]
    %v6297 = vld [vmem:[#allocation6 + $0x2b0] sm:$0xff]
    %v6298 = vld [vmem:[#allocation6 + $0x2b8] sm:$0xff]
    %v6299 = vld [vmem:[#allocation6 + $0x2c0] sm:$0xff]
    %v6300 = vld [vmem:[#allocation6 + $0x2c8] sm:$0xff]
    %v6301 = vld [vmem:[#allocation6 + $0x2d0] sm:$0xff]
    %v6302 = vld [vmem:[#allocation6 + $0x2d8] sm:$0xff]
    %v6303 = vld [vmem:[#allocation6 + $0x2e0] sm:$0xff]
    %v6304 = vld [vmem:[#allocation6 + $0x2e8] sm:$0xff]
    %v6305 = vld [vmem:[#allocation6 + $0x2f0] sm:$0xff]
    %v6306 = vld [vmem:[#allocation6 + $0x2f8] sm:$0xff]
    %v6307 = vld [vmem:[#allocation6 + $0x300] sm:$0xff]
    %v6308 = vld [vmem:[#allocation6 + $0x308] sm:$0xff]
    %v6309 = vld [vmem:[#allocation6 + $0x310] sm:$0xff]
    %v6310 = vld [vmem:[#allocation6 + $0x318] sm:$0xff]
    %v6311 = vld [vmem:[#allocation6 + $0x320] sm:$0xff]
    %v6312 = vld [vmem:[#allocation6 + $0x328] sm:$0xff]
    %v6313 = vld [vmem:[#allocation6 + $0x330] sm:$0xff]
    %v6314 = vld [vmem:[#allocation6 + $0x338] sm:$0xff]
    %v6315 = vld [vmem:[#allocation6 + $0x340] sm:$0xff]
    %v6316 = vld [vmem:[#allocation6 + $0x348] sm:$0xff]
    %v6317 = vld [vmem:[#allocation6 + $0x350] sm:$0xff]
    %v6318 = vld [vmem:[#allocation6 + $0x358] sm:$0xff]
    %v6319 = vld [vmem:[#allocation6 + $0x360] sm:$0xff]
    %v6320 = vld [vmem:[#allocation6 + $0x368] sm:$0xff]
    %v6321 = vld [vmem:[#allocation6 + $0x370] sm:$0xff]
    %v6322 = vld [vmem:[#allocation6 + $0x378] sm:$0xff]
    %v6323 = vld [vmem:[#allocation6 + $0x380] sm:$0xff]
    %v6324 = vld [vmem:[#allocation6 + $0x388] sm:$0xff]
    %v6325 = vld [vmem:[#allocation6 + $0x390] sm:$0xff]
    %v6326 = vld [vmem:[#allocation6 + $0x398] sm:$0xff]
    %v6327 = vld [vmem:[#allocation6 + $0x3a0] sm:$0xff]
    %v6328 = vld [vmem:[#allocation6 + $0x3a8] sm:$0xff]
    %v6329 = vld [vmem:[#allocation6 + $0x3b0] sm:$0xff]
    %v6330 = vld [vmem:[#allocation6 + $0x3b8] sm:$0xff]
    %v6331 = vld [vmem:[#allocation6 + $0x3c0] sm:$0xff]
    %v6332 = vld [vmem:[#allocation6 + $0x3c8] sm:$0xff]
    %v6333 = vld [vmem:[#allocation6 + $0x3d0] sm:$0xff]
    %v6334 = vld [vmem:[#allocation6 + $0x3d8] sm:$0xff]
    %v6335 = vld [vmem:[#allocation6 + $0x3e0] sm:$0xff]
    %v6336 = vld [vmem:[#allocation6 + $0x3e8] sm:$0xff]
    %v6337 = vld [vmem:[#allocation6 + $0x3f0] sm:$0xff]
    %v6338 = vld [vmem:[#allocation6 + $0x3f8] sm:$0xff]
    %v6339 = vld [vmem:[#allocation7] sm:$0xf]
    %v6341 = vperm.slane %v6339, 0
    %v6342 = vperm.slane %v6339, 1
    %v6343 = vperm.slane %v6339, 2
    %v6344 = vperm.slane %v6339, 3
    %v6477 = vunpack.c.l.b16 %v6211
    %v6478 = vunpack.c.h.b16 %v6211
    %v6479 = vunpack.c.l.b16 %v6212
    %v6480 = vunpack.c.h.b16 %v6212
    %v6481 = vunpack.c.l.b16 %v6213
    %v6482 = vunpack.c.h.b16 %v6213
    %v6483 = vunpack.c.l.b16 %v6214
    %v6484 = vunpack.c.h.b16 %v6214
    %v6485 = vunpack.c.l.b16 %v6215
    %v6486 = vunpack.c.h.b16 %v6215
    %v6487 = vunpack.c.l.b16 %v6216
    %v6488 = vunpack.c.h.b16 %v6216
    %v6489 = vunpack.c.l.b16 %v6217
    %v6490 = vunpack.c.h.b16 %v6217
    %v6491 = vunpack.c.l.b16 %v6218
    %v6492 = vunpack.c.h.b16 %v6218
    %v6493 = vunpack.c.l.b16 %v6219
    %v6494 = vunpack.c.h.b16 %v6219
    %v6495 = vunpack.c.l.b16 %v6220
    %v6496 = vunpack.c.h.b16 %v6220
    %v6497 = vunpack.c.l.b16 %v6221
    %v6498 = vunpack.c.h.b16 %v6221
    %v6499 = vunpack.c.l.b16 %v6222
    %v6500 = vunpack.c.h.b16 %v6222
    %v6501 = vunpack.c.l.b16 %v6223
    %v6502 = vunpack.c.h.b16 %v6223
    %v6503 = vunpack.c.l.b16 %v6224
    %v6504 = vunpack.c.h.b16 %v6224
    %v6505 = vunpack.c.l.b16 %v6225
    %v6506 = vunpack.c.h.b16 %v6225
    %v6507 = vunpack.c.l.b16 %v6226
    %v6508 = vunpack.c.h.b16 %v6226
    %v6509 = vunpack.c.l.b16 %v6227
    %v6510 = vunpack.c.h.b16 %v6227
    %v6511 = vunpack.c.l.b16 %v6228
    %v6512 = vunpack.c.h.b16 %v6228
    %v6513 = vunpack.c.l.b16 %v6229
    %v6514 = vunpack.c.h.b16 %v6229
    %v6515 = vunpack.c.l.b16 %v6230
    %v6516 = vunpack.c.h.b16 %v6230
    %v6517 = vunpack.c.l.b16 %v6231
    %v6518 = vunpack.c.h.b16 %v6231
    %v6519 = vunpack.c.l.b16 %v6232
    %v6520 = vunpack.c.h.b16 %v6232
    %v6521 = vunpack.c.l.b16 %v6233
    %v6522 = vunpack.c.h.b16 %v6233
    %v6523 = vunpack.c.l.b16 %v6234
    %v6524 = vunpack.c.h.b16 %v6234
    %v6525 = vunpack.c.l.b16 %v6235
    %v6526 = vunpack.c.h.b16 %v6235
    %v6527 = vunpack.c.l.b16 %v6236
    %v6528 = vunpack.c.h.b16 %v6236
    %v6529 = vunpack.c.l.b16 %v6237
    %v6530 = vunpack.c.h.b16 %v6237
    %v6531 = vunpack.c.l.b16 %v6238
    %v6532 = vunpack.c.h.b16 %v6238
    %v6533 = vunpack.c.l.b16 %v6239
    %v6534 = vunpack.c.h.b16 %v6239
    %v6535 = vunpack.c.l.b16 %v6240
    %v6536 = vunpack.c.h.b16 %v6240
    %v6537 = vunpack.c.l.b16 %v6241
    %v6538 = vunpack.c.h.b16 %v6241
    %v6539 = vunpack.c.l.b16 %v6242
    %v6540 = vunpack.c.h.b16 %v6242
    %v6541 = vunpack.c.l.b16 %v6243
    %v6542 = vunpack.c.h.b16 %v6243
    %v6543 = vunpack.c.l.b16 %v6244
    %v6544 = vunpack.c.h.b16 %v6244
    %v6545 = vunpack.c.l.b16 %v6245
    %v6546 = vunpack.c.h.b16 %v6245
    %v6547 = vunpack.c.l.b16 %v6246
    %v6548 = vunpack.c.h.b16 %v6246
    %v6549 = vunpack.c.l.b16 %v6247
    %v6550 = vunpack.c.h.b16 %v6247
    %v6551 = vunpack.c.l.b16 %v6248
    %v6552 = vunpack.c.h.b16 %v6248
    %v6553 = vunpack.c.l.b16 %v6249
    %v6554 = vunpack.c.h.b16 %v6249
    %v6555 = vunpack.c.l.b16 %v6250
    %v6556 = vunpack.c.h.b16 %v6250
    %v6557 = vunpack.c.l.b16 %v6251
    %v6558 = vunpack.c.h.b16 %v6251
    %v6559 = vunpack.c.l.b16 %v6252
    %v6560 = vunpack.c.h.b16 %v6252
    %v6561 = vunpack.c.l.b16 %v6253
    %v6562 = vunpack.c.h.b16 %v6253
    %v6563 = vunpack.c.l.b16 %v6254
    %v6564 = vunpack.c.h.b16 %v6254
    %v6565 = vunpack.c.l.b16 %v6255
    %v6566 = vunpack.c.h.b16 %v6255
    %v6567 = vunpack.c.l.b16 %v6256
    %v6568 = vunpack.c.h.b16 %v6256
    %v6569 = vunpack.c.l.b16 %v6257
    %v6570 = vunpack.c.h.b16 %v6257
    %v6571 = vunpack.c.l.b16 %v6258
    %v6572 = vunpack.c.h.b16 %v6258
    %v6573 = vunpack.c.l.b16 %v6259
    %v6574 = vunpack.c.h.b16 %v6259
    %v6575 = vunpack.c.l.b16 %v6260
    %v6576 = vunpack.c.h.b16 %v6260
    %v6577 = vunpack.c.l.b16 %v6261
    %v6578 = vunpack.c.h.b16 %v6261
    %v6579 = vunpack.c.l.b16 %v6262
    %v6580 = vunpack.c.h.b16 %v6262
    %v6581 = vunpack.c.l.b16 %v6263
    %v6582 = vunpack.c.h.b16 %v6263
    %v6583 = vunpack.c.l.b16 %v6264
    %v6584 = vunpack.c.h.b16 %v6264
    %v6585 = vunpack.c.l.b16 %v6265
    %v6586 = vunpack.c.h.b16 %v6265
    %v6587 = vunpack.c.l.b16 %v6266
    %v6588 = vunpack.c.h.b16 %v6266
    %v6589 = vunpack.c.l.b16 %v6267
    %v6590 = vunpack.c.h.b16 %v6267
    %v6591 = vunpack.c.l.b16 %v6268
    %v6592 = vunpack.c.h.b16 %v6268
    %v6593 = vunpack.c.l.b16 %v6269
    %v6594 = vunpack.c.h.b16 %v6269
    %v6595 = vunpack.c.l.b16 %v6270
    %v6596 = vunpack.c.h.b16 %v6270
    %v6597 = vunpack.c.l.b16 %v6271
    %v6598 = vunpack.c.h.b16 %v6271
    %v6599 = vunpack.c.l.b16 %v6272
    %v6600 = vunpack.c.h.b16 %v6272
    %v6601 = vunpack.c.l.b16 %v6273
    %v6602 = vunpack.c.h.b16 %v6273
    %v6603 = vunpack.c.l.b16 %v6274
    %v6604 = vunpack.c.h.b16 %v6274
    %v6605 = vunpack.c.l.b16 %v6275
    %v6606 = vunpack.c.h.b16 %v6275
    %v6607 = vunpack.c.l.b16 %v6276
    %v6608 = vunpack.c.h.b16 %v6276
    %v6609 = vunpack.c.l.b16 %v6277
    %v6610 = vunpack.c.h.b16 %v6277
    %v6611 = vunpack.c.l.b16 %v6278
    %v6612 = vunpack.c.h.b16 %v6278
    %v6613 = vunpack.c.l.b16 %v6279
    %v6614 = vunpack.c.h.b16 %v6279
    %v6615 = vunpack.c.l.b16 %v6280
    %v6616 = vunpack.c.h.b16 %v6280
    %v6617 = vunpack.c.l.b16 %v6281
    %v6618 = vunpack.c.h.b16 %v6281
    %v6619 = vunpack.c.l.b16 %v6282
    %v6620 = vunpack.c.h.b16 %v6282
    %v6621 = vunpack.c.l.b16 %v6283
    %v6622 = vunpack.c.h.b16 %v6283
    %v6623 = vunpack.c.l.b16 %v6284
    %v6624 = vunpack.c.h.b16 %v6284
    %v6625 = vunpack.c.l.b16 %v6285
    %v6626 = vunpack.c.h.b16 %v6285
    %v6627 = vunpack.c.l.b16 %v6286
    %v6628 = vunpack.c.h.b16 %v6286
    %v6629 = vunpack.c.l.b16 %v6287
    %v6630 = vunpack.c.h.b16 %v6287
    %v6631 = vunpack.c.l.b16 %v6288
    %v6632 = vunpack.c.h.b16 %v6288
    %v6633 = vunpack.c.l.b16 %v6289
    %v6634 = vunpack.c.h.b16 %v6289
    %v6635 = vunpack.c.l.b16 %v6290
    %v6636 = vunpack.c.h.b16 %v6290
    %v6637 = vunpack.c.l.b16 %v6291
    %v6638 = vunpack.c.h.b16 %v6291
    %v6639 = vunpack.c.l.b16 %v6292
    %v6640 = vunpack.c.h.b16 %v6292
    %v6641 = vunpack.c.l.b16 %v6293
    %v6642 = vunpack.c.h.b16 %v6293
    %v6643 = vunpack.c.l.b16 %v6294
    %v6644 = vunpack.c.h.b16 %v6294
    %v6645 = vunpack.c.l.b16 %v6295
    %v6646 = vunpack.c.h.b16 %v6295
    %v6647 = vunpack.c.l.b16 %v6296
    %v6648 = vunpack.c.h.b16 %v6296
    %v6649 = vunpack.c.l.b16 %v6297
    %v6650 = vunpack.c.h.b16 %v6297
    %v6651 = vunpack.c.l.b16 %v6298
    %v6652 = vunpack.c.h.b16 %v6298
    %v6653 = vunpack.c.l.b16 %v6299
    %v6654 = vunpack.c.h.b16 %v6299
    %v6655 = vunpack.c.l.b16 %v6300
    %v6656 = vunpack.c.h.b16 %v6300
    %v6657 = vunpack.c.l.b16 %v6301
    %v6658 = vunpack.c.h.b16 %v6301
    %v6659 = vunpack.c.l.b16 %v6302
    %v6660 = vunpack.c.h.b16 %v6302
    %v6661 = vunpack.c.l.b16 %v6303
    %v6662 = vunpack.c.h.b16 %v6303
    %v6663 = vunpack.c.l.b16 %v6304
    %v6664 = vunpack.c.h.b16 %v6304
    %v6665 = vunpack.c.l.b16 %v6305
    %v6666 = vunpack.c.h.b16 %v6305
    %v6667 = vunpack.c.l.b16 %v6306
    %v6668 = vunpack.c.h.b16 %v6306
    %v6669 = vunpack.c.l.b16 %v6307
    %v6670 = vunpack.c.h.b16 %v6307
    %v6671 = vunpack.c.l.b16 %v6308
    %v6672 = vunpack.c.h.b16 %v6308
    %v6673 = vunpack.c.l.b16 %v6309
    %v6674 = vunpack.c.h.b16 %v6309
    %v6675 = vunpack.c.l.b16 %v6310
    %v6676 = vunpack.c.h.b16 %v6310
    %v6677 = vunpack.c.l.b16 %v6311
    %v6678 = vunpack.c.h.b16 %v6311
    %v6679 = vunpack.c.l.b16 %v6312
    %v6680 = vunpack.c.h.b16 %v6312
    %v6681 = vunpack.c.l.b16 %v6313
    %v6682 = vunpack.c.h.b16 %v6313
    %v6683 = vunpack.c.l.b16 %v6314
    %v6684 = vunpack.c.h.b16 %v6314
    %v6685 = vunpack.c.l.b16 %v6315
    %v6686 = vunpack.c.h.b16 %v6315
    %v6687 = vunpack.c.l.b16 %v6316
    %v6688 = vunpack.c.h.b16 %v6316
    %v6689 = vunpack.c.l.b16 %v6317
    %v6690 = vunpack.c.h.b16 %v6317
    %v6691 = vunpack.c.l.b16 %v6318
    %v6692 = vunpack.c.h.b16 %v6318
    %v6693 = vunpack.c.l.b16 %v6319
    %v6694 = vunpack.c.h.b16 %v6319
    %v6695 = vunpack.c.l.b16 %v6320
    %v6696 = vunpack.c.h.b16 %v6320
    %v6697 = vunpack.c.l.b16 %v6321
    %v6698 = vunpack.c.h.b16 %v6321
    %v6699 = vunpack.c.l.b16 %v6322
    %v6700 = vunpack.c.h.b16 %v6322
    %v6701 = vunpack.c.l.b16 %v6323
    %v6702 = vunpack.c.h.b16 %v6323
    %v6703 = vunpack.c.l.b16 %v6324
    %v6704 = vunpack.c.h.b16 %v6324
    %v6705 = vunpack.c.l.b16 %v6325
    %v6706 = vunpack.c.h.b16 %v6325
    %v6707 = vunpack.c.l.b16 %v6326
    %v6708 = vunpack.c.h.b16 %v6326
    %v6709 = vunpack.c.l.b16 %v6327
    %v6710 = vunpack.c.h.b16 %v6327
    %v6711 = vunpack.c.l.b16 %v6328
    %v6712 = vunpack.c.h.b16 %v6328
    %v6713 = vunpack.c.l.b16 %v6329
    %v6714 = vunpack.c.h.b16 %v6329
    %v6715 = vunpack.c.l.b16 %v6330
    %v6716 = vunpack.c.h.b16 %v6330
    %v6717 = vunpack.c.l.b16 %v6331
    %v6718 = vunpack.c.h.b16 %v6331
    %v6719 = vunpack.c.l.b16 %v6332
    %v6720 = vunpack.c.h.b16 %v6332
    %v6721 = vunpack.c.l.b16 %v6333
    %v6722 = vunpack.c.h.b16 %v6333
    %v6723 = vunpack.c.l.b16 %v6334
    %v6724 = vunpack.c.h.b16 %v6334
    %v6725 = vunpack.c.l.b16 %v6335
    %v6726 = vunpack.c.h.b16 %v6335
    %v6727 = vunpack.c.l.b16 %v6336
    %v6728 = vunpack.c.h.b16 %v6336
    %v6729 = vunpack.c.l.b16 %v6337
    %v6730 = vunpack.c.h.b16 %v6337
    %v6731 = vunpack.c.l.b16 %v6338
    %v6732 = vunpack.c.h.b16 %v6338
    %v6733 = vpack.c.b16 %v6481, %v6477
    %v6734 = vpack.c.b16 %v6482, %v6478
    %v6735 = vpack.c.b16 %v6483, %v6479
    %v6736 = vpack.c.b16 %v6484, %v6480
    %v6737 = vpack.c.b16 %v6489, %v6485
    %v6738 = vpack.c.b16 %v6490, %v6486
    %v6739 = vpack.c.b16 %v6491, %v6487
    %v6740 = vpack.c.b16 %v6492, %v6488
    %v6741 = vpack.c.b16 %v6497, %v6493
    %v6742 = vpack.c.b16 %v6498, %v6494
    %v6743 = vpack.c.b16 %v6499, %v6495
    %v6744 = vpack.c.b16 %v6500, %v6496
    %v6745 = vpack.c.b16 %v6505, %v6501
    %v6746 = vpack.c.b16 %v6506, %v6502
    %v6747 = vpack.c.b16 %v6507, %v6503
    %v6748 = vpack.c.b16 %v6508, %v6504
    %v6749 = vpack.c.b16 %v6513, %v6509
    %v6750 = vpack.c.b16 %v6514, %v6510
    %v6751 = vpack.c.b16 %v6515, %v6511
    %v6752 = vpack.c.b16 %v6516, %v6512
    %v6753 = vpack.c.b16 %v6521, %v6517
    %v6754 = vpack.c.b16 %v6522, %v6518
    %v6755 = vpack.c.b16 %v6523, %v6519
    %v6756 = vpack.c.b16 %v6524, %v6520
    %v6757 = vpack.c.b16 %v6529, %v6525
    %v6758 = vpack.c.b16 %v6530, %v6526
    %v6759 = vpack.c.b16 %v6531, %v6527
    %v6760 = vpack.c.b16 %v6532, %v6528
    %v6761 = vpack.c.b16 %v6537, %v6533
    %v6762 = vpack.c.b16 %v6538, %v6534
    %v6763 = vpack.c.b16 %v6539, %v6535
    %v6764 = vpack.c.b16 %v6540, %v6536
    %v6765 = vpack.c.b16 %v6545, %v6541
    %v6766 = vpack.c.b16 %v6546, %v6542
    %v6767 = vpack.c.b16 %v6547, %v6543
    %v6768 = vpack.c.b16 %v6548, %v6544
    %v6769 = vpack.c.b16 %v6553, %v6549
    %v6770 = vpack.c.b16 %v6554, %v6550
    %v6771 = vpack.c.b16 %v6555, %v6551
    %v6772 = vpack.c.b16 %v6556, %v6552
    %v6773 = vpack.c.b16 %v6561, %v6557
    %v6774 = vpack.c.b16 %v6562, %v6558
    %v6775 = vpack.c.b16 %v6563, %v6559
    %v6776 = vpack.c.b16 %v6564, %v6560
    %v6777 = vpack.c.b16 %v6569, %v6565
    %v6778 = vpack.c.b16 %v6570, %v6566
    %v6779 = vpack.c.b16 %v6571, %v6567
    %v6780 = vpack.c.b16 %v6572, %v6568
    %v6781 = vpack.c.b16 %v6577, %v6573
    %v6782 = vpack.c.b16 %v6578, %v6574
    %v6783 = vpack.c.b16 %v6579, %v6575
    %v6784 = vpack.c.b16 %v6580, %v6576
    %v6785 = vpack.c.b16 %v6585, %v6581
    %v6786 = vpack.c.b16 %v6586, %v6582
    %v6787 = vpack.c.b16 %v6587, %v6583
    %v6788 = vpack.c.b16 %v6588, %v6584
    %v6789 = vpack.c.b16 %v6593, %v6589
    %v6790 = vpack.c.b16 %v6594, %v6590
    %v6791 = vpack.c.b16 %v6595, %v6591
    %v6792 = vpack.c.b16 %v6596, %v6592
    %v6793 = vpack.c.b16 %v6601, %v6597
    %v6794 = vpack.c.b16 %v6602, %v6598
    %v6795 = vpack.c.b16 %v6603, %v6599
    %v6796 = vpack.c.b16 %v6604, %v6600
    %v6797 = vpack.c.b16 %v6609, %v6605
    %v6798 = vpack.c.b16 %v6610, %v6606
    %v6799 = vpack.c.b16 %v6611, %v6607
    %v6800 = vpack.c.b16 %v6612, %v6608
    %v6801 = vpack.c.b16 %v6617, %v6613
    %v6802 = vpack.c.b16 %v6618, %v6614
    %v6803 = vpack.c.b16 %v6619, %v6615
    %v6804 = vpack.c.b16 %v6620, %v6616
    %v6805 = vpack.c.b16 %v6625, %v6621
    %v6806 = vpack.c.b16 %v6626, %v6622
    %v6807 = vpack.c.b16 %v6627, %v6623
    %v6808 = vpack.c.b16 %v6628, %v6624
    %v6809 = vpack.c.b16 %v6633, %v6629
    %v6810 = vpack.c.b16 %v6634, %v6630
    %v6811 = vpack.c.b16 %v6635, %v6631
    %v6812 = vpack.c.b16 %v6636, %v6632
    %v6813 = vpack.c.b16 %v6641, %v6637
    %v6814 = vpack.c.b16 %v6642, %v6638
    %v6815 = vpack.c.b16 %v6643, %v6639
    %v6816 = vpack.c.b16 %v6644, %v6640
    %v6817 = vpack.c.b16 %v6649, %v6645
    %v6818 = vpack.c.b16 %v6650, %v6646
    %v6819 = vpack.c.b16 %v6651, %v6647
    %v6820 = vpack.c.b16 %v6652, %v6648
    %v6821 = vpack.c.b16 %v6657, %v6653
    %v6822 = vpack.c.b16 %v6658, %v6654
    %v6823 = vpack.c.b16 %v6659, %v6655
    %v6824 = vpack.c.b16 %v6660, %v6656
    %v6825 = vpack.c.b16 %v6665, %v6661
    %v6826 = vpack.c.b16 %v6666, %v6662
    %v6827 = vpack.c.b16 %v6667, %v6663
    %v6828 = vpack.c.b16 %v6668, %v6664
    %v6829 = vpack.c.b16 %v6673, %v6669
    %v6830 = vpack.c.b16 %v6674, %v6670
    %v6831 = vpack.c.b16 %v6675, %v6671
    %v6832 = vpack.c.b16 %v6676, %v6672
    %v6833 = vpack.c.b16 %v6681, %v6677
    %v6834 = vpack.c.b16 %v6682, %v6678
    %v6835 = vpack.c.b16 %v6683, %v6679
    %v6836 = vpack.c.b16 %v6684, %v6680
    %v6837 = vpack.c.b16 %v6689, %v6685
    %v6838 = vpack.c.b16 %v6690, %v6686
    %v6839 = vpack.c.b16 %v6691, %v6687
    %v6840 = vpack.c.b16 %v6692, %v6688
    %v6841 = vpack.c.b16 %v6697, %v6693
    %v6842 = vpack.c.b16 %v6698, %v6694
    %v6843 = vpack.c.b16 %v6699, %v6695
    %v6844 = vpack.c.b16 %v6700, %v6696
    %v6845 = vpack.c.b16 %v6705, %v6701
    %v6846 = vpack.c.b16 %v6706, %v6702
    %v6847 = vpack.c.b16 %v6707, %v6703
    %v6848 = vpack.c.b16 %v6708, %v6704
    %v6849 = vpack.c.b16 %v6713, %v6709
    %v6850 = vpack.c.b16 %v6714, %v6710
    %v6851 = vpack.c.b16 %v6715, %v6711
    %v6852 = vpack.c.b16 %v6716, %v6712
    %v6853 = vpack.c.b16 %v6721, %v6717
    %v6854 = vpack.c.b16 %v6722, %v6718
    %v6855 = vpack.c.b16 %v6723, %v6719
    %v6856 = vpack.c.b16 %v6724, %v6720
    %v6857 = vpack.c.b16 %v6729, %v6725
    %v6858 = vpack.c.b16 %v6730, %v6726
    %v6859 = vpack.c.b16 %v6731, %v6727
    %v6860 = vpack.c.b16 %v6732, %v6728
    %6989 = vmatpush.bf16.msra.mxu0 %v6761
    %6990 = vmatpush.bf16.msra.mxu0 %v6757
    %6991 = vmatpush.bf16.msra.mxu0 %v6753
    %6992 = vmatpush.bf16.msra.mxu0 %v6749
    %6993 = vmatpush.bf16.msra.mxu0 %v6745
    %6994 = vmatpush.bf16.msra.mxu0 %v6741
    %6995 = vmatpush.bf16.msra.mxu0 %v6737
    %6996 = vmatpush.bf16.msra.mxu0 %v6733
    %6997 = vmatmul.bf16.gmra.mxu0 %v6207
    %v6998 = vpop.f32.mrf.mxu0
    %v6999 = vadd.f32 %v6341, %v6998
    %v7000 = vpop.f32.mrf.mxu0
    %v7001 = vadd.f32 %v6341, %v7000
    %7002 = vdwg.mxu0
    %7003 = vmatpush.bf16.msra.mxu0 %v6793
    %7004 = vmatpush.bf16.msra.mxu0 %v6789
    %7005 = vmatpush.bf16.msra.mxu0 %v6785
    %7006 = vmatpush.bf16.msra.mxu0 %v6781
    %7007 = vmatpush.bf16.msra.mxu0 %v6777
    %7008 = vmatpush.bf16.msra.mxu0 %v6773
    %7009 = vmatpush.bf16.msra.mxu0 %v6769
    %7010 = vmatpush.bf16.msra.mxu0 %v6765
    %7011 = vmatmul.bf16.gmra.mxu0 %v6208
    %v7012 = vpop.f32.mrf.mxu0
    %v7013 = vadd.f32 %v6999, %v7012
    %v7014 = vpop.f32.mrf.mxu0
    %v7015 = vadd.f32 %v7001, %v7014
    %7016 = vdwg.mxu0
    %7017 = vmatpush.bf16.msra.mxu0 %v6825
    %7018 = vmatpush.bf16.msra.mxu0 %v6821
    %7019 = vmatpush.bf16.msra.mxu0 %v6817
    %7020 = vmatpush.bf16.msra.mxu0 %v6813
    %7021 = vmatpush.bf16.msra.mxu0 %v6809
    %7022 = vmatpush.bf16.msra.mxu0 %v6805
    %7023 = vmatpush.bf16.msra.mxu0 %v6801
    %7024 = vmatpush.bf16.msra.mxu0 %v6797
    %7025 = vmatmul.bf16.gmra.mxu0 %v6209
    %v7026 = vpop.f32.mrf.mxu0
    %v7027 = vadd.f32 %v7013, %v7026
    %v7028 = vpop.f32.mrf.mxu0
    %v7029 = vadd.f32 %v7015, %v7028
    %7030 = vdwg.mxu0
    %7031 = vmatpush.bf16.msra.mxu0 %v6857
    %7032 = vmatpush.bf16.msra.mxu0 %v6853
    %7033 = vmatpush.bf16.msra.mxu0 %v6849
    %7034 = vmatpush.bf16.msra.mxu0 %v6845
    %7035 = vmatpush.bf16.msra.mxu0 %v6841
    %7036 = vmatpush.bf16.msra.mxu0 %v6837
    %7037 = vmatpush.bf16.msra.mxu0 %v6833
    %7038 = vmatpush.bf16.msra.mxu0 %v6829
    %7039 = vmatmul.bf16.gmra.mxu0 %v6210
    %v7040 = vpop.f32.mrf.mxu0
    %v7041 = vadd.f32 %v7027, %v7040
    %v7042 = vpop.f32.mrf.mxu0
    %v7043 = vadd.f32 %v7029, %v7042
    %7044 = vdwg.mxu0
    %7045 = vmatpush.bf16.msra.mxu0 %v6762
    %7046 = vmatpush.bf16.msra.mxu0 %v6758
    %7047 = vmatpush.bf16.msra.mxu0 %v6754
    %7048 = vmatpush.bf16.msra.mxu0 %v6750
    %7049 = vmatpush.bf16.msra.mxu0 %v6746
    %7050 = vmatpush.bf16.msra.mxu0 %v6742
    %7051 = vmatpush.bf16.msra.mxu0 %v6738
    %7052 = vmatpush.bf16.msra.mxu0 %v6734
    %7053 = vmatmul.bf16.gmra.mxu0 %v6207
    %v7054 = vpop.f32.mrf.mxu0
    %v7055 = vadd.f32 %v6342, %v7054
    %v7056 = vpop.f32.mrf.mxu0
    %v7057 = vadd.f32 %v6342, %v7056
    %7058 = vdwg.mxu0
    %7059 = vmatpush.bf16.msra.mxu0 %v6794
    %7060 = vmatpush.bf16.msra.mxu0 %v6790
    %7061 = vmatpush.bf16.msra.mxu0 %v6786
    %7062 = vmatpush.bf16.msra.mxu0 %v6782
    %7063 = vmatpush.bf16.msra.mxu0 %v6778
    %7064 = vmatpush.bf16.msra.mxu0 %v6774
    %7065 = vmatpush.bf16.msra.mxu0 %v6770
    %7066 = vmatpush.bf16.msra.mxu0 %v6766
    %7067 = vmatmul.bf16.gmra.mxu0 %v6208
    %v7068 = vpop.f32.mrf.mxu0
    %v7069 = vadd.f32 %v7055, %v7068
    %v7070 = vpop.f32.mrf.mxu0
    %v7071 = vadd.f32 %v7057, %v7070
    %7072 = vdwg.mxu0
    %7073 = vmatpush.bf16.msra.mxu0 %v6826
    %7074 = vmatpush.bf16.msra.mxu0 %v6822
    %7075 = vmatpush.bf16.msra.mxu0 %v6818
    %7076 = vmatpush.bf16.msra.mxu0 %v6814
    %7077 = vmatpush.bf16.msra.mxu0 %v6810
    %7078 = vmatpush.bf16.msra.mxu0 %v6806
    %7079 = vmatpush.bf16.msra.mxu0 %v6802
    %7080 = vmatpush.bf16.msra.mxu0 %v6798
    %7081 = vmatmul.bf16.gmra.mxu0 %v6209
    %v7082 = vpop.f32.mrf.mxu0
    %v7083 = vadd.f32 %v7069, %v7082
    %v7084 = vpop.f32.mrf.mxu0
    %v7085 = vadd.f32 %v7071, %v7084
    %7086 = vdwg.mxu0
    %7087 = vmatpush.bf16.msra.mxu0 %v6858
    %7088 = vmatpush.bf16.msra.mxu0 %v6854
    %7089 = vmatpush.bf16.msra.mxu0 %v6850
    %7090 = vmatpush.bf16.msra.mxu0 %v6846
    %7091 = vmatpush.bf16.msra.mxu0 %v6842
    %7092 = vmatpush.bf16.msra.mxu0 %v6838
    %7093 = vmatpush.bf16.msra.mxu0 %v6834
    %7094 = vmatpush.bf16.msra.mxu0 %v6830
    %7095 = vmatmul.bf16.gmra.mxu0 %v6210
    %v7096 = vpop.f32.mrf.mxu0
    %v7097 = vadd.f32 %v7083, %v7096
    %v7098 = vpop.f32.mrf.mxu0
    %v7099 = vadd.f32 %v7085, %v7098
    %7100 = vdwg.mxu0
    %7101 = vmatpush.bf16.msra.mxu0 %v6763
    %7102 = vmatpush.bf16.msra.mxu0 %v6759
    %7103 = vmatpush.bf16.msra.mxu0 %v6755
    %7104 = vmatpush.bf16.msra.mxu0 %v6751
    %7105 = vmatpush.bf16.msra.mxu0 %v6747
    %7106 = vmatpush.bf16.msra.mxu0 %v6743
    %7107 = vmatpush.bf16.msra.mxu0 %v6739
    %7108 = vmatpush.bf16.msra.mxu0 %v6735
    %7109 = vmatmul.bf16.gmra.mxu0 %v6207
    %v7110 = vpop.f32.mrf.mxu0
    %v7111 = vadd.f32 %v6343, %v7110
    %v7112 = vpop.f32.mrf.mxu0
    %v7113 = vadd.f32 %v6343, %v7112
    %7114 = vdwg.mxu0
    %7115 = vmatpush.bf16.msra.mxu0 %v6795
    %7116 = vmatpush.bf16.msra.mxu0 %v6791
    %7117 = vmatpush.bf16.msra.mxu0 %v6787
    %7118 = vmatpush.bf16.msra.mxu0 %v6783
    %7119 = vmatpush.bf16.msra.mxu0 %v6779
    %7120 = vmatpush.bf16.msra.mxu0 %v6775
    %7121 = vmatpush.bf16.msra.mxu0 %v6771
    %7122 = vmatpush.bf16.msra.mxu0 %v6767
    %7123 = vmatmul.bf16.gmra.mxu0 %v6208
    %v7124 = vpop.f32.mrf.mxu0
    %v7125 = vadd.f32 %v7111, %v7124
    %v7126 = vpop.f32.mrf.mxu0
    %v7127 = vadd.f32 %v7113, %v7126
    %7128 = vdwg.mxu0
    %7129 = vmatpush.bf16.msra.mxu0 %v6827
    %7130 = vmatpush.bf16.msra.mxu0 %v6823
    %7131 = vmatpush.bf16.msra.mxu0 %v6819
    %7132 = vmatpush.bf16.msra.mxu0 %v6815
    %7133 = vmatpush.bf16.msra.mxu0 %v6811
    %7134 = vmatpush.bf16.msra.mxu0 %v6807
    %7135 = vmatpush.bf16.msra.mxu0 %v6803
    %7136 = vmatpush.bf16.msra.mxu0 %v6799
    %7137 = vmatmul.bf16.gmra.mxu0 %v6209
    %v7138 = vpop.f32.mrf.mxu0
    %v7139 = vadd.f32 %v7125, %v7138
    %v7140 = vpop.f32.mrf.mxu0
    %v7141 = vadd.f32 %v7127, %v7140
    %7142 = vdwg.mxu0
    %7143 = vmatpush.bf16.msra.mxu0 %v6859
    %7144 = vmatpush.bf16.msra.mxu0 %v6855
    %7145 = vmatpush.bf16.msra.mxu0 %v6851
    %7146 = vmatpush.bf16.msra.mxu0 %v6847
    %7147 = vmatpush.bf16.msra.mxu0 %v6843
    %7148 = vmatpush.bf16.msra.mxu0 %v6839
    %7149 = vmatpush.bf16.msra.mxu0 %v6835
    %7150 = vmatpush.bf16.msra.mxu0 %v6831
    %7151 = vmatmul.bf16.gmra.mxu0 %v6210
    %v7152 = vpop.f32.mrf.mxu0
    %v7153 = vadd.f32 %v7139, %v7152
    %v7154 = vpop.f32.mrf.mxu0
    %v7155 = vadd.f32 %v7141, %v7154
    %7156 = vdwg.mxu0
    %7157 = vmatpush.bf16.msra.mxu0 %v6764
    %7158 = vmatpush.bf16.msra.mxu0 %v6760
    %7159 = vmatpush.bf16.msra.mxu0 %v6756
    %7160 = vmatpush.bf16.msra.mxu0 %v6752
    %7161 = vmatpush.bf16.msra.mxu0 %v6748
    %7162 = vmatpush.bf16.msra.mxu0 %v6744
    %7163 = vmatpush.bf16.msra.mxu0 %v6740
    %7164 = vmatpush.bf16.msra.mxu0 %v6736
    %7165 = vmatmul.bf16.gmra.mxu0 %v6207
    %v7166 = vpop.f32.mrf.mxu0
    %v7167 = vadd.f32 %v6344, %v7166
    %v7168 = vpop.f32.mrf.mxu0
    %v7169 = vadd.f32 %v6344, %v7168
    %7170 = vdwg.mxu0
    %7171 = vmatpush.bf16.msra.mxu0 %v6796
    %7172 = vmatpush.bf16.msra.mxu0 %v6792
    %7173 = vmatpush.bf16.msra.mxu0 %v6788
    %7174 = vmatpush.bf16.msra.mxu0 %v6784
    %7175 = vmatpush.bf16.msra.mxu0 %v6780
    %7176 = vmatpush.bf16.msra.mxu0 %v6776
    %7177 = vmatpush.bf16.msra.mxu0 %v6772
    %7178 = vmatpush.bf16.msra.mxu0 %v6768
    %7179 = vmatmul.bf16.gmra.mxu0 %v6208
    %v7180 = vpop.f32.mrf.mxu0
    %v7181 = vadd.f32 %v7167, %v7180
    %v7182 = vpop.f32.mrf.mxu0
    %v7183 = vadd.f32 %v7169, %v7182
    %7184 = vdwg.mxu0
    %7185 = vmatpush.bf16.msra.mxu0 %v6828
    %7186 = vmatpush.bf16.msra.mxu0 %v6824
    %7187 = vmatpush.bf16.msra.mxu0 %v6820
    %7188 = vmatpush.bf16.msra.mxu0 %v6816
    %7189 = vmatpush.bf16.msra.mxu0 %v6812
    %7190 = vmatpush.bf16.msra.mxu0 %v6808
    %7191 = vmatpush.bf16.msra.mxu0 %v6804
    %7192 = vmatpush.bf16.msra.mxu0 %v6800
    %7193 = vmatmul.bf16.gmra.mxu0 %v6209
    %v7194 = vpop.f32.mrf.mxu0
    %v7195 = vadd.f32 %v7181, %v7194
    %v7196 = vpop.f32.mrf.mxu0
    %v7197 = vadd.f32 %v7183, %v7196
    %7198 = vdwg.mxu0
    %7199 = vmatpush.bf16.msra.mxu0 %v6860
    %7200 = vmatpush.bf16.msra.mxu0 %v6856
    %7201 = vmatpush.bf16.msra.mxu0 %v6852
    %7202 = vmatpush.bf16.msra.mxu0 %v6848
    %7203 = vmatpush.bf16.msra.mxu0 %v6844
    %7204 = vmatpush.bf16.msra.mxu0 %v6840
    %7205 = vmatpush.bf16.msra.mxu0 %v6836
    %7206 = vmatpush.bf16.msra.mxu0 %v6832
    %7207 = vmatmul.bf16.gmra.mxu0 %v6210
    %v7208 = vpop.f32.mrf.mxu0
    %v7209 = vadd.f32 %v7195, %v7208
    %v7210 = vpop.f32.mrf.mxu0
    %v7211 = vadd.f32 %v7197, %v7210
    %7212 = vdwg.mxu0
    %vm7213 = vcmp.ge.f32.partialorder %v7041, 0.0
    %vm7214 = vcmp.ge.f32.partialorder %v7097, 0.0
    %vm7215 = vcmp.ge.f32.partialorder %v7153, 0.0
    %vm7216 = vcmp.ge.f32.partialorder %v7209, 0.0
    %vm7217 = vcmp.ge.f32.partialorder %v7043, 0.0
    %vm7218 = vcmp.ge.f32.partialorder %v7099, 0.0
    %vm7219 = vcmp.ge.f32.partialorder %v7155, 0.0
    %vm7220 = vcmp.ge.f32.partialorder %v7211, 0.0
    %v7221 = vmul.f32 %v7041, 0.2
    %v7222 = vmul.f32 %v7097, 0.2
    %v7223 = vmul.f32 %v7153, 0.2
    %v7224 = vmul.f32 %v7209, 0.2
    %v7225 = vmul.f32 %v7043, 0.2
    %v7226 = vmul.f32 %v7099, 0.2
    %v7227 = vmul.f32 %v7155, 0.2
    %v7228 = vmul.f32 %v7211, 0.2
    %v7229 = vsel %vm7213, %v7041, %v7221
    %v7230 = vsel %vm7214, %v7097, %v7222
    %v7231 = vsel %vm7215, %v7153, %v7223
    %v7232 = vsel %vm7216, %v7209, %v7224
    %v7233 = vsel %vm7217, %v7043, %v7225
    %v7234 = vsel %vm7218, %v7099, %v7226
    %v7235 = vsel %vm7219, %v7155, %v7227
    %v7236 = vsel %vm7220, %v7211, %v7228
    %v7237 = vpack.c.bf16 %v7233, %v7229
    %v7238 = vpack.c.bf16 %v7234, %v7230
    %v7239 = vpack.c.bf16 %v7235, %v7231
    %v7240 = vpack.c.bf16 %v7236, %v7232
    %v7241 = vld [vmem:[#allocation9] sm:$0xff]
    %v7242 = vld [vmem:[#allocation9 + $0x8] sm:$0xff]
    %v7243 = vld [vmem:[#allocation9 + $0x10] sm:$0xff]
    %v7244 = vld [vmem:[#allocation9 + $0x18] sm:$0xff]
    %v7245 = vld [vmem:[#allocation9 + $0x20] sm:$0xff]
    %v7246 = vld [vmem:[#allocation9 + $0x28] sm:$0xff]
    %v7247 = vld [vmem:[#allocation9 + $0x30] sm:$0xff]
    %v7248 = vld [vmem:[#allocation9 + $0x38] sm:$0xff]
    %v7249 = vld [vmem:[#allocation9 + $0x40] sm:$0xff]
    %v7250 = vld [vmem:[#allocation9 + $0x48] sm:$0xff]
    %v7251 = vld [vmem:[#allocation9 + $0x50] sm:$0xff]
    %v7252 = vld [vmem:[#allocation9 + $0x58] sm:$0xff]
    %v7253 = vld [vmem:[#allocation9 + $0x60] sm:$0xff]
    %v7254 = vld [vmem:[#allocation9 + $0x68] sm:$0xff]
    %v7255 = vld [vmem:[#allocation9 + $0x70] sm:$0xff]
    %v7256 = vld [vmem:[#allocation9 + $0x78] sm:$0xff]
    %v7257 = vld [vmem:[#allocation9 + $0x80] sm:$0xff]
    %v7258 = vld [vmem:[#allocation9 + $0x88] sm:$0xff]
    %v7259 = vld [vmem:[#allocation9 + $0x90] sm:$0xff]
    %v7260 = vld [vmem:[#allocation9 + $0x98] sm:$0xff]
    %v7261 = vld [vmem:[#allocation9 + $0xa0] sm:$0xff]
    %v7262 = vld [vmem:[#allocation9 + $0xa8] sm:$0xff]
    %v7263 = vld [vmem:[#allocation9 + $0xb0] sm:$0xff]
    %v7264 = vld [vmem:[#allocation9 + $0xb8] sm:$0xff]
    %v7265 = vld [vmem:[#allocation9 + $0xc0] sm:$0xff]
    %v7266 = vld [vmem:[#allocation9 + $0xc8] sm:$0xff]
    %v7267 = vld [vmem:[#allocation9 + $0xd0] sm:$0xff]
    %v7268 = vld [vmem:[#allocation9 + $0xd8] sm:$0xff]
    %v7269 = vld [vmem:[#allocation9 + $0xe0] sm:$0xff]
    %v7270 = vld [vmem:[#allocation9 + $0xe8] sm:$0xff]
    %v7271 = vld [vmem:[#allocation9 + $0xf0] sm:$0xff]
    %v7272 = vld [vmem:[#allocation9 + $0xf8] sm:$0xff]
    %v7273 = vld [vmem:[#allocation9 + $0x100] sm:$0xff]
    %v7274 = vld [vmem:[#allocation9 + $0x108] sm:$0xff]
    %v7275 = vld [vmem:[#allocation9 + $0x110] sm:$0xff]
    %v7276 = vld [vmem:[#allocation9 + $0x118] sm:$0xff]
    %v7277 = vld [vmem:[#allocation9 + $0x120] sm:$0xff]
    %v7278 = vld [vmem:[#allocation9 + $0x128] sm:$0xff]
    %v7279 = vld [vmem:[#allocation9 + $0x130] sm:$0xff]
    %v7280 = vld [vmem:[#allocation9 + $0x138] sm:$0xff]
    %v7281 = vld [vmem:[#allocation9 + $0x140] sm:$0xff]
    %v7282 = vld [vmem:[#allocation9 + $0x148] sm:$0xff]
    %v7283 = vld [vmem:[#allocation9 + $0x150] sm:$0xff]
    %v7284 = vld [vmem:[#allocation9 + $0x158] sm:$0xff]
    %v7285 = vld [vmem:[#allocation9 + $0x160] sm:$0xff]
    %v7286 = vld [vmem:[#allocation9 + $0x168] sm:$0xff]
    %v7287 = vld [vmem:[#allocation9 + $0x170] sm:$0xff]
    %v7288 = vld [vmem:[#allocation9 + $0x178] sm:$0xff]
    %v7289 = vld [vmem:[#allocation9 + $0x180] sm:$0xff]
    %v7290 = vld [vmem:[#allocation9 + $0x188] sm:$0xff]
    %v7291 = vld [vmem:[#allocation9 + $0x190] sm:$0xff]
    %v7292 = vld [vmem:[#allocation9 + $0x198] sm:$0xff]
    %v7293 = vld [vmem:[#allocation9 + $0x1a0] sm:$0xff]
    %v7294 = vld [vmem:[#allocation9 + $0x1a8] sm:$0xff]
    %v7295 = vld [vmem:[#allocation9 + $0x1b0] sm:$0xff]
    %v7296 = vld [vmem:[#allocation9 + $0x1b8] sm:$0xff]
    %v7297 = vld [vmem:[#allocation9 + $0x1c0] sm:$0xff]
    %v7298 = vld [vmem:[#allocation9 + $0x1c8] sm:$0xff]
    %v7299 = vld [vmem:[#allocation9 + $0x1d0] sm:$0xff]
    %v7300 = vld [vmem:[#allocation9 + $0x1d8] sm:$0xff]
    %v7301 = vld [vmem:[#allocation9 + $0x1e0] sm:$0xff]
    %v7302 = vld [vmem:[#allocation9 + $0x1e8] sm:$0xff]
    %v7303 = vld [vmem:[#allocation9 + $0x1f0] sm:$0xff]
    %v7304 = vld [vmem:[#allocation9 + $0x1f8] sm:$0xff]
    %v7305 = vld [vmem:[#allocation9 + $0x200] sm:$0xff]
    %v7306 = vld [vmem:[#allocation9 + $0x208] sm:$0xff]
    %v7307 = vld [vmem:[#allocation9 + $0x210] sm:$0xff]
    %v7308 = vld [vmem:[#allocation9 + $0x218] sm:$0xff]
    %v7309 = vld [vmem:[#allocation9 + $0x220] sm:$0xff]
    %v7310 = vld [vmem:[#allocation9 + $0x228] sm:$0xff]
    %v7311 = vld [vmem:[#allocation9 + $0x230] sm:$0xff]
    %v7312 = vld [vmem:[#allocation9 + $0x238] sm:$0xff]
    %v7313 = vld [vmem:[#allocation9 + $0x240] sm:$0xff]
    %v7314 = vld [vmem:[#allocation9 + $0x248] sm:$0xff]
    %v7315 = vld [vmem:[#allocation9 + $0x250] sm:$0xff]
    %v7316 = vld [vmem:[#allocation9 + $0x258] sm:$0xff]
    %v7317 = vld [vmem:[#allocation9 + $0x260] sm:$0xff]
    %v7318 = vld [vmem:[#allocation9 + $0x268] sm:$0xff]
    %v7319 = vld [vmem:[#allocation9 + $0x270] sm:$0xff]
    %v7320 = vld [vmem:[#allocation9 + $0x278] sm:$0xff]
    %v7321 = vld [vmem:[#allocation9 + $0x280] sm:$0xff]
    %v7322 = vld [vmem:[#allocation9 + $0x288] sm:$0xff]
    %v7323 = vld [vmem:[#allocation9 + $0x290] sm:$0xff]
    %v7324 = vld [vmem:[#allocation9 + $0x298] sm:$0xff]
    %v7325 = vld [vmem:[#allocation9 + $0x2a0] sm:$0xff]
    %v7326 = vld [vmem:[#allocation9 + $0x2a8] sm:$0xff]
    %v7327 = vld [vmem:[#allocation9 + $0x2b0] sm:$0xff]
    %v7328 = vld [vmem:[#allocation9 + $0x2b8] sm:$0xff]
    %v7329 = vld [vmem:[#allocation9 + $0x2c0] sm:$0xff]
    %v7330 = vld [vmem:[#allocation9 + $0x2c8] sm:$0xff]
    %v7331 = vld [vmem:[#allocation9 + $0x2d0] sm:$0xff]
    %v7332 = vld [vmem:[#allocation9 + $0x2d8] sm:$0xff]
    %v7333 = vld [vmem:[#allocation9 + $0x2e0] sm:$0xff]
    %v7334 = vld [vmem:[#allocation9 + $0x2e8] sm:$0xff]
    %v7335 = vld [vmem:[#allocation9 + $0x2f0] sm:$0xff]
    %v7336 = vld [vmem:[#allocation9 + $0x2f8] sm:$0xff]
    %v7337 = vld [vmem:[#allocation9 + $0x300] sm:$0xff]
    %v7338 = vld [vmem:[#allocation9 + $0x308] sm:$0xff]
    %v7339 = vld [vmem:[#allocation9 + $0x310] sm:$0xff]
    %v7340 = vld [vmem:[#allocation9 + $0x318] sm:$0xff]
    %v7341 = vld [vmem:[#allocation9 + $0x320] sm:$0xff]
    %v7342 = vld [vmem:[#allocation9 + $0x328] sm:$0xff]
    %v7343 = vld [vmem:[#allocation9 + $0x330] sm:$0xff]
    %v7344 = vld [vmem:[#allocation9 + $0x338] sm:$0xff]
    %v7345 = vld [vmem:[#allocation9 + $0x340] sm:$0xff]
    %v7346 = vld [vmem:[#allocation9 + $0x348] sm:$0xff]
    %v7347 = vld [vmem:[#allocation9 + $0x350] sm:$0xff]
    %v7348 = vld [vmem:[#allocation9 + $0x358] sm:$0xff]
    %v7349 = vld [vmem:[#allocation9 + $0x360] sm:$0xff]
    %v7350 = vld [vmem:[#allocation9 + $0x368] sm:$0xff]
    %v7351 = vld [vmem:[#allocation9 + $0x370] sm:$0xff]
    %v7352 = vld [vmem:[#allocation9 + $0x378] sm:$0xff]
    %v7353 = vld [vmem:[#allocation9 + $0x380] sm:$0xff]
    %v7354 = vld [vmem:[#allocation9 + $0x388] sm:$0xff]
    %v7355 = vld [vmem:[#allocation9 + $0x390] sm:$0xff]
    %v7356 = vld [vmem:[#allocation9 + $0x398] sm:$0xff]
    %v7357 = vld [vmem:[#allocation9 + $0x3a0] sm:$0xff]
    %v7358 = vld [vmem:[#allocation9 + $0x3a8] sm:$0xff]
    %v7359 = vld [vmem:[#allocation9 + $0x3b0] sm:$0xff]
    %v7360 = vld [vmem:[#allocation9 + $0x3b8] sm:$0xff]
    %v7361 = vld [vmem:[#allocation9 + $0x3c0] sm:$0xff]
    %v7362 = vld [vmem:[#allocation9 + $0x3c8] sm:$0xff]
    %v7363 = vld [vmem:[#allocation9 + $0x3d0] sm:$0xff]
    %v7364 = vld [vmem:[#allocation9 + $0x3d8] sm:$0xff]
    %v7365 = vld [vmem:[#allocation9 + $0x3e0] sm:$0xff]
    %v7366 = vld [vmem:[#allocation9 + $0x3e8] sm:$0xff]
    %v7367 = vld [vmem:[#allocation9 + $0x3f0] sm:$0xff]
    %v7368 = vld [vmem:[#allocation9 + $0x3f8] sm:$0xff]
    %v7369 = vld [vmem:[#allocation10] sm:$0xf]
    %v7371 = vperm.slane %v7369, 0
    %v7372 = vperm.slane %v7369, 1
    %v7373 = vperm.slane %v7369, 2
    %v7374 = vperm.slane %v7369, 3
    %v7507 = vunpack.c.l.b16 %v7241
    %v7508 = vunpack.c.h.b16 %v7241
    %v7509 = vunpack.c.l.b16 %v7242
    %v7510 = vunpack.c.h.b16 %v7242
    %v7511 = vunpack.c.l.b16 %v7243
    %v7512 = vunpack.c.h.b16 %v7243
    %v7513 = vunpack.c.l.b16 %v7244
    %v7514 = vunpack.c.h.b16 %v7244
    %v7515 = vunpack.c.l.b16 %v7245
    %v7516 = vunpack.c.h.b16 %v7245
    %v7517 = vunpack.c.l.b16 %v7246
    %v7518 = vunpack.c.h.b16 %v7246
    %v7519 = vunpack.c.l.b16 %v7247
    %v7520 = vunpack.c.h.b16 %v7247
    %v7521 = vunpack.c.l.b16 %v7248
    %v7522 = vunpack.c.h.b16 %v7248
    %v7523 = vunpack.c.l.b16 %v7249
    %v7524 = vunpack.c.h.b16 %v7249
    %v7525 = vunpack.c.l.b16 %v7250
    %v7526 = vunpack.c.h.b16 %v7250
    %v7527 = vunpack.c.l.b16 %v7251
    %v7528 = vunpack.c.h.b16 %v7251
    %v7529 = vunpack.c.l.b16 %v7252
    %v7530 = vunpack.c.h.b16 %v7252
    %v7531 = vunpack.c.l.b16 %v7253
    %v7532 = vunpack.c.h.b16 %v7253
    %v7533 = vunpack.c.l.b16 %v7254
    %v7534 = vunpack.c.h.b16 %v7254
    %v7535 = vunpack.c.l.b16 %v7255
    %v7536 = vunpack.c.h.b16 %v7255
    %v7537 = vunpack.c.l.b16 %v7256
    %v7538 = vunpack.c.h.b16 %v7256
    %v7539 = vunpack.c.l.b16 %v7257
    %v7540 = vunpack.c.h.b16 %v7257
    %v7541 = vunpack.c.l.b16 %v7258
    %v7542 = vunpack.c.h.b16 %v7258
    %v7543 = vunpack.c.l.b16 %v7259
    %v7544 = vunpack.c.h.b16 %v7259
    %v7545 = vunpack.c.l.b16 %v7260
    %v7546 = vunpack.c.h.b16 %v7260
    %v7547 = vunpack.c.l.b16 %v7261
    %v7548 = vunpack.c.h.b16 %v7261
    %v7549 = vunpack.c.l.b16 %v7262
    %v7550 = vunpack.c.h.b16 %v7262
    %v7551 = vunpack.c.l.b16 %v7263
    %v7552 = vunpack.c.h.b16 %v7263
    %v7553 = vunpack.c.l.b16 %v7264
    %v7554 = vunpack.c.h.b16 %v7264
    %v7555 = vunpack.c.l.b16 %v7265
    %v7556 = vunpack.c.h.b16 %v7265
    %v7557 = vunpack.c.l.b16 %v7266
    %v7558 = vunpack.c.h.b16 %v7266
    %v7559 = vunpack.c.l.b16 %v7267
    %v7560 = vunpack.c.h.b16 %v7267
    %v7561 = vunpack.c.l.b16 %v7268
    %v7562 = vunpack.c.h.b16 %v7268
    %v7563 = vunpack.c.l.b16 %v7269
    %v7564 = vunpack.c.h.b16 %v7269
    %v7565 = vunpack.c.l.b16 %v7270
    %v7566 = vunpack.c.h.b16 %v7270
    %v7567 = vunpack.c.l.b16 %v7271
    %v7568 = vunpack.c.h.b16 %v7271
    %v7569 = vunpack.c.l.b16 %v7272
    %v7570 = vunpack.c.h.b16 %v7272
    %v7571 = vunpack.c.l.b16 %v7273
    %v7572 = vunpack.c.h.b16 %v7273
    %v7573 = vunpack.c.l.b16 %v7274
    %v7574 = vunpack.c.h.b16 %v7274
    %v7575 = vunpack.c.l.b16 %v7275
    %v7576 = vunpack.c.h.b16 %v7275
    %v7577 = vunpack.c.l.b16 %v7276
    %v7578 = vunpack.c.h.b16 %v7276
    %v7579 = vunpack.c.l.b16 %v7277
    %v7580 = vunpack.c.h.b16 %v7277
    %v7581 = vunpack.c.l.b16 %v7278
    %v7582 = vunpack.c.h.b16 %v7278
    %v7583 = vunpack.c.l.b16 %v7279
    %v7584 = vunpack.c.h.b16 %v7279
    %v7585 = vunpack.c.l.b16 %v7280
    %v7586 = vunpack.c.h.b16 %v7280
    %v7587 = vunpack.c.l.b16 %v7281
    %v7588 = vunpack.c.h.b16 %v7281
    %v7589 = vunpack.c.l.b16 %v7282
    %v7590 = vunpack.c.h.b16 %v7282
    %v7591 = vunpack.c.l.b16 %v7283
    %v7592 = vunpack.c.h.b16 %v7283
    %v7593 = vunpack.c.l.b16 %v7284
    %v7594 = vunpack.c.h.b16 %v7284
    %v7595 = vunpack.c.l.b16 %v7285
    %v7596 = vunpack.c.h.b16 %v7285
    %v7597 = vunpack.c.l.b16 %v7286
    %v7598 = vunpack.c.h.b16 %v7286
    %v7599 = vunpack.c.l.b16 %v7287
    %v7600 = vunpack.c.h.b16 %v7287
    %v7601 = vunpack.c.l.b16 %v7288
    %v7602 = vunpack.c.h.b16 %v7288
    %v7603 = vunpack.c.l.b16 %v7289
    %v7604 = vunpack.c.h.b16 %v7289
    %v7605 = vunpack.c.l.b16 %v7290
    %v7606 = vunpack.c.h.b16 %v7290
    %v7607 = vunpack.c.l.b16 %v7291
    %v7608 = vunpack.c.h.b16 %v7291
    %v7609 = vunpack.c.l.b16 %v7292
    %v7610 = vunpack.c.h.b16 %v7292
    %v7611 = vunpack.c.l.b16 %v7293
    %v7612 = vunpack.c.h.b16 %v7293
    %v7613 = vunpack.c.l.b16 %v7294
    %v7614 = vunpack.c.h.b16 %v7294
    %v7615 = vunpack.c.l.b16 %v7295
    %v7616 = vunpack.c.h.b16 %v7295
    %v7617 = vunpack.c.l.b16 %v7296
    %v7618 = vunpack.c.h.b16 %v7296
    %v7619 = vunpack.c.l.b16 %v7297
    %v7620 = vunpack.c.h.b16 %v7297
    %v7621 = vunpack.c.l.b16 %v7298
    %v7622 = vunpack.c.h.b16 %v7298
    %v7623 = vunpack.c.l.b16 %v7299
    %v7624 = vunpack.c.h.b16 %v7299
    %v7625 = vunpack.c.l.b16 %v7300
    %v7626 = vunpack.c.h.b16 %v7300
    %v7627 = vunpack.c.l.b16 %v7301
    %v7628 = vunpack.c.h.b16 %v7301
    %v7629 = vunpack.c.l.b16 %v7302
    %v7630 = vunpack.c.h.b16 %v7302
    %v7631 = vunpack.c.l.b16 %v7303
    %v7632 = vunpack.c.h.b16 %v7303
    %v7633 = vunpack.c.l.b16 %v7304
    %v7634 = vunpack.c.h.b16 %v7304
    %v7635 = vunpack.c.l.b16 %v7305
    %v7636 = vunpack.c.h.b16 %v7305
    %v7637 = vunpack.c.l.b16 %v7306
    %v7638 = vunpack.c.h.b16 %v7306
    %v7639 = vunpack.c.l.b16 %v7307
    %v7640 = vunpack.c.h.b16 %v7307
    %v7641 = vunpack.c.l.b16 %v7308
    %v7642 = vunpack.c.h.b16 %v7308
    %v7643 = vunpack.c.l.b16 %v7309
    %v7644 = vunpack.c.h.b16 %v7309
    %v7645 = vunpack.c.l.b16 %v7310
    %v7646 = vunpack.c.h.b16 %v7310
    %v7647 = vunpack.c.l.b16 %v7311
    %v7648 = vunpack.c.h.b16 %v7311
    %v7649 = vunpack.c.l.b16 %v7312
    %v7650 = vunpack.c.h.b16 %v7312
    %v7651 = vunpack.c.l.b16 %v7313
    %v7652 = vunpack.c.h.b16 %v7313
    %v7653 = vunpack.c.l.b16 %v7314
    %v7654 = vunpack.c.h.b16 %v7314
    %v7655 = vunpack.c.l.b16 %v7315
    %v7656 = vunpack.c.h.b16 %v7315
    %v7657 = vunpack.c.l.b16 %v7316
    %v7658 = vunpack.c.h.b16 %v7316
    %v7659 = vunpack.c.l.b16 %v7317
    %v7660 = vunpack.c.h.b16 %v7317
    %v7661 = vunpack.c.l.b16 %v7318
    %v7662 = vunpack.c.h.b16 %v7318
    %v7663 = vunpack.c.l.b16 %v7319
    %v7664 = vunpack.c.h.b16 %v7319
    %v7665 = vunpack.c.l.b16 %v7320
    %v7666 = vunpack.c.h.b16 %v7320
    %v7667 = vunpack.c.l.b16 %v7321
    %v7668 = vunpack.c.h.b16 %v7321
    %v7669 = vunpack.c.l.b16 %v7322
    %v7670 = vunpack.c.h.b16 %v7322
    %v7671 = vunpack.c.l.b16 %v7323
    %v7672 = vunpack.c.h.b16 %v7323
    %v7673 = vunpack.c.l.b16 %v7324
    %v7674 = vunpack.c.h.b16 %v7324
    %v7675 = vunpack.c.l.b16 %v7325
    %v7676 = vunpack.c.h.b16 %v7325
    %v7677 = vunpack.c.l.b16 %v7326
    %v7678 = vunpack.c.h.b16 %v7326
    %v7679 = vunpack.c.l.b16 %v7327
    %v7680 = vunpack.c.h.b16 %v7327
    %v7681 = vunpack.c.l.b16 %v7328
    %v7682 = vunpack.c.h.b16 %v7328
    %v7683 = vunpack.c.l.b16 %v7329
    %v7684 = vunpack.c.h.b16 %v7329
    %v7685 = vunpack.c.l.b16 %v7330
    %v7686 = vunpack.c.h.b16 %v7330
    %v7687 = vunpack.c.l.b16 %v7331
    %v7688 = vunpack.c.h.b16 %v7331
    %v7689 = vunpack.c.l.b16 %v7332
    %v7690 = vunpack.c.h.b16 %v7332
    %v7691 = vunpack.c.l.b16 %v7333
    %v7692 = vunpack.c.h.b16 %v7333
    %v7693 = vunpack.c.l.b16 %v7334
    %v7694 = vunpack.c.h.b16 %v7334
    %v7695 = vunpack.c.l.b16 %v7335
    %v7696 = vunpack.c.h.b16 %v7335
    %v7697 = vunpack.c.l.b16 %v7336
    %v7698 = vunpack.c.h.b16 %v7336
    %v7699 = vunpack.c.l.b16 %v7337
    %v7700 = vunpack.c.h.b16 %v7337
    %v7701 = vunpack.c.l.b16 %v7338
    %v7702 = vunpack.c.h.b16 %v7338
    %v7703 = vunpack.c.l.b16 %v7339
    %v7704 = vunpack.c.h.b16 %v7339
    %v7705 = vunpack.c.l.b16 %v7340
    %v7706 = vunpack.c.h.b16 %v7340
    %v7707 = vunpack.c.l.b16 %v7341
    %v7708 = vunpack.c.h.b16 %v7341
    %v7709 = vunpack.c.l.b16 %v7342
    %v7710 = vunpack.c.h.b16 %v7342
    %v7711 = vunpack.c.l.b16 %v7343
    %v7712 = vunpack.c.h.b16 %v7343
    %v7713 = vunpack.c.l.b16 %v7344
    %v7714 = vunpack.c.h.b16 %v7344
    %v7715 = vunpack.c.l.b16 %v7345
    %v7716 = vunpack.c.h.b16 %v7345
    %v7717 = vunpack.c.l.b16 %v7346
    %v7718 = vunpack.c.h.b16 %v7346
    %v7719 = vunpack.c.l.b16 %v7347
    %v7720 = vunpack.c.h.b16 %v7347
    %v7721 = vunpack.c.l.b16 %v7348
    %v7722 = vunpack.c.h.b16 %v7348
    %v7723 = vunpack.c.l.b16 %v7349
    %v7724 = vunpack.c.h.b16 %v7349
    %v7725 = vunpack.c.l.b16 %v7350
    %v7726 = vunpack.c.h.b16 %v7350
    %v7727 = vunpack.c.l.b16 %v7351
    %v7728 = vunpack.c.h.b16 %v7351
    %v7729 = vunpack.c.l.b16 %v7352
    %v7730 = vunpack.c.h.b16 %v7352
    %v7731 = vunpack.c.l.b16 %v7353
    %v7732 = vunpack.c.h.b16 %v7353
    %v7733 = vunpack.c.l.b16 %v7354
    %v7734 = vunpack.c.h.b16 %v7354
    %v7735 = vunpack.c.l.b16 %v7355
    %v7736 = vunpack.c.h.b16 %v7355
    %v7737 = vunpack.c.l.b16 %v7356
    %v7738 = vunpack.c.h.b16 %v7356
    %v7739 = vunpack.c.l.b16 %v7357
    %v7740 = vunpack.c.h.b16 %v7357
    %v7741 = vunpack.c.l.b16 %v7358
    %v7742 = vunpack.c.h.b16 %v7358
    %v7743 = vunpack.c.l.b16 %v7359
    %v7744 = vunpack.c.h.b16 %v7359
    %v7745 = vunpack.c.l.b16 %v7360
    %v7746 = vunpack.c.h.b16 %v7360
    %v7747 = vunpack.c.l.b16 %v7361
    %v7748 = vunpack.c.h.b16 %v7361
    %v7749 = vunpack.c.l.b16 %v7362
    %v7750 = vunpack.c.h.b16 %v7362
    %v7751 = vunpack.c.l.b16 %v7363
    %v7752 = vunpack.c.h.b16 %v7363
    %v7753 = vunpack.c.l.b16 %v7364
    %v7754 = vunpack.c.h.b16 %v7364
    %v7755 = vunpack.c.l.b16 %v7365
    %v7756 = vunpack.c.h.b16 %v7365
    %v7757 = vunpack.c.l.b16 %v7366
    %v7758 = vunpack.c.h.b16 %v7366
    %v7759 = vunpack.c.l.b16 %v7367
    %v7760 = vunpack.c.h.b16 %v7367
    %v7761 = vunpack.c.l.b16 %v7368
    %v7762 = vunpack.c.h.b16 %v7368
    %v7763 = vpack.c.b16 %v7511, %v7507
    %v7764 = vpack.c.b16 %v7512, %v7508
    %v7765 = vpack.c.b16 %v7513, %v7509
    %v7766 = vpack.c.b16 %v7514, %v7510
    %v7767 = vpack.c.b16 %v7519, %v7515
    %v7768 = vpack.c.b16 %v7520, %v7516
    %v7769 = vpack.c.b16 %v7521, %v7517
    %v7770 = vpack.c.b16 %v7522, %v7518
    %v7771 = vpack.c.b16 %v7527, %v7523
    %v7772 = vpack.c.b16 %v7528, %v7524
    %v7773 = vpack.c.b16 %v7529, %v7525
    %v7774 = vpack.c.b16 %v7530, %v7526
    %v7775 = vpack.c.b16 %v7535, %v7531
    %v7776 = vpack.c.b16 %v7536, %v7532
    %v7777 = vpack.c.b16 %v7537, %v7533
    %v7778 = vpack.c.b16 %v7538, %v7534
    %v7779 = vpack.c.b16 %v7543, %v7539
    %v7780 = vpack.c.b16 %v7544, %v7540
    %v7781 = vpack.c.b16 %v7545, %v7541
    %v7782 = vpack.c.b16 %v7546, %v7542
    %v7783 = vpack.c.b16 %v7551, %v7547
    %v7784 = vpack.c.b16 %v7552, %v7548
    %v7785 = vpack.c.b16 %v7553, %v7549
    %v7786 = vpack.c.b16 %v7554, %v7550
    %v7787 = vpack.c.b16 %v7559, %v7555
    %v7788 = vpack.c.b16 %v7560, %v7556
    %v7789 = vpack.c.b16 %v7561, %v7557
    %v7790 = vpack.c.b16 %v7562, %v7558
    %v7791 = vpack.c.b16 %v7567, %v7563
    %v7792 = vpack.c.b16 %v7568, %v7564
    %v7793 = vpack.c.b16 %v7569, %v7565
    %v7794 = vpack.c.b16 %v7570, %v7566
    %v7795 = vpack.c.b16 %v7575, %v7571
    %v7796 = vpack.c.b16 %v7576, %v7572
    %v7797 = vpack.c.b16 %v7577, %v7573
    %v7798 = vpack.c.b16 %v7578, %v7574
    %v7799 = vpack.c.b16 %v7583, %v7579
    %v7800 = vpack.c.b16 %v7584, %v7580
    %v7801 = vpack.c.b16 %v7585, %v7581
    %v7802 = vpack.c.b16 %v7586, %v7582
    %v7803 = vpack.c.b16 %v7591, %v7587
    %v7804 = vpack.c.b16 %v7592, %v7588
    %v7805 = vpack.c.b16 %v7593, %v7589
    %v7806 = vpack.c.b16 %v7594, %v7590
    %v7807 = vpack.c.b16 %v7599, %v7595
    %v7808 = vpack.c.b16 %v7600, %v7596
    %v7809 = vpack.c.b16 %v7601, %v7597
    %v7810 = vpack.c.b16 %v7602, %v7598
    %v7811 = vpack.c.b16 %v7607, %v7603
    %v7812 = vpack.c.b16 %v7608, %v7604
    %v7813 = vpack.c.b16 %v7609, %v7605
    %v7814 = vpack.c.b16 %v7610, %v7606
    %v7815 = vpack.c.b16 %v7615, %v7611
    %v7816 = vpack.c.b16 %v7616, %v7612
    %v7817 = vpack.c.b16 %v7617, %v7613
    %v7818 = vpack.c.b16 %v7618, %v7614
    %v7819 = vpack.c.b16 %v7623, %v7619
    %v7820 = vpack.c.b16 %v7624, %v7620
    %v7821 = vpack.c.b16 %v7625, %v7621
    %v7822 = vpack.c.b16 %v7626, %v7622
    %v7823 = vpack.c.b16 %v7631, %v7627
    %v7824 = vpack.c.b16 %v7632, %v7628
    %v7825 = vpack.c.b16 %v7633, %v7629
    %v7826 = vpack.c.b16 %v7634, %v7630
    %v7827 = vpack.c.b16 %v7639, %v7635
    %v7828 = vpack.c.b16 %v7640, %v7636
    %v7829 = vpack.c.b16 %v7641, %v7637
    %v7830 = vpack.c.b16 %v7642, %v7638
    %v7831 = vpack.c.b16 %v7647, %v7643
    %v7832 = vpack.c.b16 %v7648, %v7644
    %v7833 = vpack.c.b16 %v7649, %v7645
    %v7834 = vpack.c.b16 %v7650, %v7646
    %v7835 = vpack.c.b16 %v7655, %v7651
    %v7836 = vpack.c.b16 %v7656, %v7652
    %v7837 = vpack.c.b16 %v7657, %v7653
    %v7838 = vpack.c.b16 %v7658, %v7654
    %v7839 = vpack.c.b16 %v7663, %v7659
    %v7840 = vpack.c.b16 %v7664, %v7660
    %v7841 = vpack.c.b16 %v7665, %v7661
    %v7842 = vpack.c.b16 %v7666, %v7662
    %v7843 = vpack.c.b16 %v7671, %v7667
    %v7844 = vpack.c.b16 %v7672, %v7668
    %v7845 = vpack.c.b16 %v7673, %v7669
    %v7846 = vpack.c.b16 %v7674, %v7670
    %v7847 = vpack.c.b16 %v7679, %v7675
    %v7848 = vpack.c.b16 %v7680, %v7676
    %v7849 = vpack.c.b16 %v7681, %v7677
    %v7850 = vpack.c.b16 %v7682, %v7678
    %v7851 = vpack.c.b16 %v7687, %v7683
    %v7852 = vpack.c.b16 %v7688, %v7684
    %v7853 = vpack.c.b16 %v7689, %v7685
    %v7854 = vpack.c.b16 %v7690, %v7686
    %v7855 = vpack.c.b16 %v7695, %v7691
    %v7856 = vpack.c.b16 %v7696, %v7692
    %v7857 = vpack.c.b16 %v7697, %v7693
    %v7858 = vpack.c.b16 %v7698, %v7694
    %v7859 = vpack.c.b16 %v7703, %v7699
    %v7860 = vpack.c.b16 %v7704, %v7700
    %v7861 = vpack.c.b16 %v7705, %v7701
    %v7862 = vpack.c.b16 %v7706, %v7702
    %v7863 = vpack.c.b16 %v7711, %v7707
    %v7864 = vpack.c.b16 %v7712, %v7708
    %v7865 = vpack.c.b16 %v7713, %v7709
    %v7866 = vpack.c.b16 %v7714, %v7710
    %v7867 = vpack.c.b16 %v7719, %v7715
    %v7868 = vpack.c.b16 %v7720, %v7716
    %v7869 = vpack.c.b16 %v7721, %v7717
    %v7870 = vpack.c.b16 %v7722, %v7718
    %v7871 = vpack.c.b16 %v7727, %v7723
    %v7872 = vpack.c.b16 %v7728, %v7724
    %v7873 = vpack.c.b16 %v7729, %v7725
    %v7874 = vpack.c.b16 %v7730, %v7726
    %v7875 = vpack.c.b16 %v7735, %v7731
    %v7876 = vpack.c.b16 %v7736, %v7732
    %v7877 = vpack.c.b16 %v7737, %v7733
    %v7878 = vpack.c.b16 %v7738, %v7734
    %v7879 = vpack.c.b16 %v7743, %v7739
    %v7880 = vpack.c.b16 %v7744, %v7740
    %v7881 = vpack.c.b16 %v7745, %v7741
    %v7882 = vpack.c.b16 %v7746, %v7742
    %v7883 = vpack.c.b16 %v7751, %v7747
    %v7884 = vpack.c.b16 %v7752, %v7748
    %v7885 = vpack.c.b16 %v7753, %v7749
    %v7886 = vpack.c.b16 %v7754, %v7750
    %v7887 = vpack.c.b16 %v7759, %v7755
    %v7888 = vpack.c.b16 %v7760, %v7756
    %v7889 = vpack.c.b16 %v7761, %v7757
    %v7890 = vpack.c.b16 %v7762, %v7758
    %8019 = vmatpush.bf16.msra.mxu0 %v7791
    %8020 = vmatpush.bf16.msra.mxu0 %v7787
    %8021 = vmatpush.bf16.msra.mxu0 %v7783
    %8022 = vmatpush.bf16.msra.mxu0 %v7779
    %8023 = vmatpush.bf16.msra.mxu0 %v7775
    %8024 = vmatpush.bf16.msra.mxu0 %v7771
    %8025 = vmatpush.bf16.msra.mxu0 %v7767
    %8026 = vmatpush.bf16.msra.mxu0 %v7763
    %8027 = vmatmul.bf16.gmra.mxu0 %v7237
    %v8028 = vpop.f32.mrf.mxu0
    %v8029 = vadd.f32 %v7371, %v8028
    %v8030 = vpop.f32.mrf.mxu0
    %v8031 = vadd.f32 %v7371, %v8030
    %8032 = vdwg.mxu0
    %8033 = vmatpush.bf16.msra.mxu0 %v7823
    %8034 = vmatpush.bf16.msra.mxu0 %v7819
    %8035 = vmatpush.bf16.msra.mxu0 %v7815
    %8036 = vmatpush.bf16.msra.mxu0 %v7811
    %8037 = vmatpush.bf16.msra.mxu0 %v7807
    %8038 = vmatpush.bf16.msra.mxu0 %v7803
    %8039 = vmatpush.bf16.msra.mxu0 %v7799
    %8040 = vmatpush.bf16.msra.mxu0 %v7795
    %8041 = vmatmul.bf16.gmra.mxu0 %v7238
    %v8042 = vpop.f32.mrf.mxu0
    %v8043 = vadd.f32 %v8029, %v8042
    %v8044 = vpop.f32.mrf.mxu0
    %v8045 = vadd.f32 %v8031, %v8044
    %8046 = vdwg.mxu0
    %8047 = vmatpush.bf16.msra.mxu0 %v7855
    %8048 = vmatpush.bf16.msra.mxu0 %v7851
    %8049 = vmatpush.bf16.msra.mxu0 %v7847
    %8050 = vmatpush.bf16.msra.mxu0 %v7843
    %8051 = vmatpush.bf16.msra.mxu0 %v7839
    %8052 = vmatpush.bf16.msra.mxu0 %v7835
    %8053 = vmatpush.bf16.msra.mxu0 %v7831
    %8054 = vmatpush.bf16.msra.mxu0 %v7827
    %8055 = vmatmul.bf16.gmra.mxu0 %v7239
    %v8056 = vpop.f32.mrf.mxu0
    %v8057 = vadd.f32 %v8043, %v8056
    %v8058 = vpop.f32.mrf.mxu0
    %v8059 = vadd.f32 %v8045, %v8058
    %8060 = vdwg.mxu0
    %8061 = vmatpush.bf16.msra.mxu0 %v7887
    %8062 = vmatpush.bf16.msra.mxu0 %v7883
    %8063 = vmatpush.bf16.msra.mxu0 %v7879
    %8064 = vmatpush.bf16.msra.mxu0 %v7875
    %8065 = vmatpush.bf16.msra.mxu0 %v7871
    %8066 = vmatpush.bf16.msra.mxu0 %v7867
    %8067 = vmatpush.bf16.msra.mxu0 %v7863
    %8068 = vmatpush.bf16.msra.mxu0 %v7859
    %8069 = vmatmul.bf16.gmra.mxu0 %v7240
    %v8070 = vpop.f32.mrf.mxu0
    %v8071 = vadd.f32 %v8057, %v8070
    %v8072 = vpop.f32.mrf.mxu0
    %v8073 = vadd.f32 %v8059, %v8072
    %8074 = vdwg.mxu0
    %8075 = vmatpush.bf16.msra.mxu0 %v7792
    %8076 = vmatpush.bf16.msra.mxu0 %v7788
    %8077 = vmatpush.bf16.msra.mxu0 %v7784
    %8078 = vmatpush.bf16.msra.mxu0 %v7780
    %8079 = vmatpush.bf16.msra.mxu0 %v7776
    %8080 = vmatpush.bf16.msra.mxu0 %v7772
    %8081 = vmatpush.bf16.msra.mxu0 %v7768
    %8082 = vmatpush.bf16.msra.mxu0 %v7764
    %8083 = vmatmul.bf16.gmra.mxu0 %v7237
    %v8084 = vpop.f32.mrf.mxu0
    %v8085 = vadd.f32 %v7372, %v8084
    %v8086 = vpop.f32.mrf.mxu0
    %v8087 = vadd.f32 %v7372, %v8086
    %8088 = vdwg.mxu0
    %8089 = vmatpush.bf16.msra.mxu0 %v7824
    %8090 = vmatpush.bf16.msra.mxu0 %v7820
    %8091 = vmatpush.bf16.msra.mxu0 %v7816
    %8092 = vmatpush.bf16.msra.mxu0 %v7812
    %8093 = vmatpush.bf16.msra.mxu0 %v7808
    %8094 = vmatpush.bf16.msra.mxu0 %v7804
    %8095 = vmatpush.bf16.msra.mxu0 %v7800
    %8096 = vmatpush.bf16.msra.mxu0 %v7796
    %8097 = vmatmul.bf16.gmra.mxu0 %v7238
    %v8098 = vpop.f32.mrf.mxu0
    %v8099 = vadd.f32 %v8085, %v8098
    %v8100 = vpop.f32.mrf.mxu0
    %v8101 = vadd.f32 %v8087, %v8100
    %8102 = vdwg.mxu0
    %8103 = vmatpush.bf16.msra.mxu0 %v7856
    %8104 = vmatpush.bf16.msra.mxu0 %v7852
    %8105 = vmatpush.bf16.msra.mxu0 %v7848
    %8106 = vmatpush.bf16.msra.mxu0 %v7844
    %8107 = vmatpush.bf16.msra.mxu0 %v7840
    %8108 = vmatpush.bf16.msra.mxu0 %v7836
    %8109 = vmatpush.bf16.msra.mxu0 %v7832
    %8110 = vmatpush.bf16.msra.mxu0 %v7828
    %8111 = vmatmul.bf16.gmra.mxu0 %v7239
    %v8112 = vpop.f32.mrf.mxu0
    %v8113 = vadd.f32 %v8099, %v8112
    %v8114 = vpop.f32.mrf.mxu0
    %v8115 = vadd.f32 %v8101, %v8114
    %8116 = vdwg.mxu0
    %8117 = vmatpush.bf16.msra.mxu0 %v7888
    %8118 = vmatpush.bf16.msra.mxu0 %v7884
    %8119 = vmatpush.bf16.msra.mxu0 %v7880
    %8120 = vmatpush.bf16.msra.mxu0 %v7876
    %8121 = vmatpush.bf16.msra.mxu0 %v7872
    %8122 = vmatpush.bf16.msra.mxu0 %v7868
    %8123 = vmatpush.bf16.msra.mxu0 %v7864
    %8124 = vmatpush.bf16.msra.mxu0 %v7860
    %8125 = vmatmul.bf16.gmra.mxu0 %v7240
    %v8126 = vpop.f32.mrf.mxu0
    %v8127 = vadd.f32 %v8113, %v8126
    %v8128 = vpop.f32.mrf.mxu0
    %v8129 = vadd.f32 %v8115, %v8128
    %8130 = vdwg.mxu0
    %8131 = vmatpush.bf16.msra.mxu0 %v7793
    %8132 = vmatpush.bf16.msra.mxu0 %v7789
    %8133 = vmatpush.bf16.msra.mxu0 %v7785
    %8134 = vmatpush.bf16.msra.mxu0 %v7781
    %8135 = vmatpush.bf16.msra.mxu0 %v7777
    %8136 = vmatpush.bf16.msra.mxu0 %v7773
    %8137 = vmatpush.bf16.msra.mxu0 %v7769
    %8138 = vmatpush.bf16.msra.mxu0 %v7765
    %8139 = vmatmul.bf16.gmra.mxu0 %v7237
    %v8140 = vpop.f32.mrf.mxu0
    %v8141 = vadd.f32 %v7373, %v8140
    %v8142 = vpop.f32.mrf.mxu0
    %v8143 = vadd.f32 %v7373, %v8142
    %8144 = vdwg.mxu0
    %8145 = vmatpush.bf16.msra.mxu0 %v7825
    %8146 = vmatpush.bf16.msra.mxu0 %v7821
    %8147 = vmatpush.bf16.msra.mxu0 %v7817
    %8148 = vmatpush.bf16.msra.mxu0 %v7813
    %8149 = vmatpush.bf16.msra.mxu0 %v7809
    %8150 = vmatpush.bf16.msra.mxu0 %v7805
    %8151 = vmatpush.bf16.msra.mxu0 %v7801
    %8152 = vmatpush.bf16.msra.mxu0 %v7797
    %8153 = vmatmul.bf16.gmra.mxu0 %v7238
    %v8154 = vpop.f32.mrf.mxu0
    %v8155 = vadd.f32 %v8141, %v8154
    %v8156 = vpop.f32.mrf.mxu0
    %v8157 = vadd.f32 %v8143, %v8156
    %8158 = vdwg.mxu0
    %8159 = vmatpush.bf16.msra.mxu0 %v7857
    %8160 = vmatpush.bf16.msra.mxu0 %v7853
    %8161 = vmatpush.bf16.msra.mxu0 %v7849
    %8162 = vmatpush.bf16.msra.mxu0 %v7845
    %8163 = vmatpush.bf16.msra.mxu0 %v7841
    %8164 = vmatpush.bf16.msra.mxu0 %v7837
    %8165 = vmatpush.bf16.msra.mxu0 %v7833
    %8166 = vmatpush.bf16.msra.mxu0 %v7829
    %8167 = vmatmul.bf16.gmra.mxu0 %v7239
    %v8168 = vpop.f32.mrf.mxu0
    %v8169 = vadd.f32 %v8155, %v8168
    %v8170 = vpop.f32.mrf.mxu0
    %v8171 = vadd.f32 %v8157, %v8170
    %8172 = vdwg.mxu0
    %8173 = vmatpush.bf16.msra.mxu0 %v7889
    %8174 = vmatpush.bf16.msra.mxu0 %v7885
    %8175 = vmatpush.bf16.msra.mxu0 %v7881
    %8176 = vmatpush.bf16.msra.mxu0 %v7877
    %8177 = vmatpush.bf16.msra.mxu0 %v7873
    %8178 = vmatpush.bf16.msra.mxu0 %v7869
    %8179 = vmatpush.bf16.msra.mxu0 %v7865
    %8180 = vmatpush.bf16.msra.mxu0 %v7861
    %8181 = vmatmul.bf16.gmra.mxu0 %v7240
    %v8182 = vpop.f32.mrf.mxu0
    %v8183 = vadd.f32 %v8169, %v8182
    %v8184 = vpop.f32.mrf.mxu0
    %v8185 = vadd.f32 %v8171, %v8184
    %8186 = vdwg.mxu0
    %8187 = vmatpush.bf16.msra.mxu0 %v7794
    %8188 = vmatpush.bf16.msra.mxu0 %v7790
    %8189 = vmatpush.bf16.msra.mxu0 %v7786
    %8190 = vmatpush.bf16.msra.mxu0 %v7782
    %8191 = vmatpush.bf16.msra.mxu0 %v7778
    %8192 = vmatpush.bf16.msra.mxu0 %v7774
    %8193 = vmatpush.bf16.msra.mxu0 %v7770
    %8194 = vmatpush.bf16.msra.mxu0 %v7766
    %8195 = vmatmul.bf16.gmra.mxu0 %v7237
    %v8196 = vpop.f32.mrf.mxu0
    %v8197 = vadd.f32 %v7374, %v8196
    %v8198 = vpop.f32.mrf.mxu0
    %v8199 = vadd.f32 %v7374, %v8198
    %8200 = vdwg.mxu0
    %8201 = vmatpush.bf16.msra.mxu0 %v7826
    %8202 = vmatpush.bf16.msra.mxu0 %v7822
    %8203 = vmatpush.bf16.msra.mxu0 %v7818
    %8204 = vmatpush.bf16.msra.mxu0 %v7814
    %8205 = vmatpush.bf16.msra.mxu0 %v7810
    %8206 = vmatpush.bf16.msra.mxu0 %v7806
    %8207 = vmatpush.bf16.msra.mxu0 %v7802
    %8208 = vmatpush.bf16.msra.mxu0 %v7798
    %8209 = vmatmul.bf16.gmra.mxu0 %v7238
    %v8210 = vpop.f32.mrf.mxu0
    %v8211 = vadd.f32 %v8197, %v8210
    %v8212 = vpop.f32.mrf.mxu0
    %v8213 = vadd.f32 %v8199, %v8212
    %8214 = vdwg.mxu0
    %8215 = vmatpush.bf16.msra.mxu0 %v7858
    %8216 = vmatpush.bf16.msra.mxu0 %v7854
    %8217 = vmatpush.bf16.msra.mxu0 %v7850
    %8218 = vmatpush.bf16.msra.mxu0 %v7846
    %8219 = vmatpush.bf16.msra.mxu0 %v7842
    %8220 = vmatpush.bf16.msra.mxu0 %v7838
    %8221 = vmatpush.bf16.msra.mxu0 %v7834
    %8222 = vmatpush.bf16.msra.mxu0 %v7830
    %8223 = vmatmul.bf16.gmra.mxu0 %v7239
    %v8224 = vpop.f32.mrf.mxu0
    %v8225 = vadd.f32 %v8211, %v8224
    %v8226 = vpop.f32.mrf.mxu0
    %v8227 = vadd.f32 %v8213, %v8226
    %8228 = vdwg.mxu0
    %8229 = vmatpush.bf16.msra.mxu0 %v7890
    %8230 = vmatpush.bf16.msra.mxu0 %v7886
    %8231 = vmatpush.bf16.msra.mxu0 %v7882
    %8232 = vmatpush.bf16.msra.mxu0 %v7878
    %8233 = vmatpush.bf16.msra.mxu0 %v7874
    %8234 = vmatpush.bf16.msra.mxu0 %v7870
    %8235 = vmatpush.bf16.msra.mxu0 %v7866
    %8236 = vmatpush.bf16.msra.mxu0 %v7862
    %8237 = vmatmul.bf16.gmra.mxu0 %v7240
    %v8238 = vpop.f32.mrf.mxu0
    %v8239 = vadd.f32 %v8225, %v8238
    %v8240 = vpop.f32.mrf.mxu0
    %v8241 = vadd.f32 %v8227, %v8240
    %8242 = vdwg.mxu0
    %vm8243 = vcmp.ge.f32.partialorder %v8071, 0.0
    %vm8244 = vcmp.ge.f32.partialorder %v8127, 0.0
    %vm8245 = vcmp.ge.f32.partialorder %v8183, 0.0
    %vm8246 = vcmp.ge.f32.partialorder %v8239, 0.0
    %vm8247 = vcmp.ge.f32.partialorder %v8073, 0.0
    %vm8248 = vcmp.ge.f32.partialorder %v8129, 0.0
    %vm8249 = vcmp.ge.f32.partialorder %v8185, 0.0
    %vm8250 = vcmp.ge.f32.partialorder %v8241, 0.0
    %v8251 = vmul.f32 %v8071, 0.2
    %v8252 = vmul.f32 %v8127, 0.2
    %v8253 = vmul.f32 %v8183, 0.2
    %v8254 = vmul.f32 %v8239, 0.2
    %v8255 = vmul.f32 %v8073, 0.2
    %v8256 = vmul.f32 %v8129, 0.2
    %v8257 = vmul.f32 %v8185, 0.2
    %v8258 = vmul.f32 %v8241, 0.2
    %v8259 = vsel %vm8243, %v8071, %v8251
    %v8260 = vsel %vm8244, %v8127, %v8252
    %v8261 = vsel %vm8245, %v8183, %v8253
    %v8262 = vsel %vm8246, %v8239, %v8254
    %v8263 = vsel %vm8247, %v8073, %v8255
    %v8264 = vsel %vm8248, %v8129, %v8256
    %v8265 = vsel %vm8249, %v8185, %v8257
    %v8266 = vsel %vm8250, %v8241, %v8258
    %v8267 = vpack.c.bf16 %v8263, %v8259
    %v8268 = vpack.c.bf16 %v8264, %v8260
    %v8269 = vpack.c.bf16 %v8265, %v8261
    %v8270 = vpack.c.bf16 %v8266, %v8262
    %v8271 = vld [vmem:[#allocation12] sm:$0xf]
    %v8272 = vld [vmem:[#allocation12 + $0x4] sm:$0xf]
    %v8273 = vld [vmem:[#allocation12 + $0x8] sm:$0xf]
    %v8274 = vld [vmem:[#allocation12 + $0xc] sm:$0xf]
    %v8275 = vld [vmem:[#allocation12 + $0x10] sm:$0xf]
    %v8276 = vld [vmem:[#allocation12 + $0x14] sm:$0xf]
    %v8277 = vld [vmem:[#allocation12 + $0x18] sm:$0xf]
    %v8278 = vld [vmem:[#allocation12 + $0x1c] sm:$0xf]
    %v8279 = vld [vmem:[#allocation12 + $0x20] sm:$0xf]
    %v8280 = vld [vmem:[#allocation12 + $0x24] sm:$0xf]
    %v8281 = vld [vmem:[#allocation12 + $0x28] sm:$0xf]
    %v8282 = vld [vmem:[#allocation12 + $0x2c] sm:$0xf]
    %v8283 = vld [vmem:[#allocation12 + $0x30] sm:$0xf]
    %v8284 = vld [vmem:[#allocation12 + $0x34] sm:$0xf]
    %v8285 = vld [vmem:[#allocation12 + $0x38] sm:$0xf]
    %v8286 = vld [vmem:[#allocation12 + $0x3c] sm:$0xf]
    %v8287 = vld [vmem:[#allocation12 + $0x40] sm:$0xf]
    %v8288 = vld [vmem:[#allocation12 + $0x44] sm:$0xf]
    %v8289 = vld [vmem:[#allocation12 + $0x48] sm:$0xf]
    %v8290 = vld [vmem:[#allocation12 + $0x4c] sm:$0xf]
    %v8291 = vld [vmem:[#allocation12 + $0x50] sm:$0xf]
    %v8292 = vld [vmem:[#allocation12 + $0x54] sm:$0xf]
    %v8293 = vld [vmem:[#allocation12 + $0x58] sm:$0xf]
    %v8294 = vld [vmem:[#allocation12 + $0x5c] sm:$0xf]
    %v8295 = vld [vmem:[#allocation12 + $0x60] sm:$0xf]
    %v8296 = vld [vmem:[#allocation12 + $0x64] sm:$0xf]
    %v8297 = vld [vmem:[#allocation12 + $0x68] sm:$0xf]
    %v8298 = vld [vmem:[#allocation12 + $0x6c] sm:$0xf]
    %v8299 = vld [vmem:[#allocation12 + $0x70] sm:$0xf]
    %v8300 = vld [vmem:[#allocation12 + $0x74] sm:$0xf]
    %v8301 = vld [vmem:[#allocation12 + $0x78] sm:$0xf]
    %v8302 = vld [vmem:[#allocation12 + $0x7c] sm:$0xf]
    %v8303 = vld [vmem:[#allocation12 + $0x80] sm:$0xf]
    %v8304 = vld [vmem:[#allocation12 + $0x84] sm:$0xf]
    %v8305 = vld [vmem:[#allocation12 + $0x88] sm:$0xf]
    %v8306 = vld [vmem:[#allocation12 + $0x8c] sm:$0xf]
    %v8307 = vld [vmem:[#allocation12 + $0x90] sm:$0xf]
    %v8308 = vld [vmem:[#allocation12 + $0x94] sm:$0xf]
    %v8309 = vld [vmem:[#allocation12 + $0x98] sm:$0xf]
    %v8310 = vld [vmem:[#allocation12 + $0x9c] sm:$0xf]
    %v8311 = vld [vmem:[#allocation12 + $0xa0] sm:$0xf]
    %v8312 = vld [vmem:[#allocation12 + $0xa4] sm:$0xf]
    %v8313 = vld [vmem:[#allocation12 + $0xa8] sm:$0xf]
    %v8314 = vld [vmem:[#allocation12 + $0xac] sm:$0xf]
    %v8315 = vld [vmem:[#allocation12 + $0xb0] sm:$0xf]
    %v8316 = vld [vmem:[#allocation12 + $0xb4] sm:$0xf]
    %v8317 = vld [vmem:[#allocation12 + $0xb8] sm:$0xf]
    %v8318 = vld [vmem:[#allocation12 + $0xbc] sm:$0xf]
    %v8319 = vld [vmem:[#allocation12 + $0xc0] sm:$0xf]
    %v8320 = vld [vmem:[#allocation12 + $0xc4] sm:$0xf]
    %v8321 = vld [vmem:[#allocation12 + $0xc8] sm:$0xf]
    %v8322 = vld [vmem:[#allocation12 + $0xcc] sm:$0xf]
    %v8323 = vld [vmem:[#allocation12 + $0xd0] sm:$0xf]
    %v8324 = vld [vmem:[#allocation12 + $0xd4] sm:$0xf]
    %v8325 = vld [vmem:[#allocation12 + $0xd8] sm:$0xf]
    %v8326 = vld [vmem:[#allocation12 + $0xdc] sm:$0xf]
    %v8327 = vld [vmem:[#allocation12 + $0xe0] sm:$0xf]
    %v8328 = vld [vmem:[#allocation12 + $0xe4] sm:$0xf]
    %v8329 = vld [vmem:[#allocation12 + $0xe8] sm:$0xf]
    %v8330 = vld [vmem:[#allocation12 + $0xec] sm:$0xf]
    %v8331 = vld [vmem:[#allocation12 + $0xf0] sm:$0xf]
    %v8332 = vld [vmem:[#allocation12 + $0xf4] sm:$0xf]
    %v8333 = vld [vmem:[#allocation12 + $0xf8] sm:$0xf]
    %v8334 = vld [vmem:[#allocation12 + $0xfc] sm:$0xf]
    %v8335 = vld [vmem:[#allocation13] sm:$0x1]
    %v8337 = vperm.slane %v8335, 0
    %v8403 = vunpack.c.l.b16 %v8271
    %v8404 = vunpack.c.l.b16 %v8272
    %v8405 = vunpack.c.l.b16 %v8273
    %v8406 = vunpack.c.l.b16 %v8274
    %v8407 = vunpack.c.l.b16 %v8275
    %v8408 = vunpack.c.l.b16 %v8276
    %v8409 = vunpack.c.l.b16 %v8277
    %v8410 = vunpack.c.l.b16 %v8278
    %v8411 = vunpack.c.l.b16 %v8279
    %v8412 = vunpack.c.l.b16 %v8280
    %v8413 = vunpack.c.l.b16 %v8281
    %v8414 = vunpack.c.l.b16 %v8282
    %v8415 = vunpack.c.l.b16 %v8283
    %v8416 = vunpack.c.l.b16 %v8284
    %v8417 = vunpack.c.l.b16 %v8285
    %v8418 = vunpack.c.l.b16 %v8286
    %v8419 = vunpack.c.l.b16 %v8287
    %v8420 = vunpack.c.l.b16 %v8288
    %v8421 = vunpack.c.l.b16 %v8289
    %v8422 = vunpack.c.l.b16 %v8290
    %v8423 = vunpack.c.l.b16 %v8291
    %v8424 = vunpack.c.l.b16 %v8292
    %v8425 = vunpack.c.l.b16 %v8293
    %v8426 = vunpack.c.l.b16 %v8294
    %v8427 = vunpack.c.l.b16 %v8295
    %v8428 = vunpack.c.l.b16 %v8296
    %v8429 = vunpack.c.l.b16 %v8297
    %v8430 = vunpack.c.l.b16 %v8298
    %v8431 = vunpack.c.l.b16 %v8299
    %v8432 = vunpack.c.l.b16 %v8300
    %v8433 = vunpack.c.l.b16 %v8301
    %v8434 = vunpack.c.l.b16 %v8302
    %v8435 = vunpack.c.l.b16 %v8303
    %v8436 = vunpack.c.l.b16 %v8304
    %v8437 = vunpack.c.l.b16 %v8305
    %v8438 = vunpack.c.l.b16 %v8306
    %v8439 = vunpack.c.l.b16 %v8307
    %v8440 = vunpack.c.l.b16 %v8308
    %v8441 = vunpack.c.l.b16 %v8309
    %v8442 = vunpack.c.l.b16 %v8310
    %v8443 = vunpack.c.l.b16 %v8311
    %v8444 = vunpack.c.l.b16 %v8312
    %v8445 = vunpack.c.l.b16 %v8313
    %v8446 = vunpack.c.l.b16 %v8314
    %v8447 = vunpack.c.l.b16 %v8315
    %v8448 = vunpack.c.l.b16 %v8316
    %v8449 = vunpack.c.l.b16 %v8317
    %v8450 = vunpack.c.l.b16 %v8318
    %v8451 = vunpack.c.l.b16 %v8319
    %v8452 = vunpack.c.l.b16 %v8320
    %v8453 = vunpack.c.l.b16 %v8321
    %v8454 = vunpack.c.l.b16 %v8322
    %v8455 = vunpack.c.l.b16 %v8323
    %v8456 = vunpack.c.l.b16 %v8324
    %v8457 = vunpack.c.l.b16 %v8325
    %v8458 = vunpack.c.l.b16 %v8326
    %v8459 = vunpack.c.l.b16 %v8327
    %v8460 = vunpack.c.l.b16 %v8328
    %v8461 = vunpack.c.l.b16 %v8329
    %v8462 = vunpack.c.l.b16 %v8330
    %v8463 = vunpack.c.l.b16 %v8331
    %v8464 = vunpack.c.l.b16 %v8332
    %v8465 = vunpack.c.l.b16 %v8333
    %v8466 = vunpack.c.l.b16 %v8334
    %v8467 = vpack.c.b16 %v8404, %v8403
    %v8468 = vpack.c.b16 %v8406, %v8405
    %v8469 = vpack.c.b16 %v8408, %v8407
    %v8470 = vpack.c.b16 %v8410, %v8409
    %v8471 = vpack.c.b16 %v8412, %v8411
    %v8472 = vpack.c.b16 %v8414, %v8413
    %v8473 = vpack.c.b16 %v8416, %v8415
    %v8474 = vpack.c.b16 %v8418, %v8417
    %v8475 = vpack.c.b16 %v8420, %v8419
    %v8476 = vpack.c.b16 %v8422, %v8421
    %v8477 = vpack.c.b16 %v8424, %v8423
    %v8478 = vpack.c.b16 %v8426, %v8425
    %v8479 = vpack.c.b16 %v8428, %v8427
    %v8480 = vpack.c.b16 %v8430, %v8429
    %v8481 = vpack.c.b16 %v8432, %v8431
    %v8482 = vpack.c.b16 %v8434, %v8433
    %v8483 = vpack.c.b16 %v8436, %v8435
    %v8484 = vpack.c.b16 %v8438, %v8437
    %v8485 = vpack.c.b16 %v8440, %v8439
    %v8486 = vpack.c.b16 %v8442, %v8441
    %v8487 = vpack.c.b16 %v8444, %v8443
    %v8488 = vpack.c.b16 %v8446, %v8445
    %v8489 = vpack.c.b16 %v8448, %v8447
    %v8490 = vpack.c.b16 %v8450, %v8449
    %v8491 = vpack.c.b16 %v8452, %v8451
    %v8492 = vpack.c.b16 %v8454, %v8453
    %v8493 = vpack.c.b16 %v8456, %v8455
    %v8494 = vpack.c.b16 %v8458, %v8457
    %v8495 = vpack.c.b16 %v8460, %v8459
    %v8496 = vpack.c.b16 %v8462, %v8461
    %v8497 = vpack.c.b16 %v8464, %v8463
    %v8498 = vpack.c.b16 %v8466, %v8465
    %8531 = vmatpush.bf16.msra.mxu0 %v8474
    %8532 = vmatpush.bf16.msra.mxu0 %v8473
    %8533 = vmatpush.bf16.msra.mxu0 %v8472
    %8534 = vmatpush.bf16.msra.mxu0 %v8471
    %8535 = vmatpush.bf16.msra.mxu0 %v8470
    %8536 = vmatpush.bf16.msra.mxu0 %v8469
    %8537 = vmatpush.bf16.msra.mxu0 %v8468
    %8538 = vmatpush.bf16.msra.mxu0 %v8467
    %8539 = vmatmul.bf16.gmra.mxu0 %v8267
    %v8540 = vpop.f32.mrf.mxu0
    %v8541 = vadd.f32 %v8337, %v8540
    %v8542 = vpop.f32.mrf.mxu0
    %v8543 = vadd.f32 %v8337, %v8542
    %8544 = vdwg.mxu0
    %8545 = vmatpush.bf16.msra.mxu0 %v8482
    %8546 = vmatpush.bf16.msra.mxu0 %v8481
    %8547 = vmatpush.bf16.msra.mxu0 %v8480
    %8548 = vmatpush.bf16.msra.mxu0 %v8479
    %8549 = vmatpush.bf16.msra.mxu0 %v8478
    %8550 = vmatpush.bf16.msra.mxu0 %v8477
    %8551 = vmatpush.bf16.msra.mxu0 %v8476
    %8552 = vmatpush.bf16.msra.mxu0 %v8475
    %8553 = vmatmul.bf16.gmra.mxu0 %v8268
    %v8554 = vpop.f32.mrf.mxu0
    %v8555 = vadd.f32 %v8541, %v8554
    %v8556 = vpop.f32.mrf.mxu0
    %v8557 = vadd.f32 %v8543, %v8556
    %8558 = vdwg.mxu0
    %8559 = vmatpush.bf16.msra.mxu0 %v8490
    %8560 = vmatpush.bf16.msra.mxu0 %v8489
    %8561 = vmatpush.bf16.msra.mxu0 %v8488
    %8562 = vmatpush.bf16.msra.mxu0 %v8487
    %8563 = vmatpush.bf16.msra.mxu0 %v8486
    %8564 = vmatpush.bf16.msra.mxu0 %v8485
    %8565 = vmatpush.bf16.msra.mxu0 %v8484
    %8566 = vmatpush.bf16.msra.mxu0 %v8483
    %8567 = vmatmul.bf16.gmra.mxu0 %v8269
    %v8568 = vpop.f32.mrf.mxu0
    %v8569 = vadd.f32 %v8555, %v8568
    %v8570 = vpop.f32.mrf.mxu0
    %v8571 = vadd.f32 %v8557, %v8570
    %8572 = vdwg.mxu0
    %8573 = vmatpush.bf16.msra.mxu0 %v8498
    %8574 = vmatpush.bf16.msra.mxu0 %v8497
    %8575 = vmatpush.bf16.msra.mxu0 %v8496
    %8576 = vmatpush.bf16.msra.mxu0 %v8495
    %8577 = vmatpush.bf16.msra.mxu0 %v8494
    %8578 = vmatpush.bf16.msra.mxu0 %v8493
    %8579 = vmatpush.bf16.msra.mxu0 %v8492
    %8580 = vmatpush.bf16.msra.mxu0 %v8491
    %8581 = vmatmul.bf16.gmra.mxu0 %v8270
    %v8582 = vpop.f32.mrf.mxu0
    %v8583 = vadd.f32 %v8569, %v8582
    %v8584 = vpop.f32.mrf.mxu0
    %v8585 = vadd.f32 %v8571, %v8584
    %8586 = vdwg.mxu0
    %v8587 = vpack.c.bf16 %v8583, %v8583
    %v8588 = vpack.c.bf16 %v8585, %v8585
    %8589 = vst [vmem:[%s9] sm:$0xf] %v8587
    %8590 = vst [vmem:[%s9 + $0x4] sm:$0xf] %v8588
    // Predicated region
    $region70: #{discriminator_forward.1} parent=1 // pred_check
      _
    $region71: #{discriminator_forward.1} parent=1 // pred_check_branch
      %8592 = sbr.rel (0) target = $region73
    $region72: #{discriminator_forward.1} parent=1 // pred_region
      _
    $region73: #{discriminator_forward.1} parent=1 // pred_fallthru
      _
    // Predicated region
    $region74: #{discriminator_forward.1} parent=1 // pred_check
      _
    $region75: #{discriminator_forward.1} parent=1 // pred_check_branch
      %8594 = sbr.rel (0) target = $region77
    $region76: #{discriminator_forward.1} parent=1 // pred_region
      _
    $region77: #{discriminator_forward.1} parent=1 // pred_fallthru
      _
    %8595 = vsyncpa [#allocation3], 1
    %8596 = vsyncpa [#allocation5], 1
    %8597 = vsyncpa [#allocation8], 1
    %8598 = vsyncpa [#allocation11], 1
    %8599 = vsyncpa [#allocation14], 1

</llo_original>
